<compile_context>
chip_gen: v5e
topology: v5e:2x2
jax: 0.10.0
libtpu: 0.0.40
codegen_flags: <defaults>
</compile_context>

<pallas_src>
import functools

import jax
import jax.numpy as jnp
from jax import lax
from jax.experimental import pallas as pl
from jax.experimental.pallas import tpu as pltpu


# ----------------------------------------------------------------------------
# Fused fast path: scores -> mean -> softmax -> weighted sum, one kernel.
# ----------------------------------------------------------------------------
def _fused_kernel(z_ref, w1_ref, b1_ref, w2_ref, out_ref, beta_ref, *,
                  n_nodes, n_meta, d):
    # z_ref : (N, M*D) in z's dtype   w1_ref : (D, H) in z's dtype
    # b1_ref, w2_ref : (1, H) f32     out_ref : (N, D) f32   beta_ref : (1, M)
    w1 = w1_ref[...]
    b1 = b1_ref[...]
    w2 = w2_ref[...]

    # Per-metapath mean score (f32 accumulation, lane-dense reductions).
    means = []
    for m in range(n_meta):
        zm = z_ref[:, m * d:(m + 1) * d]                       # (N, D)
        h = jnp.tanh(jnp.dot(zm, w1, preferred_element_type=jnp.float32) + b1)
        s = jnp.sum(h * w2, axis=1, keepdims=True)             # (N, 1)
        means.append(jnp.sum(s, axis=0, keepdims=True) * (1.0 / n_nodes))

    # Softmax over the M metapaths: all ops on (1, 1) f32 values.
    mx = means[0]
    for m in range(1, n_meta):
        mx = jnp.maximum(mx, means[m])
    exps = [jnp.exp(wm - mx) for wm in means]
    denom = exps[0]
    for m in range(1, n_meta):
        denom = denom + exps[m]
    betas = [e / denom for e in exps]                          # M x (1, 1)

    # Assemble beta as a (1, M) vector for the output.
    lane = lax.broadcasted_iota(jnp.int32, (1, n_meta), 1)
    beta_vec = jnp.zeros((1, n_meta), jnp.float32)
    for m in range(n_meta):
        beta_vec = jnp.where(lane == m, betas[m], beta_vec)
    beta_ref[...] = beta_vec

    # Beta-weighted sum over metapaths (f32 accumulate, lane-dense store).
    acc = betas[0] * z_ref[:, 0:d].astype(jnp.float32)
    for m in range(1, n_meta):
        acc = acc + betas[m] * z_ref[:, m * d:(m + 1) * d].astype(jnp.float32)
    out_ref[...] = acc.astype(out_ref.dtype)


# ----------------------------------------------------------------------------
# Tiled phase 1: per-metapath partial score sums (reduction over node tiles).
# ----------------------------------------------------------------------------
def _phase1_kernel(z_ref, w1_ref, b1_ref, w2_ref, part_ref, *,
                   tile_n, n_meta, d, n_valid, pad_present, tiles_per_core):
    # z_ref : (tile_n, M*D)   part_ref : (1, 1, M) f32, resident over axis 1
    i = pl.program_id(1)

    @pl.when(i == 0)
    def _init():
        part_ref[...] = jnp.zeros_like(part_ref)

    w1 = w1_ref[...]
    b1 = b1_ref[...]
    w2 = w2_ref[...]

    if pad_present:
        tile_idx = pl.program_id(0) * tiles_per_core + i
        row = tile_idx * tile_n + lax.broadcasted_iota(
            jnp.int32, (tile_n, 1), 0)
        valid = row < n_valid

    lane = lax.broadcasted_iota(jnp.int32, (1, n_meta), 1)
    update = jnp.zeros((1, n_meta), jnp.float32)
    for m in range(n_meta):
        zm = z_ref[:, m * d:(m + 1) * d]                       # (tile_n, D)
        h = jnp.tanh(jnp.dot(zm, w1, preferred_element_type=jnp.float32) + b1)
        s = jnp.sum(h * w2, axis=1, keepdims=True)             # (tile_n, 1)
        if pad_present:
            s = jnp.where(valid, s, 0.0)
        part_m = jnp.sum(s, axis=0, keepdims=True)             # (1, 1)
        update = jnp.where(lane == m, part_m, update)
    part_ref[...] += update[None]                              # (1, 1, M)


# ----------------------------------------------------------------------------
# Tiled phase 2: beta-weighted sum over metapaths (independent node tiles).
# ----------------------------------------------------------------------------
def _phase2_kernel(beta_ref, z_ref, out_ref, *, n_meta, d):
    # beta_ref : SMEM (1, M) f32   z_ref : (tile_n, M*D)   out_ref : (tile_n, D)
    acc = beta_ref[0, 0] * z_ref[:, 0:d].astype(jnp.float32)
    for m in range(1, n_meta):
        acc = acc + beta_ref[0, m] * z_ref[:, m * d:(m + 1) * d].astype(
            jnp.float32)
    out_ref[...] = acc.astype(out_ref.dtype)


# ----------------------------------------------------------------------------
# Wrapper
# ----------------------------------------------------------------------------
def _vmem_capacity_bytes():
    try:
        cap = int(pltpu.get_tpu_info().vmem_capacity_bytes)
        if cap > 0:
            return cap
    except Exception:
        pass
    return 64 * 1024 * 1024   # v7x-safe lower bound if the query is unavailable


def semantic_attention(z, w1, b1, w2, *, tile_n=None, force_tiled=False):
    """z: (N, M, D). w1: (D, H), b1: (H,) or (1, H), w2: (H, 1).

    Returns (out (N, D) f32, beta (M, 1) f32) matching the PyTorch forward in
    eval mode.  z may be bf16 (recommended: halves HBM traffic); accumulation,
    softmax and the weighted sum are always f32.
    """
    N, M, D = z.shape
    H = w1.shape[1]
    isz = z.dtype.itemsize

    w1_c = jnp.asarray(w1).astype(z.dtype)          # MXU operand matches z dtype
    b1_r = jnp.asarray(b1, jnp.float32).reshape(1, H)
    w2_r = jnp.asarray(w2, jnp.float32).reshape(1, H)
    z_wide = z.reshape(N, M * D)                    # free row-major reshape

    # Generation-aware VMEM budget (v7x: 64 MiB physical, v5e/v6e: 128 MiB).
    vmem_cap = _vmem_capacity_bytes()
    vmem_limit = int(min(int(0.75 * vmem_cap), 96 * 1024 * 1024))

    weight_bytes = D * H * isz + 8 * H + 4 * M

    # ---------------- fused fast path (single pallas_call) ----------------
    fused_bytes = (N * M * D * isz                  # z_wide resident in VMEM
                   + 2 * N * H * 4                  # h, h*w2 (f32)
                   + 3 * N * D * 4                  # f32 z slice, acc, out
                   + 2 * weight_bytes
                   + (1 << 20))                     # slack
    if (not force_tiled) and fused_bytes <= vmem_limit // 2:
        out, beta_row = pl.pallas_call(
            functools.partial(_fused_kernel, n_nodes=N, n_meta=M, d=D),
            out_shape=(jax.ShapeDtypeStruct((N, D), jnp.float32),
                       jax.ShapeDtypeStruct((1, M), jnp.float32)),
            in_specs=[pl.BlockSpec(memory_space=pltpu.MemorySpace.VMEM)] * 4,
            out_specs=(pl.BlockSpec(memory_space=pltpu.MemorySpace.VMEM),
                       pl.BlockSpec(memory_space=pltpu.MemorySpace.VMEM)),
            compiler_params=pltpu.CompilerParams(vmem_limit_bytes=vmem_limit),
            cost_estimate=pl.CostEstimate(
                flops=2 * N * M * D * H + 4 * N * M * H + 2 * N * M * D,
                transcendentals=N * M * H,
                bytes_accessed=N * M * D * isz + N * D * 4 + weight_bytes),
        )(z_wide, w1_c, b1_r, w2_r)
        return out, beta_row.reshape(M, 1)

    # ---------------- tiled fallback ----------------
    if tile_n is None:
        # Budget counts double-buffered z rows plus the f32 intermediates
        # (h, h*w2, f32 z slice, out/acc rows), not just raw z bytes.
        budget = int(0.45 * vmem_limit)
        per_row = 2 * M * D * isz + 8 * H + 8 * D
        tile_n = max(8, (budget - 4 * weight_bytes) // max(per_row, 1))
    tile_n = int(min(int(tile_n), N))
    if tile_n < N:
        tile_n = max(8, tile_n - tile_n % 8)        # respect the (8, 128) rule

    n_tiles = -(-N // tile_n)
    n_pad = n_tiles * tile_n
    zp = z_wide if n_pad == N else jnp.pad(z_wide, ((0, n_pad - N), (0, 0)))

    # Shard the N-reduction across TensorCores (2 on v7x; harmless elsewhere).
    n_cores = 2 if (n_tiles >= 2 and n_tiles % 2 == 0) else 1
    tiles_per_core = n_tiles // n_cores

    # ---- phase 1: per-core per-metapath partial score sums ----
    p1 = functools.partial(_phase1_kernel, tile_n=tile_n, n_meta=M, d=D,
                           n_valid=N, pad_present=(n_pad != N),
                           tiles_per_core=tiles_per_core)
    partial = pl.pallas_call(
        p1,
        out_shape=jax.ShapeDtypeStruct((n_cores, 1, M), jnp.float32),
        grid=(n_cores, tiles_per_core),
        in_specs=[
            pl.BlockSpec((tile_n, M * D),
                         lambda p, i: (p * tiles_per_core + i, 0)),
            pl.BlockSpec((D, H), lambda p, i: (0, 0)),   # weights stay resident
            pl.BlockSpec((1, H), lambda p, i: (0, 0)),
            pl.BlockSpec((1, H), lambda p, i: (0, 0)),
        ],
        out_specs=pl.BlockSpec((1, 1, M), lambda p, i: (p, 0, 0)),
        compiler_params=pltpu.CompilerParams(
            dimension_semantics=("parallel", "arbitrary"),
            vmem_limit_bytes=vmem_limit),
        cost_estimate=pl.CostEstimate(
            flops=2 * n_pad * M * D * H + 4 * n_pad * M * H,
            transcendentals=n_pad * M * H,
            bytes_accessed=n_pad * M * D * isz + weight_bytes + n_cores * M * 4),
    )(zp, w1_c, b1_r, w2_r)

    # Mean over nodes + softmax over metapaths: M scalars, finish in JAX.
    w_mean = jnp.sum(partial, axis=0) / float(N)                # (1, M)
    beta_row = jax.nn.softmax(w_mean, axis=-1).astype(jnp.float32)

    # ---- phase 2: beta-weighted sum over metapaths ----
    p2 = functools.partial(_phase2_kernel, n_meta=M, d=D)
    out_pad = pl.pallas_call(
        p2,
        out_shape=jax.ShapeDtypeStruct((n_pad, D), jnp.float32),
        grid=(n_tiles,),
        in_specs=[
            pl.BlockSpec(memory_space=pltpu.MemorySpace.SMEM),  # beta scalars
            pl.BlockSpec((tile_n, M * D), lambda i: (i, 0)),
        ],
        out_specs=pl.BlockSpec((tile_n, D), lambda i: (i, 0)),
        compiler_params=pltpu.CompilerParams(
            dimension_semantics=("parallel",),
            vmem_limit_bytes=vmem_limit),
        cost_estimate=pl.CostEstimate(
            flops=2 * n_pad * M * D,
            transcendentals=0,
            bytes_accessed=n_pad * M * D * isz + n_pad * D * 4 + M * 4),
    )(beta_row, zp)

    out = out_pad[:N] if n_pad != N else out_pad
    return out, beta_row.reshape(M, 1)


# ----------------------------------------------------------------------------
# Pure-JAX reference mirroring the PyTorch forward (eval mode)
# ----------------------------------------------------------------------------
def _reference(z, w1, b1, w2):
    h = jnp.tanh(jnp.einsum("nmd,dh->nmh", z, w1) + b1.reshape(1, 1, -1))
    w = jnp.einsum("nmh,ho->nmo", h, w2.reshape(-1, 1))   # (N, M, 1)
    wm = jnp.mean(w, axis=0)                              # (M, 1)
    beta = jax.nn.softmax(wm, axis=0)                     # (M, 1)
    out = jnp.sum(beta[None, :, :] * z, axis=1)
    return out, beta


if __name__ == "__main__":
    # N nodes, M metapaths, D = in_size, H = hidden_size (module default 128)
    N, M, D, H = 1024, 4, 128, 128

    key = jax.random.PRNGKey(0)
    kz, kw1, kb1, kw2 = jax.random.split(key, 4)

    z = jax.random.normal(kz, (N, M, D), dtype=jnp.float32)
    w1 = jax.random.normal(kw1, (D, H), dtype=jnp.float32) * 0.1
    b1 = jax.random.normal(kb1, (H,), dtype=jnp.float32) * 0.1
    w2 = jax.random.normal(kw2, (H, 1), dtype=jnp.float32) * 0.1

    out_ref, beta_ref = _reference(z, w1, b1, w2)

    # 1) Fused single-call fast path (f32): z fits in VMEM -> one HBM pass.
    out, beta = semantic_attention(z, w1, b1, w2)
    jax.block_until_ready(out)
    jax.block_until_ready(beta)
    assert jnp.allclose(out, out_ref, rtol=1e-4, atol=1e-4), "fused out mismatch"
    assert jnp.allclose(beta, beta_ref, rtol=1e-4, atol=1e-4), "fused beta mismatch"

    # 2) Tiled fallback (f32). Small tiles on purpose to exercise the
    #    multi-tile grid and the 2-way reduction split (not a perf setting).
    out_t, beta_t = semantic_attention(z, w1, b1, w2, tile_n=256,
                                       force_tiled=True)
    jax.block_until_ready(out_t)
    assert jnp.allclose(out_t, out_ref, rtol=1e-4, atol=1e-4), "tiled out mismatch"
    assert jnp.allclose(beta_t, beta_ref, rtol=1e-4, atol=1e-4), "tiled beta mismatch"

    # 3) bf16 z path (halves HBM traffic; bf16 MXU, f32 accumulation).
    #    Reference is computed on the bf16-rounded inputs, so only
    #    accumulation-order noise remains.
    z16 = z.astype(jnp.bfloat16)
    w1_16 = w1.astype(jnp.bfloat16)
    out16, beta16 = semantic_attention(z16, w1, b1, w2)
    jax.block_until_ready(out16)
    out_ref16, beta_ref16 = _reference(z16.astype(jnp.float32),
                                       w1_16.astype(jnp.float32), b1, w2)
    assert jnp.allclose(out16, out_ref16, rtol=2e-2, atol=2e-2), "bf16 out mismatch"
    assert jnp.allclose(beta16, beta_ref16, rtol=2e-2, atol=2e-2), "bf16 beta mismatch"

    print("KERNEL_OK")
</pallas_src>

<mosaic_0001>
module attributes {stable_mosaic.version = 11 : i64} {
  func.func @_fused_kernel(%arg0: memref<1024x512xf32, #tpu.memory_space<vmem>>, %arg1: memref<128x128xf32, #tpu.memory_space<vmem>>, %arg2: memref<1x128xf32, #tpu.memory_space<vmem>>, %arg3: memref<1x128xf32, #tpu.memory_space<vmem>>, %arg4: memref<1024x128xf32, #tpu.memory_space<vmem>>, %arg5: memref<1x4xf32, #tpu.memory_space<vmem>>) attributes {dimension_semantics = [], scalar_prefetch = 0 : i64, scratch_operands = 0 : i64, tpu.core_type = #tpu.core_type<tc>} {
    %c0 = arith.constant 0 : index
    %c0_0 = arith.constant 0 : index
    %0 = vector.load %arg1[%c0, %c0_0] : memref<128x128xf32, #tpu.memory_space<vmem>>, vector<128x128xf32>
    %c0_1 = arith.constant 0 : index
    %c0_2 = arith.constant 0 : index
    %1 = vector.load %arg2[%c0_1, %c0_2] : memref<1x128xf32, #tpu.memory_space<vmem>>, vector<1x128xf32>
    %c0_3 = arith.constant 0 : index
    %c0_4 = arith.constant 0 : index
    %2 = vector.load %arg3[%c0_3, %c0_4] : memref<1x128xf32, #tpu.memory_space<vmem>>, vector<1x128xf32>
    %c0_5 = arith.constant 0 : index
    %c0_6 = arith.constant 0 : index
    %3 = vector.load %arg0[%c0_5, %c0_6] : memref<1024x512xf32, #tpu.memory_space<vmem>>, vector<1024x128xf32>
    %cst = arith.constant dense<0.000000e+00> : vector<1024x128xf32>
    %4 = tpu.matmul %3, %0, %cst {dimension_numbers = #tpu.dot_dimension_numbers<[1], [0], [0], [1], [0, 0, 1, 1], [], []>} : vector<1024x128xf32>, vector<128x128xf32>, vector<1024x128xf32> -> vector<1024x128xf32>
    %5 = vector.broadcast %1 : vector<1x128xf32> to vector<1024x128xf32>
    %6 = arith.addf %4, %5 : vector<1024x128xf32>
    %7 = math.tanh %6 : vector<1024x128xf32>
    %8 = vector.broadcast %2 : vector<1x128xf32> to vector<1024x128xf32>
    %9 = arith.mulf %7, %8 : vector<1024x128xf32>
    %cst_7 = arith.constant dense<0.000000e+00> : vector<1024xf32>
    %10 = vector.multi_reduction <add>, %9, %cst_7 [1] : vector<1024x128xf32> to vector<1024xf32>
    %11 = vector.shape_cast %10 : vector<1024xf32> to vector<1024x1xf32>
    %cst_8 = arith.constant dense<0.000000e+00> : vector<1xf32>
    %12 = vector.multi_reduction <add>, %11, %cst_8 [0] : vector<1024x1xf32> to vector<1xf32>
    %13 = vector.shape_cast %12 : vector<1xf32> to vector<1x1xf32>
    %cst_9 = arith.constant 9.765625E-4 : f32
    %14 = vector.broadcast %cst_9 : f32 to vector<1x1xf32>
    %15 = arith.mulf %13, %14 : vector<1x1xf32>
    %c0_10 = arith.constant 0 : index
    %c128 = arith.constant 128 : index
    %16 = vector.load %arg0[%c0_10, %c128] : memref<1024x512xf32, #tpu.memory_space<vmem>>, vector<1024x128xf32>
    %cst_11 = arith.constant dense<0.000000e+00> : vector<1024x128xf32>
    %17 = tpu.matmul %16, %0, %cst_11 {dimension_numbers = #tpu.dot_dimension_numbers<[1], [0], [0], [1], [0, 0, 1, 1], [], []>} : vector<1024x128xf32>, vector<128x128xf32>, vector<1024x128xf32> -> vector<1024x128xf32>
    %18 = vector.broadcast %1 : vector<1x128xf32> to vector<1024x128xf32>
    %19 = arith.addf %17, %18 : vector<1024x128xf32>
    %20 = math.tanh %19 : vector<1024x128xf32>
    %21 = vector.broadcast %2 : vector<1x128xf32> to vector<1024x128xf32>
    %22 = arith.mulf %20, %21 : vector<1024x128xf32>
    %cst_12 = arith.constant dense<0.000000e+00> : vector<1024xf32>
    %23 = vector.multi_reduction <add>, %22, %cst_12 [1] : vector<1024x128xf32> to vector<1024xf32>
    %24 = vector.shape_cast %23 : vector<1024xf32> to vector<1024x1xf32>
    %cst_13 = arith.constant dense<0.000000e+00> : vector<1xf32>
    %25 = vector.multi_reduction <add>, %24, %cst_13 [0] : vector<1024x1xf32> to vector<1xf32>
    %26 = vector.shape_cast %25 : vector<1xf32> to vector<1x1xf32>
    %cst_14 = arith.constant 9.765625E-4 : f32
    %27 = vector.broadcast %cst_14 : f32 to vector<1x1xf32>
    %28 = arith.mulf %26, %27 : vector<1x1xf32>
    %c0_15 = arith.constant 0 : index
    %c256 = arith.constant 256 : index
    %29 = vector.load %arg0[%c0_15, %c256] : memref<1024x512xf32, #tpu.memory_space<vmem>>, vector<1024x128xf32>
    %cst_16 = arith.constant dense<0.000000e+00> : vector<1024x128xf32>
    %30 = tpu.matmul %29, %0, %cst_16 {dimension_numbers = #tpu.dot_dimension_numbers<[1], [0], [0], [1], [0, 0, 1, 1], [], []>} : vector<1024x128xf32>, vector<128x128xf32>, vector<1024x128xf32> -> vector<1024x128xf32>
    %31 = vector.broadcast %1 : vector<1x128xf32> to vector<1024x128xf32>
    %32 = arith.addf %30, %31 : vector<1024x128xf32>
    %33 = math.tanh %32 : vector<1024x128xf32>
    %34 = vector.broadcast %2 : vector<1x128xf32> to vector<1024x128xf32>
    %35 = arith.mulf %33, %34 : vector<1024x128xf32>
    %cst_17 = arith.constant dense<0.000000e+00> : vector<1024xf32>
    %36 = vector.multi_reduction <add>, %35, %cst_17 [1] : vector<1024x128xf32> to vector<1024xf32>
    %37 = vector.shape_cast %36 : vector<1024xf32> to vector<1024x1xf32>
    %cst_18 = arith.constant dense<0.000000e+00> : vector<1xf32>
    %38 = vector.multi_reduction <add>, %37, %cst_18 [0] : vector<1024x1xf32> to vector<1xf32>
    %39 = vector.shape_cast %38 : vector<1xf32> to vector<1x1xf32>
    %cst_19 = arith.constant 9.765625E-4 : f32
    %40 = vector.broadcast %cst_19 : f32 to vector<1x1xf32>
    %41 = arith.mulf %39, %40 : vector<1x1xf32>
    %c0_20 = arith.constant 0 : index
    %c384 = arith.constant 384 : index
    %42 = vector.load %arg0[%c0_20, %c384] : memref<1024x512xf32, #tpu.memory_space<vmem>>, vector<1024x128xf32>
    %cst_21 = arith.constant dense<0.000000e+00> : vector<1024x128xf32>
    %43 = tpu.matmul %42, %0, %cst_21 {dimension_numbers = #tpu.dot_dimension_numbers<[1], [0], [0], [1], [0, 0, 1, 1], [], []>} : vector<1024x128xf32>, vector<128x128xf32>, vector<1024x128xf32> -> vector<1024x128xf32>
    %44 = vector.broadcast %1 : vector<1x128xf32> to vector<1024x128xf32>
    %45 = arith.addf %43, %44 : vector<1024x128xf32>
    %46 = math.tanh %45 : vector<1024x128xf32>
    %47 = vector.broadcast %2 : vector<1x128xf32> to vector<1024x128xf32>
    %48 = arith.mulf %46, %47 : vector<1024x128xf32>
    %cst_22 = arith.constant dense<0.000000e+00> : vector<1024xf32>
    %49 = vector.multi_reduction <add>, %48, %cst_22 [1] : vector<1024x128xf32> to vector<1024xf32>
    %50 = vector.shape_cast %49 : vector<1024xf32> to vector<1024x1xf32>
    %cst_23 = arith.constant dense<0.000000e+00> : vector<1xf32>
    %51 = vector.multi_reduction <add>, %50, %cst_23 [0] : vector<1024x1xf32> to vector<1xf32>
    %52 = vector.shape_cast %51 : vector<1xf32> to vector<1x1xf32>
    %cst_24 = arith.constant 9.765625E-4 : f32
    %53 = vector.broadcast %cst_24 : f32 to vector<1x1xf32>
    %54 = arith.mulf %52, %53 : vector<1x1xf32>
    %55 = arith.maximumf %15, %28 : vector<1x1xf32>
    %56 = arith.maximumf %55, %41 : vector<1x1xf32>
    %57 = arith.maximumf %56, %54 : vector<1x1xf32>
    %58 = arith.subf %15, %57 : vector<1x1xf32>
    %59 = math.exp %58 : vector<1x1xf32>
    %60 = arith.subf %28, %57 : vector<1x1xf32>
    %61 = math.exp %60 : vector<1x1xf32>
    %62 = arith.subf %41, %57 : vector<1x1xf32>
    %63 = math.exp %62 : vector<1x1xf32>
    %64 = arith.subf %54, %57 : vector<1x1xf32>
    %65 = math.exp %64 : vector<1x1xf32>
    %66 = arith.addf %59, %61 : vector<1x1xf32>
    %67 = arith.addf %66, %63 : vector<1x1xf32>
    %68 = arith.addf %67, %65 : vector<1x1xf32>
    %69 = arith.divf %59, %68 : vector<1x1xf32>
    %70 = arith.divf %61, %68 : vector<1x1xf32>
    %71 = arith.divf %63, %68 : vector<1x1xf32>
    %72 = arith.divf %65, %68 : vector<1x1xf32>
    %73 = tpu.iota {dimensions = array<i32: 1>} : vector<1x4xi32>
    %cst_25 = arith.constant 0.000000e+00 : f32
    %74 = vector.broadcast %cst_25 : f32 to vector<1x4xf32>
    %c0_i32 = arith.constant 0 : i32
    %75 = vector.broadcast %c0_i32 : i32 to vector<1x4xi32>
    %76 = arith.cmpi eq, %73, %75 : vector<1x4xi32>
    %77 = vector.shape_cast %69 : vector<1x1xf32> to vector<1x1xf32>
    %78 = vector.broadcast %77 : vector<1x1xf32> to vector<1x4xf32>
    %79 = arith.select %76, %78, %74 : vector<1x4xi1>, vector<1x4xf32>
    %c1_i32 = arith.constant 1 : i32
    %80 = vector.broadcast %c1_i32 : i32 to vector<1x4xi32>
    %81 = arith.cmpi eq, %73, %80 : vector<1x4xi32>
    %82 = vector.shape_cast %70 : vector<1x1xf32> to vector<1x1xf32>
    %83 = vector.broadcast %82 : vector<1x1xf32> to vector<1x4xf32>
    %84 = arith.select %81, %83, %79 : vector<1x4xi1>, vector<1x4xf32>
    %c2_i32 = arith.constant 2 : i32
    %85 = vector.broadcast %c2_i32 : i32 to vector<1x4xi32>
    %86 = arith.cmpi eq, %73, %85 : vector<1x4xi32>
    %87 = vector.shape_cast %71 : vector<1x1xf32> to vector<1x1xf32>
    %88 = vector.broadcast %87 : vector<1x1xf32> to vector<1x4xf32>
    %89 = arith.select %86, %88, %84 : vector<1x4xi1>, vector<1x4xf32>
    %c3_i32 = arith.constant 3 : i32
    %90 = vector.broadcast %c3_i32 : i32 to vector<1x4xi32>
    %91 = arith.cmpi eq, %73, %90 : vector<1x4xi32>
    %92 = vector.shape_cast %72 : vector<1x1xf32> to vector<1x1xf32>
    %93 = vector.broadcast %92 : vector<1x1xf32> to vector<1x4xf32>
    %94 = arith.select %91, %93, %89 : vector<1x4xi1>, vector<1x4xf32>
    %c0_26 = arith.constant 0 : index
    %c0_27 = arith.constant 0 : index
    %95 = vector.load %arg5[%c0_26, %c0_27] : memref<1x4xf32, #tpu.memory_space<vmem>>, vector<1x4xf32>
    tpu.vector_store %arg5[%c0_26, %c0_27], %94 {strides = array<i32>} : memref<1x4xf32, #tpu.memory_space<vmem>>, vector<1x4xf32>,
    %c0_28 = arith.constant 0 : index
    %c0_29 = arith.constant 0 : index
    %96 = vector.load %arg0[%c0_28, %c0_29] : memref<1024x512xf32, #tpu.memory_space<vmem>>, vector<1024x128xf32>
    %97 = vector.broadcast %69 : vector<1x1xf32> to vector<1024x128xf32>
    %98 = arith.mulf %97, %96 : vector<1024x128xf32>
    %c0_30 = arith.constant 0 : index
    %c128_31 = arith.constant 128 : index
    %99 = vector.load %arg0[%c0_30, %c128_31] : memref<1024x512xf32, #tpu.memory_space<vmem>>, vector<1024x128xf32>
    %100 = vector.broadcast %70 : vector<1x1xf32> to vector<1024x128xf32>
    %101 = arith.mulf %100, %99 : vector<1024x128xf32>
    %102 = arith.addf %98, %101 : vector<1024x128xf32>
    %c0_32 = arith.constant 0 : index
    %c256_33 = arith.constant 256 : index
    %103 = vector.load %arg0[%c0_32, %c256_33] : memref<1024x512xf32, #tpu.memory_space<vmem>>, vector<1024x128xf32>
    %104 = vector.broadcast %71 : vector<1x1xf32> to vector<1024x128xf32>
    %105 = arith.mulf %104, %103 : vector<1024x128xf32>
    %106 = arith.addf %102, %105 : vector<1024x128xf32>
    %c0_34 = arith.constant 0 : index
    %c384_35 = arith.constant 384 : index
    %107 = vector.load %arg0[%c0_34, %c384_35] : memref<1024x512xf32, #tpu.memory_space<vmem>>, vector<1024x128xf32>
    %108 = vector.broadcast %72 : vector<1x1xf32> to vector<1024x128xf32>
    %109 = arith.mulf %108, %107 : vector<1024x128xf32>
    %110 = arith.addf %106, %109 : vector<1024x128xf32>
    %c0_36 = arith.constant 0 : index
    %c0_37 = arith.constant 0 : index
    %111 = vector.load %arg4[%c0_36, %c0_37] : memref<1024x128xf32, #tpu.memory_space<vmem>>, vector<1024x128xf32>
    tpu.vector_store %arg4[%c0_36, %c0_37], %110 {strides = array<i32>} : memref<1024x128xf32, #tpu.memory_space<vmem>>, vector<1024x128xf32>,
    return
  }
}

</mosaic_0001>

<llo_original>
// kernel: tpu_custom_call.1
$region0: #{tpu_custom_call.1}
  #allocation0 [shape = 'u32[]', space=smem, size = 0x4, offset = 0x4, fixed_abs, tag = 'smem constant byte address 0x4 - core index']
  #allocation1 [shape = 'u32[72,128]{1,0:T(1,128)}', space=vmem, size = 0x9000, scoped, tag = 'internal scratch']
  %s0 = inlined_call_operand.hbm [shape: f32[1024,512], index: 0, kind: input, shape index: {}]
  %s1 = inlined_call_operand.hbm [shape: f32[128,128], index: 1, kind: input, shape index: {}]
  %s2 = inlined_call_operand.hbm [shape: f32[1,128], index: 2, kind: input, shape index: {}]
  %s3 = inlined_call_operand.hbm [shape: f32[1,128], index: 3, kind: input, shape index: {}]
  %s4 = inlined_call_operand.hbm [shape: f32[1024,128], index: 4, kind: output, shape index: {0}]
  %s5 = inlined_call_operand.hbm [shape: f32[1,4], index: 5, kind: output, shape index: {1}]
  %6 = xla_tuple %s4, %s5
  %s7 = sld [smem:[#allocation0]]
  $region50: #{tpu_custom_call.1} parent=0
    _
  %s9 = ssub.s32 1, %s7
  %s10 = scalar_select 0, %s9, %s7
  $region1: #{tpu_custom_call.1} parent=0
    #allocation2 [shape = 'u8[2097152]{0}', space=vmem, size = 0x200000, scoped, tag = 'input window, operand 0, single buffered']
    #allocation3 [shape = 's32[1]{0}', space=sflag, size = 0x4, scoped, tag = 'scoped memory for tpu_custom_call.1']
    #allocation4 [shape = 's32[1]{0}', space=sflag, size = 0x4, scoped, tag = 'scoped memory for tpu_custom_call.1']
    #allocation5 [shape = 'u8[65536]{0}', space=vmem, size = 0x10000, scoped, tag = 'input window, operand 1, single buffered']
    #allocation6 [shape = 's32[1]{0}', space=sflag, size = 0x4, scoped, tag = 'scoped memory for tpu_custom_call.1']
    #allocation7 [shape = 'u8[512]{0}', space=vmem, size = 0x400, scoped, tag = 'input window, operand 2, single buffered']
    #allocation8 [shape = 'u8[512]{0}', space=vmem, size = 0x400, scoped, tag = 'input window, operand 3, single buffered']
    #allocation9 [shape = 's32[1]{0}', space=sflag, size = 0x4, scoped, tag = 'scoped memory for tpu_custom_call.1']
    #allocation10 [shape = 'u8[524288]{0}', space=vmem, size = 0x80000, scoped, tag = 'output window, operand 0, single buffered']
    #allocation11 [shape = 'u8[512]{0}', space=vmem, size = 0x400, scoped, tag = 'output window, operand 1, single buffered']
    #allocation12 [shape = 's32[1]{0}', space=sflag, size = 0x4, scoped, tag = 'scoped memory for tpu_custom_call.1']
    %11 = vsyncpa [#allocation3], 0
    %12 = vsyncpa [#allocation6], 0
    %13 = vsyncpa [#allocation9], 0
    %14 = vsyncpa [#allocation4], 0
    %15 = vsyncpa [#allocation12], 0
    // Predicated region
    $region2: #{tpu_custom_call.1} parent=1 // pred_check
      _
    $region3: #{tpu_custom_call.1} parent=1 // pred_check_branch
      %17 = sbr.rel (0) target = $region5
    $region4: #{tpu_custom_call.1} parent=1 // pred_region
      %19 = vsyncadd [#allocation3], 0
      %s20 = sshll.u32 %s0, 4
      %s21 = int_to_ptr.hbm [resolvable:$true] %s20
      %s22 = sshll.u32 [#allocation2], 4
      %s23 = int_to_ptr.vmem [resolvable:$true] %s22
      %28 = dma.hbm_to_vmem [thread:$0]  %s21, 65536, %s23, [#allocation3], 512, 512, 32
    $region5: #{tpu_custom_call.1} parent=1 // pred_fallthru
      _
    // Predicated region
    $region6: #{tpu_custom_call.1} parent=1 // pred_check
      _
    $region7: #{tpu_custom_call.1} parent=1 // pred_check_branch
      %30 = sbr.rel (0) target = $region9
    $region8: #{tpu_custom_call.1} parent=1 // pred_region
      %32 = vsyncadd [#allocation6], 0
      %s33 = sshll.u32 %s1, 4
      %s34 = int_to_ptr.hbm [resolvable:$true] %s33
      %s35 = sshll.u32 [#allocation5], 4
      %s36 = int_to_ptr.vmem [resolvable:$true] %s35
      %41 = dma.hbm_to_vmem [thread:$0]  %s34, 2048, %s36, [#allocation6], 128, 128, 8
    $region9: #{tpu_custom_call.1} parent=1 // pred_fallthru
      _
    // Predicated region
    $region10: #{tpu_custom_call.1} parent=1 // pred_check
      _
    $region11: #{tpu_custom_call.1} parent=1 // pred_check_branch
      %43 = sbr.rel (0) target = $region13
    $region12: #{tpu_custom_call.1} parent=1 // pred_region
      %45 = vsyncadd [#allocation6], 0
      %s47 = sshll.u32 %s2, 4
      %s48 = int_to_ptr.hbm [resolvable:$true] %s47
      %s49 = sshll.u32 [#allocation7], 4
      %s50 = int_to_ptr.vmem [resolvable:$true] %s49
      %52 = dma.hbm_to_vmem [thread:$0]  %s48, 16, %s50, [#allocation6]
    $region13: #{tpu_custom_call.1} parent=1 // pred_fallthru
      _
    // Predicated region
    $region14: #{tpu_custom_call.1} parent=1 // pred_check
      _
    $region15: #{tpu_custom_call.1} parent=1 // pred_check_branch
      %54 = sbr.rel (0) target = $region17
    $region16: #{tpu_custom_call.1} parent=1 // pred_region
      %56 = vsyncadd [#allocation9], 0
      %s58 = sshll.u32 %s3, 4
      %s59 = int_to_ptr.hbm [resolvable:$true] %s58
      %s60 = sshll.u32 [#allocation8], 4
      %s61 = int_to_ptr.vmem [resolvable:$true] %s60
      %63 = dma.hbm_to_vmem [thread:$0]  %s59, 16, %s61, [#allocation9]
    $region17: #{tpu_custom_call.1} parent=1 // pred_fallthru
      _
    // Predicated region
    $region18: #{tpu_custom_call.1} parent=1 // pred_check
      _
    $region19: #{tpu_custom_call.1} parent=1 // pred_check_branch
      %65 = sbr.rel (0) target = $region21
    $region20: #{tpu_custom_call.1} parent=1 // pred_region
      %67 = dma.done [#allocation3], 65536
    $region21: #{tpu_custom_call.1} parent=1 // pred_fallthru
      _
    // Predicated region
    $region22: #{tpu_custom_call.1} parent=1 // pred_check
      _
    $region23: #{tpu_custom_call.1} parent=1 // pred_check_branch
      %69 = sbr.rel (0) target = $region25
    $region24: #{tpu_custom_call.1} parent=1 // pred_region
      %71 = dma.done [#allocation6], 2048
    $region25: #{tpu_custom_call.1} parent=1 // pred_fallthru
      _
    // Predicated region
    $region26: #{tpu_custom_call.1} parent=1 // pred_check
      _
    $region27: #{tpu_custom_call.1} parent=1 // pred_check_branch
      %73 = sbr.rel (0) target = $region29
    $region28: #{tpu_custom_call.1} parent=1 // pred_region
      %75 = dma.done [#allocation6], 16
    $region29: #{tpu_custom_call.1} parent=1 // pred_fallthru
      _
    // Predicated region
    $region30: #{tpu_custom_call.1} parent=1 // pred_check
      _
    $region31: #{tpu_custom_call.1} parent=1 // pred_check_branch
      %77 = sbr.rel (0) target = $region33
    $region32: #{tpu_custom_call.1} parent=1 // pred_region
      %79 = dma.done [#allocation9], 16
    $region33: #{tpu_custom_call.1} parent=1 // pred_fallthru
      _
    %v80 = vld [vmem:[#allocation5] sm:$0xff]
    %v81 = vld [vmem:[#allocation5 + $0x8] sm:$0xff]
    %v82 = vld [vmem:[#allocation5 + $0x10] sm:$0xff]
    %v83 = vld [vmem:[#allocation5 + $0x18] sm:$0xff]
    %v84 = vld [vmem:[#allocation5 + $0x20] sm:$0xff]
    %v85 = vld [vmem:[#allocation5 + $0x28] sm:$0xff]
    %v86 = vld [vmem:[#allocation5 + $0x30] sm:$0xff]
    %v87 = vld [vmem:[#allocation5 + $0x38] sm:$0xff]
    %v88 = vld [vmem:[#allocation5 + $0x40] sm:$0xff]
    %v89 = vld [vmem:[#allocation5 + $0x48] sm:$0xff]
    %v90 = vld [vmem:[#allocation5 + $0x50] sm:$0xff]
    %v91 = vld [vmem:[#allocation5 + $0x58] sm:$0xff]
    %v92 = vld [vmem:[#allocation5 + $0x60] sm:$0xff]
    %v93 = vld [vmem:[#allocation5 + $0x68] sm:$0xff]
    %v94 = vld [vmem:[#allocation5 + $0x70] sm:$0xff]
    %v95 = vld [vmem:[#allocation5 + $0x78] sm:$0xff]
    %v96 = vld [vmem:[#allocation7] sm:$0x1]
    %v97 = vld [vmem:[#allocation8] sm:$0x1]
    %v98 = vld [vmem:[#allocation2] sm:$0xff]
    %v99 = vld [vmem:[#allocation2 + $0x20] sm:$0xff]
    %v100 = vld [vmem:[#allocation2 + $0x40] sm:$0xff]
    %v101 = vld [vmem:[#allocation2 + $0x60] sm:$0xff]
    %v102 = vld [vmem:[#allocation2 + $0x80] sm:$0xff]
    %v103 = vld [vmem:[#allocation2 + $0xa0] sm:$0xff]
    %v104 = vld [vmem:[#allocation2 + $0xc0] sm:$0xff]
    %v105 = vld [vmem:[#allocation2 + $0xe0] sm:$0xff]
    %v106 = vld [vmem:[#allocation2 + $0x100] sm:$0xff]
    %v107 = vld [vmem:[#allocation2 + $0x120] sm:$0xff]
    %v108 = vld [vmem:[#allocation2 + $0x140] sm:$0xff]
    %v109 = vld [vmem:[#allocation2 + $0x160] sm:$0xff]
    %v110 = vld [vmem:[#allocation2 + $0x180] sm:$0xff]
    %v111 = vld [vmem:[#allocation2 + $0x1a0] sm:$0xff]
    %v112 = vld [vmem:[#allocation2 + $0x1c0] sm:$0xff]
    %v113 = vld [vmem:[#allocation2 + $0x1e0] sm:$0xff]
    %v114 = vld [vmem:[#allocation2 + $0x200] sm:$0xff]
    %v115 = vld [vmem:[#allocation2 + $0x220] sm:$0xff]
    %v116 = vld [vmem:[#allocation2 + $0x240] sm:$0xff]
    %v117 = vld [vmem:[#allocation2 + $0x260] sm:$0xff]
    %v118 = vld [vmem:[#allocation2 + $0x280] sm:$0xff]
    %v119 = vld [vmem:[#allocation2 + $0x2a0] sm:$0xff]
    %v120 = vld [vmem:[#allocation2 + $0x2c0] sm:$0xff]
    %v121 = vld [vmem:[#allocation2 + $0x2e0] sm:$0xff]
    %v122 = vld [vmem:[#allocation2 + $0x300] sm:$0xff]
    %v123 = vld [vmem:[#allocation2 + $0x320] sm:$0xff]
    %v124 = vld [vmem:[#allocation2 + $0x340] sm:$0xff]
    %v125 = vld [vmem:[#allocation2 + $0x360] sm:$0xff]
    %v126 = vld [vmem:[#allocation2 + $0x380] sm:$0xff]
    %v127 = vld [vmem:[#allocation2 + $0x3a0] sm:$0xff]
    %v128 = vld [vmem:[#allocation2 + $0x3c0] sm:$0xff]
    %v129 = vld [vmem:[#allocation2 + $0x3e0] sm:$0xff]
    %v130 = vld [vmem:[#allocation2 + $0x400] sm:$0xff]
    %v131 = vld [vmem:[#allocation2 + $0x420] sm:$0xff]
    %v132 = vld [vmem:[#allocation2 + $0x440] sm:$0xff]
    %v133 = vld [vmem:[#allocation2 + $0x460] sm:$0xff]
    %v134 = vld [vmem:[#allocation2 + $0x480] sm:$0xff]
    %v135 = vld [vmem:[#allocation2 + $0x4a0] sm:$0xff]
    %v136 = vld [vmem:[#allocation2 + $0x4c0] sm:$0xff]
    %v137 = vld [vmem:[#allocation2 + $0x4e0] sm:$0xff]
    %v138 = vld [vmem:[#allocation2 + $0x500] sm:$0xff]
    %v139 = vld [vmem:[#allocation2 + $0x520] sm:$0xff]
    %v140 = vld [vmem:[#allocation2 + $0x540] sm:$0xff]
    %v141 = vld [vmem:[#allocation2 + $0x560] sm:$0xff]
    %v142 = vld [vmem:[#allocation2 + $0x580] sm:$0xff]
    %v143 = vld [vmem:[#allocation2 + $0x5a0] sm:$0xff]
    %v144 = vld [vmem:[#allocation2 + $0x5c0] sm:$0xff]
    %v145 = vld [vmem:[#allocation2 + $0x5e0] sm:$0xff]
    %v146 = vld [vmem:[#allocation2 + $0x600] sm:$0xff]
    %v147 = vld [vmem:[#allocation2 + $0x620] sm:$0xff]
    %v148 = vld [vmem:[#allocation2 + $0x640] sm:$0xff]
    %v149 = vld [vmem:[#allocation2 + $0x660] sm:$0xff]
    %v150 = vld [vmem:[#allocation2 + $0x680] sm:$0xff]
    %v151 = vld [vmem:[#allocation2 + $0x6a0] sm:$0xff]
    %v152 = vld [vmem:[#allocation2 + $0x6c0] sm:$0xff]
    %v153 = vld [vmem:[#allocation2 + $0x6e0] sm:$0xff]
    %v154 = vld [vmem:[#allocation2 + $0x700] sm:$0xff]
    %v155 = vld [vmem:[#allocation2 + $0x720] sm:$0xff]
    %v156 = vld [vmem:[#allocation2 + $0x740] sm:$0xff]
    %v157 = vld [vmem:[#allocation2 + $0x760] sm:$0xff]
    %v158 = vld [vmem:[#allocation2 + $0x780] sm:$0xff]
    %v159 = vld [vmem:[#allocation2 + $0x7a0] sm:$0xff]
    %v160 = vld [vmem:[#allocation2 + $0x7c0] sm:$0xff]
    %v161 = vld [vmem:[#allocation2 + $0x7e0] sm:$0xff]
    %v162 = vld [vmem:[#allocation2 + $0x800] sm:$0xff]
    %v163 = vld [vmem:[#allocation2 + $0x820] sm:$0xff]
    %v164 = vld [vmem:[#allocation2 + $0x840] sm:$0xff]
    %v165 = vld [vmem:[#allocation2 + $0x860] sm:$0xff]
    %v166 = vld [vmem:[#allocation2 + $0x880] sm:$0xff]
    %v167 = vld [vmem:[#allocation2 + $0x8a0] sm:$0xff]
    %v168 = vld [vmem:[#allocation2 + $0x8c0] sm:$0xff]
    %v169 = vld [vmem:[#allocation2 + $0x8e0] sm:$0xff]
    %v170 = vld [vmem:[#allocation2 + $0x900] sm:$0xff]
    %v171 = vld [vmem:[#allocation2 + $0x920] sm:$0xff]
    %v172 = vld [vmem:[#allocation2 + $0x940] sm:$0xff]
    %v173 = vld [vmem:[#allocation2 + $0x960] sm:$0xff]
    %v174 = vld [vmem:[#allocation2 + $0x980] sm:$0xff]
    %v175 = vld [vmem:[#allocation2 + $0x9a0] sm:$0xff]
    %v176 = vld [vmem:[#allocation2 + $0x9c0] sm:$0xff]
    %v177 = vld [vmem:[#allocation2 + $0x9e0] sm:$0xff]
    %v178 = vld [vmem:[#allocation2 + $0xa00] sm:$0xff]
    %v179 = vld [vmem:[#allocation2 + $0xa20] sm:$0xff]
    %v180 = vld [vmem:[#allocation2 + $0xa40] sm:$0xff]
    %v181 = vld [vmem:[#allocation2 + $0xa60] sm:$0xff]
    %v182 = vld [vmem:[#allocation2 + $0xa80] sm:$0xff]
    %v183 = vld [vmem:[#allocation2 + $0xaa0] sm:$0xff]
    %v184 = vld [vmem:[#allocation2 + $0xac0] sm:$0xff]
    %v185 = vld [vmem:[#allocation2 + $0xae0] sm:$0xff]
    %v186 = vld [vmem:[#allocation2 + $0xb00] sm:$0xff]
    %v187 = vld [vmem:[#allocation2 + $0xb20] sm:$0xff]
    %v188 = vld [vmem:[#allocation2 + $0xb40] sm:$0xff]
    %v189 = vld [vmem:[#allocation2 + $0xb60] sm:$0xff]
    %v190 = vld [vmem:[#allocation2 + $0xb80] sm:$0xff]
    %v191 = vld [vmem:[#allocation2 + $0xba0] sm:$0xff]
    %v192 = vld [vmem:[#allocation2 + $0xbc0] sm:$0xff]
    %v193 = vld [vmem:[#allocation2 + $0xbe0] sm:$0xff]
    %v194 = vld [vmem:[#allocation2 + $0xc00] sm:$0xff]
    %v195 = vld [vmem:[#allocation2 + $0xc20] sm:$0xff]
    %v196 = vld [vmem:[#allocation2 + $0xc40] sm:$0xff]
    %v197 = vld [vmem:[#allocation2 + $0xc60] sm:$0xff]
    %v198 = vld [vmem:[#allocation2 + $0xc80] sm:$0xff]
    %v199 = vld [vmem:[#allocation2 + $0xca0] sm:$0xff]
    %v200 = vld [vmem:[#allocation2 + $0xcc0] sm:$0xff]
    %v201 = vld [vmem:[#allocation2 + $0xce0] sm:$0xff]
    %v202 = vld [vmem:[#allocation2 + $0xd00] sm:$0xff]
    %v203 = vld [vmem:[#allocation2 + $0xd20] sm:$0xff]
    %v204 = vld [vmem:[#allocation2 + $0xd40] sm:$0xff]
    %v205 = vld [vmem:[#allocation2 + $0xd60] sm:$0xff]
    %v206 = vld [vmem:[#allocation2 + $0xd80] sm:$0xff]
    %v207 = vld [vmem:[#allocation2 + $0xda0] sm:$0xff]
    %v208 = vld [vmem:[#allocation2 + $0xdc0] sm:$0xff]
    %v209 = vld [vmem:[#allocation2 + $0xde0] sm:$0xff]
    %v210 = vld [vmem:[#allocation2 + $0xe00] sm:$0xff]
    %v211 = vld [vmem:[#allocation2 + $0xe20] sm:$0xff]
    %v212 = vld [vmem:[#allocation2 + $0xe40] sm:$0xff]
    %v213 = vld [vmem:[#allocation2 + $0xe60] sm:$0xff]
    %v214 = vld [vmem:[#allocation2 + $0xe80] sm:$0xff]
    %v215 = vld [vmem:[#allocation2 + $0xea0] sm:$0xff]
    %v216 = vld [vmem:[#allocation2 + $0xec0] sm:$0xff]
    %v217 = vld [vmem:[#allocation2 + $0xee0] sm:$0xff]
    %v218 = vld [vmem:[#allocation2 + $0xf00] sm:$0xff]
    %v219 = vld [vmem:[#allocation2 + $0xf20] sm:$0xff]
    %v220 = vld [vmem:[#allocation2 + $0xf40] sm:$0xff]
    %v221 = vld [vmem:[#allocation2 + $0xf60] sm:$0xff]
    %v222 = vld [vmem:[#allocation2 + $0xf80] sm:$0xff]
    %v223 = vld [vmem:[#allocation2 + $0xfa0] sm:$0xff]
    %v224 = vld [vmem:[#allocation2 + $0xfc0] sm:$0xff]
    %v225 = vld [vmem:[#allocation2 + $0xfe0] sm:$0xff]
    %v227 = vperm.slane %v96, 0
    %229 = vmatpush.msra.mxu0 %v95
    %230 = vmatpush.msra.mxu0 %v94
    %231 = vmatpush.msra.mxu0 %v93
    %232 = vmatpush.msra.mxu0 %v92
    %233 = vmatpush.msra.mxu0 %v91
    %234 = vmatpush.msra.mxu0 %v90
    %235 = vmatpush.msra.mxu0 %v89
    %236 = vmatpush.msra.mxu0 %v88
    %237 = vmatpush.msra.mxu0 %v87
    %238 = vmatpush.msra.mxu0 %v86
    %239 = vmatpush.msra.mxu0 %v85
    %240 = vmatpush.msra.mxu0 %v84
    %241 = vmatpush.msra.mxu0 %v83
    %242 = vmatpush.msra.mxu0 %v82
    %243 = vmatpush.msra.mxu0 %v81
    %244 = vmatpush.msra.mxu0 %v80
    %245 = vmatmul.f32.gmra.mxu0 %v98
    %v246 = vpop.f32.mrf.mxu0
    %v247 = vadd.f32 %v227, %v246
    %248 = vmatmul.f32.gmra.mxu0 %v99
    %v249 = vpop.f32.mrf.mxu0
    %v250 = vadd.f32 %v227, %v249
    %251 = vmatmul.f32.gmra.mxu0 %v100
    %v252 = vpop.f32.mrf.mxu0
    %v253 = vadd.f32 %v227, %v252
    %254 = vmatmul.f32.gmra.mxu0 %v101
    %v255 = vpop.f32.mrf.mxu0
    %v256 = vadd.f32 %v227, %v255
    %257 = vmatmul.f32.gmra.mxu0 %v102
    %v258 = vpop.f32.mrf.mxu0
    %v259 = vadd.f32 %v227, %v258
    %260 = vmatmul.f32.gmra.mxu0 %v103
    %v261 = vpop.f32.mrf.mxu0
    %v262 = vadd.f32 %v227, %v261
    %263 = vmatmul.f32.gmra.mxu0 %v104
    %v264 = vpop.f32.mrf.mxu0
    %v265 = vadd.f32 %v227, %v264
    %266 = vmatmul.f32.gmra.mxu0 %v105
    %v267 = vpop.f32.mrf.mxu0
    %v268 = vadd.f32 %v227, %v267
    %269 = vmatmul.f32.gmra.mxu0 %v106
    %v270 = vpop.f32.mrf.mxu0
    %v271 = vadd.f32 %v227, %v270
    %272 = vmatmul.f32.gmra.mxu0 %v107
    %v273 = vpop.f32.mrf.mxu0
    %v274 = vadd.f32 %v227, %v273
    %275 = vmatmul.f32.gmra.mxu0 %v108
    %v276 = vpop.f32.mrf.mxu0
    %v277 = vadd.f32 %v227, %v276
    %278 = vmatmul.f32.gmra.mxu0 %v109
    %v279 = vpop.f32.mrf.mxu0
    %v280 = vadd.f32 %v227, %v279
    %281 = vmatmul.f32.gmra.mxu0 %v110
    %v282 = vpop.f32.mrf.mxu0
    %v283 = vadd.f32 %v227, %v282
    %284 = vmatmul.f32.gmra.mxu0 %v111
    %v285 = vpop.f32.mrf.mxu0
    %v286 = vadd.f32 %v227, %v285
    %287 = vmatmul.f32.gmra.mxu0 %v112
    %v288 = vpop.f32.mrf.mxu0
    %v289 = vadd.f32 %v227, %v288
    %290 = vmatmul.f32.gmra.mxu0 %v113
    %v291 = vpop.f32.mrf.mxu0
    %v292 = vadd.f32 %v227, %v291
    %293 = vmatmul.f32.gmra.mxu0 %v114
    %v294 = vpop.f32.mrf.mxu0
    %v295 = vadd.f32 %v227, %v294
    %296 = vmatmul.f32.gmra.mxu0 %v115
    %v297 = vpop.f32.mrf.mxu0
    %v298 = vadd.f32 %v227, %v297
    %299 = vmatmul.f32.gmra.mxu0 %v116
    %v300 = vpop.f32.mrf.mxu0
    %v301 = vadd.f32 %v227, %v300
    %302 = vmatmul.f32.gmra.mxu0 %v117
    %v303 = vpop.f32.mrf.mxu0
    %v304 = vadd.f32 %v227, %v303
    %305 = vmatmul.f32.gmra.mxu0 %v118
    %v306 = vpop.f32.mrf.mxu0
    %v307 = vadd.f32 %v227, %v306
    %308 = vmatmul.f32.gmra.mxu0 %v119
    %v309 = vpop.f32.mrf.mxu0
    %v310 = vadd.f32 %v227, %v309
    %311 = vmatmul.f32.gmra.mxu0 %v120
    %v312 = vpop.f32.mrf.mxu0
    %v313 = vadd.f32 %v227, %v312
    %314 = vmatmul.f32.gmra.mxu0 %v121
    %v315 = vpop.f32.mrf.mxu0
    %v316 = vadd.f32 %v227, %v315
    %317 = vmatmul.f32.gmra.mxu0 %v122
    %v318 = vpop.f32.mrf.mxu0
    %v319 = vadd.f32 %v227, %v318
    %320 = vmatmul.f32.gmra.mxu0 %v123
    %v321 = vpop.f32.mrf.mxu0
    %v322 = vadd.f32 %v227, %v321
    %323 = vmatmul.f32.gmra.mxu0 %v124
    %v324 = vpop.f32.mrf.mxu0
    %v325 = vadd.f32 %v227, %v324
    %326 = vmatmul.f32.gmra.mxu0 %v125
    %v327 = vpop.f32.mrf.mxu0
    %v328 = vadd.f32 %v227, %v327
    %329 = vmatmul.f32.gmra.mxu0 %v126
    %v330 = vpop.f32.mrf.mxu0
    %v331 = vadd.f32 %v227, %v330
    %332 = vmatmul.f32.gmra.mxu0 %v127
    %v333 = vpop.f32.mrf.mxu0
    %v334 = vadd.f32 %v227, %v333
    %335 = vmatmul.f32.gmra.mxu0 %v128
    %v336 = vpop.f32.mrf.mxu0
    %v337 = vadd.f32 %v227, %v336
    %338 = vmatmul.f32.gmra.mxu0 %v129
    %v339 = vpop.f32.mrf.mxu0
    %v340 = vadd.f32 %v227, %v339
    %341 = vmatmul.f32.gmra.mxu0 %v130
    %v342 = vpop.f32.mrf.mxu0
    %v343 = vadd.f32 %v227, %v342
    %344 = vmatmul.f32.gmra.mxu0 %v131
    %v345 = vpop.f32.mrf.mxu0
    %v346 = vadd.f32 %v227, %v345
    %347 = vmatmul.f32.gmra.mxu0 %v132
    %v348 = vpop.f32.mrf.mxu0
    %v349 = vadd.f32 %v227, %v348
    %350 = vmatmul.f32.gmra.mxu0 %v133
    %v351 = vpop.f32.mrf.mxu0
    %v352 = vadd.f32 %v227, %v351
    %353 = vmatmul.f32.gmra.mxu0 %v134
    %v354 = vpop.f32.mrf.mxu0
    %v355 = vadd.f32 %v227, %v354
    %356 = vmatmul.f32.gmra.mxu0 %v135
    %v357 = vpop.f32.mrf.mxu0
    %v358 = vadd.f32 %v227, %v357
    %359 = vmatmul.f32.gmra.mxu0 %v136
    %v360 = vpop.f32.mrf.mxu0
    %v361 = vadd.f32 %v227, %v360
    %362 = vmatmul.f32.gmra.mxu0 %v137
    %v363 = vpop.f32.mrf.mxu0
    %v364 = vadd.f32 %v227, %v363
    %365 = vmatmul.f32.gmra.mxu0 %v138
    %v366 = vpop.f32.mrf.mxu0
    %v367 = vadd.f32 %v227, %v366
    %368 = vmatmul.f32.gmra.mxu0 %v139
    %v369 = vpop.f32.mrf.mxu0
    %v370 = vadd.f32 %v227, %v369
    %371 = vmatmul.f32.gmra.mxu0 %v140
    %v372 = vpop.f32.mrf.mxu0
    %v373 = vadd.f32 %v227, %v372
    %374 = vmatmul.f32.gmra.mxu0 %v141
    %v375 = vpop.f32.mrf.mxu0
    %v376 = vadd.f32 %v227, %v375
    %377 = vmatmul.f32.gmra.mxu0 %v142
    %v378 = vpop.f32.mrf.mxu0
    %v379 = vadd.f32 %v227, %v378
    %380 = vmatmul.f32.gmra.mxu0 %v143
    %v381 = vpop.f32.mrf.mxu0
    %v382 = vadd.f32 %v227, %v381
    %383 = vmatmul.f32.gmra.mxu0 %v144
    %v384 = vpop.f32.mrf.mxu0
    %v385 = vadd.f32 %v227, %v384
    %386 = vmatmul.f32.gmra.mxu0 %v145
    %v387 = vpop.f32.mrf.mxu0
    %v388 = vadd.f32 %v227, %v387
    %389 = vmatmul.f32.gmra.mxu0 %v146
    %v390 = vpop.f32.mrf.mxu0
    %v391 = vadd.f32 %v227, %v390
    %392 = vmatmul.f32.gmra.mxu0 %v147
    %v393 = vpop.f32.mrf.mxu0
    %v394 = vadd.f32 %v227, %v393
    %395 = vmatmul.f32.gmra.mxu0 %v148
    %v396 = vpop.f32.mrf.mxu0
    %v397 = vadd.f32 %v227, %v396
    %398 = vmatmul.f32.gmra.mxu0 %v149
    %v399 = vpop.f32.mrf.mxu0
    %v400 = vadd.f32 %v227, %v399
    %401 = vmatmul.f32.gmra.mxu0 %v150
    %v402 = vpop.f32.mrf.mxu0
    %v403 = vadd.f32 %v227, %v402
    %404 = vmatmul.f32.gmra.mxu0 %v151
    %v405 = vpop.f32.mrf.mxu0
    %v406 = vadd.f32 %v227, %v405
    %407 = vmatmul.f32.gmra.mxu0 %v152
    %v408 = vpop.f32.mrf.mxu0
    %v409 = vadd.f32 %v227, %v408
    %410 = vmatmul.f32.gmra.mxu0 %v153
    %v411 = vpop.f32.mrf.mxu0
    %v412 = vadd.f32 %v227, %v411
    %413 = vmatmul.f32.gmra.mxu0 %v154
    %v414 = vpop.f32.mrf.mxu0
    %v415 = vadd.f32 %v227, %v414
    %416 = vmatmul.f32.gmra.mxu0 %v155
    %v417 = vpop.f32.mrf.mxu0
    %v418 = vadd.f32 %v227, %v417
    %419 = vmatmul.f32.gmra.mxu0 %v156
    %v420 = vpop.f32.mrf.mxu0
    %v421 = vadd.f32 %v227, %v420
    %422 = vmatmul.f32.gmra.mxu0 %v157
    %v423 = vpop.f32.mrf.mxu0
    %v424 = vadd.f32 %v227, %v423
    %425 = vmatmul.f32.gmra.mxu0 %v158
    %v426 = vpop.f32.mrf.mxu0
    %v427 = vadd.f32 %v227, %v426
    %428 = vmatmul.f32.gmra.mxu0 %v159
    %v429 = vpop.f32.mrf.mxu0
    %v430 = vadd.f32 %v227, %v429
    %431 = vmatmul.f32.gmra.mxu0 %v160
    %v432 = vpop.f32.mrf.mxu0
    %v433 = vadd.f32 %v227, %v432
    %434 = vmatmul.f32.gmra.mxu0 %v161
    %v435 = vpop.f32.mrf.mxu0
    %v436 = vadd.f32 %v227, %v435
    %437 = vmatmul.f32.gmra.mxu0 %v162
    %v438 = vpop.f32.mrf.mxu0
    %v439 = vadd.f32 %v227, %v438
    %440 = vmatmul.f32.gmra.mxu0 %v163
    %v441 = vpop.f32.mrf.mxu0
    %v442 = vadd.f32 %v227, %v441
    %443 = vmatmul.f32.gmra.mxu0 %v164
    %v444 = vpop.f32.mrf.mxu0
    %v445 = vadd.f32 %v227, %v444
    %446 = vmatmul.f32.gmra.mxu0 %v165
    %v447 = vpop.f32.mrf.mxu0
    %v448 = vadd.f32 %v227, %v447
    %449 = vmatmul.f32.gmra.mxu0 %v166
    %v450 = vpop.f32.mrf.mxu0
    %v451 = vadd.f32 %v227, %v450
    %452 = vmatmul.f32.gmra.mxu0 %v167
    %v453 = vpop.f32.mrf.mxu0
    %v454 = vadd.f32 %v227, %v453
    %455 = vmatmul.f32.gmra.mxu0 %v168
    %v456 = vpop.f32.mrf.mxu0
    %v457 = vadd.f32 %v227, %v456
    %458 = vmatmul.f32.gmra.mxu0 %v169
    %v459 = vpop.f32.mrf.mxu0
    %v460 = vadd.f32 %v227, %v459
    %461 = vmatmul.f32.gmra.mxu0 %v170
    %v462 = vpop.f32.mrf.mxu0
    %v463 = vadd.f32 %v227, %v462
    %464 = vmatmul.f32.gmra.mxu0 %v171
    %v465 = vpop.f32.mrf.mxu0
    %v466 = vadd.f32 %v227, %v465
    %467 = vmatmul.f32.gmra.mxu0 %v172
    %v468 = vpop.f32.mrf.mxu0
    %v469 = vadd.f32 %v227, %v468
    %470 = vmatmul.f32.gmra.mxu0 %v173
    %v471 = vpop.f32.mrf.mxu0
    %v472 = vadd.f32 %v227, %v471
    %473 = vmatmul.f32.gmra.mxu0 %v174
    %v474 = vpop.f32.mrf.mxu0
    %v475 = vadd.f32 %v227, %v474
    %476 = vmatmul.f32.gmra.mxu0 %v175
    %v477 = vpop.f32.mrf.mxu0
    %v478 = vadd.f32 %v227, %v477
    %479 = vmatmul.f32.gmra.mxu0 %v176
    %v480 = vpop.f32.mrf.mxu0
    %v481 = vadd.f32 %v227, %v480
    %482 = vmatmul.f32.gmra.mxu0 %v177
    %v483 = vpop.f32.mrf.mxu0
    %v484 = vadd.f32 %v227, %v483
    %485 = vmatmul.f32.gmra.mxu0 %v178
    %v486 = vpop.f32.mrf.mxu0
    %v487 = vadd.f32 %v227, %v486
    %488 = vmatmul.f32.gmra.mxu0 %v179
    %v489 = vpop.f32.mrf.mxu0
    %v490 = vadd.f32 %v227, %v489
    %491 = vmatmul.f32.gmra.mxu0 %v180
    %v492 = vpop.f32.mrf.mxu0
    %v493 = vadd.f32 %v227, %v492
    %494 = vmatmul.f32.gmra.mxu0 %v181
    %v495 = vpop.f32.mrf.mxu0
    %v496 = vadd.f32 %v227, %v495
    %497 = vmatmul.f32.gmra.mxu0 %v182
    %v498 = vpop.f32.mrf.mxu0
    %v499 = vadd.f32 %v227, %v498
    %500 = vmatmul.f32.gmra.mxu0 %v183
    %v501 = vpop.f32.mrf.mxu0
    %v502 = vadd.f32 %v227, %v501
    %503 = vmatmul.f32.gmra.mxu0 %v184
    %v504 = vpop.f32.mrf.mxu0
    %v505 = vadd.f32 %v227, %v504
    %506 = vmatmul.f32.gmra.mxu0 %v185
    %v507 = vpop.f32.mrf.mxu0
    %v508 = vadd.f32 %v227, %v507
    %509 = vmatmul.f32.gmra.mxu0 %v186
    %v510 = vpop.f32.mrf.mxu0
    %v511 = vadd.f32 %v227, %v510
    %512 = vmatmul.f32.gmra.mxu0 %v187
    %v513 = vpop.f32.mrf.mxu0
    %v514 = vadd.f32 %v227, %v513
    %515 = vmatmul.f32.gmra.mxu0 %v188
    %v516 = vpop.f32.mrf.mxu0
    %v517 = vadd.f32 %v227, %v516
    %518 = vmatmul.f32.gmra.mxu0 %v189
    %v519 = vpop.f32.mrf.mxu0
    %v520 = vadd.f32 %v227, %v519
    %521 = vmatmul.f32.gmra.mxu0 %v190
    %v522 = vpop.f32.mrf.mxu0
    %v523 = vadd.f32 %v227, %v522
    %524 = vmatmul.f32.gmra.mxu0 %v191
    %v525 = vpop.f32.mrf.mxu0
    %v526 = vadd.f32 %v227, %v525
    %527 = vmatmul.f32.gmra.mxu0 %v192
    %v528 = vpop.f32.mrf.mxu0
    %v529 = vadd.f32 %v227, %v528
    %530 = vmatmul.f32.gmra.mxu0 %v193
    %v531 = vpop.f32.mrf.mxu0
    %v532 = vadd.f32 %v227, %v531
    %533 = vmatmul.f32.gmra.mxu0 %v194
    %v534 = vpop.f32.mrf.mxu0
    %v535 = vadd.f32 %v227, %v534
    %536 = vmatmul.f32.gmra.mxu0 %v195
    %v537 = vpop.f32.mrf.mxu0
    %v538 = vadd.f32 %v227, %v537
    %539 = vmatmul.f32.gmra.mxu0 %v196
    %v540 = vpop.f32.mrf.mxu0
    %v541 = vadd.f32 %v227, %v540
    %542 = vmatmul.f32.gmra.mxu0 %v197
    %v543 = vpop.f32.mrf.mxu0
    %v544 = vadd.f32 %v227, %v543
    %545 = vmatmul.f32.gmra.mxu0 %v198
    %v546 = vpop.f32.mrf.mxu0
    %v547 = vadd.f32 %v227, %v546
    %548 = vmatmul.f32.gmra.mxu0 %v199
    %v549 = vpop.f32.mrf.mxu0
    %v550 = vadd.f32 %v227, %v549
    %551 = vmatmul.f32.gmra.mxu0 %v200
    %v552 = vpop.f32.mrf.mxu0
    %v553 = vadd.f32 %v227, %v552
    %554 = vmatmul.f32.gmra.mxu0 %v201
    %v555 = vpop.f32.mrf.mxu0
    %v556 = vadd.f32 %v227, %v555
    %557 = vmatmul.f32.gmra.mxu0 %v202
    %v558 = vpop.f32.mrf.mxu0
    %v559 = vadd.f32 %v227, %v558
    %560 = vmatmul.f32.gmra.mxu0 %v203
    %v561 = vpop.f32.mrf.mxu0
    %v562 = vadd.f32 %v227, %v561
    %563 = vmatmul.f32.gmra.mxu0 %v204
    %v564 = vpop.f32.mrf.mxu0
    %v565 = vadd.f32 %v227, %v564
    %566 = vmatmul.f32.gmra.mxu0 %v205
    %v567 = vpop.f32.mrf.mxu0
    %v568 = vadd.f32 %v227, %v567
    %569 = vmatmul.f32.gmra.mxu0 %v206
    %v570 = vpop.f32.mrf.mxu0
    %v571 = vadd.f32 %v227, %v570
    %572 = vmatmul.f32.gmra.mxu0 %v207
    %v573 = vpop.f32.mrf.mxu0
    %v574 = vadd.f32 %v227, %v573
    %575 = vmatmul.f32.gmra.mxu0 %v208
    %v576 = vpop.f32.mrf.mxu0
    %v577 = vadd.f32 %v227, %v576
    %578 = vmatmul.f32.gmra.mxu0 %v209
    %v579 = vpop.f32.mrf.mxu0
    %v580 = vadd.f32 %v227, %v579
    %581 = vmatmul.f32.gmra.mxu0 %v210
    %v582 = vpop.f32.mrf.mxu0
    %v583 = vadd.f32 %v227, %v582
    %584 = vmatmul.f32.gmra.mxu0 %v211
    %v585 = vpop.f32.mrf.mxu0
    %v586 = vadd.f32 %v227, %v585
    %587 = vmatmul.f32.gmra.mxu0 %v212
    %v588 = vpop.f32.mrf.mxu0
    %v589 = vadd.f32 %v227, %v588
    %590 = vmatmul.f32.gmra.mxu0 %v213
    %v591 = vpop.f32.mrf.mxu0
    %v592 = vadd.f32 %v227, %v591
    %593 = vmatmul.f32.gmra.mxu0 %v214
    %v594 = vpop.f32.mrf.mxu0
    %v595 = vadd.f32 %v227, %v594
    %596 = vmatmul.f32.gmra.mxu0 %v215
    %v597 = vpop.f32.mrf.mxu0
    %v598 = vadd.f32 %v227, %v597
    %599 = vmatmul.f32.gmra.mxu0 %v216
    %v600 = vpop.f32.mrf.mxu0
    %v601 = vadd.f32 %v227, %v600
    %602 = vmatmul.f32.gmra.mxu0 %v217
    %v603 = vpop.f32.mrf.mxu0
    %v604 = vadd.f32 %v227, %v603
    %605 = vmatmul.f32.gmra.mxu0 %v218
    %v606 = vpop.f32.mrf.mxu0
    %v607 = vadd.f32 %v227, %v606
    %608 = vmatmul.f32.gmra.mxu0 %v219
    %v609 = vpop.f32.mrf.mxu0
    %v610 = vadd.f32 %v227, %v609
    %611 = vmatmul.f32.gmra.mxu0 %v220
    %v612 = vpop.f32.mrf.mxu0
    %v613 = vadd.f32 %v227, %v612
    %614 = vmatmul.f32.gmra.mxu0 %v221
    %v615 = vpop.f32.mrf.mxu0
    %v616 = vadd.f32 %v227, %v615
    %617 = vmatmul.f32.gmra.mxu0 %v222
    %v618 = vpop.f32.mrf.mxu0
    %v619 = vadd.f32 %v227, %v618
    %620 = vmatmul.f32.gmra.mxu0 %v223
    %v621 = vpop.f32.mrf.mxu0
    %v622 = vadd.f32 %v227, %v621
    %623 = vmatmul.f32.gmra.mxu0 %v224
    %v624 = vpop.f32.mrf.mxu0
    %v625 = vadd.f32 %v227, %v624
    %626 = vmatmul.f32.gmra.mxu0 %v225
    %v627 = vpop.f32.mrf.mxu0
    %v628 = vadd.f32 %v227, %v627
    %629 = vdwg.mxu0
    %v630 = vtanh.pop %v247
    %v631 = vtanh.pop %v250
    %v632 = vtanh.pop %v253
    %v633 = vtanh.pop %v256
    %v634 = vtanh.pop %v259
    %v635 = vtanh.pop %v262
    %v636 = vtanh.pop %v265
    %v637 = vtanh.pop %v268
    %v638 = vtanh.pop %v271
    %v639 = vtanh.pop %v274
    %v640 = vtanh.pop %v277
    %v641 = vtanh.pop %v280
    %v642 = vtanh.pop %v283
    %v643 = vtanh.pop %v286
    %v644 = vtanh.pop %v289
    %v645 = vtanh.pop %v292
    %v646 = vtanh.pop %v295
    %v647 = vtanh.pop %v298
    %v648 = vtanh.pop %v301
    %v649 = vtanh.pop %v304
    %v650 = vtanh.pop %v307
    %v651 = vtanh.pop %v310
    %v652 = vtanh.pop %v313
    %v653 = vtanh.pop %v316
    %v654 = vtanh.pop %v319
    %v655 = vtanh.pop %v322
    %v656 = vtanh.pop %v325
    %v657 = vtanh.pop %v328
    %v658 = vtanh.pop %v331
    %v659 = vtanh.pop %v334
    %v660 = vtanh.pop %v337
    %v661 = vtanh.pop %v340
    %v662 = vtanh.pop %v343
    %v663 = vtanh.pop %v346
    %v664 = vtanh.pop %v349
    %v665 = vtanh.pop %v352
    %v666 = vtanh.pop %v355
    %v667 = vtanh.pop %v358
    %v668 = vtanh.pop %v361
    %v669 = vtanh.pop %v364
    %v670 = vtanh.pop %v367
    %v671 = vtanh.pop %v370
    %v672 = vtanh.pop %v373
    %v673 = vtanh.pop %v376
    %v674 = vtanh.pop %v379
    %v675 = vtanh.pop %v382
    %v676 = vtanh.pop %v385
    %v677 = vtanh.pop %v388
    %v678 = vtanh.pop %v391
    %v679 = vtanh.pop %v394
    %v680 = vtanh.pop %v397
    %v681 = vtanh.pop %v400
    %v682 = vtanh.pop %v403
    %v683 = vtanh.pop %v406
    %v684 = vtanh.pop %v409
    %v685 = vtanh.pop %v412
    %v686 = vtanh.pop %v415
    %v687 = vtanh.pop %v418
    %v688 = vtanh.pop %v421
    %v689 = vtanh.pop %v424
    %v690 = vtanh.pop %v427
    %v691 = vtanh.pop %v430
    %v692 = vtanh.pop %v433
    %v693 = vtanh.pop %v436
    %v694 = vtanh.pop %v439
    %v695 = vtanh.pop %v442
    %v696 = vtanh.pop %v445
    %v697 = vtanh.pop %v448
    %v698 = vtanh.pop %v451
    %v699 = vtanh.pop %v454
    %v700 = vtanh.pop %v457
    %v701 = vtanh.pop %v460
    %v702 = vtanh.pop %v463
    %v703 = vtanh.pop %v466
    %v704 = vtanh.pop %v469
    %v705 = vtanh.pop %v472
    %v706 = vtanh.pop %v475
    %v707 = vtanh.pop %v478
    %v708 = vtanh.pop %v481
    %v709 = vtanh.pop %v484
    %v710 = vtanh.pop %v487
    %v711 = vtanh.pop %v490
    %v712 = vtanh.pop %v493
    %v713 = vtanh.pop %v496
    %v714 = vtanh.pop %v499
    %v715 = vtanh.pop %v502
    %v716 = vtanh.pop %v505
    %v717 = vtanh.pop %v508
    %v718 = vtanh.pop %v511
    %v719 = vtanh.pop %v514
    %v720 = vtanh.pop %v517
    %v721 = vtanh.pop %v520
    %v722 = vtanh.pop %v523
    %v723 = vtanh.pop %v526
    %v724 = vtanh.pop %v529
    %v725 = vtanh.pop %v532
    %v726 = vtanh.pop %v535
    %v727 = vtanh.pop %v538
    %v728 = vtanh.pop %v541
    %v729 = vtanh.pop %v544
    %v730 = vtanh.pop %v547
    %v731 = vtanh.pop %v550
    %v732 = vtanh.pop %v553
    %v733 = vtanh.pop %v556
    %v734 = vtanh.pop %v559
    %v735 = vtanh.pop %v562
    %v736 = vtanh.pop %v565
    %v737 = vtanh.pop %v568
    %v738 = vtanh.pop %v571
    %v739 = vtanh.pop %v574
    %v740 = vtanh.pop %v577
    %v741 = vtanh.pop %v580
    %v742 = vtanh.pop %v583
    %v743 = vtanh.pop %v586
    %v744 = vtanh.pop %v589
    %v745 = vtanh.pop %v592
    %v746 = vtanh.pop %v595
    %v747 = vtanh.pop %v598
    %v748 = vtanh.pop %v601
    %v749 = vtanh.pop %v604
    %v750 = vtanh.pop %v607
    %v751 = vtanh.pop %v610
    %v752 = vtanh.pop %v613
    %v753 = vtanh.pop %v616
    %v754 = vtanh.pop %v619
    %v755 = vtanh.pop %v622
    %v756 = vtanh.pop %v625
    %v757 = vtanh.pop %v628
    %v759 = vperm.slane %v97, 0
    %v761 = vmul.f32 %v630, %v759
    %v762 = vmul.f32 %v631, %v759
    %v763 = vmul.f32 %v632, %v759
    %v764 = vmul.f32 %v633, %v759
    %v765 = vmul.f32 %v634, %v759
    %v766 = vmul.f32 %v635, %v759
    %v767 = vmul.f32 %v636, %v759
    %v768 = vmul.f32 %v637, %v759
    %v769 = vmul.f32 %v638, %v759
    %v770 = vmul.f32 %v639, %v759
    %v771 = vmul.f32 %v640, %v759
    %v772 = vmul.f32 %v641, %v759
    %v773 = vmul.f32 %v642, %v759
    %v774 = vmul.f32 %v643, %v759
    %v775 = vmul.f32 %v644, %v759
    %v776 = vmul.f32 %v645, %v759
    %v777 = vmul.f32 %v646, %v759
    %v778 = vmul.f32 %v647, %v759
    %v779 = vmul.f32 %v648, %v759
    %v780 = vmul.f32 %v649, %v759
    %v781 = vmul.f32 %v650, %v759
    %v782 = vmul.f32 %v651, %v759
    %v783 = vmul.f32 %v652, %v759
    %v784 = vmul.f32 %v653, %v759
    %v785 = vmul.f32 %v654, %v759
    %v786 = vmul.f32 %v655, %v759
    %v787 = vmul.f32 %v656, %v759
    %v788 = vmul.f32 %v657, %v759
    %v789 = vmul.f32 %v658, %v759
    %v790 = vmul.f32 %v659, %v759
    %v791 = vmul.f32 %v660, %v759
    %v792 = vmul.f32 %v661, %v759
    %v793 = vmul.f32 %v662, %v759
    %v794 = vmul.f32 %v663, %v759
    %v795 = vmul.f32 %v664, %v759
    %v796 = vmul.f32 %v665, %v759
    %v797 = vmul.f32 %v666, %v759
    %v798 = vmul.f32 %v667, %v759
    %v799 = vmul.f32 %v668, %v759
    %v800 = vmul.f32 %v669, %v759
    %v801 = vmul.f32 %v670, %v759
    %v802 = vmul.f32 %v671, %v759
    %v803 = vmul.f32 %v672, %v759
    %v804 = vmul.f32 %v673, %v759
    %v805 = vmul.f32 %v674, %v759
    %v806 = vmul.f32 %v675, %v759
    %v807 = vmul.f32 %v676, %v759
    %v808 = vmul.f32 %v677, %v759
    %v809 = vmul.f32 %v678, %v759
    %v810 = vmul.f32 %v679, %v759
    %v811 = vmul.f32 %v680, %v759
    %v812 = vmul.f32 %v681, %v759
    %v813 = vmul.f32 %v682, %v759
    %v814 = vmul.f32 %v683, %v759
    %v815 = vmul.f32 %v684, %v759
    %v816 = vmul.f32 %v685, %v759
    %v817 = vmul.f32 %v686, %v759
    %v818 = vmul.f32 %v687, %v759
    %v819 = vmul.f32 %v688, %v759
    %v820 = vmul.f32 %v689, %v759
    %v821 = vmul.f32 %v690, %v759
    %v822 = vmul.f32 %v691, %v759
    %v823 = vmul.f32 %v692, %v759
    %v824 = vmul.f32 %v693, %v759
    %v825 = vmul.f32 %v694, %v759
    %v826 = vmul.f32 %v695, %v759
    %v827 = vmul.f32 %v696, %v759
    %v828 = vmul.f32 %v697, %v759
    %v829 = vmul.f32 %v698, %v759
    %v830 = vmul.f32 %v699, %v759
    %v831 = vmul.f32 %v700, %v759
    %v832 = vmul.f32 %v701, %v759
    %v833 = vmul.f32 %v702, %v759
    %v834 = vmul.f32 %v703, %v759
    %v835 = vmul.f32 %v704, %v759
    %v836 = vmul.f32 %v705, %v759
    %v837 = vmul.f32 %v706, %v759
    %v838 = vmul.f32 %v707, %v759
    %v839 = vmul.f32 %v708, %v759
    %v840 = vmul.f32 %v709, %v759
    %v841 = vmul.f32 %v710, %v759
    %v842 = vmul.f32 %v711, %v759
    %v843 = vmul.f32 %v712, %v759
    %v844 = vmul.f32 %v713, %v759
    %v845 = vmul.f32 %v714, %v759
    %v846 = vmul.f32 %v715, %v759
    %v847 = vmul.f32 %v716, %v759
    %v848 = vmul.f32 %v717, %v759
    %v849 = vmul.f32 %v718, %v759
    %v850 = vmul.f32 %v719, %v759
    %v851 = vmul.f32 %v720, %v759
    %v852 = vmul.f32 %v721, %v759
    %v853 = vmul.f32 %v722, %v759
    %v854 = vmul.f32 %v723, %v759
    %v855 = vmul.f32 %v724, %v759
    %v856 = vmul.f32 %v725, %v759
    %v857 = vmul.f32 %v726, %v759
    %v858 = vmul.f32 %v727, %v759
    %v859 = vmul.f32 %v728, %v759
    %v860 = vmul.f32 %v729, %v759
    %v861 = vmul.f32 %v730, %v759
    %v862 = vmul.f32 %v731, %v759
    %v863 = vmul.f32 %v732, %v759
    %v864 = vmul.f32 %v733, %v759
    %v865 = vmul.f32 %v734, %v759
    %v866 = vmul.f32 %v735, %v759
    %v867 = vmul.f32 %v736, %v759
    %v868 = vmul.f32 %v737, %v759
    %v869 = vmul.f32 %v738, %v759
    %v870 = vmul.f32 %v739, %v759
    %v871 = vmul.f32 %v740, %v759
    %v872 = vmul.f32 %v741, %v759
    %v873 = vmul.f32 %v742, %v759
    %v874 = vmul.f32 %v743, %v759
    %v875 = vmul.f32 %v744, %v759
    %v876 = vmul.f32 %v745, %v759
    %v877 = vmul.f32 %v746, %v759
    %v878 = vmul.f32 %v747, %v759
    %v879 = vmul.f32 %v748, %v759
    %v880 = vmul.f32 %v749, %v759
    %v881 = vmul.f32 %v750, %v759
    %v882 = vmul.f32 %v751, %v759
    %v883 = vmul.f32 %v752, %v759
    %v884 = vmul.f32 %v753, %v759
    %v885 = vmul.f32 %v754, %v759
    %v886 = vmul.f32 %v755, %v759
    %v887 = vmul.f32 %v756, %v759
    %v888 = vmul.f32 %v757, %v759
    %889 = vadd.xlane.f32.xlu0 %v761
    %v890 = vpop.xlane.xlu0 %889
    %891 = vadd.xlane.f32.xlu0 %v762
    %v892 = vpop.xlane.xlu0 %891
    %893 = vadd.xlane.f32.xlu0 %v763
    %v894 = vpop.xlane.xlu0 %893
    %895 = vadd.xlane.f32.xlu0 %v764
    %v896 = vpop.xlane.xlu0 %895
    %897 = vadd.xlane.f32.xlu0 %v765
    %v898 = vpop.xlane.xlu0 %897
    %899 = vadd.xlane.f32.xlu0 %v766
    %v900 = vpop.xlane.xlu0 %899
    %901 = vadd.xlane.f32.xlu0 %v767
    %v902 = vpop.xlane.xlu0 %901
    %903 = vadd.xlane.f32.xlu0 %v768
    %v904 = vpop.xlane.xlu0 %903
    %905 = vadd.xlane.f32.xlu0 %v769
    %v906 = vpop.xlane.xlu0 %905
    %907 = vadd.xlane.f32.xlu0 %v770
    %v908 = vpop.xlane.xlu0 %907
    %909 = vadd.xlane.f32.xlu0 %v771
    %v910 = vpop.xlane.xlu0 %909
    %911 = vadd.xlane.f32.xlu0 %v772
    %v912 = vpop.xlane.xlu0 %911
    %913 = vadd.xlane.f32.xlu0 %v773
    %v914 = vpop.xlane.xlu0 %913
    %915 = vadd.xlane.f32.xlu0 %v774
    %v916 = vpop.xlane.xlu0 %915
    %917 = vadd.xlane.f32.xlu0 %v775
    %v918 = vpop.xlane.xlu0 %917
    %919 = vadd.xlane.f32.xlu0 %v776
    %v920 = vpop.xlane.xlu0 %919
    %921 = vadd.xlane.f32.xlu0 %v777
    %v922 = vpop.xlane.xlu0 %921
    %923 = vadd.xlane.f32.xlu0 %v778
    %v924 = vpop.xlane.xlu0 %923
    %925 = vadd.xlane.f32.xlu0 %v779
    %v926 = vpop.xlane.xlu0 %925
    %927 = vadd.xlane.f32.xlu0 %v780
    %v928 = vpop.xlane.xlu0 %927
    %929 = vadd.xlane.f32.xlu0 %v781
    %v930 = vpop.xlane.xlu0 %929
    %931 = vadd.xlane.f32.xlu0 %v782
    %v932 = vpop.xlane.xlu0 %931
    %933 = vadd.xlane.f32.xlu0 %v783
    %v934 = vpop.xlane.xlu0 %933
    %935 = vadd.xlane.f32.xlu0 %v784
    %v936 = vpop.xlane.xlu0 %935
    %937 = vadd.xlane.f32.xlu0 %v785
    %v938 = vpop.xlane.xlu0 %937
    %939 = vadd.xlane.f32.xlu0 %v786
    %v940 = vpop.xlane.xlu0 %939
    %941 = vadd.xlane.f32.xlu0 %v787
    %v942 = vpop.xlane.xlu0 %941
    %943 = vadd.xlane.f32.xlu0 %v788
    %v944 = vpop.xlane.xlu0 %943
    %945 = vadd.xlane.f32.xlu0 %v789
    %v946 = vpop.xlane.xlu0 %945
    %947 = vadd.xlane.f32.xlu0 %v790
    %v948 = vpop.xlane.xlu0 %947
    %949 = vadd.xlane.f32.xlu0 %v791
    %v950 = vpop.xlane.xlu0 %949
    %951 = vadd.xlane.f32.xlu0 %v792
    %v952 = vpop.xlane.xlu0 %951
    %953 = vadd.xlane.f32.xlu0 %v793
    %v954 = vpop.xlane.xlu0 %953
    %955 = vadd.xlane.f32.xlu0 %v794
    %v956 = vpop.xlane.xlu0 %955
    %957 = vadd.xlane.f32.xlu0 %v795
    %v958 = vpop.xlane.xlu0 %957
    %959 = vadd.xlane.f32.xlu0 %v796
    %v960 = vpop.xlane.xlu0 %959
    %961 = vadd.xlane.f32.xlu0 %v797
    %v962 = vpop.xlane.xlu0 %961
    %963 = vadd.xlane.f32.xlu0 %v798
    %v964 = vpop.xlane.xlu0 %963
    %965 = vadd.xlane.f32.xlu0 %v799
    %v966 = vpop.xlane.xlu0 %965
    %967 = vadd.xlane.f32.xlu0 %v800
    %v968 = vpop.xlane.xlu0 %967
    %969 = vadd.xlane.f32.xlu0 %v801
    %v970 = vpop.xlane.xlu0 %969
    %971 = vadd.xlane.f32.xlu0 %v802
    %v972 = vpop.xlane.xlu0 %971
    %973 = vadd.xlane.f32.xlu0 %v803
    %v974 = vpop.xlane.xlu0 %973
    %975 = vadd.xlane.f32.xlu0 %v804
    %v976 = vpop.xlane.xlu0 %975
    %977 = vadd.xlane.f32.xlu0 %v805
    %v978 = vpop.xlane.xlu0 %977
    %979 = vadd.xlane.f32.xlu0 %v806
    %v980 = vpop.xlane.xlu0 %979
    %981 = vadd.xlane.f32.xlu0 %v807
    %v982 = vpop.xlane.xlu0 %981
    %983 = vadd.xlane.f32.xlu0 %v808
    %v984 = vpop.xlane.xlu0 %983
    %985 = vadd.xlane.f32.xlu0 %v809
    %v986 = vpop.xlane.xlu0 %985
    %987 = vadd.xlane.f32.xlu0 %v810
    %v988 = vpop.xlane.xlu0 %987
    %989 = vadd.xlane.f32.xlu0 %v811
    %v990 = vpop.xlane.xlu0 %989
    %991 = vadd.xlane.f32.xlu0 %v812
    %v992 = vpop.xlane.xlu0 %991
    %993 = vadd.xlane.f32.xlu0 %v813
    %v994 = vpop.xlane.xlu0 %993
    %995 = vadd.xlane.f32.xlu0 %v814
    %v996 = vpop.xlane.xlu0 %995
    %997 = vadd.xlane.f32.xlu0 %v815
    %v998 = vpop.xlane.xlu0 %997
    %999 = vadd.xlane.f32.xlu0 %v816
    %v1000 = vpop.xlane.xlu0 %999
    %1001 = vadd.xlane.f32.xlu0 %v817
    %v1002 = vpop.xlane.xlu0 %1001
    %1003 = vadd.xlane.f32.xlu0 %v818
    %v1004 = vpop.xlane.xlu0 %1003
    %1005 = vadd.xlane.f32.xlu0 %v819
    %v1006 = vpop.xlane.xlu0 %1005
    %1007 = vadd.xlane.f32.xlu0 %v820
    %v1008 = vpop.xlane.xlu0 %1007
    %1009 = vadd.xlane.f32.xlu0 %v821
    %v1010 = vpop.xlane.xlu0 %1009
    %1011 = vadd.xlane.f32.xlu0 %v822
    %v1012 = vpop.xlane.xlu0 %1011
    %1013 = vadd.xlane.f32.xlu0 %v823
    %v1014 = vpop.xlane.xlu0 %1013
    %1015 = vadd.xlane.f32.xlu0 %v824
    %v1016 = vpop.xlane.xlu0 %1015
    %1017 = vadd.xlane.f32.xlu0 %v825
    %v1018 = vpop.xlane.xlu0 %1017
    %1019 = vadd.xlane.f32.xlu0 %v826
    %v1020 = vpop.xlane.xlu0 %1019
    %1021 = vadd.xlane.f32.xlu0 %v827
    %v1022 = vpop.xlane.xlu0 %1021
    %1023 = vadd.xlane.f32.xlu0 %v828
    %v1024 = vpop.xlane.xlu0 %1023
    %1025 = vadd.xlane.f32.xlu0 %v829
    %v1026 = vpop.xlane.xlu0 %1025
    %1027 = vadd.xlane.f32.xlu0 %v830
    %v1028 = vpop.xlane.xlu0 %1027
    %1029 = vadd.xlane.f32.xlu0 %v831
    %v1030 = vpop.xlane.xlu0 %1029
    %1031 = vadd.xlane.f32.xlu0 %v832
    %v1032 = vpop.xlane.xlu0 %1031
    %1033 = vadd.xlane.f32.xlu0 %v833
    %v1034 = vpop.xlane.xlu0 %1033
    %1035 = vadd.xlane.f32.xlu0 %v834
    %v1036 = vpop.xlane.xlu0 %1035
    %1037 = vadd.xlane.f32.xlu0 %v835
    %v1038 = vpop.xlane.xlu0 %1037
    %1039 = vadd.xlane.f32.xlu0 %v836
    %v1040 = vpop.xlane.xlu0 %1039
    %1041 = vadd.xlane.f32.xlu0 %v837
    %v1042 = vpop.xlane.xlu0 %1041
    %1043 = vadd.xlane.f32.xlu0 %v838
    %v1044 = vpop.xlane.xlu0 %1043
    %1045 = vadd.xlane.f32.xlu0 %v839
    %v1046 = vpop.xlane.xlu0 %1045
    %1047 = vadd.xlane.f32.xlu0 %v840
    %v1048 = vpop.xlane.xlu0 %1047
    %1049 = vadd.xlane.f32.xlu0 %v841
    %v1050 = vpop.xlane.xlu0 %1049
    %1051 = vadd.xlane.f32.xlu0 %v842
    %v1052 = vpop.xlane.xlu0 %1051
    %1053 = vadd.xlane.f32.xlu0 %v843
    %v1054 = vpop.xlane.xlu0 %1053
    %1055 = vadd.xlane.f32.xlu0 %v844
    %v1056 = vpop.xlane.xlu0 %1055
    %1057 = vadd.xlane.f32.xlu0 %v845
    %v1058 = vpop.xlane.xlu0 %1057
    %1059 = vadd.xlane.f32.xlu0 %v846
    %v1060 = vpop.xlane.xlu0 %1059
    %1061 = vadd.xlane.f32.xlu0 %v847
    %v1062 = vpop.xlane.xlu0 %1061
    %1063 = vadd.xlane.f32.xlu0 %v848
    %v1064 = vpop.xlane.xlu0 %1063
    %1065 = vadd.xlane.f32.xlu0 %v849
    %v1066 = vpop.xlane.xlu0 %1065
    %1067 = vadd.xlane.f32.xlu0 %v850
    %v1068 = vpop.xlane.xlu0 %1067
    %1069 = vadd.xlane.f32.xlu0 %v851
    %v1070 = vpop.xlane.xlu0 %1069
    %1071 = vadd.xlane.f32.xlu0 %v852
    %v1072 = vpop.xlane.xlu0 %1071
    %1073 = vadd.xlane.f32.xlu0 %v853
    %v1074 = vpop.xlane.xlu0 %1073
    %1075 = vadd.xlane.f32.xlu0 %v854
    %v1076 = vpop.xlane.xlu0 %1075
    %1077 = vadd.xlane.f32.xlu0 %v855
    %v1078 = vpop.xlane.xlu0 %1077
    %1079 = vadd.xlane.f32.xlu0 %v856
    %v1080 = vpop.xlane.xlu0 %1079
    %1081 = vadd.xlane.f32.xlu0 %v857
    %v1082 = vpop.xlane.xlu0 %1081
    %1083 = vadd.xlane.f32.xlu0 %v858
    %v1084 = vpop.xlane.xlu0 %1083
    %1085 = vadd.xlane.f32.xlu0 %v859
    %v1086 = vpop.xlane.xlu0 %1085
    %1087 = vadd.xlane.f32.xlu0 %v860
    %v1088 = vpop.xlane.xlu0 %1087
    %1089 = vadd.xlane.f32.xlu0 %v861
    %v1090 = vpop.xlane.xlu0 %1089
    %1091 = vadd.xlane.f32.xlu0 %v862
    %v1092 = vpop.xlane.xlu0 %1091
    %1093 = vadd.xlane.f32.xlu0 %v863
    %v1094 = vpop.xlane.xlu0 %1093
    %1095 = vadd.xlane.f32.xlu0 %v864
    %v1096 = vpop.xlane.xlu0 %1095
    %1097 = vadd.xlane.f32.xlu0 %v865
    %v1098 = vpop.xlane.xlu0 %1097
    %1099 = vadd.xlane.f32.xlu0 %v866
    %v1100 = vpop.xlane.xlu0 %1099
    %1101 = vadd.xlane.f32.xlu0 %v867
    %v1102 = vpop.xlane.xlu0 %1101
    %1103 = vadd.xlane.f32.xlu0 %v868
    %v1104 = vpop.xlane.xlu0 %1103
    %1105 = vadd.xlane.f32.xlu0 %v869
    %v1106 = vpop.xlane.xlu0 %1105
    %1107 = vadd.xlane.f32.xlu0 %v870
    %v1108 = vpop.xlane.xlu0 %1107
    %1109 = vadd.xlane.f32.xlu0 %v871
    %v1110 = vpop.xlane.xlu0 %1109
    %1111 = vadd.xlane.f32.xlu0 %v872
    %v1112 = vpop.xlane.xlu0 %1111
    %1113 = vadd.xlane.f32.xlu0 %v873
    %v1114 = vpop.xlane.xlu0 %1113
    %1115 = vadd.xlane.f32.xlu0 %v874
    %v1116 = vpop.xlane.xlu0 %1115
    %1117 = vadd.xlane.f32.xlu0 %v875
    %v1118 = vpop.xlane.xlu0 %1117
    %1119 = vadd.xlane.f32.xlu0 %v876
    %v1120 = vpop.xlane.xlu0 %1119
    %1121 = vadd.xlane.f32.xlu0 %v877
    %v1122 = vpop.xlane.xlu0 %1121
    %1123 = vadd.xlane.f32.xlu0 %v878
    %v1124 = vpop.xlane.xlu0 %1123
    %1125 = vadd.xlane.f32.xlu0 %v879
    %v1126 = vpop.xlane.xlu0 %1125
    %1127 = vadd.xlane.f32.xlu0 %v880
    %v1128 = vpop.xlane.xlu0 %1127
    %1129 = vadd.xlane.f32.xlu0 %v881
    %v1130 = vpop.xlane.xlu0 %1129
    %1131 = vadd.xlane.f32.xlu0 %v882
    %v1132 = vpop.xlane.xlu0 %1131
    %1133 = vadd.xlane.f32.xlu0 %v883
    %v1134 = vpop.xlane.xlu0 %1133
    %1135 = vadd.xlane.f32.xlu0 %v884
    %v1136 = vpop.xlane.xlu0 %1135
    %1137 = vadd.xlane.f32.xlu0 %v885
    %v1138 = vpop.xlane.xlu0 %1137
    %1139 = vadd.xlane.f32.xlu0 %v886
    %v1140 = vpop.xlane.xlu0 %1139
    %1141 = vadd.xlane.f32.xlu0 %v887
    %v1142 = vpop.xlane.xlu0 %1141
    %1143 = vadd.xlane.f32.xlu0 %v888
    %v1144 = vpop.xlane.xlu0 %1143
    %v1145 = vadd.f32 %v890, %v892
    %v1146 = vadd.f32 %v1145, %v894
    %v1147 = vadd.f32 %v1146, %v896
    %v1148 = vadd.f32 %v1147, %v898
    %v1149 = vadd.f32 %v1148, %v900
    %v1150 = vadd.f32 %v1149, %v902
    %v1151 = vadd.f32 %v1150, %v904
    %v1152 = vadd.f32 %v1151, %v906
    %v1153 = vadd.f32 %v1152, %v908
    %v1154 = vadd.f32 %v1153, %v910
    %v1155 = vadd.f32 %v1154, %v912
    %v1156 = vadd.f32 %v1155, %v914
    %v1157 = vadd.f32 %v1156, %v916
    %v1158 = vadd.f32 %v1157, %v918
    %v1159 = vadd.f32 %v1158, %v920
    %v1160 = vadd.f32 %v1159, %v922
    %v1161 = vadd.f32 %v1160, %v924
    %v1162 = vadd.f32 %v1161, %v926
    %v1163 = vadd.f32 %v1162, %v928
    %v1164 = vadd.f32 %v1163, %v930
    %v1165 = vadd.f32 %v1164, %v932
    %v1166 = vadd.f32 %v1165, %v934
    %v1167 = vadd.f32 %v1166, %v936
    %v1168 = vadd.f32 %v1167, %v938
    %v1169 = vadd.f32 %v1168, %v940
    %v1170 = vadd.f32 %v1169, %v942
    %v1171 = vadd.f32 %v1170, %v944
    %v1172 = vadd.f32 %v1171, %v946
    %v1173 = vadd.f32 %v1172, %v948
    %v1174 = vadd.f32 %v1173, %v950
    %v1175 = vadd.f32 %v1174, %v952
    %v1176 = vadd.f32 %v1175, %v954
    %v1177 = vadd.f32 %v1176, %v956
    %v1178 = vadd.f32 %v1177, %v958
    %v1179 = vadd.f32 %v1178, %v960
    %v1180 = vadd.f32 %v1179, %v962
    %v1181 = vadd.f32 %v1180, %v964
    %v1182 = vadd.f32 %v1181, %v966
    %v1183 = vadd.f32 %v1182, %v968
    %v1184 = vadd.f32 %v1183, %v970
    %v1185 = vadd.f32 %v1184, %v972
    %v1186 = vadd.f32 %v1185, %v974
    %v1187 = vadd.f32 %v1186, %v976
    %v1188 = vadd.f32 %v1187, %v978
    %v1189 = vadd.f32 %v1188, %v980
    %v1190 = vadd.f32 %v1189, %v982
    %v1191 = vadd.f32 %v1190, %v984
    %v1192 = vadd.f32 %v1191, %v986
    %v1193 = vadd.f32 %v1192, %v988
    %v1194 = vadd.f32 %v1193, %v990
    %v1195 = vadd.f32 %v1194, %v992
    %v1196 = vadd.f32 %v1195, %v994
    %v1197 = vadd.f32 %v1196, %v996
    %v1198 = vadd.f32 %v1197, %v998
    %v1199 = vadd.f32 %v1198, %v1000
    %v1200 = vadd.f32 %v1199, %v1002
    %v1201 = vadd.f32 %v1200, %v1004
    %v1202 = vadd.f32 %v1201, %v1006
    %v1203 = vadd.f32 %v1202, %v1008
    %v1204 = vadd.f32 %v1203, %v1010
    %v1205 = vadd.f32 %v1204, %v1012
    %v1206 = vadd.f32 %v1205, %v1014
    %v1207 = vadd.f32 %v1206, %v1016
    %v1208 = vadd.f32 %v1207, %v1018
    %v1209 = vadd.f32 %v1208, %v1020
    %v1210 = vadd.f32 %v1209, %v1022
    %v1211 = vadd.f32 %v1210, %v1024
    %v1212 = vadd.f32 %v1211, %v1026
    %v1213 = vadd.f32 %v1212, %v1028
    %v1214 = vadd.f32 %v1213, %v1030
    %v1215 = vadd.f32 %v1214, %v1032
    %v1216 = vadd.f32 %v1215, %v1034
    %v1217 = vadd.f32 %v1216, %v1036
    %v1218 = vadd.f32 %v1217, %v1038
    %v1219 = vadd.f32 %v1218, %v1040
    %v1220 = vadd.f32 %v1219, %v1042
    %v1221 = vadd.f32 %v1220, %v1044
    %v1222 = vadd.f32 %v1221, %v1046
    %v1223 = vadd.f32 %v1222, %v1048
    %v1224 = vadd.f32 %v1223, %v1050
    %v1225 = vadd.f32 %v1224, %v1052
    %v1226 = vadd.f32 %v1225, %v1054
    %v1227 = vadd.f32 %v1226, %v1056
    %v1228 = vadd.f32 %v1227, %v1058
    %v1229 = vadd.f32 %v1228, %v1060
    %v1230 = vadd.f32 %v1229, %v1062
    %v1231 = vadd.f32 %v1230, %v1064
    %v1232 = vadd.f32 %v1231, %v1066
    %v1233 = vadd.f32 %v1232, %v1068
    %v1234 = vadd.f32 %v1233, %v1070
    %v1235 = vadd.f32 %v1234, %v1072
    %v1236 = vadd.f32 %v1235, %v1074
    %v1237 = vadd.f32 %v1236, %v1076
    %v1238 = vadd.f32 %v1237, %v1078
    %v1239 = vadd.f32 %v1238, %v1080
    %v1240 = vadd.f32 %v1239, %v1082
    %v1241 = vadd.f32 %v1240, %v1084
    %v1242 = vadd.f32 %v1241, %v1086
    %v1243 = vadd.f32 %v1242, %v1088
    %v1244 = vadd.f32 %v1243, %v1090
    %v1245 = vadd.f32 %v1244, %v1092
    %v1246 = vadd.f32 %v1245, %v1094
    %v1247 = vadd.f32 %v1246, %v1096
    %v1248 = vadd.f32 %v1247, %v1098
    %v1249 = vadd.f32 %v1248, %v1100
    %v1250 = vadd.f32 %v1249, %v1102
    %v1251 = vadd.f32 %v1250, %v1104
    %v1252 = vadd.f32 %v1251, %v1106
    %v1253 = vadd.f32 %v1252, %v1108
    %v1254 = vadd.f32 %v1253, %v1110
    %v1255 = vadd.f32 %v1254, %v1112
    %v1256 = vadd.f32 %v1255, %v1114
    %v1257 = vadd.f32 %v1256, %v1116
    %v1258 = vadd.f32 %v1257, %v1118
    %v1259 = vadd.f32 %v1258, %v1120
    %v1260 = vadd.f32 %v1259, %v1122
    %v1261 = vadd.f32 %v1260, %v1124
    %v1262 = vadd.f32 %v1261, %v1126
    %v1263 = vadd.f32 %v1262, %v1128
    %v1264 = vadd.f32 %v1263, %v1130
    %v1265 = vadd.f32 %v1264, %v1132
    %v1266 = vadd.f32 %v1265, %v1134
    %v1267 = vadd.f32 %v1266, %v1136
    %v1268 = vadd.f32 %v1267, %v1138
    %v1269 = vadd.f32 %v1268, %v1140
    %v1270 = vadd.f32 %v1269, %v1142
    %v1271 = vadd.f32 %v1270, %v1144
    %v1272 = vrot.slane %v1271, 4
    %v1273 = vadd.f32 %v1271, %v1272
    %v1274 = vrot.slane %v1273, 2
    %v1275 = vadd.f32 %v1273, %v1274
    %v1276 = vrot.slane %v1275, 1
    %v1277 = vadd.f32 %v1275, %v1276
    %v1278 = vmul.f32 %v1277, 0.0009765625
    %v1279 = vld [vmem:[#allocation2 + $0x8] sm:$0xff]
    %v1280 = vld [vmem:[#allocation2 + $0x28] sm:$0xff]
    %v1281 = vld [vmem:[#allocation2 + $0x48] sm:$0xff]
    %v1282 = vld [vmem:[#allocation2 + $0x68] sm:$0xff]
    %v1283 = vld [vmem:[#allocation2 + $0x88] sm:$0xff]
    %v1284 = vld [vmem:[#allocation2 + $0xa8] sm:$0xff]
    %v1285 = vld [vmem:[#allocation2 + $0xc8] sm:$0xff]
    %v1286 = vld [vmem:[#allocation2 + $0xe8] sm:$0xff]
    %v1287 = vld [vmem:[#allocation2 + $0x108] sm:$0xff]
    %v1288 = vld [vmem:[#allocation2 + $0x128] sm:$0xff]
    %v1289 = vld [vmem:[#allocation2 + $0x148] sm:$0xff]
    %v1290 = vld [vmem:[#allocation2 + $0x168] sm:$0xff]
    %v1291 = vld [vmem:[#allocation2 + $0x188] sm:$0xff]
    %v1292 = vld [vmem:[#allocation2 + $0x1a8] sm:$0xff]
    %v1293 = vld [vmem:[#allocation2 + $0x1c8] sm:$0xff]
    %v1294 = vld [vmem:[#allocation2 + $0x1e8] sm:$0xff]
    %v1295 = vld [vmem:[#allocation2 + $0x208] sm:$0xff]
    %v1296 = vld [vmem:[#allocation2 + $0x228] sm:$0xff]
    %v1297 = vld [vmem:[#allocation2 + $0x248] sm:$0xff]
    %v1298 = vld [vmem:[#allocation2 + $0x268] sm:$0xff]
    %v1299 = vld [vmem:[#allocation2 + $0x288] sm:$0xff]
    %v1300 = vld [vmem:[#allocation2 + $0x2a8] sm:$0xff]
    %v1301 = vld [vmem:[#allocation2 + $0x2c8] sm:$0xff]
    %v1302 = vld [vmem:[#allocation2 + $0x2e8] sm:$0xff]
    %v1303 = vld [vmem:[#allocation2 + $0x308] sm:$0xff]
    %v1304 = vld [vmem:[#allocation2 + $0x328] sm:$0xff]
    %v1305 = vld [vmem:[#allocation2 + $0x348] sm:$0xff]
    %v1306 = vld [vmem:[#allocation2 + $0x368] sm:$0xff]
    %v1307 = vld [vmem:[#allocation2 + $0x388] sm:$0xff]
    %v1308 = vld [vmem:[#allocation2 + $0x3a8] sm:$0xff]
    %v1309 = vld [vmem:[#allocation2 + $0x3c8] sm:$0xff]
    %v1310 = vld [vmem:[#allocation2 + $0x3e8] sm:$0xff]
    %v1311 = vld [vmem:[#allocation2 + $0x408] sm:$0xff]
    %v1312 = vld [vmem:[#allocation2 + $0x428] sm:$0xff]
    %v1313 = vld [vmem:[#allocation2 + $0x448] sm:$0xff]
    %v1314 = vld [vmem:[#allocation2 + $0x468] sm:$0xff]
    %v1315 = vld [vmem:[#allocation2 + $0x488] sm:$0xff]
    %v1316 = vld [vmem:[#allocation2 + $0x4a8] sm:$0xff]
    %v1317 = vld [vmem:[#allocation2 + $0x4c8] sm:$0xff]
    %v1318 = vld [vmem:[#allocation2 + $0x4e8] sm:$0xff]
    %v1319 = vld [vmem:[#allocation2 + $0x508] sm:$0xff]
    %v1320 = vld [vmem:[#allocation2 + $0x528] sm:$0xff]
    %v1321 = vld [vmem:[#allocation2 + $0x548] sm:$0xff]
    %v1322 = vld [vmem:[#allocation2 + $0x568] sm:$0xff]
    %v1323 = vld [vmem:[#allocation2 + $0x588] sm:$0xff]
    %v1324 = vld [vmem:[#allocation2 + $0x5a8] sm:$0xff]
    %v1325 = vld [vmem:[#allocation2 + $0x5c8] sm:$0xff]
    %v1326 = vld [vmem:[#allocation2 + $0x5e8] sm:$0xff]
    %v1327 = vld [vmem:[#allocation2 + $0x608] sm:$0xff]
    %v1328 = vld [vmem:[#allocation2 + $0x628] sm:$0xff]
    %v1329 = vld [vmem:[#allocation2 + $0x648] sm:$0xff]
    %v1330 = vld [vmem:[#allocation2 + $0x668] sm:$0xff]
    %v1331 = vld [vmem:[#allocation2 + $0x688] sm:$0xff]
    %v1332 = vld [vmem:[#allocation2 + $0x6a8] sm:$0xff]
    %v1333 = vld [vmem:[#allocation2 + $0x6c8] sm:$0xff]
    %v1334 = vld [vmem:[#allocation2 + $0x6e8] sm:$0xff]
    %v1335 = vld [vmem:[#allocation2 + $0x708] sm:$0xff]
    %v1336 = vld [vmem:[#allocation2 + $0x728] sm:$0xff]
    %v1337 = vld [vmem:[#allocation2 + $0x748] sm:$0xff]
    %v1338 = vld [vmem:[#allocation2 + $0x768] sm:$0xff]
    %v1339 = vld [vmem:[#allocation2 + $0x788] sm:$0xff]
    %v1340 = vld [vmem:[#allocation2 + $0x7a8] sm:$0xff]
    %v1341 = vld [vmem:[#allocation2 + $0x7c8] sm:$0xff]
    %v1342 = vld [vmem:[#allocation2 + $0x7e8] sm:$0xff]
    %v1343 = vld [vmem:[#allocation2 + $0x808] sm:$0xff]
    %v1344 = vld [vmem:[#allocation2 + $0x828] sm:$0xff]
    %v1345 = vld [vmem:[#allocation2 + $0x848] sm:$0xff]
    %v1346 = vld [vmem:[#allocation2 + $0x868] sm:$0xff]
    %v1347 = vld [vmem:[#allocation2 + $0x888] sm:$0xff]
    %v1348 = vld [vmem:[#allocation2 + $0x8a8] sm:$0xff]
    %v1349 = vld [vmem:[#allocation2 + $0x8c8] sm:$0xff]
    %v1350 = vld [vmem:[#allocation2 + $0x8e8] sm:$0xff]
    %v1351 = vld [vmem:[#allocation2 + $0x908] sm:$0xff]
    %v1352 = vld [vmem:[#allocation2 + $0x928] sm:$0xff]
    %v1353 = vld [vmem:[#allocation2 + $0x948] sm:$0xff]
    %v1354 = vld [vmem:[#allocation2 + $0x968] sm:$0xff]
    %v1355 = vld [vmem:[#allocation2 + $0x988] sm:$0xff]
    %v1356 = vld [vmem:[#allocation2 + $0x9a8] sm:$0xff]
    %v1357 = vld [vmem:[#allocation2 + $0x9c8] sm:$0xff]
    %v1358 = vld [vmem:[#allocation2 + $0x9e8] sm:$0xff]
    %v1359 = vld [vmem:[#allocation2 + $0xa08] sm:$0xff]
    %v1360 = vld [vmem:[#allocation2 + $0xa28] sm:$0xff]
    %v1361 = vld [vmem:[#allocation2 + $0xa48] sm:$0xff]
    %v1362 = vld [vmem:[#allocation2 + $0xa68] sm:$0xff]
    %v1363 = vld [vmem:[#allocation2 + $0xa88] sm:$0xff]
    %v1364 = vld [vmem:[#allocation2 + $0xaa8] sm:$0xff]
    %v1365 = vld [vmem:[#allocation2 + $0xac8] sm:$0xff]
    %v1366 = vld [vmem:[#allocation2 + $0xae8] sm:$0xff]
    %v1367 = vld [vmem:[#allocation2 + $0xb08] sm:$0xff]
    %v1368 = vld [vmem:[#allocation2 + $0xb28] sm:$0xff]
    %v1369 = vld [vmem:[#allocation2 + $0xb48] sm:$0xff]
    %v1370 = vld [vmem:[#allocation2 + $0xb68] sm:$0xff]
    %v1371 = vld [vmem:[#allocation2 + $0xb88] sm:$0xff]
    %v1372 = vld [vmem:[#allocation2 + $0xba8] sm:$0xff]
    %v1373 = vld [vmem:[#allocation2 + $0xbc8] sm:$0xff]
    %v1374 = vld [vmem:[#allocation2 + $0xbe8] sm:$0xff]
    %v1375 = vld [vmem:[#allocation2 + $0xc08] sm:$0xff]
    %v1376 = vld [vmem:[#allocation2 + $0xc28] sm:$0xff]
    %v1377 = vld [vmem:[#allocation2 + $0xc48] sm:$0xff]
    %v1378 = vld [vmem:[#allocation2 + $0xc68] sm:$0xff]
    %v1379 = vld [vmem:[#allocation2 + $0xc88] sm:$0xff]
    %v1380 = vld [vmem:[#allocation2 + $0xca8] sm:$0xff]
    %v1381 = vld [vmem:[#allocation2 + $0xcc8] sm:$0xff]
    %v1382 = vld [vmem:[#allocation2 + $0xce8] sm:$0xff]
    %v1383 = vld [vmem:[#allocation2 + $0xd08] sm:$0xff]
    %v1384 = vld [vmem:[#allocation2 + $0xd28] sm:$0xff]
    %v1385 = vld [vmem:[#allocation2 + $0xd48] sm:$0xff]
    %v1386 = vld [vmem:[#allocation2 + $0xd68] sm:$0xff]
    %v1387 = vld [vmem:[#allocation2 + $0xd88] sm:$0xff]
    %v1388 = vld [vmem:[#allocation2 + $0xda8] sm:$0xff]
    %v1389 = vld [vmem:[#allocation2 + $0xdc8] sm:$0xff]
    %v1390 = vld [vmem:[#allocation2 + $0xde8] sm:$0xff]
    %v1391 = vld [vmem:[#allocation2 + $0xe08] sm:$0xff]
    %v1392 = vld [vmem:[#allocation2 + $0xe28] sm:$0xff]
    %v1393 = vld [vmem:[#allocation2 + $0xe48] sm:$0xff]
    %v1394 = vld [vmem:[#allocation2 + $0xe68] sm:$0xff]
    %v1395 = vld [vmem:[#allocation2 + $0xe88] sm:$0xff]
    %v1396 = vld [vmem:[#allocation2 + $0xea8] sm:$0xff]
    %v1397 = vld [vmem:[#allocation2 + $0xec8] sm:$0xff]
    %v1398 = vld [vmem:[#allocation2 + $0xee8] sm:$0xff]
    %v1399 = vld [vmem:[#allocation2 + $0xf08] sm:$0xff]
    %v1400 = vld [vmem:[#allocation2 + $0xf28] sm:$0xff]
    %v1401 = vld [vmem:[#allocation2 + $0xf48] sm:$0xff]
    %v1402 = vld [vmem:[#allocation2 + $0xf68] sm:$0xff]
    %v1403 = vld [vmem:[#allocation2 + $0xf88] sm:$0xff]
    %v1404 = vld [vmem:[#allocation2 + $0xfa8] sm:$0xff]
    %v1405 = vld [vmem:[#allocation2 + $0xfc8] sm:$0xff]
    %v1406 = vld [vmem:[#allocation2 + $0xfe8] sm:$0xff]
    %1407 = vmatpush.msra.mxu0 %v95
    %1408 = vmatpush.msra.mxu0 %v94
    %1409 = vmatpush.msra.mxu0 %v93
    %1410 = vmatpush.msra.mxu0 %v92
    %1411 = vmatpush.msra.mxu0 %v91
    %1412 = vmatpush.msra.mxu0 %v90
    %1413 = vmatpush.msra.mxu0 %v89
    %1414 = vmatpush.msra.mxu0 %v88
    %1415 = vmatpush.msra.mxu0 %v87
    %1416 = vmatpush.msra.mxu0 %v86
    %1417 = vmatpush.msra.mxu0 %v85
    %1418 = vmatpush.msra.mxu0 %v84
    %1419 = vmatpush.msra.mxu0 %v83
    %1420 = vmatpush.msra.mxu0 %v82
    %1421 = vmatpush.msra.mxu0 %v81
    %1422 = vmatpush.msra.mxu0 %v80
    %1423 = vmatmul.f32.gmra.mxu0 %v1279
    %v1424 = vpop.f32.mrf.mxu0
    %v1425 = vadd.f32 %v227, %v1424
    %1426 = vmatmul.f32.gmra.mxu0 %v1280
    %v1427 = vpop.f32.mrf.mxu0
    %v1428 = vadd.f32 %v227, %v1427
    %1429 = vmatmul.f32.gmra.mxu0 %v1281
    %v1430 = vpop.f32.mrf.mxu0
    %v1431 = vadd.f32 %v227, %v1430
    %1432 = vmatmul.f32.gmra.mxu0 %v1282
    %v1433 = vpop.f32.mrf.mxu0
    %v1434 = vadd.f32 %v227, %v1433
    %1435 = vmatmul.f32.gmra.mxu0 %v1283
    %v1436 = vpop.f32.mrf.mxu0
    %v1437 = vadd.f32 %v227, %v1436
    %1438 = vmatmul.f32.gmra.mxu0 %v1284
    %v1439 = vpop.f32.mrf.mxu0
    %v1440 = vadd.f32 %v227, %v1439
    %1441 = vmatmul.f32.gmra.mxu0 %v1285
    %v1442 = vpop.f32.mrf.mxu0
    %v1443 = vadd.f32 %v227, %v1442
    %1444 = vmatmul.f32.gmra.mxu0 %v1286
    %v1445 = vpop.f32.mrf.mxu0
    %v1446 = vadd.f32 %v227, %v1445
    %1447 = vmatmul.f32.gmra.mxu0 %v1287
    %v1448 = vpop.f32.mrf.mxu0
    %v1449 = vadd.f32 %v227, %v1448
    %1450 = vmatmul.f32.gmra.mxu0 %v1288
    %v1451 = vpop.f32.mrf.mxu0
    %v1452 = vadd.f32 %v227, %v1451
    %1453 = vmatmul.f32.gmra.mxu0 %v1289
    %v1454 = vpop.f32.mrf.mxu0
    %v1455 = vadd.f32 %v227, %v1454
    %1456 = vmatmul.f32.gmra.mxu0 %v1290
    %v1457 = vpop.f32.mrf.mxu0
    %v1458 = vadd.f32 %v227, %v1457
    %1459 = vmatmul.f32.gmra.mxu0 %v1291
    %v1460 = vpop.f32.mrf.mxu0
    %v1461 = vadd.f32 %v227, %v1460
    %1462 = vmatmul.f32.gmra.mxu0 %v1292
    %v1463 = vpop.f32.mrf.mxu0
    %v1464 = vadd.f32 %v227, %v1463
    %1465 = vmatmul.f32.gmra.mxu0 %v1293
    %v1466 = vpop.f32.mrf.mxu0
    %v1467 = vadd.f32 %v227, %v1466
    %1468 = vmatmul.f32.gmra.mxu0 %v1294
    %v1469 = vpop.f32.mrf.mxu0
    %v1470 = vadd.f32 %v227, %v1469
    %1471 = vmatmul.f32.gmra.mxu0 %v1295
    %v1472 = vpop.f32.mrf.mxu0
    %v1473 = vadd.f32 %v227, %v1472
    %1474 = vmatmul.f32.gmra.mxu0 %v1296
    %v1475 = vpop.f32.mrf.mxu0
    %v1476 = vadd.f32 %v227, %v1475
    %1477 = vmatmul.f32.gmra.mxu0 %v1297
    %v1478 = vpop.f32.mrf.mxu0
    %v1479 = vadd.f32 %v227, %v1478
    %1480 = vmatmul.f32.gmra.mxu0 %v1298
    %v1481 = vpop.f32.mrf.mxu0
    %v1482 = vadd.f32 %v227, %v1481
    %1483 = vmatmul.f32.gmra.mxu0 %v1299
    %v1484 = vpop.f32.mrf.mxu0
    %v1485 = vadd.f32 %v227, %v1484
    %1486 = vmatmul.f32.gmra.mxu0 %v1300
    %v1487 = vpop.f32.mrf.mxu0
    %v1488 = vadd.f32 %v227, %v1487
    %1489 = vmatmul.f32.gmra.mxu0 %v1301
    %v1490 = vpop.f32.mrf.mxu0
    %v1491 = vadd.f32 %v227, %v1490
    %1492 = vmatmul.f32.gmra.mxu0 %v1302
    %v1493 = vpop.f32.mrf.mxu0
    %v1494 = vadd.f32 %v227, %v1493
    %1495 = vmatmul.f32.gmra.mxu0 %v1303
    %v1496 = vpop.f32.mrf.mxu0
    %v1497 = vadd.f32 %v227, %v1496
    %1498 = vmatmul.f32.gmra.mxu0 %v1304
    %v1499 = vpop.f32.mrf.mxu0
    %v1500 = vadd.f32 %v227, %v1499
    %1501 = vmatmul.f32.gmra.mxu0 %v1305
    %v1502 = vpop.f32.mrf.mxu0
    %v1503 = vadd.f32 %v227, %v1502
    %1504 = vmatmul.f32.gmra.mxu0 %v1306
    %v1505 = vpop.f32.mrf.mxu0
    %v1506 = vadd.f32 %v227, %v1505
    %1507 = vmatmul.f32.gmra.mxu0 %v1307
    %v1508 = vpop.f32.mrf.mxu0
    %v1509 = vadd.f32 %v227, %v1508
    %1510 = vmatmul.f32.gmra.mxu0 %v1308
    %v1511 = vpop.f32.mrf.mxu0
    %v1512 = vadd.f32 %v227, %v1511
    %1513 = vmatmul.f32.gmra.mxu0 %v1309
    %v1514 = vpop.f32.mrf.mxu0
    %v1515 = vadd.f32 %v227, %v1514
    %1516 = vmatmul.f32.gmra.mxu0 %v1310
    %v1517 = vpop.f32.mrf.mxu0
    %v1518 = vadd.f32 %v227, %v1517
    %1519 = vmatmul.f32.gmra.mxu0 %v1311
    %v1520 = vpop.f32.mrf.mxu0
    %v1521 = vadd.f32 %v227, %v1520
    %1522 = vmatmul.f32.gmra.mxu0 %v1312
    %v1523 = vpop.f32.mrf.mxu0
    %v1524 = vadd.f32 %v227, %v1523
    %1525 = vmatmul.f32.gmra.mxu0 %v1313
    %v1526 = vpop.f32.mrf.mxu0
    %v1527 = vadd.f32 %v227, %v1526
    %1528 = vmatmul.f32.gmra.mxu0 %v1314
    %v1529 = vpop.f32.mrf.mxu0
    %v1530 = vadd.f32 %v227, %v1529
    %1531 = vmatmul.f32.gmra.mxu0 %v1315
    %v1532 = vpop.f32.mrf.mxu0
    %v1533 = vadd.f32 %v227, %v1532
    %1534 = vmatmul.f32.gmra.mxu0 %v1316
    %v1535 = vpop.f32.mrf.mxu0
    %v1536 = vadd.f32 %v227, %v1535
    %1537 = vmatmul.f32.gmra.mxu0 %v1317
    %v1538 = vpop.f32.mrf.mxu0
    %v1539 = vadd.f32 %v227, %v1538
    %1540 = vmatmul.f32.gmra.mxu0 %v1318
    %v1541 = vpop.f32.mrf.mxu0
    %v1542 = vadd.f32 %v227, %v1541
    %1543 = vmatmul.f32.gmra.mxu0 %v1319
    %v1544 = vpop.f32.mrf.mxu0
    %v1545 = vadd.f32 %v227, %v1544
    %1546 = vmatmul.f32.gmra.mxu0 %v1320
    %v1547 = vpop.f32.mrf.mxu0
    %v1548 = vadd.f32 %v227, %v1547
    %1549 = vmatmul.f32.gmra.mxu0 %v1321
    %v1550 = vpop.f32.mrf.mxu0
    %v1551 = vadd.f32 %v227, %v1550
    %1552 = vmatmul.f32.gmra.mxu0 %v1322
    %v1553 = vpop.f32.mrf.mxu0
    %v1554 = vadd.f32 %v227, %v1553
    %1555 = vmatmul.f32.gmra.mxu0 %v1323
    %v1556 = vpop.f32.mrf.mxu0
    %v1557 = vadd.f32 %v227, %v1556
    %1558 = vmatmul.f32.gmra.mxu0 %v1324
    %v1559 = vpop.f32.mrf.mxu0
    %v1560 = vadd.f32 %v227, %v1559
    %1561 = vmatmul.f32.gmra.mxu0 %v1325
    %v1562 = vpop.f32.mrf.mxu0
    %v1563 = vadd.f32 %v227, %v1562
    %1564 = vmatmul.f32.gmra.mxu0 %v1326
    %v1565 = vpop.f32.mrf.mxu0
    %v1566 = vadd.f32 %v227, %v1565
    %1567 = vmatmul.f32.gmra.mxu0 %v1327
    %v1568 = vpop.f32.mrf.mxu0
    %v1569 = vadd.f32 %v227, %v1568
    %1570 = vmatmul.f32.gmra.mxu0 %v1328
    %v1571 = vpop.f32.mrf.mxu0
    %v1572 = vadd.f32 %v227, %v1571
    %1573 = vmatmul.f32.gmra.mxu0 %v1329
    %v1574 = vpop.f32.mrf.mxu0
    %v1575 = vadd.f32 %v227, %v1574
    %1576 = vmatmul.f32.gmra.mxu0 %v1330
    %v1577 = vpop.f32.mrf.mxu0
    %v1578 = vadd.f32 %v227, %v1577
    %1579 = vmatmul.f32.gmra.mxu0 %v1331
    %v1580 = vpop.f32.mrf.mxu0
    %v1581 = vadd.f32 %v227, %v1580
    %1582 = vmatmul.f32.gmra.mxu0 %v1332
    %v1583 = vpop.f32.mrf.mxu0
    %v1584 = vadd.f32 %v227, %v1583
    %1585 = vmatmul.f32.gmra.mxu0 %v1333
    %v1586 = vpop.f32.mrf.mxu0
    %v1587 = vadd.f32 %v227, %v1586
    %1588 = vmatmul.f32.gmra.mxu0 %v1334
    %v1589 = vpop.f32.mrf.mxu0
    %v1590 = vadd.f32 %v227, %v1589
    %1591 = vmatmul.f32.gmra.mxu0 %v1335
    %v1592 = vpop.f32.mrf.mxu0
    %v1593 = vadd.f32 %v227, %v1592
    %1594 = vmatmul.f32.gmra.mxu0 %v1336
    %v1595 = vpop.f32.mrf.mxu0
    %v1596 = vadd.f32 %v227, %v1595
    %1597 = vmatmul.f32.gmra.mxu0 %v1337
    %v1598 = vpop.f32.mrf.mxu0
    %v1599 = vadd.f32 %v227, %v1598
    %1600 = vmatmul.f32.gmra.mxu0 %v1338
    %v1601 = vpop.f32.mrf.mxu0
    %v1602 = vadd.f32 %v227, %v1601
    %1603 = vmatmul.f32.gmra.mxu0 %v1339
    %v1604 = vpop.f32.mrf.mxu0
    %v1605 = vadd.f32 %v227, %v1604
    %1606 = vmatmul.f32.gmra.mxu0 %v1340
    %v1607 = vpop.f32.mrf.mxu0
    %v1608 = vadd.f32 %v227, %v1607
    %1609 = vmatmul.f32.gmra.mxu0 %v1341
    %v1610 = vpop.f32.mrf.mxu0
    %v1611 = vadd.f32 %v227, %v1610
    %1612 = vmatmul.f32.gmra.mxu0 %v1342
    %v1613 = vpop.f32.mrf.mxu0
    %v1614 = vadd.f32 %v227, %v1613
    %1615 = vmatmul.f32.gmra.mxu0 %v1343
    %v1616 = vpop.f32.mrf.mxu0
    %v1617 = vadd.f32 %v227, %v1616
    %1618 = vmatmul.f32.gmra.mxu0 %v1344
    %v1619 = vpop.f32.mrf.mxu0
    %v1620 = vadd.f32 %v227, %v1619
    %1621 = vmatmul.f32.gmra.mxu0 %v1345
    %v1622 = vpop.f32.mrf.mxu0
    %v1623 = vadd.f32 %v227, %v1622
    %1624 = vmatmul.f32.gmra.mxu0 %v1346
    %v1625 = vpop.f32.mrf.mxu0
    %v1626 = vadd.f32 %v227, %v1625
    %1627 = vmatmul.f32.gmra.mxu0 %v1347
    %v1628 = vpop.f32.mrf.mxu0
    %v1629 = vadd.f32 %v227, %v1628
    %1630 = vmatmul.f32.gmra.mxu0 %v1348
    %v1631 = vpop.f32.mrf.mxu0
    %v1632 = vadd.f32 %v227, %v1631
    %1633 = vmatmul.f32.gmra.mxu0 %v1349
    %v1634 = vpop.f32.mrf.mxu0
    %v1635 = vadd.f32 %v227, %v1634
    %1636 = vmatmul.f32.gmra.mxu0 %v1350
    %v1637 = vpop.f32.mrf.mxu0
    %v1638 = vadd.f32 %v227, %v1637
    %1639 = vmatmul.f32.gmra.mxu0 %v1351
    %v1640 = vpop.f32.mrf.mxu0
    %v1641 = vadd.f32 %v227, %v1640
    %1642 = vmatmul.f32.gmra.mxu0 %v1352
    %v1643 = vpop.f32.mrf.mxu0
    %v1644 = vadd.f32 %v227, %v1643
    %1645 = vmatmul.f32.gmra.mxu0 %v1353
    %v1646 = vpop.f32.mrf.mxu0
    %v1647 = vadd.f32 %v227, %v1646
    %1648 = vmatmul.f32.gmra.mxu0 %v1354
    %v1649 = vpop.f32.mrf.mxu0
    %v1650 = vadd.f32 %v227, %v1649
    %1651 = vmatmul.f32.gmra.mxu0 %v1355
    %v1652 = vpop.f32.mrf.mxu0
    %v1653 = vadd.f32 %v227, %v1652
    %1654 = vmatmul.f32.gmra.mxu0 %v1356
    %v1655 = vpop.f32.mrf.mxu0
    %v1656 = vadd.f32 %v227, %v1655
    %1657 = vmatmul.f32.gmra.mxu0 %v1357
    %v1658 = vpop.f32.mrf.mxu0
    %v1659 = vadd.f32 %v227, %v1658
    %1660 = vmatmul.f32.gmra.mxu0 %v1358
    %v1661 = vpop.f32.mrf.mxu0
    %v1662 = vadd.f32 %v227, %v1661
    %1663 = vmatmul.f32.gmra.mxu0 %v1359
    %v1664 = vpop.f32.mrf.mxu0
    %v1665 = vadd.f32 %v227, %v1664
    %1666 = vmatmul.f32.gmra.mxu0 %v1360
    %v1667 = vpop.f32.mrf.mxu0
    %v1668 = vadd.f32 %v227, %v1667
    %1669 = vmatmul.f32.gmra.mxu0 %v1361
    %v1670 = vpop.f32.mrf.mxu0
    %v1671 = vadd.f32 %v227, %v1670
    %1672 = vmatmul.f32.gmra.mxu0 %v1362
    %v1673 = vpop.f32.mrf.mxu0
    %v1674 = vadd.f32 %v227, %v1673
    %1675 = vmatmul.f32.gmra.mxu0 %v1363
    %v1676 = vpop.f32.mrf.mxu0
    %v1677 = vadd.f32 %v227, %v1676
    %1678 = vmatmul.f32.gmra.mxu0 %v1364
    %v1679 = vpop.f32.mrf.mxu0
    %v1680 = vadd.f32 %v227, %v1679
    %1681 = vmatmul.f32.gmra.mxu0 %v1365
    %v1682 = vpop.f32.mrf.mxu0
    %v1683 = vadd.f32 %v227, %v1682
    %1684 = vmatmul.f32.gmra.mxu0 %v1366
    %v1685 = vpop.f32.mrf.mxu0
    %v1686 = vadd.f32 %v227, %v1685
    %1687 = vmatmul.f32.gmra.mxu0 %v1367
    %v1688 = vpop.f32.mrf.mxu0
    %v1689 = vadd.f32 %v227, %v1688
    %1690 = vmatmul.f32.gmra.mxu0 %v1368
    %v1691 = vpop.f32.mrf.mxu0
    %v1692 = vadd.f32 %v227, %v1691
    %1693 = vmatmul.f32.gmra.mxu0 %v1369
    %v1694 = vpop.f32.mrf.mxu0
    %v1695 = vadd.f32 %v227, %v1694
    %1696 = vmatmul.f32.gmra.mxu0 %v1370
    %v1697 = vpop.f32.mrf.mxu0
    %v1698 = vadd.f32 %v227, %v1697
    %1699 = vmatmul.f32.gmra.mxu0 %v1371
    %v1700 = vpop.f32.mrf.mxu0
    %v1701 = vadd.f32 %v227, %v1700
    %1702 = vmatmul.f32.gmra.mxu0 %v1372
    %v1703 = vpop.f32.mrf.mxu0
    %v1704 = vadd.f32 %v227, %v1703
    %1705 = vmatmul.f32.gmra.mxu0 %v1373
    %v1706 = vpop.f32.mrf.mxu0
    %v1707 = vadd.f32 %v227, %v1706
    %1708 = vmatmul.f32.gmra.mxu0 %v1374
    %v1709 = vpop.f32.mrf.mxu0
    %v1710 = vadd.f32 %v227, %v1709
    %1711 = vmatmul.f32.gmra.mxu0 %v1375
    %v1712 = vpop.f32.mrf.mxu0
    %v1713 = vadd.f32 %v227, %v1712
    %1714 = vmatmul.f32.gmra.mxu0 %v1376
    %v1715 = vpop.f32.mrf.mxu0
    %v1716 = vadd.f32 %v227, %v1715
    %1717 = vmatmul.f32.gmra.mxu0 %v1377
    %v1718 = vpop.f32.mrf.mxu0
    %v1719 = vadd.f32 %v227, %v1718
    %1720 = vmatmul.f32.gmra.mxu0 %v1378
    %v1721 = vpop.f32.mrf.mxu0
    %v1722 = vadd.f32 %v227, %v1721
    %1723 = vmatmul.f32.gmra.mxu0 %v1379
    %v1724 = vpop.f32.mrf.mxu0
    %v1725 = vadd.f32 %v227, %v1724
    %1726 = vmatmul.f32.gmra.mxu0 %v1380
    %v1727 = vpop.f32.mrf.mxu0
    %v1728 = vadd.f32 %v227, %v1727
    %1729 = vmatmul.f32.gmra.mxu0 %v1381
    %v1730 = vpop.f32.mrf.mxu0
    %v1731 = vadd.f32 %v227, %v1730
    %1732 = vmatmul.f32.gmra.mxu0 %v1382
    %v1733 = vpop.f32.mrf.mxu0
    %v1734 = vadd.f32 %v227, %v1733
    %1735 = vmatmul.f32.gmra.mxu0 %v1383
    %v1736 = vpop.f32.mrf.mxu0
    %v1737 = vadd.f32 %v227, %v1736
    %1738 = vmatmul.f32.gmra.mxu0 %v1384
    %v1739 = vpop.f32.mrf.mxu0
    %v1740 = vadd.f32 %v227, %v1739
    %1741 = vmatmul.f32.gmra.mxu0 %v1385
    %v1742 = vpop.f32.mrf.mxu0
    %v1743 = vadd.f32 %v227, %v1742
    %1744 = vmatmul.f32.gmra.mxu0 %v1386
    %v1745 = vpop.f32.mrf.mxu0
    %v1746 = vadd.f32 %v227, %v1745
    %1747 = vmatmul.f32.gmra.mxu0 %v1387
    %v1748 = vpop.f32.mrf.mxu0
    %v1749 = vadd.f32 %v227, %v1748
    %1750 = vmatmul.f32.gmra.mxu0 %v1388
    %v1751 = vpop.f32.mrf.mxu0
    %v1752 = vadd.f32 %v227, %v1751
    %1753 = vmatmul.f32.gmra.mxu0 %v1389
    %v1754 = vpop.f32.mrf.mxu0
    %v1755 = vadd.f32 %v227, %v1754
    %1756 = vmatmul.f32.gmra.mxu0 %v1390
    %v1757 = vpop.f32.mrf.mxu0
    %v1758 = vadd.f32 %v227, %v1757
    %1759 = vmatmul.f32.gmra.mxu0 %v1391
    %v1760 = vpop.f32.mrf.mxu0
    %v1761 = vadd.f32 %v227, %v1760
    %1762 = vmatmul.f32.gmra.mxu0 %v1392
    %v1763 = vpop.f32.mrf.mxu0
    %v1764 = vadd.f32 %v227, %v1763
    %1765 = vmatmul.f32.gmra.mxu0 %v1393
    %v1766 = vpop.f32.mrf.mxu0
    %v1767 = vadd.f32 %v227, %v1766
    %1768 = vmatmul.f32.gmra.mxu0 %v1394
    %v1769 = vpop.f32.mrf.mxu0
    %v1770 = vadd.f32 %v227, %v1769
    %1771 = vmatmul.f32.gmra.mxu0 %v1395
    %v1772 = vpop.f32.mrf.mxu0
    %v1773 = vadd.f32 %v227, %v1772
    %1774 = vmatmul.f32.gmra.mxu0 %v1396
    %v1775 = vpop.f32.mrf.mxu0
    %v1776 = vadd.f32 %v227, %v1775
    %1777 = vmatmul.f32.gmra.mxu0 %v1397
    %v1778 = vpop.f32.mrf.mxu0
    %v1779 = vadd.f32 %v227, %v1778
    %1780 = vmatmul.f32.gmra.mxu0 %v1398
    %v1781 = vpop.f32.mrf.mxu0
    %v1782 = vadd.f32 %v227, %v1781
    %1783 = vmatmul.f32.gmra.mxu0 %v1399
    %v1784 = vpop.f32.mrf.mxu0
    %v1785 = vadd.f32 %v227, %v1784
    %1786 = vmatmul.f32.gmra.mxu0 %v1400
    %v1787 = vpop.f32.mrf.mxu0
    %v1788 = vadd.f32 %v227, %v1787
    %1789 = vmatmul.f32.gmra.mxu0 %v1401
    %v1790 = vpop.f32.mrf.mxu0
    %v1791 = vadd.f32 %v227, %v1790
    %1792 = vmatmul.f32.gmra.mxu0 %v1402
    %v1793 = vpop.f32.mrf.mxu0
    %v1794 = vadd.f32 %v227, %v1793
    %1795 = vmatmul.f32.gmra.mxu0 %v1403
    %v1796 = vpop.f32.mrf.mxu0
    %v1797 = vadd.f32 %v227, %v1796
    %1798 = vmatmul.f32.gmra.mxu0 %v1404
    %v1799 = vpop.f32.mrf.mxu0
    %v1800 = vadd.f32 %v227, %v1799
    %1801 = vmatmul.f32.gmra.mxu0 %v1405
    %v1802 = vpop.f32.mrf.mxu0
    %v1803 = vadd.f32 %v227, %v1802
    %1804 = vmatmul.f32.gmra.mxu0 %v1406
    %v1805 = vpop.f32.mrf.mxu0
    %v1806 = vadd.f32 %v227, %v1805
    %1807 = vdwg.mxu0
    %v1808 = vtanh.pop %v1425
    %v1809 = vtanh.pop %v1428
    %v1810 = vtanh.pop %v1431
    %v1811 = vtanh.pop %v1434
    %v1812 = vtanh.pop %v1437
    %v1813 = vtanh.pop %v1440
    %v1814 = vtanh.pop %v1443
    %v1815 = vtanh.pop %v1446
    %v1816 = vtanh.pop %v1449
    %v1817 = vtanh.pop %v1452
    %v1818 = vtanh.pop %v1455
    %v1819 = vtanh.pop %v1458
    %v1820 = vtanh.pop %v1461
    %v1821 = vtanh.pop %v1464
    %v1822 = vtanh.pop %v1467
    %v1823 = vtanh.pop %v1470
    %v1824 = vtanh.pop %v1473
    %v1825 = vtanh.pop %v1476
    %v1826 = vtanh.pop %v1479
    %v1827 = vtanh.pop %v1482
    %v1828 = vtanh.pop %v1485
    %v1829 = vtanh.pop %v1488
    %v1830 = vtanh.pop %v1491
    %v1831 = vtanh.pop %v1494
    %v1832 = vtanh.pop %v1497
    %v1833 = vtanh.pop %v1500
    %v1834 = vtanh.pop %v1503
    %v1835 = vtanh.pop %v1506
    %v1836 = vtanh.pop %v1509
    %v1837 = vtanh.pop %v1512
    %v1838 = vtanh.pop %v1515
    %v1839 = vtanh.pop %v1518
    %v1840 = vtanh.pop %v1521
    %v1841 = vtanh.pop %v1524
    %v1842 = vtanh.pop %v1527
    %v1843 = vtanh.pop %v1530
    %v1844 = vtanh.pop %v1533
    %v1845 = vtanh.pop %v1536
    %v1846 = vtanh.pop %v1539
    %v1847 = vtanh.pop %v1542
    %v1848 = vtanh.pop %v1545
    %v1849 = vtanh.pop %v1548
    %v1850 = vtanh.pop %v1551
    %v1851 = vtanh.pop %v1554
    %v1852 = vtanh.pop %v1557
    %v1853 = vtanh.pop %v1560
    %v1854 = vtanh.pop %v1563
    %v1855 = vtanh.pop %v1566
    %v1856 = vtanh.pop %v1569
    %v1857 = vtanh.pop %v1572
    %v1858 = vtanh.pop %v1575
    %v1859 = vtanh.pop %v1578
    %v1860 = vtanh.pop %v1581
    %v1861 = vtanh.pop %v1584
    %v1862 = vtanh.pop %v1587
    %v1863 = vtanh.pop %v1590
    %v1864 = vtanh.pop %v1593
    %v1865 = vtanh.pop %v1596
    %v1866 = vtanh.pop %v1599
    %v1867 = vtanh.pop %v1602
    %v1868 = vtanh.pop %v1605
    %v1869 = vtanh.pop %v1608
    %v1870 = vtanh.pop %v1611
    %v1871 = vtanh.pop %v1614
    %v1872 = vtanh.pop %v1617
    %v1873 = vtanh.pop %v1620
    %v1874 = vtanh.pop %v1623
    %v1875 = vtanh.pop %v1626
    %v1876 = vtanh.pop %v1629
    %v1877 = vtanh.pop %v1632
    %v1878 = vtanh.pop %v1635
    %v1879 = vtanh.pop %v1638
    %v1880 = vtanh.pop %v1641
    %v1881 = vtanh.pop %v1644
    %v1882 = vtanh.pop %v1647
    %v1883 = vtanh.pop %v1650
    %v1884 = vtanh.pop %v1653
    %v1885 = vtanh.pop %v1656
    %v1886 = vtanh.pop %v1659
    %v1887 = vtanh.pop %v1662
    %v1888 = vtanh.pop %v1665
    %v1889 = vtanh.pop %v1668
    %v1890 = vtanh.pop %v1671
    %v1891 = vtanh.pop %v1674
    %v1892 = vtanh.pop %v1677
    %v1893 = vtanh.pop %v1680
    %v1894 = vtanh.pop %v1683
    %v1895 = vtanh.pop %v1686
    %v1896 = vtanh.pop %v1689
    %v1897 = vtanh.pop %v1692
    %v1898 = vtanh.pop %v1695
    %v1899 = vtanh.pop %v1698
    %v1900 = vtanh.pop %v1701
    %v1901 = vtanh.pop %v1704
    %v1902 = vtanh.pop %v1707
    %v1903 = vtanh.pop %v1710
    %v1904 = vtanh.pop %v1713
    %v1905 = vtanh.pop %v1716
    %v1906 = vtanh.pop %v1719
    %v1907 = vtanh.pop %v1722
    %v1908 = vtanh.pop %v1725
    %v1909 = vtanh.pop %v1728
    %v1910 = vtanh.pop %v1731
    %v1911 = vtanh.pop %v1734
    %v1912 = vtanh.pop %v1737
    %v1913 = vtanh.pop %v1740
    %v1914 = vtanh.pop %v1743
    %v1915 = vtanh.pop %v1746
    %v1916 = vtanh.pop %v1749
    %v1917 = vtanh.pop %v1752
    %v1918 = vtanh.pop %v1755
    %v1919 = vtanh.pop %v1758
    %v1920 = vtanh.pop %v1761
    %v1921 = vtanh.pop %v1764
    %v1922 = vtanh.pop %v1767
    %v1923 = vtanh.pop %v1770
    %v1924 = vtanh.pop %v1773
    %v1925 = vtanh.pop %v1776
    %v1926 = vtanh.pop %v1779
    %v1927 = vtanh.pop %v1782
    %v1928 = vtanh.pop %v1785
    %v1929 = vtanh.pop %v1788
    %v1930 = vtanh.pop %v1791
    %v1931 = vtanh.pop %v1794
    %v1932 = vtanh.pop %v1797
    %v1933 = vtanh.pop %v1800
    %v1934 = vtanh.pop %v1803
    %v1935 = vtanh.pop %v1806
    %v1936 = vmul.f32 %v1808, %v759
    %v1937 = vmul.f32 %v1809, %v759
    %v1938 = vmul.f32 %v1810, %v759
    %v1939 = vmul.f32 %v1811, %v759
    %v1940 = vmul.f32 %v1812, %v759
    %v1941 = vmul.f32 %v1813, %v759
    %v1942 = vmul.f32 %v1814, %v759
    %v1943 = vmul.f32 %v1815, %v759
    %v1944 = vmul.f32 %v1816, %v759
    %v1945 = vmul.f32 %v1817, %v759
    %v1946 = vmul.f32 %v1818, %v759
    %v1947 = vmul.f32 %v1819, %v759
    %v1948 = vmul.f32 %v1820, %v759
    %v1949 = vmul.f32 %v1821, %v759
    %v1950 = vmul.f32 %v1822, %v759
    %v1951 = vmul.f32 %v1823, %v759
    %v1952 = vmul.f32 %v1824, %v759
    %v1953 = vmul.f32 %v1825, %v759
    %v1954 = vmul.f32 %v1826, %v759
    %v1955 = vmul.f32 %v1827, %v759
    %v1956 = vmul.f32 %v1828, %v759
    %v1957 = vmul.f32 %v1829, %v759
    %v1958 = vmul.f32 %v1830, %v759
    %v1959 = vmul.f32 %v1831, %v759
    %v1960 = vmul.f32 %v1832, %v759
    %v1961 = vmul.f32 %v1833, %v759
    %v1962 = vmul.f32 %v1834, %v759
    %v1963 = vmul.f32 %v1835, %v759
    %v1964 = vmul.f32 %v1836, %v759
    %v1965 = vmul.f32 %v1837, %v759
    %v1966 = vmul.f32 %v1838, %v759
    %v1967 = vmul.f32 %v1839, %v759
    %v1968 = vmul.f32 %v1840, %v759
    %v1969 = vmul.f32 %v1841, %v759
    %v1970 = vmul.f32 %v1842, %v759
    %v1971 = vmul.f32 %v1843, %v759
    %v1972 = vmul.f32 %v1844, %v759
    %v1973 = vmul.f32 %v1845, %v759
    %v1974 = vmul.f32 %v1846, %v759
    %v1975 = vmul.f32 %v1847, %v759
    %v1976 = vmul.f32 %v1848, %v759
    %v1977 = vmul.f32 %v1849, %v759
    %v1978 = vmul.f32 %v1850, %v759
    %v1979 = vmul.f32 %v1851, %v759
    %v1980 = vmul.f32 %v1852, %v759
    %v1981 = vmul.f32 %v1853, %v759
    %v1982 = vmul.f32 %v1854, %v759
    %v1983 = vmul.f32 %v1855, %v759
    %v1984 = vmul.f32 %v1856, %v759
    %v1985 = vmul.f32 %v1857, %v759
    %v1986 = vmul.f32 %v1858, %v759
    %v1987 = vmul.f32 %v1859, %v759
    %v1988 = vmul.f32 %v1860, %v759
    %v1989 = vmul.f32 %v1861, %v759
    %v1990 = vmul.f32 %v1862, %v759
    %v1991 = vmul.f32 %v1863, %v759
    %v1992 = vmul.f32 %v1864, %v759
    %v1993 = vmul.f32 %v1865, %v759
    %v1994 = vmul.f32 %v1866, %v759
    %v1995 = vmul.f32 %v1867, %v759
    %v1996 = vmul.f32 %v1868, %v759
    %v1997 = vmul.f32 %v1869, %v759
    %v1998 = vmul.f32 %v1870, %v759
    %v1999 = vmul.f32 %v1871, %v759
    %v2000 = vmul.f32 %v1872, %v759
    %v2001 = vmul.f32 %v1873, %v759
    %v2002 = vmul.f32 %v1874, %v759
    %v2003 = vmul.f32 %v1875, %v759
    %v2004 = vmul.f32 %v1876, %v759
    %v2005 = vmul.f32 %v1877, %v759
    %v2006 = vmul.f32 %v1878, %v759
    %v2007 = vmul.f32 %v1879, %v759
    %v2008 = vmul.f32 %v1880, %v759
    %v2009 = vmul.f32 %v1881, %v759
    %v2010 = vmul.f32 %v1882, %v759
    %v2011 = vmul.f32 %v1883, %v759
    %v2012 = vmul.f32 %v1884, %v759
    %v2013 = vmul.f32 %v1885, %v759
    %v2014 = vmul.f32 %v1886, %v759
    %v2015 = vmul.f32 %v1887, %v759
    %v2016 = vmul.f32 %v1888, %v759
    %v2017 = vmul.f32 %v1889, %v759
    %v2018 = vmul.f32 %v1890, %v759
    %v2019 = vmul.f32 %v1891, %v759
    %v2020 = vmul.f32 %v1892, %v759
    %v2021 = vmul.f32 %v1893, %v759
    %v2022 = vmul.f32 %v1894, %v759
    %v2023 = vmul.f32 %v1895, %v759
    %v2024 = vmul.f32 %v1896, %v759
    %v2025 = vmul.f32 %v1897, %v759
    %v2026 = vmul.f32 %v1898, %v759
    %v2027 = vmul.f32 %v1899, %v759
    %v2028 = vmul.f32 %v1900, %v759
    %v2029 = vmul.f32 %v1901, %v759
    %v2030 = vmul.f32 %v1902, %v759
    %v2031 = vmul.f32 %v1903, %v759
    %v2032 = vmul.f32 %v1904, %v759
    %v2033 = vmul.f32 %v1905, %v759
    %v2034 = vmul.f32 %v1906, %v759
    %v2035 = vmul.f32 %v1907, %v759
    %v2036 = vmul.f32 %v1908, %v759
    %v2037 = vmul.f32 %v1909, %v759
    %v2038 = vmul.f32 %v1910, %v759
    %v2039 = vmul.f32 %v1911, %v759
    %v2040 = vmul.f32 %v1912, %v759
    %v2041 = vmul.f32 %v1913, %v759
    %v2042 = vmul.f32 %v1914, %v759
    %v2043 = vmul.f32 %v1915, %v759
    %v2044 = vmul.f32 %v1916, %v759
    %v2045 = vmul.f32 %v1917, %v759
    %v2046 = vmul.f32 %v1918, %v759
    %v2047 = vmul.f32 %v1919, %v759
    %v2048 = vmul.f32 %v1920, %v759
    %v2049 = vmul.f32 %v1921, %v759
    %v2050 = vmul.f32 %v1922, %v759
    %v2051 = vmul.f32 %v1923, %v759
    %v2052 = vmul.f32 %v1924, %v759
    %v2053 = vmul.f32 %v1925, %v759
    %v2054 = vmul.f32 %v1926, %v759
    %v2055 = vmul.f32 %v1927, %v759
    %v2056 = vmul.f32 %v1928, %v759
    %v2057 = vmul.f32 %v1929, %v759
    %v2058 = vmul.f32 %v1930, %v759
    %v2059 = vmul.f32 %v1931, %v759
    %v2060 = vmul.f32 %v1932, %v759
    %v2061 = vmul.f32 %v1933, %v759
    %v2062 = vmul.f32 %v1934, %v759
    %v2063 = vmul.f32 %v1935, %v759
    %2064 = vadd.xlane.f32.xlu0 %v1936
    %v2065 = vpop.xlane.xlu0 %2064
    %2066 = vadd.xlane.f32.xlu0 %v1937
    %v2067 = vpop.xlane.xlu0 %2066
    %2068 = vadd.xlane.f32.xlu0 %v1938
    %v2069 = vpop.xlane.xlu0 %2068
    %2070 = vadd.xlane.f32.xlu0 %v1939
    %v2071 = vpop.xlane.xlu0 %2070
    %2072 = vadd.xlane.f32.xlu0 %v1940
    %v2073 = vpop.xlane.xlu0 %2072
    %2074 = vadd.xlane.f32.xlu0 %v1941
    %v2075 = vpop.xlane.xlu0 %2074
    %2076 = vadd.xlane.f32.xlu0 %v1942
    %v2077 = vpop.xlane.xlu0 %2076
    %2078 = vadd.xlane.f32.xlu0 %v1943
    %v2079 = vpop.xlane.xlu0 %2078
    %2080 = vadd.xlane.f32.xlu0 %v1944
    %v2081 = vpop.xlane.xlu0 %2080
    %2082 = vadd.xlane.f32.xlu0 %v1945
    %v2083 = vpop.xlane.xlu0 %2082
    %2084 = vadd.xlane.f32.xlu0 %v1946
    %v2085 = vpop.xlane.xlu0 %2084
    %2086 = vadd.xlane.f32.xlu0 %v1947
    %v2087 = vpop.xlane.xlu0 %2086
    %2088 = vadd.xlane.f32.xlu0 %v1948
    %v2089 = vpop.xlane.xlu0 %2088
    %2090 = vadd.xlane.f32.xlu0 %v1949
    %v2091 = vpop.xlane.xlu0 %2090
    %2092 = vadd.xlane.f32.xlu0 %v1950
    %v2093 = vpop.xlane.xlu0 %2092
    %2094 = vadd.xlane.f32.xlu0 %v1951
    %v2095 = vpop.xlane.xlu0 %2094
    %2096 = vadd.xlane.f32.xlu0 %v1952
    %v2097 = vpop.xlane.xlu0 %2096
    %2098 = vadd.xlane.f32.xlu0 %v1953
    %v2099 = vpop.xlane.xlu0 %2098
    %2100 = vadd.xlane.f32.xlu0 %v1954
    %v2101 = vpop.xlane.xlu0 %2100
    %2102 = vadd.xlane.f32.xlu0 %v1955
    %v2103 = vpop.xlane.xlu0 %2102
    %2104 = vadd.xlane.f32.xlu0 %v1956
    %v2105 = vpop.xlane.xlu0 %2104
    %2106 = vadd.xlane.f32.xlu0 %v1957
    %v2107 = vpop.xlane.xlu0 %2106
    %2108 = vadd.xlane.f32.xlu0 %v1958
    %v2109 = vpop.xlane.xlu0 %2108
    %2110 = vadd.xlane.f32.xlu0 %v1959
    %v2111 = vpop.xlane.xlu0 %2110
    %2112 = vadd.xlane.f32.xlu0 %v1960
    %v2113 = vpop.xlane.xlu0 %2112
    %2114 = vadd.xlane.f32.xlu0 %v1961
    %v2115 = vpop.xlane.xlu0 %2114
    %2116 = vadd.xlane.f32.xlu0 %v1962
    %v2117 = vpop.xlane.xlu0 %2116
    %2118 = vadd.xlane.f32.xlu0 %v1963
    %v2119 = vpop.xlane.xlu0 %2118
    %2120 = vadd.xlane.f32.xlu0 %v1964
    %v2121 = vpop.xlane.xlu0 %2120
    %2122 = vadd.xlane.f32.xlu0 %v1965
    %v2123 = vpop.xlane.xlu0 %2122
    %2124 = vadd.xlane.f32.xlu0 %v1966
    %v2125 = vpop.xlane.xlu0 %2124
    %2126 = vadd.xlane.f32.xlu0 %v1967
    %v2127 = vpop.xlane.xlu0 %2126
    %2128 = vadd.xlane.f32.xlu0 %v1968
    %v2129 = vpop.xlane.xlu0 %2128
    %2130 = vadd.xlane.f32.xlu0 %v1969
    %v2131 = vpop.xlane.xlu0 %2130
    %2132 = vadd.xlane.f32.xlu0 %v1970
    %v2133 = vpop.xlane.xlu0 %2132
    %2134 = vadd.xlane.f32.xlu0 %v1971
    %v2135 = vpop.xlane.xlu0 %2134
    %2136 = vadd.xlane.f32.xlu0 %v1972
    %v2137 = vpop.xlane.xlu0 %2136
    %2138 = vadd.xlane.f32.xlu0 %v1973
    %v2139 = vpop.xlane.xlu0 %2138
    %2140 = vadd.xlane.f32.xlu0 %v1974
    %v2141 = vpop.xlane.xlu0 %2140
    %2142 = vadd.xlane.f32.xlu0 %v1975
    %v2143 = vpop.xlane.xlu0 %2142
    %2144 = vadd.xlane.f32.xlu0 %v1976
    %v2145 = vpop.xlane.xlu0 %2144
    %2146 = vadd.xlane.f32.xlu0 %v1977
    %v2147 = vpop.xlane.xlu0 %2146
    %2148 = vadd.xlane.f32.xlu0 %v1978
    %v2149 = vpop.xlane.xlu0 %2148
    %2150 = vadd.xlane.f32.xlu0 %v1979
    %v2151 = vpop.xlane.xlu0 %2150
    %2152 = vadd.xlane.f32.xlu0 %v1980
    %v2153 = vpop.xlane.xlu0 %2152
    %2154 = vadd.xlane.f32.xlu0 %v1981
    %v2155 = vpop.xlane.xlu0 %2154
    %2156 = vadd.xlane.f32.xlu0 %v1982
    %v2157 = vpop.xlane.xlu0 %2156
    %2158 = vadd.xlane.f32.xlu0 %v1983
    %v2159 = vpop.xlane.xlu0 %2158
    %2160 = vadd.xlane.f32.xlu0 %v1984
    %v2161 = vpop.xlane.xlu0 %2160
    %2162 = vadd.xlane.f32.xlu0 %v1985
    %v2163 = vpop.xlane.xlu0 %2162
    %2164 = vadd.xlane.f32.xlu0 %v1986
    %v2165 = vpop.xlane.xlu0 %2164
    %2166 = vadd.xlane.f32.xlu0 %v1987
    %v2167 = vpop.xlane.xlu0 %2166
    %2168 = vadd.xlane.f32.xlu0 %v1988
    %v2169 = vpop.xlane.xlu0 %2168
    %2170 = vadd.xlane.f32.xlu0 %v1989
    %v2171 = vpop.xlane.xlu0 %2170
    %2172 = vadd.xlane.f32.xlu0 %v1990
    %v2173 = vpop.xlane.xlu0 %2172
    %2174 = vadd.xlane.f32.xlu0 %v1991
    %v2175 = vpop.xlane.xlu0 %2174
    %2176 = vadd.xlane.f32.xlu0 %v1992
    %v2177 = vpop.xlane.xlu0 %2176
    %2178 = vadd.xlane.f32.xlu0 %v1993
    %v2179 = vpop.xlane.xlu0 %2178
    %2180 = vadd.xlane.f32.xlu0 %v1994
    %v2181 = vpop.xlane.xlu0 %2180
    %2182 = vadd.xlane.f32.xlu0 %v1995
    %v2183 = vpop.xlane.xlu0 %2182
    %2184 = vadd.xlane.f32.xlu0 %v1996
    %v2185 = vpop.xlane.xlu0 %2184
    %2186 = vadd.xlane.f32.xlu0 %v1997
    %v2187 = vpop.xlane.xlu0 %2186
    %2188 = vadd.xlane.f32.xlu0 %v1998
    %v2189 = vpop.xlane.xlu0 %2188
    %2190 = vadd.xlane.f32.xlu0 %v1999
    %v2191 = vpop.xlane.xlu0 %2190
    %2192 = vadd.xlane.f32.xlu0 %v2000
    %v2193 = vpop.xlane.xlu0 %2192
    %2194 = vadd.xlane.f32.xlu0 %v2001
    %v2195 = vpop.xlane.xlu0 %2194
    %2196 = vadd.xlane.f32.xlu0 %v2002
    %v2197 = vpop.xlane.xlu0 %2196
    %2198 = vadd.xlane.f32.xlu0 %v2003
    %v2199 = vpop.xlane.xlu0 %2198
    %2200 = vadd.xlane.f32.xlu0 %v2004
    %v2201 = vpop.xlane.xlu0 %2200
    %2202 = vadd.xlane.f32.xlu0 %v2005
    %v2203 = vpop.xlane.xlu0 %2202
    %2204 = vadd.xlane.f32.xlu0 %v2006
    %v2205 = vpop.xlane.xlu0 %2204
    %2206 = vadd.xlane.f32.xlu0 %v2007
    %v2207 = vpop.xlane.xlu0 %2206
    %2208 = vadd.xlane.f32.xlu0 %v2008
    %v2209 = vpop.xlane.xlu0 %2208
    %2210 = vadd.xlane.f32.xlu0 %v2009
    %v2211 = vpop.xlane.xlu0 %2210
    %2212 = vadd.xlane.f32.xlu0 %v2010
    %v2213 = vpop.xlane.xlu0 %2212
    %2214 = vadd.xlane.f32.xlu0 %v2011
    %v2215 = vpop.xlane.xlu0 %2214
    %2216 = vadd.xlane.f32.xlu0 %v2012
    %v2217 = vpop.xlane.xlu0 %2216
    %2218 = vadd.xlane.f32.xlu0 %v2013
    %v2219 = vpop.xlane.xlu0 %2218
    %2220 = vadd.xlane.f32.xlu0 %v2014
    %v2221 = vpop.xlane.xlu0 %2220
    %2222 = vadd.xlane.f32.xlu0 %v2015
    %v2223 = vpop.xlane.xlu0 %2222
    %2224 = vadd.xlane.f32.xlu0 %v2016
    %v2225 = vpop.xlane.xlu0 %2224
    %2226 = vadd.xlane.f32.xlu0 %v2017
    %v2227 = vpop.xlane.xlu0 %2226
    %2228 = vadd.xlane.f32.xlu0 %v2018
    %v2229 = vpop.xlane.xlu0 %2228
    %2230 = vadd.xlane.f32.xlu0 %v2019
    %v2231 = vpop.xlane.xlu0 %2230
    %2232 = vadd.xlane.f32.xlu0 %v2020
    %v2233 = vpop.xlane.xlu0 %2232
    %2234 = vadd.xlane.f32.xlu0 %v2021
    %v2235 = vpop.xlane.xlu0 %2234
    %2236 = vadd.xlane.f32.xlu0 %v2022
    %v2237 = vpop.xlane.xlu0 %2236
    %2238 = vadd.xlane.f32.xlu0 %v2023
    %v2239 = vpop.xlane.xlu0 %2238
    %2240 = vadd.xlane.f32.xlu0 %v2024
    %v2241 = vpop.xlane.xlu0 %2240
    %2242 = vadd.xlane.f32.xlu0 %v2025
    %v2243 = vpop.xlane.xlu0 %2242
    %2244 = vadd.xlane.f32.xlu0 %v2026
    %v2245 = vpop.xlane.xlu0 %2244
    %2246 = vadd.xlane.f32.xlu0 %v2027
    %v2247 = vpop.xlane.xlu0 %2246
    %2248 = vadd.xlane.f32.xlu0 %v2028
    %v2249 = vpop.xlane.xlu0 %2248
    %2250 = vadd.xlane.f32.xlu0 %v2029
    %v2251 = vpop.xlane.xlu0 %2250
    %2252 = vadd.xlane.f32.xlu0 %v2030
    %v2253 = vpop.xlane.xlu0 %2252
    %2254 = vadd.xlane.f32.xlu0 %v2031
    %v2255 = vpop.xlane.xlu0 %2254
    %2256 = vadd.xlane.f32.xlu0 %v2032
    %v2257 = vpop.xlane.xlu0 %2256
    %2258 = vadd.xlane.f32.xlu0 %v2033
    %v2259 = vpop.xlane.xlu0 %2258
    %2260 = vadd.xlane.f32.xlu0 %v2034
    %v2261 = vpop.xlane.xlu0 %2260
    %2262 = vadd.xlane.f32.xlu0 %v2035
    %v2263 = vpop.xlane.xlu0 %2262
    %2264 = vadd.xlane.f32.xlu0 %v2036
    %v2265 = vpop.xlane.xlu0 %2264
    %2266 = vadd.xlane.f32.xlu0 %v2037
    %v2267 = vpop.xlane.xlu0 %2266
    %2268 = vadd.xlane.f32.xlu0 %v2038
    %v2269 = vpop.xlane.xlu0 %2268
    %2270 = vadd.xlane.f32.xlu0 %v2039
    %v2271 = vpop.xlane.xlu0 %2270
    %2272 = vadd.xlane.f32.xlu0 %v2040
    %v2273 = vpop.xlane.xlu0 %2272
    %2274 = vadd.xlane.f32.xlu0 %v2041
    %v2275 = vpop.xlane.xlu0 %2274
    %2276 = vadd.xlane.f32.xlu0 %v2042
    %v2277 = vpop.xlane.xlu0 %2276
    %2278 = vadd.xlane.f32.xlu0 %v2043
    %v2279 = vpop.xlane.xlu0 %2278
    %2280 = vadd.xlane.f32.xlu0 %v2044
    %v2281 = vpop.xlane.xlu0 %2280
    %2282 = vadd.xlane.f32.xlu0 %v2045
    %v2283 = vpop.xlane.xlu0 %2282
    %2284 = vadd.xlane.f32.xlu0 %v2046
    %v2285 = vpop.xlane.xlu0 %2284
    %2286 = vadd.xlane.f32.xlu0 %v2047
    %v2287 = vpop.xlane.xlu0 %2286
    %2288 = vadd.xlane.f32.xlu0 %v2048
    %v2289 = vpop.xlane.xlu0 %2288
    %2290 = vadd.xlane.f32.xlu0 %v2049
    %v2291 = vpop.xlane.xlu0 %2290
    %2292 = vadd.xlane.f32.xlu0 %v2050
    %v2293 = vpop.xlane.xlu0 %2292
    %2294 = vadd.xlane.f32.xlu0 %v2051
    %v2295 = vpop.xlane.xlu0 %2294
    %2296 = vadd.xlane.f32.xlu0 %v2052
    %v2297 = vpop.xlane.xlu0 %2296
    %2298 = vadd.xlane.f32.xlu0 %v2053
    %v2299 = vpop.xlane.xlu0 %2298
    %2300 = vadd.xlane.f32.xlu0 %v2054
    %v2301 = vpop.xlane.xlu0 %2300
    %2302 = vadd.xlane.f32.xlu0 %v2055
    %v2303 = vpop.xlane.xlu0 %2302
    %2304 = vadd.xlane.f32.xlu0 %v2056
    %v2305 = vpop.xlane.xlu0 %2304
    %2306 = vadd.xlane.f32.xlu0 %v2057
    %v2307 = vpop.xlane.xlu0 %2306
    %2308 = vadd.xlane.f32.xlu0 %v2058
    %v2309 = vpop.xlane.xlu0 %2308
    %2310 = vadd.xlane.f32.xlu0 %v2059
    %v2311 = vpop.xlane.xlu0 %2310
    %2312 = vadd.xlane.f32.xlu0 %v2060
    %v2313 = vpop.xlane.xlu0 %2312
    %2314 = vadd.xlane.f32.xlu0 %v2061
    %v2315 = vpop.xlane.xlu0 %2314
    %2316 = vadd.xlane.f32.xlu0 %v2062
    %v2317 = vpop.xlane.xlu0 %2316
    %2318 = vadd.xlane.f32.xlu0 %v2063
    %v2319 = vpop.xlane.xlu0 %2318
    %v2320 = vadd.f32 %v2065, %v2067
    %v2321 = vadd.f32 %v2320, %v2069
    %v2322 = vadd.f32 %v2321, %v2071
    %v2323 = vadd.f32 %v2322, %v2073
    %v2324 = vadd.f32 %v2323, %v2075
    %v2325 = vadd.f32 %v2324, %v2077
    %v2326 = vadd.f32 %v2325, %v2079
    %v2327 = vadd.f32 %v2326, %v2081
    %v2328 = vadd.f32 %v2327, %v2083
    %v2329 = vadd.f32 %v2328, %v2085
    %v2330 = vadd.f32 %v2329, %v2087
    %v2331 = vadd.f32 %v2330, %v2089
    %v2332 = vadd.f32 %v2331, %v2091
    %v2333 = vadd.f32 %v2332, %v2093
    %v2334 = vadd.f32 %v2333, %v2095
    %v2335 = vadd.f32 %v2334, %v2097
    %v2336 = vadd.f32 %v2335, %v2099
    %v2337 = vadd.f32 %v2336, %v2101
    %v2338 = vadd.f32 %v2337, %v2103
    %v2339 = vadd.f32 %v2338, %v2105
    %v2340 = vadd.f32 %v2339, %v2107
    %v2341 = vadd.f32 %v2340, %v2109
    %v2342 = vadd.f32 %v2341, %v2111
    %v2343 = vadd.f32 %v2342, %v2113
    %v2344 = vadd.f32 %v2343, %v2115
    %v2345 = vadd.f32 %v2344, %v2117
    %v2346 = vadd.f32 %v2345, %v2119
    %v2347 = vadd.f32 %v2346, %v2121
    %v2348 = vadd.f32 %v2347, %v2123
    %v2349 = vadd.f32 %v2348, %v2125
    %v2350 = vadd.f32 %v2349, %v2127
    %v2351 = vadd.f32 %v2350, %v2129
    %v2352 = vadd.f32 %v2351, %v2131
    %v2353 = vadd.f32 %v2352, %v2133
    %v2354 = vadd.f32 %v2353, %v2135
    %v2355 = vadd.f32 %v2354, %v2137
    %v2356 = vadd.f32 %v2355, %v2139
    %v2357 = vadd.f32 %v2356, %v2141
    %v2358 = vadd.f32 %v2357, %v2143
    %v2359 = vadd.f32 %v2358, %v2145
    %v2360 = vadd.f32 %v2359, %v2147
    %v2361 = vadd.f32 %v2360, %v2149
    %v2362 = vadd.f32 %v2361, %v2151
    %v2363 = vadd.f32 %v2362, %v2153
    %v2364 = vadd.f32 %v2363, %v2155
    %v2365 = vadd.f32 %v2364, %v2157
    %v2366 = vadd.f32 %v2365, %v2159
    %v2367 = vadd.f32 %v2366, %v2161
    %v2368 = vadd.f32 %v2367, %v2163
    %v2369 = vadd.f32 %v2368, %v2165
    %v2370 = vadd.f32 %v2369, %v2167
    %v2371 = vadd.f32 %v2370, %v2169
    %v2372 = vadd.f32 %v2371, %v2171
    %v2373 = vadd.f32 %v2372, %v2173
    %v2374 = vadd.f32 %v2373, %v2175
    %v2375 = vadd.f32 %v2374, %v2177
    %v2376 = vadd.f32 %v2375, %v2179
    %v2377 = vadd.f32 %v2376, %v2181
    %v2378 = vadd.f32 %v2377, %v2183
    %v2379 = vadd.f32 %v2378, %v2185
    %v2380 = vadd.f32 %v2379, %v2187
    %v2381 = vadd.f32 %v2380, %v2189
    %v2382 = vadd.f32 %v2381, %v2191
    %v2383 = vadd.f32 %v2382, %v2193
    %v2384 = vadd.f32 %v2383, %v2195
    %v2385 = vadd.f32 %v2384, %v2197
    %v2386 = vadd.f32 %v2385, %v2199
    %v2387 = vadd.f32 %v2386, %v2201
    %v2388 = vadd.f32 %v2387, %v2203
    %v2389 = vadd.f32 %v2388, %v2205
    %v2390 = vadd.f32 %v2389, %v2207
    %v2391 = vadd.f32 %v2390, %v2209
    %v2392 = vadd.f32 %v2391, %v2211
    %v2393 = vadd.f32 %v2392, %v2213
    %v2394 = vadd.f32 %v2393, %v2215
    %v2395 = vadd.f32 %v2394, %v2217
    %v2396 = vadd.f32 %v2395, %v2219
    %v2397 = vadd.f32 %v2396, %v2221
    %v2398 = vadd.f32 %v2397, %v2223
    %v2399 = vadd.f32 %v2398, %v2225
    %v2400 = vadd.f32 %v2399, %v2227
    %v2401 = vadd.f32 %v2400, %v2229
    %v2402 = vadd.f32 %v2401, %v2231
    %v2403 = vadd.f32 %v2402, %v2233
    %v2404 = vadd.f32 %v2403, %v2235
    %v2405 = vadd.f32 %v2404, %v2237
    %v2406 = vadd.f32 %v2405, %v2239
    %v2407 = vadd.f32 %v2406, %v2241
    %v2408 = vadd.f32 %v2407, %v2243
    %v2409 = vadd.f32 %v2408, %v2245
    %v2410 = vadd.f32 %v2409, %v2247
    %v2411 = vadd.f32 %v2410, %v2249
    %v2412 = vadd.f32 %v2411, %v2251
    %v2413 = vadd.f32 %v2412, %v2253
    %v2414 = vadd.f32 %v2413, %v2255
    %v2415 = vadd.f32 %v2414, %v2257
    %v2416 = vadd.f32 %v2415, %v2259
    %v2417 = vadd.f32 %v2416, %v2261
    %v2418 = vadd.f32 %v2417, %v2263
    %v2419 = vadd.f32 %v2418, %v2265
    %v2420 = vadd.f32 %v2419, %v2267
    %v2421 = vadd.f32 %v2420, %v2269
    %v2422 = vadd.f32 %v2421, %v2271
    %v2423 = vadd.f32 %v2422, %v2273
    %v2424 = vadd.f32 %v2423, %v2275
    %v2425 = vadd.f32 %v2424, %v2277
    %v2426 = vadd.f32 %v2425, %v2279
    %v2427 = vadd.f32 %v2426, %v2281
    %v2428 = vadd.f32 %v2427, %v2283
    %v2429 = vadd.f32 %v2428, %v2285
    %v2430 = vadd.f32 %v2429, %v2287
    %v2431 = vadd.f32 %v2430, %v2289
    %v2432 = vadd.f32 %v2431, %v2291
    %v2433 = vadd.f32 %v2432, %v2293
    %v2434 = vadd.f32 %v2433, %v2295
    %v2435 = vadd.f32 %v2434, %v2297
    %v2436 = vadd.f32 %v2435, %v2299
    %v2437 = vadd.f32 %v2436, %v2301
    %v2438 = vadd.f32 %v2437, %v2303
    %v2439 = vadd.f32 %v2438, %v2305
    %v2440 = vadd.f32 %v2439, %v2307
    %v2441 = vadd.f32 %v2440, %v2309
    %v2442 = vadd.f32 %v2441, %v2311
    %v2443 = vadd.f32 %v2442, %v2313
    %v2444 = vadd.f32 %v2443, %v2315
    %v2445 = vadd.f32 %v2444, %v2317
    %v2446 = vadd.f32 %v2445, %v2319
    %v2447 = vrot.slane %v2446, 4
    %v2448 = vadd.f32 %v2446, %v2447
    %v2449 = vrot.slane %v2448, 2
    %v2450 = vadd.f32 %v2448, %v2449
    %v2451 = vrot.slane %v2450, 1
    %v2452 = vadd.f32 %v2450, %v2451
    %v2453 = vmul.f32 %v2452, 0.0009765625
    %v2454 = vld [vmem:[#allocation2 + $0x10] sm:$0xff]
    %v2455 = vld [vmem:[#allocation2 + $0x30] sm:$0xff]
    %v2456 = vld [vmem:[#allocation2 + $0x50] sm:$0xff]
    %v2457 = vld [vmem:[#allocation2 + $0x70] sm:$0xff]
    %v2458 = vld [vmem:[#allocation2 + $0x90] sm:$0xff]
    %v2459 = vld [vmem:[#allocation2 + $0xb0] sm:$0xff]
    %v2460 = vld [vmem:[#allocation2 + $0xd0] sm:$0xff]
    %v2461 = vld [vmem:[#allocation2 + $0xf0] sm:$0xff]
    %v2462 = vld [vmem:[#allocation2 + $0x110] sm:$0xff]
    %v2463 = vld [vmem:[#allocation2 + $0x130] sm:$0xff]
    %v2464 = vld [vmem:[#allocation2 + $0x150] sm:$0xff]
    %v2465 = vld [vmem:[#allocation2 + $0x170] sm:$0xff]
    %v2466 = vld [vmem:[#allocation2 + $0x190] sm:$0xff]
    %v2467 = vld [vmem:[#allocation2 + $0x1b0] sm:$0xff]
    %v2468 = vld [vmem:[#allocation2 + $0x1d0] sm:$0xff]
    %v2469 = vld [vmem:[#allocation2 + $0x1f0] sm:$0xff]
    %v2470 = vld [vmem:[#allocation2 + $0x210] sm:$0xff]
    %v2471 = vld [vmem:[#allocation2 + $0x230] sm:$0xff]
    %v2472 = vld [vmem:[#allocation2 + $0x250] sm:$0xff]
    %v2473 = vld [vmem:[#allocation2 + $0x270] sm:$0xff]
    %v2474 = vld [vmem:[#allocation2 + $0x290] sm:$0xff]
    %v2475 = vld [vmem:[#allocation2 + $0x2b0] sm:$0xff]
    %v2476 = vld [vmem:[#allocation2 + $0x2d0] sm:$0xff]
    %v2477 = vld [vmem:[#allocation2 + $0x2f0] sm:$0xff]
    %v2478 = vld [vmem:[#allocation2 + $0x310] sm:$0xff]
    %v2479 = vld [vmem:[#allocation2 + $0x330] sm:$0xff]
    %v2480 = vld [vmem:[#allocation2 + $0x350] sm:$0xff]
    %v2481 = vld [vmem:[#allocation2 + $0x370] sm:$0xff]
    %v2482 = vld [vmem:[#allocation2 + $0x390] sm:$0xff]
    %v2483 = vld [vmem:[#allocation2 + $0x3b0] sm:$0xff]
    %v2484 = vld [vmem:[#allocation2 + $0x3d0] sm:$0xff]
    %v2485 = vld [vmem:[#allocation2 + $0x3f0] sm:$0xff]
    %v2486 = vld [vmem:[#allocation2 + $0x410] sm:$0xff]
    %v2487 = vld [vmem:[#allocation2 + $0x430] sm:$0xff]
    %v2488 = vld [vmem:[#allocation2 + $0x450] sm:$0xff]
    %v2489 = vld [vmem:[#allocation2 + $0x470] sm:$0xff]
    %v2490 = vld [vmem:[#allocation2 + $0x490] sm:$0xff]
    %v2491 = vld [vmem:[#allocation2 + $0x4b0] sm:$0xff]
    %v2492 = vld [vmem:[#allocation2 + $0x4d0] sm:$0xff]
    %v2493 = vld [vmem:[#allocation2 + $0x4f0] sm:$0xff]
    %v2494 = vld [vmem:[#allocation2 + $0x510] sm:$0xff]
    %v2495 = vld [vmem:[#allocation2 + $0x530] sm:$0xff]
    %v2496 = vld [vmem:[#allocation2 + $0x550] sm:$0xff]
    %v2497 = vld [vmem:[#allocation2 + $0x570] sm:$0xff]
    %v2498 = vld [vmem:[#allocation2 + $0x590] sm:$0xff]
    %v2499 = vld [vmem:[#allocation2 + $0x5b0] sm:$0xff]
    %v2500 = vld [vmem:[#allocation2 + $0x5d0] sm:$0xff]
    %v2501 = vld [vmem:[#allocation2 + $0x5f0] sm:$0xff]
    %v2502 = vld [vmem:[#allocation2 + $0x610] sm:$0xff]
    %v2503 = vld [vmem:[#allocation2 + $0x630] sm:$0xff]
    %v2504 = vld [vmem:[#allocation2 + $0x650] sm:$0xff]
    %v2505 = vld [vmem:[#allocation2 + $0x670] sm:$0xff]
    %v2506 = vld [vmem:[#allocation2 + $0x690] sm:$0xff]
    %v2507 = vld [vmem:[#allocation2 + $0x6b0] sm:$0xff]
    %v2508 = vld [vmem:[#allocation2 + $0x6d0] sm:$0xff]
    %v2509 = vld [vmem:[#allocation2 + $0x6f0] sm:$0xff]
    %v2510 = vld [vmem:[#allocation2 + $0x710] sm:$0xff]
    %v2511 = vld [vmem:[#allocation2 + $0x730] sm:$0xff]
    %v2512 = vld [vmem:[#allocation2 + $0x750] sm:$0xff]
    %v2513 = vld [vmem:[#allocation2 + $0x770] sm:$0xff]
    %v2514 = vld [vmem:[#allocation2 + $0x790] sm:$0xff]
    %v2515 = vld [vmem:[#allocation2 + $0x7b0] sm:$0xff]
    %v2516 = vld [vmem:[#allocation2 + $0x7d0] sm:$0xff]
    %v2517 = vld [vmem:[#allocation2 + $0x7f0] sm:$0xff]
    %v2518 = vld [vmem:[#allocation2 + $0x810] sm:$0xff]
    %v2519 = vld [vmem:[#allocation2 + $0x830] sm:$0xff]
    %v2520 = vld [vmem:[#allocation2 + $0x850] sm:$0xff]
    %v2521 = vld [vmem:[#allocation2 + $0x870] sm:$0xff]
    %v2522 = vld [vmem:[#allocation2 + $0x890] sm:$0xff]
    %v2523 = vld [vmem:[#allocation2 + $0x8b0] sm:$0xff]
    %v2524 = vld [vmem:[#allocation2 + $0x8d0] sm:$0xff]
    %v2525 = vld [vmem:[#allocation2 + $0x8f0] sm:$0xff]
    %v2526 = vld [vmem:[#allocation2 + $0x910] sm:$0xff]
    %v2527 = vld [vmem:[#allocation2 + $0x930] sm:$0xff]
    %v2528 = vld [vmem:[#allocation2 + $0x950] sm:$0xff]
    %v2529 = vld [vmem:[#allocation2 + $0x970] sm:$0xff]
    %v2530 = vld [vmem:[#allocation2 + $0x990] sm:$0xff]
    %v2531 = vld [vmem:[#allocation2 + $0x9b0] sm:$0xff]
    %v2532 = vld [vmem:[#allocation2 + $0x9d0] sm:$0xff]
    %v2533 = vld [vmem:[#allocation2 + $0x9f0] sm:$0xff]
    %v2534 = vld [vmem:[#allocation2 + $0xa10] sm:$0xff]
    %v2535 = vld [vmem:[#allocation2 + $0xa30] sm:$0xff]
    %v2536 = vld [vmem:[#allocation2 + $0xa50] sm:$0xff]
    %v2537 = vld [vmem:[#allocation2 + $0xa70] sm:$0xff]
    %v2538 = vld [vmem:[#allocation2 + $0xa90] sm:$0xff]
    %v2539 = vld [vmem:[#allocation2 + $0xab0] sm:$0xff]
    %v2540 = vld [vmem:[#allocation2 + $0xad0] sm:$0xff]
    %v2541 = vld [vmem:[#allocation2 + $0xaf0] sm:$0xff]
    %v2542 = vld [vmem:[#allocation2 + $0xb10] sm:$0xff]
    %v2543 = vld [vmem:[#allocation2 + $0xb30] sm:$0xff]
    %v2544 = vld [vmem:[#allocation2 + $0xb50] sm:$0xff]
    %v2545 = vld [vmem:[#allocation2 + $0xb70] sm:$0xff]
    %v2546 = vld [vmem:[#allocation2 + $0xb90] sm:$0xff]
    %v2547 = vld [vmem:[#allocation2 + $0xbb0] sm:$0xff]
    %v2548 = vld [vmem:[#allocation2 + $0xbd0] sm:$0xff]
    %v2549 = vld [vmem:[#allocation2 + $0xbf0] sm:$0xff]
    %v2550 = vld [vmem:[#allocation2 + $0xc10] sm:$0xff]
    %v2551 = vld [vmem:[#allocation2 + $0xc30] sm:$0xff]
    %v2552 = vld [vmem:[#allocation2 + $0xc50] sm:$0xff]
    %v2553 = vld [vmem:[#allocation2 + $0xc70] sm:$0xff]
    %v2554 = vld [vmem:[#allocation2 + $0xc90] sm:$0xff]
    %v2555 = vld [vmem:[#allocation2 + $0xcb0] sm:$0xff]
    %v2556 = vld [vmem:[#allocation2 + $0xcd0] sm:$0xff]
    %v2557 = vld [vmem:[#allocation2 + $0xcf0] sm:$0xff]
    %v2558 = vld [vmem:[#allocation2 + $0xd10] sm:$0xff]
    %v2559 = vld [vmem:[#allocation2 + $0xd30] sm:$0xff]
    %v2560 = vld [vmem:[#allocation2 + $0xd50] sm:$0xff]
    %v2561 = vld [vmem:[#allocation2 + $0xd70] sm:$0xff]
    %v2562 = vld [vmem:[#allocation2 + $0xd90] sm:$0xff]
    %v2563 = vld [vmem:[#allocation2 + $0xdb0] sm:$0xff]
    %v2564 = vld [vmem:[#allocation2 + $0xdd0] sm:$0xff]
    %v2565 = vld [vmem:[#allocation2 + $0xdf0] sm:$0xff]
    %v2566 = vld [vmem:[#allocation2 + $0xe10] sm:$0xff]
    %v2567 = vld [vmem:[#allocation2 + $0xe30] sm:$0xff]
    %v2568 = vld [vmem:[#allocation2 + $0xe50] sm:$0xff]
    %v2569 = vld [vmem:[#allocation2 + $0xe70] sm:$0xff]
    %v2570 = vld [vmem:[#allocation2 + $0xe90] sm:$0xff]
    %v2571 = vld [vmem:[#allocation2 + $0xeb0] sm:$0xff]
    %v2572 = vld [vmem:[#allocation2 + $0xed0] sm:$0xff]
    %v2573 = vld [vmem:[#allocation2 + $0xef0] sm:$0xff]
    %v2574 = vld [vmem:[#allocation2 + $0xf10] sm:$0xff]
    %v2575 = vld [vmem:[#allocation2 + $0xf30] sm:$0xff]
    %v2576 = vld [vmem:[#allocation2 + $0xf50] sm:$0xff]
    %v2577 = vld [vmem:[#allocation2 + $0xf70] sm:$0xff]
    %v2578 = vld [vmem:[#allocation2 + $0xf90] sm:$0xff]
    %v2579 = vld [vmem:[#allocation2 + $0xfb0] sm:$0xff]
    %v2580 = vld [vmem:[#allocation2 + $0xfd0] sm:$0xff]
    %v2581 = vld [vmem:[#allocation2 + $0xff0] sm:$0xff]
    %2582 = vmatpush.msra.mxu0 %v95
    %2583 = vmatpush.msra.mxu0 %v94
    %2584 = vmatpush.msra.mxu0 %v93
    %2585 = vmatpush.msra.mxu0 %v92
    %2586 = vmatpush.msra.mxu0 %v91
    %2587 = vmatpush.msra.mxu0 %v90
    %2588 = vmatpush.msra.mxu0 %v89
    %2589 = vmatpush.msra.mxu0 %v88
    %2590 = vmatpush.msra.mxu0 %v87
    %2591 = vmatpush.msra.mxu0 %v86
    %2592 = vmatpush.msra.mxu0 %v85
    %2593 = vmatpush.msra.mxu0 %v84
    %2594 = vmatpush.msra.mxu0 %v83
    %2595 = vmatpush.msra.mxu0 %v82
    %2596 = vmatpush.msra.mxu0 %v81
    %2597 = vmatpush.msra.mxu0 %v80
    %2598 = vmatmul.f32.gmra.mxu0 %v2454
    %v2599 = vpop.f32.mrf.mxu0
    %v2600 = vadd.f32 %v227, %v2599
    %2601 = vmatmul.f32.gmra.mxu0 %v2455
    %v2602 = vpop.f32.mrf.mxu0
    %v2603 = vadd.f32 %v227, %v2602
    %2604 = vmatmul.f32.gmra.mxu0 %v2456
    %v2605 = vpop.f32.mrf.mxu0
    %v2606 = vadd.f32 %v227, %v2605
    %2607 = vmatmul.f32.gmra.mxu0 %v2457
    %v2608 = vpop.f32.mrf.mxu0
    %v2609 = vadd.f32 %v227, %v2608
    %2610 = vmatmul.f32.gmra.mxu0 %v2458
    %v2611 = vpop.f32.mrf.mxu0
    %v2612 = vadd.f32 %v227, %v2611
    %2613 = vmatmul.f32.gmra.mxu0 %v2459
    %v2614 = vpop.f32.mrf.mxu0
    %v2615 = vadd.f32 %v227, %v2614
    %2616 = vmatmul.f32.gmra.mxu0 %v2460
    %v2617 = vpop.f32.mrf.mxu0
    %v2618 = vadd.f32 %v227, %v2617
    %2619 = vmatmul.f32.gmra.mxu0 %v2461
    %v2620 = vpop.f32.mrf.mxu0
    %v2621 = vadd.f32 %v227, %v2620
    %2622 = vmatmul.f32.gmra.mxu0 %v2462
    %v2623 = vpop.f32.mrf.mxu0
    %v2624 = vadd.f32 %v227, %v2623
    %2625 = vmatmul.f32.gmra.mxu0 %v2463
    %v2626 = vpop.f32.mrf.mxu0
    %v2627 = vadd.f32 %v227, %v2626
    %2628 = vmatmul.f32.gmra.mxu0 %v2464
    %v2629 = vpop.f32.mrf.mxu0
    %v2630 = vadd.f32 %v227, %v2629
    %2631 = vmatmul.f32.gmra.mxu0 %v2465
    %v2632 = vpop.f32.mrf.mxu0
    %v2633 = vadd.f32 %v227, %v2632
    %2634 = vmatmul.f32.gmra.mxu0 %v2466
    %v2635 = vpop.f32.mrf.mxu0
    %v2636 = vadd.f32 %v227, %v2635
    %2637 = vmatmul.f32.gmra.mxu0 %v2467
    %v2638 = vpop.f32.mrf.mxu0
    %v2639 = vadd.f32 %v227, %v2638
    %2640 = vmatmul.f32.gmra.mxu0 %v2468
    %v2641 = vpop.f32.mrf.mxu0
    %v2642 = vadd.f32 %v227, %v2641
    %2643 = vmatmul.f32.gmra.mxu0 %v2469
    %v2644 = vpop.f32.mrf.mxu0
    %v2645 = vadd.f32 %v227, %v2644
    %2646 = vmatmul.f32.gmra.mxu0 %v2470
    %v2647 = vpop.f32.mrf.mxu0
    %v2648 = vadd.f32 %v227, %v2647
    %2649 = vmatmul.f32.gmra.mxu0 %v2471
    %v2650 = vpop.f32.mrf.mxu0
    %v2651 = vadd.f32 %v227, %v2650
    %2652 = vmatmul.f32.gmra.mxu0 %v2472
    %v2653 = vpop.f32.mrf.mxu0
    %v2654 = vadd.f32 %v227, %v2653
    %2655 = vmatmul.f32.gmra.mxu0 %v2473
    %v2656 = vpop.f32.mrf.mxu0
    %v2657 = vadd.f32 %v227, %v2656
    %2658 = vmatmul.f32.gmra.mxu0 %v2474
    %v2659 = vpop.f32.mrf.mxu0
    %v2660 = vadd.f32 %v227, %v2659
    %2661 = vmatmul.f32.gmra.mxu0 %v2475
    %v2662 = vpop.f32.mrf.mxu0
    %v2663 = vadd.f32 %v227, %v2662
    %2664 = vmatmul.f32.gmra.mxu0 %v2476
    %v2665 = vpop.f32.mrf.mxu0
    %v2666 = vadd.f32 %v227, %v2665
    %2667 = vmatmul.f32.gmra.mxu0 %v2477
    %v2668 = vpop.f32.mrf.mxu0
    %v2669 = vadd.f32 %v227, %v2668
    %2670 = vmatmul.f32.gmra.mxu0 %v2478
    %v2671 = vpop.f32.mrf.mxu0
    %v2672 = vadd.f32 %v227, %v2671
    %2673 = vmatmul.f32.gmra.mxu0 %v2479
    %v2674 = vpop.f32.mrf.mxu0
    %v2675 = vadd.f32 %v227, %v2674
    %2676 = vmatmul.f32.gmra.mxu0 %v2480
    %v2677 = vpop.f32.mrf.mxu0
    %v2678 = vadd.f32 %v227, %v2677
    %2679 = vmatmul.f32.gmra.mxu0 %v2481
    %v2680 = vpop.f32.mrf.mxu0
    %v2681 = vadd.f32 %v227, %v2680
    %2682 = vmatmul.f32.gmra.mxu0 %v2482
    %v2683 = vpop.f32.mrf.mxu0
    %v2684 = vadd.f32 %v227, %v2683
    %2685 = vmatmul.f32.gmra.mxu0 %v2483
    %v2686 = vpop.f32.mrf.mxu0
    %v2687 = vadd.f32 %v227, %v2686
    %2688 = vmatmul.f32.gmra.mxu0 %v2484
    %v2689 = vpop.f32.mrf.mxu0
    %v2690 = vadd.f32 %v227, %v2689
    %2691 = vmatmul.f32.gmra.mxu0 %v2485
    %v2692 = vpop.f32.mrf.mxu0
    %v2693 = vadd.f32 %v227, %v2692
    %2694 = vmatmul.f32.gmra.mxu0 %v2486
    %v2695 = vpop.f32.mrf.mxu0
    %v2696 = vadd.f32 %v227, %v2695
    %2697 = vmatmul.f32.gmra.mxu0 %v2487
    %v2698 = vpop.f32.mrf.mxu0
    %v2699 = vadd.f32 %v227, %v2698
    %2700 = vmatmul.f32.gmra.mxu0 %v2488
    %v2701 = vpop.f32.mrf.mxu0
    %v2702 = vadd.f32 %v227, %v2701
    %2703 = vmatmul.f32.gmra.mxu0 %v2489
    %v2704 = vpop.f32.mrf.mxu0
    %v2705 = vadd.f32 %v227, %v2704
    %2706 = vmatmul.f32.gmra.mxu0 %v2490
    %v2707 = vpop.f32.mrf.mxu0
    %v2708 = vadd.f32 %v227, %v2707
    %2709 = vmatmul.f32.gmra.mxu0 %v2491
    %v2710 = vpop.f32.mrf.mxu0
    %v2711 = vadd.f32 %v227, %v2710
    %2712 = vmatmul.f32.gmra.mxu0 %v2492
    %v2713 = vpop.f32.mrf.mxu0
    %v2714 = vadd.f32 %v227, %v2713
    %2715 = vmatmul.f32.gmra.mxu0 %v2493
    %v2716 = vpop.f32.mrf.mxu0
    %v2717 = vadd.f32 %v227, %v2716
    %2718 = vmatmul.f32.gmra.mxu0 %v2494
    %v2719 = vpop.f32.mrf.mxu0
    %v2720 = vadd.f32 %v227, %v2719
    %2721 = vmatmul.f32.gmra.mxu0 %v2495
    %v2722 = vpop.f32.mrf.mxu0
    %v2723 = vadd.f32 %v227, %v2722
    %2724 = vmatmul.f32.gmra.mxu0 %v2496
    %v2725 = vpop.f32.mrf.mxu0
    %v2726 = vadd.f32 %v227, %v2725
    %2727 = vmatmul.f32.gmra.mxu0 %v2497
    %v2728 = vpop.f32.mrf.mxu0
    %v2729 = vadd.f32 %v227, %v2728
    %2730 = vmatmul.f32.gmra.mxu0 %v2498
    %v2731 = vpop.f32.mrf.mxu0
    %v2732 = vadd.f32 %v227, %v2731
    %2733 = vmatmul.f32.gmra.mxu0 %v2499
    %v2734 = vpop.f32.mrf.mxu0
    %v2735 = vadd.f32 %v227, %v2734
    %2736 = vmatmul.f32.gmra.mxu0 %v2500
    %v2737 = vpop.f32.mrf.mxu0
    %v2738 = vadd.f32 %v227, %v2737
    %2739 = vmatmul.f32.gmra.mxu0 %v2501
    %v2740 = vpop.f32.mrf.mxu0
    %v2741 = vadd.f32 %v227, %v2740
    %2742 = vmatmul.f32.gmra.mxu0 %v2502
    %v2743 = vpop.f32.mrf.mxu0
    %v2744 = vadd.f32 %v227, %v2743
    %2745 = vmatmul.f32.gmra.mxu0 %v2503
    %v2746 = vpop.f32.mrf.mxu0
    %v2747 = vadd.f32 %v227, %v2746
    %2748 = vmatmul.f32.gmra.mxu0 %v2504
    %v2749 = vpop.f32.mrf.mxu0
    %v2750 = vadd.f32 %v227, %v2749
    %2751 = vmatmul.f32.gmra.mxu0 %v2505
    %v2752 = vpop.f32.mrf.mxu0
    %v2753 = vadd.f32 %v227, %v2752
    %2754 = vmatmul.f32.gmra.mxu0 %v2506
    %v2755 = vpop.f32.mrf.mxu0
    %v2756 = vadd.f32 %v227, %v2755
    %2757 = vmatmul.f32.gmra.mxu0 %v2507
    %v2758 = vpop.f32.mrf.mxu0
    %v2759 = vadd.f32 %v227, %v2758
    %2760 = vmatmul.f32.gmra.mxu0 %v2508
    %v2761 = vpop.f32.mrf.mxu0
    %v2762 = vadd.f32 %v227, %v2761
    %2763 = vmatmul.f32.gmra.mxu0 %v2509
    %v2764 = vpop.f32.mrf.mxu0
    %v2765 = vadd.f32 %v227, %v2764
    %2766 = vmatmul.f32.gmra.mxu0 %v2510
    %v2767 = vpop.f32.mrf.mxu0
    %v2768 = vadd.f32 %v227, %v2767
    %2769 = vmatmul.f32.gmra.mxu0 %v2511
    %v2770 = vpop.f32.mrf.mxu0
    %v2771 = vadd.f32 %v227, %v2770
    %2772 = vmatmul.f32.gmra.mxu0 %v2512
    %v2773 = vpop.f32.mrf.mxu0
    %v2774 = vadd.f32 %v227, %v2773
    %2775 = vmatmul.f32.gmra.mxu0 %v2513
    %v2776 = vpop.f32.mrf.mxu0
    %v2777 = vadd.f32 %v227, %v2776
    %2778 = vmatmul.f32.gmra.mxu0 %v2514
    %v2779 = vpop.f32.mrf.mxu0
    %v2780 = vadd.f32 %v227, %v2779
    %2781 = vmatmul.f32.gmra.mxu0 %v2515
    %v2782 = vpop.f32.mrf.mxu0
    %v2783 = vadd.f32 %v227, %v2782
    %2784 = vmatmul.f32.gmra.mxu0 %v2516
    %v2785 = vpop.f32.mrf.mxu0
    %v2786 = vadd.f32 %v227, %v2785
    %2787 = vmatmul.f32.gmra.mxu0 %v2517
    %v2788 = vpop.f32.mrf.mxu0
    %v2789 = vadd.f32 %v227, %v2788
    %2790 = vmatmul.f32.gmra.mxu0 %v2518
    %v2791 = vpop.f32.mrf.mxu0
    %v2792 = vadd.f32 %v227, %v2791
    %2793 = vmatmul.f32.gmra.mxu0 %v2519
    %v2794 = vpop.f32.mrf.mxu0
    %v2795 = vadd.f32 %v227, %v2794
    %2796 = vmatmul.f32.gmra.mxu0 %v2520
    %v2797 = vpop.f32.mrf.mxu0
    %v2798 = vadd.f32 %v227, %v2797
    %2799 = vmatmul.f32.gmra.mxu0 %v2521
    %v2800 = vpop.f32.mrf.mxu0
    %v2801 = vadd.f32 %v227, %v2800
    %2802 = vmatmul.f32.gmra.mxu0 %v2522
    %v2803 = vpop.f32.mrf.mxu0
    %v2804 = vadd.f32 %v227, %v2803
    %2805 = vmatmul.f32.gmra.mxu0 %v2523
    %v2806 = vpop.f32.mrf.mxu0
    %v2807 = vadd.f32 %v227, %v2806
    %2808 = vmatmul.f32.gmra.mxu0 %v2524
    %v2809 = vpop.f32.mrf.mxu0
    %v2810 = vadd.f32 %v227, %v2809
    %2811 = vmatmul.f32.gmra.mxu0 %v2525
    %v2812 = vpop.f32.mrf.mxu0
    %v2813 = vadd.f32 %v227, %v2812
    %2814 = vmatmul.f32.gmra.mxu0 %v2526
    %v2815 = vpop.f32.mrf.mxu0
    %v2816 = vadd.f32 %v227, %v2815
    %2817 = vmatmul.f32.gmra.mxu0 %v2527
    %v2818 = vpop.f32.mrf.mxu0
    %v2819 = vadd.f32 %v227, %v2818
    %2820 = vmatmul.f32.gmra.mxu0 %v2528
    %v2821 = vpop.f32.mrf.mxu0
    %v2822 = vadd.f32 %v227, %v2821
    %2823 = vmatmul.f32.gmra.mxu0 %v2529
    %v2824 = vpop.f32.mrf.mxu0
    %v2825 = vadd.f32 %v227, %v2824
    %2826 = vmatmul.f32.gmra.mxu0 %v2530
    %v2827 = vpop.f32.mrf.mxu0
    %v2828 = vadd.f32 %v227, %v2827
    %2829 = vmatmul.f32.gmra.mxu0 %v2531
    %v2830 = vpop.f32.mrf.mxu0
    %v2831 = vadd.f32 %v227, %v2830
    %2832 = vmatmul.f32.gmra.mxu0 %v2532
    %v2833 = vpop.f32.mrf.mxu0
    %v2834 = vadd.f32 %v227, %v2833
    %2835 = vmatmul.f32.gmra.mxu0 %v2533
    %v2836 = vpop.f32.mrf.mxu0
    %v2837 = vadd.f32 %v227, %v2836
    %2838 = vmatmul.f32.gmra.mxu0 %v2534
    %v2839 = vpop.f32.mrf.mxu0
    %v2840 = vadd.f32 %v227, %v2839
    %2841 = vmatmul.f32.gmra.mxu0 %v2535
    %v2842 = vpop.f32.mrf.mxu0
    %v2843 = vadd.f32 %v227, %v2842
    %2844 = vmatmul.f32.gmra.mxu0 %v2536
    %v2845 = vpop.f32.mrf.mxu0
    %v2846 = vadd.f32 %v227, %v2845
    %2847 = vmatmul.f32.gmra.mxu0 %v2537
    %v2848 = vpop.f32.mrf.mxu0
    %v2849 = vadd.f32 %v227, %v2848
    %2850 = vmatmul.f32.gmra.mxu0 %v2538
    %v2851 = vpop.f32.mrf.mxu0
    %v2852 = vadd.f32 %v227, %v2851
    %2853 = vmatmul.f32.gmra.mxu0 %v2539
    %v2854 = vpop.f32.mrf.mxu0
    %v2855 = vadd.f32 %v227, %v2854
    %2856 = vmatmul.f32.gmra.mxu0 %v2540
    %v2857 = vpop.f32.mrf.mxu0
    %v2858 = vadd.f32 %v227, %v2857
    %2859 = vmatmul.f32.gmra.mxu0 %v2541
    %v2860 = vpop.f32.mrf.mxu0
    %v2861 = vadd.f32 %v227, %v2860
    %2862 = vmatmul.f32.gmra.mxu0 %v2542
    %v2863 = vpop.f32.mrf.mxu0
    %v2864 = vadd.f32 %v227, %v2863
    %2865 = vmatmul.f32.gmra.mxu0 %v2543
    %v2866 = vpop.f32.mrf.mxu0
    %v2867 = vadd.f32 %v227, %v2866
    %2868 = vmatmul.f32.gmra.mxu0 %v2544
    %v2869 = vpop.f32.mrf.mxu0
    %v2870 = vadd.f32 %v227, %v2869
    %2871 = vmatmul.f32.gmra.mxu0 %v2545
    %v2872 = vpop.f32.mrf.mxu0
    %v2873 = vadd.f32 %v227, %v2872
    %2874 = vmatmul.f32.gmra.mxu0 %v2546
    %v2875 = vpop.f32.mrf.mxu0
    %v2876 = vadd.f32 %v227, %v2875
    %2877 = vmatmul.f32.gmra.mxu0 %v2547
    %v2878 = vpop.f32.mrf.mxu0
    %v2879 = vadd.f32 %v227, %v2878
    %2880 = vmatmul.f32.gmra.mxu0 %v2548
    %v2881 = vpop.f32.mrf.mxu0
    %v2882 = vadd.f32 %v227, %v2881
    %2883 = vmatmul.f32.gmra.mxu0 %v2549
    %v2884 = vpop.f32.mrf.mxu0
    %v2885 = vadd.f32 %v227, %v2884
    %2886 = vmatmul.f32.gmra.mxu0 %v2550
    %v2887 = vpop.f32.mrf.mxu0
    %v2888 = vadd.f32 %v227, %v2887
    %2889 = vmatmul.f32.gmra.mxu0 %v2551
    %v2890 = vpop.f32.mrf.mxu0
    %v2891 = vadd.f32 %v227, %v2890
    %2892 = vmatmul.f32.gmra.mxu0 %v2552
    %v2893 = vpop.f32.mrf.mxu0
    %v2894 = vadd.f32 %v227, %v2893
    %2895 = vmatmul.f32.gmra.mxu0 %v2553
    %v2896 = vpop.f32.mrf.mxu0
    %v2897 = vadd.f32 %v227, %v2896
    %2898 = vmatmul.f32.gmra.mxu0 %v2554
    %v2899 = vpop.f32.mrf.mxu0
    %v2900 = vadd.f32 %v227, %v2899
    %2901 = vmatmul.f32.gmra.mxu0 %v2555
    %v2902 = vpop.f32.mrf.mxu0
    %v2903 = vadd.f32 %v227, %v2902
    %2904 = vmatmul.f32.gmra.mxu0 %v2556
    %v2905 = vpop.f32.mrf.mxu0
    %v2906 = vadd.f32 %v227, %v2905
    %2907 = vmatmul.f32.gmra.mxu0 %v2557
    %v2908 = vpop.f32.mrf.mxu0
    %v2909 = vadd.f32 %v227, %v2908
    %2910 = vmatmul.f32.gmra.mxu0 %v2558
    %v2911 = vpop.f32.mrf.mxu0
    %v2912 = vadd.f32 %v227, %v2911
    %2913 = vmatmul.f32.gmra.mxu0 %v2559
    %v2914 = vpop.f32.mrf.mxu0
    %v2915 = vadd.f32 %v227, %v2914
    %2916 = vmatmul.f32.gmra.mxu0 %v2560
    %v2917 = vpop.f32.mrf.mxu0
    %v2918 = vadd.f32 %v227, %v2917
    %2919 = vmatmul.f32.gmra.mxu0 %v2561
    %v2920 = vpop.f32.mrf.mxu0
    %v2921 = vadd.f32 %v227, %v2920
    %2922 = vmatmul.f32.gmra.mxu0 %v2562
    %v2923 = vpop.f32.mrf.mxu0
    %v2924 = vadd.f32 %v227, %v2923
    %2925 = vmatmul.f32.gmra.mxu0 %v2563
    %v2926 = vpop.f32.mrf.mxu0
    %v2927 = vadd.f32 %v227, %v2926
    %2928 = vmatmul.f32.gmra.mxu0 %v2564
    %v2929 = vpop.f32.mrf.mxu0
    %v2930 = vadd.f32 %v227, %v2929
    %2931 = vmatmul.f32.gmra.mxu0 %v2565
    %v2932 = vpop.f32.mrf.mxu0
    %v2933 = vadd.f32 %v227, %v2932
    %2934 = vmatmul.f32.gmra.mxu0 %v2566
    %v2935 = vpop.f32.mrf.mxu0
    %v2936 = vadd.f32 %v227, %v2935
    %2937 = vmatmul.f32.gmra.mxu0 %v2567
    %v2938 = vpop.f32.mrf.mxu0
    %v2939 = vadd.f32 %v227, %v2938
    %2940 = vmatmul.f32.gmra.mxu0 %v2568
    %v2941 = vpop.f32.mrf.mxu0
    %v2942 = vadd.f32 %v227, %v2941
    %2943 = vmatmul.f32.gmra.mxu0 %v2569
    %v2944 = vpop.f32.mrf.mxu0
    %v2945 = vadd.f32 %v227, %v2944
    %2946 = vmatmul.f32.gmra.mxu0 %v2570
    %v2947 = vpop.f32.mrf.mxu0
    %v2948 = vadd.f32 %v227, %v2947
    %2949 = vmatmul.f32.gmra.mxu0 %v2571
    %v2950 = vpop.f32.mrf.mxu0
    %v2951 = vadd.f32 %v227, %v2950
    %2952 = vmatmul.f32.gmra.mxu0 %v2572
    %v2953 = vpop.f32.mrf.mxu0
    %v2954 = vadd.f32 %v227, %v2953
    %2955 = vmatmul.f32.gmra.mxu0 %v2573
    %v2956 = vpop.f32.mrf.mxu0
    %v2957 = vadd.f32 %v227, %v2956
    %2958 = vmatmul.f32.gmra.mxu0 %v2574
    %v2959 = vpop.f32.mrf.mxu0
    %v2960 = vadd.f32 %v227, %v2959
    %2961 = vmatmul.f32.gmra.mxu0 %v2575
    %v2962 = vpop.f32.mrf.mxu0
    %v2963 = vadd.f32 %v227, %v2962
    %2964 = vmatmul.f32.gmra.mxu0 %v2576
    %v2965 = vpop.f32.mrf.mxu0
    %v2966 = vadd.f32 %v227, %v2965
    %2967 = vmatmul.f32.gmra.mxu0 %v2577
    %v2968 = vpop.f32.mrf.mxu0
    %v2969 = vadd.f32 %v227, %v2968
    %2970 = vmatmul.f32.gmra.mxu0 %v2578
    %v2971 = vpop.f32.mrf.mxu0
    %v2972 = vadd.f32 %v227, %v2971
    %2973 = vmatmul.f32.gmra.mxu0 %v2579
    %v2974 = vpop.f32.mrf.mxu0
    %v2975 = vadd.f32 %v227, %v2974
    %2976 = vmatmul.f32.gmra.mxu0 %v2580
    %v2977 = vpop.f32.mrf.mxu0
    %v2978 = vadd.f32 %v227, %v2977
    %2979 = vmatmul.f32.gmra.mxu0 %v2581
    %v2980 = vpop.f32.mrf.mxu0
    %v2981 = vadd.f32 %v227, %v2980
    %2982 = vdwg.mxu0
    %v2983 = vtanh.pop %v2600
    %v2984 = vtanh.pop %v2603
    %v2985 = vtanh.pop %v2606
    %v2986 = vtanh.pop %v2609
    %v2987 = vtanh.pop %v2612
    %v2988 = vtanh.pop %v2615
    %v2989 = vtanh.pop %v2618
    %v2990 = vtanh.pop %v2621
    %v2991 = vtanh.pop %v2624
    %v2992 = vtanh.pop %v2627
    %v2993 = vtanh.pop %v2630
    %v2994 = vtanh.pop %v2633
    %v2995 = vtanh.pop %v2636
    %v2996 = vtanh.pop %v2639
    %v2997 = vtanh.pop %v2642
    %v2998 = vtanh.pop %v2645
    %v2999 = vtanh.pop %v2648
    %v3000 = vtanh.pop %v2651
    %v3001 = vtanh.pop %v2654
    %v3002 = vtanh.pop %v2657
    %v3003 = vtanh.pop %v2660
    %v3004 = vtanh.pop %v2663
    %v3005 = vtanh.pop %v2666
    %v3006 = vtanh.pop %v2669
    %v3007 = vtanh.pop %v2672
    %v3008 = vtanh.pop %v2675
    %v3009 = vtanh.pop %v2678
    %v3010 = vtanh.pop %v2681
    %v3011 = vtanh.pop %v2684
    %v3012 = vtanh.pop %v2687
    %v3013 = vtanh.pop %v2690
    %v3014 = vtanh.pop %v2693
    %v3015 = vtanh.pop %v2696
    %v3016 = vtanh.pop %v2699
    %v3017 = vtanh.pop %v2702
    %v3018 = vtanh.pop %v2705
    %v3019 = vtanh.pop %v2708
    %v3020 = vtanh.pop %v2711
    %v3021 = vtanh.pop %v2714
    %v3022 = vtanh.pop %v2717
    %v3023 = vtanh.pop %v2720
    %v3024 = vtanh.pop %v2723
    %v3025 = vtanh.pop %v2726
    %v3026 = vtanh.pop %v2729
    %v3027 = vtanh.pop %v2732
    %v3028 = vtanh.pop %v2735
    %v3029 = vtanh.pop %v2738
    %v3030 = vtanh.pop %v2741
    %v3031 = vtanh.pop %v2744
    %v3032 = vtanh.pop %v2747
    %v3033 = vtanh.pop %v2750
    %v3034 = vtanh.pop %v2753
    %v3035 = vtanh.pop %v2756
    %v3036 = vtanh.pop %v2759
    %v3037 = vtanh.pop %v2762
    %v3038 = vtanh.pop %v2765
    %v3039 = vtanh.pop %v2768
    %v3040 = vtanh.pop %v2771
    %v3041 = vtanh.pop %v2774
    %v3042 = vtanh.pop %v2777
    %v3043 = vtanh.pop %v2780
    %v3044 = vtanh.pop %v2783
    %v3045 = vtanh.pop %v2786
    %v3046 = vtanh.pop %v2789
    %v3047 = vtanh.pop %v2792
    %v3048 = vtanh.pop %v2795
    %v3049 = vtanh.pop %v2798
    %v3050 = vtanh.pop %v2801
    %v3051 = vtanh.pop %v2804
    %v3052 = vtanh.pop %v2807
    %v3053 = vtanh.pop %v2810
    %v3054 = vtanh.pop %v2813
    %v3055 = vtanh.pop %v2816
    %v3056 = vtanh.pop %v2819
    %v3057 = vtanh.pop %v2822
    %v3058 = vtanh.pop %v2825
    %v3059 = vtanh.pop %v2828
    %v3060 = vtanh.pop %v2831
    %v3061 = vtanh.pop %v2834
    %v3062 = vtanh.pop %v2837
    %v3063 = vtanh.pop %v2840
    %v3064 = vtanh.pop %v2843
    %v3065 = vtanh.pop %v2846
    %v3066 = vtanh.pop %v2849
    %v3067 = vtanh.pop %v2852
    %v3068 = vtanh.pop %v2855
    %v3069 = vtanh.pop %v2858
    %v3070 = vtanh.pop %v2861
    %v3071 = vtanh.pop %v2864
    %v3072 = vtanh.pop %v2867
    %v3073 = vtanh.pop %v2870
    %v3074 = vtanh.pop %v2873
    %v3075 = vtanh.pop %v2876
    %v3076 = vtanh.pop %v2879
    %v3077 = vtanh.pop %v2882
    %v3078 = vtanh.pop %v2885
    %v3079 = vtanh.pop %v2888
    %v3080 = vtanh.pop %v2891
    %v3081 = vtanh.pop %v2894
    %v3082 = vtanh.pop %v2897
    %v3083 = vtanh.pop %v2900
    %v3084 = vtanh.pop %v2903
    %v3085 = vtanh.pop %v2906
    %v3086 = vtanh.pop %v2909
    %v3087 = vtanh.pop %v2912
    %v3088 = vtanh.pop %v2915
    %v3089 = vtanh.pop %v2918
    %v3090 = vtanh.pop %v2921
    %v3091 = vtanh.pop %v2924
    %v3092 = vtanh.pop %v2927
    %v3093 = vtanh.pop %v2930
    %v3094 = vtanh.pop %v2933
    %v3095 = vtanh.pop %v2936
    %v3096 = vtanh.pop %v2939
    %v3097 = vtanh.pop %v2942
    %v3098 = vtanh.pop %v2945
    %v3099 = vtanh.pop %v2948
    %v3100 = vtanh.pop %v2951
    %v3101 = vtanh.pop %v2954
    %v3102 = vtanh.pop %v2957
    %v3103 = vtanh.pop %v2960
    %v3104 = vtanh.pop %v2963
    %v3105 = vtanh.pop %v2966
    %v3106 = vtanh.pop %v2969
    %v3107 = vtanh.pop %v2972
    %v3108 = vtanh.pop %v2975
    %v3109 = vtanh.pop %v2978
    %v3110 = vtanh.pop %v2981
    %v3111 = vmul.f32 %v2983, %v759
    %v3112 = vmul.f32 %v2984, %v759
    %v3113 = vmul.f32 %v2985, %v759
    %v3114 = vmul.f32 %v2986, %v759
    %v3115 = vmul.f32 %v2987, %v759
    %v3116 = vmul.f32 %v2988, %v759
    %v3117 = vmul.f32 %v2989, %v759
    %v3118 = vmul.f32 %v2990, %v759
    %v3119 = vmul.f32 %v2991, %v759
    %v3120 = vmul.f32 %v2992, %v759
    %v3121 = vmul.f32 %v2993, %v759
    %v3122 = vmul.f32 %v2994, %v759
    %v3123 = vmul.f32 %v2995, %v759
    %v3124 = vmul.f32 %v2996, %v759
    %v3125 = vmul.f32 %v2997, %v759
    %v3126 = vmul.f32 %v2998, %v759
    %v3127 = vmul.f32 %v2999, %v759
    %v3128 = vmul.f32 %v3000, %v759
    %v3129 = vmul.f32 %v3001, %v759
    %v3130 = vmul.f32 %v3002, %v759
    %v3131 = vmul.f32 %v3003, %v759
    %v3132 = vmul.f32 %v3004, %v759
    %v3133 = vmul.f32 %v3005, %v759
    %v3134 = vmul.f32 %v3006, %v759
    %v3135 = vmul.f32 %v3007, %v759
    %v3136 = vmul.f32 %v3008, %v759
    %v3137 = vmul.f32 %v3009, %v759
    %v3138 = vmul.f32 %v3010, %v759
    %v3139 = vmul.f32 %v3011, %v759
    %v3140 = vmul.f32 %v3012, %v759
    %v3141 = vmul.f32 %v3013, %v759
    %v3142 = vmul.f32 %v3014, %v759
    %v3143 = vmul.f32 %v3015, %v759
    %v3144 = vmul.f32 %v3016, %v759
    %v3145 = vmul.f32 %v3017, %v759
    %v3146 = vmul.f32 %v3018, %v759
    %v3147 = vmul.f32 %v3019, %v759
    %v3148 = vmul.f32 %v3020, %v759
    %v3149 = vmul.f32 %v3021, %v759
    %v3150 = vmul.f32 %v3022, %v759
    %v3151 = vmul.f32 %v3023, %v759
    %v3152 = vmul.f32 %v3024, %v759
    %v3153 = vmul.f32 %v3025, %v759
    %v3154 = vmul.f32 %v3026, %v759
    %v3155 = vmul.f32 %v3027, %v759
    %v3156 = vmul.f32 %v3028, %v759
    %v3157 = vmul.f32 %v3029, %v759
    %v3158 = vmul.f32 %v3030, %v759
    %v3159 = vmul.f32 %v3031, %v759
    %v3160 = vmul.f32 %v3032, %v759
    %v3161 = vmul.f32 %v3033, %v759
    %v3162 = vmul.f32 %v3034, %v759
    %v3163 = vmul.f32 %v3035, %v759
    %v3164 = vmul.f32 %v3036, %v759
    %v3165 = vmul.f32 %v3037, %v759
    %v3166 = vmul.f32 %v3038, %v759
    %v3167 = vmul.f32 %v3039, %v759
    %v3168 = vmul.f32 %v3040, %v759
    %v3169 = vmul.f32 %v3041, %v759
    %v3170 = vmul.f32 %v3042, %v759
    %v3171 = vmul.f32 %v3043, %v759
    %v3172 = vmul.f32 %v3044, %v759
    %v3173 = vmul.f32 %v3045, %v759
    %v3174 = vmul.f32 %v3046, %v759
    %v3175 = vmul.f32 %v3047, %v759
    %v3176 = vmul.f32 %v3048, %v759
    %v3177 = vmul.f32 %v3049, %v759
    %v3178 = vmul.f32 %v3050, %v759
    %v3179 = vmul.f32 %v3051, %v759
    %v3180 = vmul.f32 %v3052, %v759
    %v3181 = vmul.f32 %v3053, %v759
    %v3182 = vmul.f32 %v3054, %v759
    %v3183 = vmul.f32 %v3055, %v759
    %v3184 = vmul.f32 %v3056, %v759
    %v3185 = vmul.f32 %v3057, %v759
    %v3186 = vmul.f32 %v3058, %v759
    %v3187 = vmul.f32 %v3059, %v759
    %v3188 = vmul.f32 %v3060, %v759
    %v3189 = vmul.f32 %v3061, %v759
    %v3190 = vmul.f32 %v3062, %v759
    %v3191 = vmul.f32 %v3063, %v759
    %v3192 = vmul.f32 %v3064, %v759
    %v3193 = vmul.f32 %v3065, %v759
    %v3194 = vmul.f32 %v3066, %v759
    %v3195 = vmul.f32 %v3067, %v759
    %v3196 = vmul.f32 %v3068, %v759
    %v3197 = vmul.f32 %v3069, %v759
    %v3198 = vmul.f32 %v3070, %v759
    %v3199 = vmul.f32 %v3071, %v759
    %v3200 = vmul.f32 %v3072, %v759
    %v3201 = vmul.f32 %v3073, %v759
    %v3202 = vmul.f32 %v3074, %v759
    %v3203 = vmul.f32 %v3075, %v759
    %v3204 = vmul.f32 %v3076, %v759
    %v3205 = vmul.f32 %v3077, %v759
    %v3206 = vmul.f32 %v3078, %v759
    %v3207 = vmul.f32 %v3079, %v759
    %v3208 = vmul.f32 %v3080, %v759
    %v3209 = vmul.f32 %v3081, %v759
    %v3210 = vmul.f32 %v3082, %v759
    %v3211 = vmul.f32 %v3083, %v759
    %v3212 = vmul.f32 %v3084, %v759
    %v3213 = vmul.f32 %v3085, %v759
    %v3214 = vmul.f32 %v3086, %v759
    %v3215 = vmul.f32 %v3087, %v759
    %v3216 = vmul.f32 %v3088, %v759
    %v3217 = vmul.f32 %v3089, %v759
    %v3218 = vmul.f32 %v3090, %v759
    %v3219 = vmul.f32 %v3091, %v759
    %v3220 = vmul.f32 %v3092, %v759
    %v3221 = vmul.f32 %v3093, %v759
    %v3222 = vmul.f32 %v3094, %v759
    %v3223 = vmul.f32 %v3095, %v759
    %v3224 = vmul.f32 %v3096, %v759
    %v3225 = vmul.f32 %v3097, %v759
    %v3226 = vmul.f32 %v3098, %v759
    %v3227 = vmul.f32 %v3099, %v759
    %v3228 = vmul.f32 %v3100, %v759
    %v3229 = vmul.f32 %v3101, %v759
    %v3230 = vmul.f32 %v3102, %v759
    %v3231 = vmul.f32 %v3103, %v759
    %v3232 = vmul.f32 %v3104, %v759
    %v3233 = vmul.f32 %v3105, %v759
    %v3234 = vmul.f32 %v3106, %v759
    %v3235 = vmul.f32 %v3107, %v759
    %v3236 = vmul.f32 %v3108, %v759
    %v3237 = vmul.f32 %v3109, %v759
    %v3238 = vmul.f32 %v3110, %v759
    %3239 = vadd.xlane.f32.xlu0 %v3111
    %v3240 = vpop.xlane.xlu0 %3239
    %3241 = vadd.xlane.f32.xlu0 %v3112
    %v3242 = vpop.xlane.xlu0 %3241
    %3243 = vadd.xlane.f32.xlu0 %v3113
    %v3244 = vpop.xlane.xlu0 %3243
    %3245 = vadd.xlane.f32.xlu0 %v3114
    %v3246 = vpop.xlane.xlu0 %3245
    %3247 = vadd.xlane.f32.xlu0 %v3115
    %v3248 = vpop.xlane.xlu0 %3247
    %3249 = vadd.xlane.f32.xlu0 %v3116
    %v3250 = vpop.xlane.xlu0 %3249
    %3251 = vadd.xlane.f32.xlu0 %v3117
    %v3252 = vpop.xlane.xlu0 %3251
    %3253 = vadd.xlane.f32.xlu0 %v3118
    %v3254 = vpop.xlane.xlu0 %3253
    %3255 = vadd.xlane.f32.xlu0 %v3119
    %v3256 = vpop.xlane.xlu0 %3255
    %3257 = vadd.xlane.f32.xlu0 %v3120
    %v3258 = vpop.xlane.xlu0 %3257
    %3259 = vadd.xlane.f32.xlu0 %v3121
    %v3260 = vpop.xlane.xlu0 %3259
    %3261 = vadd.xlane.f32.xlu0 %v3122
    %v3262 = vpop.xlane.xlu0 %3261
    %3263 = vadd.xlane.f32.xlu0 %v3123
    %v3264 = vpop.xlane.xlu0 %3263
    %3265 = vadd.xlane.f32.xlu0 %v3124
    %v3266 = vpop.xlane.xlu0 %3265
    %3267 = vadd.xlane.f32.xlu0 %v3125
    %v3268 = vpop.xlane.xlu0 %3267
    %3269 = vadd.xlane.f32.xlu0 %v3126
    %v3270 = vpop.xlane.xlu0 %3269
    %3271 = vadd.xlane.f32.xlu0 %v3127
    %v3272 = vpop.xlane.xlu0 %3271
    %3273 = vadd.xlane.f32.xlu0 %v3128
    %v3274 = vpop.xlane.xlu0 %3273
    %3275 = vadd.xlane.f32.xlu0 %v3129
    %v3276 = vpop.xlane.xlu0 %3275
    %3277 = vadd.xlane.f32.xlu0 %v3130
    %v3278 = vpop.xlane.xlu0 %3277
    %3279 = vadd.xlane.f32.xlu0 %v3131
    %v3280 = vpop.xlane.xlu0 %3279
    %3281 = vadd.xlane.f32.xlu0 %v3132
    %v3282 = vpop.xlane.xlu0 %3281
    %3283 = vadd.xlane.f32.xlu0 %v3133
    %v3284 = vpop.xlane.xlu0 %3283
    %3285 = vadd.xlane.f32.xlu0 %v3134
    %v3286 = vpop.xlane.xlu0 %3285
    %3287 = vadd.xlane.f32.xlu0 %v3135
    %v3288 = vpop.xlane.xlu0 %3287
    %3289 = vadd.xlane.f32.xlu0 %v3136
    %v3290 = vpop.xlane.xlu0 %3289
    %3291 = vadd.xlane.f32.xlu0 %v3137
    %v3292 = vpop.xlane.xlu0 %3291
    %3293 = vadd.xlane.f32.xlu0 %v3138
    %v3294 = vpop.xlane.xlu0 %3293
    %3295 = vadd.xlane.f32.xlu0 %v3139
    %v3296 = vpop.xlane.xlu0 %3295
    %3297 = vadd.xlane.f32.xlu0 %v3140
    %v3298 = vpop.xlane.xlu0 %3297
    %3299 = vadd.xlane.f32.xlu0 %v3141
    %v3300 = vpop.xlane.xlu0 %3299
    %3301 = vadd.xlane.f32.xlu0 %v3142
    %v3302 = vpop.xlane.xlu0 %3301
    %3303 = vadd.xlane.f32.xlu0 %v3143
    %v3304 = vpop.xlane.xlu0 %3303
    %3305 = vadd.xlane.f32.xlu0 %v3144
    %v3306 = vpop.xlane.xlu0 %3305
    %3307 = vadd.xlane.f32.xlu0 %v3145
    %v3308 = vpop.xlane.xlu0 %3307
    %3309 = vadd.xlane.f32.xlu0 %v3146
    %v3310 = vpop.xlane.xlu0 %3309
    %3311 = vadd.xlane.f32.xlu0 %v3147
    %v3312 = vpop.xlane.xlu0 %3311
    %3313 = vadd.xlane.f32.xlu0 %v3148
    %v3314 = vpop.xlane.xlu0 %3313
    %3315 = vadd.xlane.f32.xlu0 %v3149
    %v3316 = vpop.xlane.xlu0 %3315
    %3317 = vadd.xlane.f32.xlu0 %v3150
    %v3318 = vpop.xlane.xlu0 %3317
    %3319 = vadd.xlane.f32.xlu0 %v3151
    %v3320 = vpop.xlane.xlu0 %3319
    %3321 = vadd.xlane.f32.xlu0 %v3152
    %v3322 = vpop.xlane.xlu0 %3321
    %3323 = vadd.xlane.f32.xlu0 %v3153
    %v3324 = vpop.xlane.xlu0 %3323
    %3325 = vadd.xlane.f32.xlu0 %v3154
    %v3326 = vpop.xlane.xlu0 %3325
    %3327 = vadd.xlane.f32.xlu0 %v3155
    %v3328 = vpop.xlane.xlu0 %3327
    %3329 = vadd.xlane.f32.xlu0 %v3156
    %v3330 = vpop.xlane.xlu0 %3329
    %3331 = vadd.xlane.f32.xlu0 %v3157
    %v3332 = vpop.xlane.xlu0 %3331
    %3333 = vadd.xlane.f32.xlu0 %v3158
    %v3334 = vpop.xlane.xlu0 %3333
    %3335 = vadd.xlane.f32.xlu0 %v3159
    %v3336 = vpop.xlane.xlu0 %3335
    %3337 = vadd.xlane.f32.xlu0 %v3160
    %v3338 = vpop.xlane.xlu0 %3337
    %3339 = vadd.xlane.f32.xlu0 %v3161
    %v3340 = vpop.xlane.xlu0 %3339
    %3341 = vadd.xlane.f32.xlu0 %v3162
    %v3342 = vpop.xlane.xlu0 %3341
    %3343 = vadd.xlane.f32.xlu0 %v3163
    %v3344 = vpop.xlane.xlu0 %3343
    %3345 = vadd.xlane.f32.xlu0 %v3164
    %v3346 = vpop.xlane.xlu0 %3345
    %3347 = vadd.xlane.f32.xlu0 %v3165
    %v3348 = vpop.xlane.xlu0 %3347
    %3349 = vadd.xlane.f32.xlu0 %v3166
    %v3350 = vpop.xlane.xlu0 %3349
    %3351 = vadd.xlane.f32.xlu0 %v3167
    %v3352 = vpop.xlane.xlu0 %3351
    %3353 = vadd.xlane.f32.xlu0 %v3168
    %v3354 = vpop.xlane.xlu0 %3353
    %3355 = vadd.xlane.f32.xlu0 %v3169
    %v3356 = vpop.xlane.xlu0 %3355
    %3357 = vadd.xlane.f32.xlu0 %v3170
    %v3358 = vpop.xlane.xlu0 %3357
    %3359 = vadd.xlane.f32.xlu0 %v3171
    %v3360 = vpop.xlane.xlu0 %3359
    %3361 = vadd.xlane.f32.xlu0 %v3172
    %v3362 = vpop.xlane.xlu0 %3361
    %3363 = vadd.xlane.f32.xlu0 %v3173
    %v3364 = vpop.xlane.xlu0 %3363
    %3365 = vadd.xlane.f32.xlu0 %v3174
    %v3366 = vpop.xlane.xlu0 %3365
    %3367 = vadd.xlane.f32.xlu0 %v3175
    %v3368 = vpop.xlane.xlu0 %3367
    %3369 = vadd.xlane.f32.xlu0 %v3176
    %v3370 = vpop.xlane.xlu0 %3369
    %3371 = vadd.xlane.f32.xlu0 %v3177
    %v3372 = vpop.xlane.xlu0 %3371
    %3373 = vadd.xlane.f32.xlu0 %v3178
    %v3374 = vpop.xlane.xlu0 %3373
    %3375 = vadd.xlane.f32.xlu0 %v3179
    %v3376 = vpop.xlane.xlu0 %3375
    %3377 = vadd.xlane.f32.xlu0 %v3180
    %v3378 = vpop.xlane.xlu0 %3377
    %3379 = vadd.xlane.f32.xlu0 %v3181
    %v3380 = vpop.xlane.xlu0 %3379
    %3381 = vadd.xlane.f32.xlu0 %v3182
    %v3382 = vpop.xlane.xlu0 %3381
    %3383 = vadd.xlane.f32.xlu0 %v3183
    %v3384 = vpop.xlane.xlu0 %3383
    %3385 = vadd.xlane.f32.xlu0 %v3184
    %v3386 = vpop.xlane.xlu0 %3385
    %3387 = vadd.xlane.f32.xlu0 %v3185
    %v3388 = vpop.xlane.xlu0 %3387
    %3389 = vadd.xlane.f32.xlu0 %v3186
    %v3390 = vpop.xlane.xlu0 %3389
    %3391 = vadd.xlane.f32.xlu0 %v3187
    %v3392 = vpop.xlane.xlu0 %3391
    %3393 = vadd.xlane.f32.xlu0 %v3188
    %v3394 = vpop.xlane.xlu0 %3393
    %3395 = vadd.xlane.f32.xlu0 %v3189
    %v3396 = vpop.xlane.xlu0 %3395
    %3397 = vadd.xlane.f32.xlu0 %v3190
    %v3398 = vpop.xlane.xlu0 %3397
    %3399 = vadd.xlane.f32.xlu0 %v3191
    %v3400 = vpop.xlane.xlu0 %3399
    %3401 = vadd.xlane.f32.xlu0 %v3192
    %v3402 = vpop.xlane.xlu0 %3401
    %3403 = vadd.xlane.f32.xlu0 %v3193
    %v3404 = vpop.xlane.xlu0 %3403
    %3405 = vadd.xlane.f32.xlu0 %v3194
    %v3406 = vpop.xlane.xlu0 %3405
    %3407 = vadd.xlane.f32.xlu0 %v3195
    %v3408 = vpop.xlane.xlu0 %3407
    %3409 = vadd.xlane.f32.xlu0 %v3196
    %v3410 = vpop.xlane.xlu0 %3409
    %3411 = vadd.xlane.f32.xlu0 %v3197
    %v3412 = vpop.xlane.xlu0 %3411
    %3413 = vadd.xlane.f32.xlu0 %v3198
    %v3414 = vpop.xlane.xlu0 %3413
    %3415 = vadd.xlane.f32.xlu0 %v3199
    %v3416 = vpop.xlane.xlu0 %3415
    %3417 = vadd.xlane.f32.xlu0 %v3200
    %v3418 = vpop.xlane.xlu0 %3417
    %3419 = vadd.xlane.f32.xlu0 %v3201
    %v3420 = vpop.xlane.xlu0 %3419
    %3421 = vadd.xlane.f32.xlu0 %v3202
    %v3422 = vpop.xlane.xlu0 %3421
    %3423 = vadd.xlane.f32.xlu0 %v3203
    %v3424 = vpop.xlane.xlu0 %3423
    %3425 = vadd.xlane.f32.xlu0 %v3204
    %v3426 = vpop.xlane.xlu0 %3425
    %3427 = vadd.xlane.f32.xlu0 %v3205
    %v3428 = vpop.xlane.xlu0 %3427
    %3429 = vadd.xlane.f32.xlu0 %v3206
    %v3430 = vpop.xlane.xlu0 %3429
    %3431 = vadd.xlane.f32.xlu0 %v3207
    %v3432 = vpop.xlane.xlu0 %3431
    %3433 = vadd.xlane.f32.xlu0 %v3208
    %v3434 = vpop.xlane.xlu0 %3433
    %3435 = vadd.xlane.f32.xlu0 %v3209
    %v3436 = vpop.xlane.xlu0 %3435
    %3437 = vadd.xlane.f32.xlu0 %v3210
    %v3438 = vpop.xlane.xlu0 %3437
    %3439 = vadd.xlane.f32.xlu0 %v3211
    %v3440 = vpop.xlane.xlu0 %3439
    %3441 = vadd.xlane.f32.xlu0 %v3212
    %v3442 = vpop.xlane.xlu0 %3441
    %3443 = vadd.xlane.f32.xlu0 %v3213
    %v3444 = vpop.xlane.xlu0 %3443
    %3445 = vadd.xlane.f32.xlu0 %v3214
    %v3446 = vpop.xlane.xlu0 %3445
    %3447 = vadd.xlane.f32.xlu0 %v3215
    %v3448 = vpop.xlane.xlu0 %3447
    %3449 = vadd.xlane.f32.xlu0 %v3216
    %v3450 = vpop.xlane.xlu0 %3449
    %3451 = vadd.xlane.f32.xlu0 %v3217
    %v3452 = vpop.xlane.xlu0 %3451
    %3453 = vadd.xlane.f32.xlu0 %v3218
    %v3454 = vpop.xlane.xlu0 %3453
    %3455 = vadd.xlane.f32.xlu0 %v3219
    %v3456 = vpop.xlane.xlu0 %3455
    %3457 = vadd.xlane.f32.xlu0 %v3220
    %v3458 = vpop.xlane.xlu0 %3457
    %3459 = vadd.xlane.f32.xlu0 %v3221
    %v3460 = vpop.xlane.xlu0 %3459
    %3461 = vadd.xlane.f32.xlu0 %v3222
    %v3462 = vpop.xlane.xlu0 %3461
    %3463 = vadd.xlane.f32.xlu0 %v3223
    %v3464 = vpop.xlane.xlu0 %3463
    %3465 = vadd.xlane.f32.xlu0 %v3224
    %v3466 = vpop.xlane.xlu0 %3465
    %3467 = vadd.xlane.f32.xlu0 %v3225
    %v3468 = vpop.xlane.xlu0 %3467
    %3469 = vadd.xlane.f32.xlu0 %v3226
    %v3470 = vpop.xlane.xlu0 %3469
    %3471 = vadd.xlane.f32.xlu0 %v3227
    %v3472 = vpop.xlane.xlu0 %3471
    %3473 = vadd.xlane.f32.xlu0 %v3228
    %v3474 = vpop.xlane.xlu0 %3473
    %3475 = vadd.xlane.f32.xlu0 %v3229
    %v3476 = vpop.xlane.xlu0 %3475
    %3477 = vadd.xlane.f32.xlu0 %v3230
    %v3478 = vpop.xlane.xlu0 %3477
    %3479 = vadd.xlane.f32.xlu0 %v3231
    %v3480 = vpop.xlane.xlu0 %3479
    %3481 = vadd.xlane.f32.xlu0 %v3232
    %v3482 = vpop.xlane.xlu0 %3481
    %3483 = vadd.xlane.f32.xlu0 %v3233
    %v3484 = vpop.xlane.xlu0 %3483
    %3485 = vadd.xlane.f32.xlu0 %v3234
    %v3486 = vpop.xlane.xlu0 %3485
    %3487 = vadd.xlane.f32.xlu0 %v3235
    %v3488 = vpop.xlane.xlu0 %3487
    %3489 = vadd.xlane.f32.xlu0 %v3236
    %v3490 = vpop.xlane.xlu0 %3489
    %3491 = vadd.xlane.f32.xlu0 %v3237
    %v3492 = vpop.xlane.xlu0 %3491
    %3493 = vadd.xlane.f32.xlu0 %v3238
    %v3494 = vpop.xlane.xlu0 %3493
    %v3495 = vadd.f32 %v3240, %v3242
    %v3496 = vadd.f32 %v3495, %v3244
    %v3497 = vadd.f32 %v3496, %v3246
    %v3498 = vadd.f32 %v3497, %v3248
    %v3499 = vadd.f32 %v3498, %v3250
    %v3500 = vadd.f32 %v3499, %v3252
    %v3501 = vadd.f32 %v3500, %v3254
    %v3502 = vadd.f32 %v3501, %v3256
    %v3503 = vadd.f32 %v3502, %v3258
    %v3504 = vadd.f32 %v3503, %v3260
    %v3505 = vadd.f32 %v3504, %v3262
    %v3506 = vadd.f32 %v3505, %v3264
    %v3507 = vadd.f32 %v3506, %v3266
    %v3508 = vadd.f32 %v3507, %v3268
    %v3509 = vadd.f32 %v3508, %v3270
    %v3510 = vadd.f32 %v3509, %v3272
    %v3511 = vadd.f32 %v3510, %v3274
    %v3512 = vadd.f32 %v3511, %v3276
    %v3513 = vadd.f32 %v3512, %v3278
    %v3514 = vadd.f32 %v3513, %v3280
    %v3515 = vadd.f32 %v3514, %v3282
    %v3516 = vadd.f32 %v3515, %v3284
    %v3517 = vadd.f32 %v3516, %v3286
    %v3518 = vadd.f32 %v3517, %v3288
    %v3519 = vadd.f32 %v3518, %v3290
    %v3520 = vadd.f32 %v3519, %v3292
    %v3521 = vadd.f32 %v3520, %v3294
    %v3522 = vadd.f32 %v3521, %v3296
    %v3523 = vadd.f32 %v3522, %v3298
    %v3524 = vadd.f32 %v3523, %v3300
    %v3525 = vadd.f32 %v3524, %v3302
    %v3526 = vadd.f32 %v3525, %v3304
    %v3527 = vadd.f32 %v3526, %v3306
    %v3528 = vadd.f32 %v3527, %v3308
    %v3529 = vadd.f32 %v3528, %v3310
    %v3530 = vadd.f32 %v3529, %v3312
    %v3531 = vadd.f32 %v3530, %v3314
    %v3532 = vadd.f32 %v3531, %v3316
    %v3533 = vadd.f32 %v3532, %v3318
    %v3534 = vadd.f32 %v3533, %v3320
    %v3535 = vadd.f32 %v3534, %v3322
    %v3536 = vadd.f32 %v3535, %v3324
    %v3537 = vadd.f32 %v3536, %v3326
    %v3538 = vadd.f32 %v3537, %v3328
    %v3539 = vadd.f32 %v3538, %v3330
    %v3540 = vadd.f32 %v3539, %v3332
    %v3541 = vadd.f32 %v3540, %v3334
    %v3542 = vadd.f32 %v3541, %v3336
    %v3543 = vadd.f32 %v3542, %v3338
    %v3544 = vadd.f32 %v3543, %v3340
    %v3545 = vadd.f32 %v3544, %v3342
    %v3546 = vadd.f32 %v3545, %v3344
    %v3547 = vadd.f32 %v3546, %v3346
    %v3548 = vadd.f32 %v3547, %v3348
    %v3549 = vadd.f32 %v3548, %v3350
    %v3550 = vadd.f32 %v3549, %v3352
    %v3551 = vadd.f32 %v3550, %v3354
    %v3552 = vadd.f32 %v3551, %v3356
    %v3553 = vadd.f32 %v3552, %v3358
    %v3554 = vadd.f32 %v3553, %v3360
    %v3555 = vadd.f32 %v3554, %v3362
    %v3556 = vadd.f32 %v3555, %v3364
    %v3557 = vadd.f32 %v3556, %v3366
    %v3558 = vadd.f32 %v3557, %v3368
    %v3559 = vadd.f32 %v3558, %v3370
    %v3560 = vadd.f32 %v3559, %v3372
    %v3561 = vadd.f32 %v3560, %v3374
    %v3562 = vadd.f32 %v3561, %v3376
    %v3563 = vadd.f32 %v3562, %v3378
    %v3564 = vadd.f32 %v3563, %v3380
    %v3565 = vadd.f32 %v3564, %v3382
    %v3566 = vadd.f32 %v3565, %v3384
    %v3567 = vadd.f32 %v3566, %v3386
    %v3568 = vadd.f32 %v3567, %v3388
    %v3569 = vadd.f32 %v3568, %v3390
    %v3570 = vadd.f32 %v3569, %v3392
    %v3571 = vadd.f32 %v3570, %v3394
    %v3572 = vadd.f32 %v3571, %v3396
    %v3573 = vadd.f32 %v3572, %v3398
    %v3574 = vadd.f32 %v3573, %v3400
    %v3575 = vadd.f32 %v3574, %v3402
    %v3576 = vadd.f32 %v3575, %v3404
    %v3577 = vadd.f32 %v3576, %v3406
    %v3578 = vadd.f32 %v3577, %v3408
    %v3579 = vadd.f32 %v3578, %v3410
    %v3580 = vadd.f32 %v3579, %v3412
    %v3581 = vadd.f32 %v3580, %v3414
    %v3582 = vadd.f32 %v3581, %v3416
    %v3583 = vadd.f32 %v3582, %v3418
    %v3584 = vadd.f32 %v3583, %v3420
    %v3585 = vadd.f32 %v3584, %v3422
    %v3586 = vadd.f32 %v3585, %v3424
    %v3587 = vadd.f32 %v3586, %v3426
    %v3588 = vadd.f32 %v3587, %v3428
    %v3589 = vadd.f32 %v3588, %v3430
    %v3590 = vadd.f32 %v3589, %v3432
    %v3591 = vadd.f32 %v3590, %v3434
    %v3592 = vadd.f32 %v3591, %v3436
    %v3593 = vadd.f32 %v3592, %v3438
    %v3594 = vadd.f32 %v3593, %v3440
    %v3595 = vadd.f32 %v3594, %v3442
    %v3596 = vadd.f32 %v3595, %v3444
    %v3597 = vadd.f32 %v3596, %v3446
    %v3598 = vadd.f32 %v3597, %v3448
    %v3599 = vadd.f32 %v3598, %v3450
    %v3600 = vadd.f32 %v3599, %v3452
    %v3601 = vadd.f32 %v3600, %v3454
    %v3602 = vadd.f32 %v3601, %v3456
    %v3603 = vadd.f32 %v3602, %v3458
    %v3604 = vadd.f32 %v3603, %v3460
    %v3605 = vadd.f32 %v3604, %v3462
    %v3606 = vadd.f32 %v3605, %v3464
    %v3607 = vadd.f32 %v3606, %v3466
    %v3608 = vadd.f32 %v3607, %v3468
    %v3609 = vadd.f32 %v3608, %v3470
    %v3610 = vadd.f32 %v3609, %v3472
    %v3611 = vadd.f32 %v3610, %v3474
    %v3612 = vadd.f32 %v3611, %v3476
    %v3613 = vadd.f32 %v3612, %v3478
    %v3614 = vadd.f32 %v3613, %v3480
    %v3615 = vadd.f32 %v3614, %v3482
    %v3616 = vadd.f32 %v3615, %v3484
    %v3617 = vadd.f32 %v3616, %v3486
    %v3618 = vadd.f32 %v3617, %v3488
    %v3619 = vadd.f32 %v3618, %v3490
    %v3620 = vadd.f32 %v3619, %v3492
    %v3621 = vadd.f32 %v3620, %v3494
    %v3622 = vrot.slane %v3621, 4
    %v3623 = vadd.f32 %v3621, %v3622
    %v3624 = vrot.slane %v3623, 2
    %v3625 = vadd.f32 %v3623, %v3624
    %v3626 = vrot.slane %v3625, 1
    %v3627 = vadd.f32 %v3625, %v3626
    %v3628 = vmul.f32 %v3627, 0.0009765625
    %v3629 = vld [vmem:[#allocation2 + $0x18] sm:$0xff]
    %v3630 = vld [vmem:[#allocation2 + $0x38] sm:$0xff]
    %v3631 = vld [vmem:[#allocation2 + $0x58] sm:$0xff]
    %v3632 = vld [vmem:[#allocation2 + $0x78] sm:$0xff]
    %v3633 = vld [vmem:[#allocation2 + $0x98] sm:$0xff]
    %v3634 = vld [vmem:[#allocation2 + $0xb8] sm:$0xff]
    %v3635 = vld [vmem:[#allocation2 + $0xd8] sm:$0xff]
    %v3636 = vld [vmem:[#allocation2 + $0xf8] sm:$0xff]
    %v3637 = vld [vmem:[#allocation2 + $0x118] sm:$0xff]
    %v3638 = vld [vmem:[#allocation2 + $0x138] sm:$0xff]
    %v3639 = vld [vmem:[#allocation2 + $0x158] sm:$0xff]
    %v3640 = vld [vmem:[#allocation2 + $0x178] sm:$0xff]
    %v3641 = vld [vmem:[#allocation2 + $0x198] sm:$0xff]
    %v3642 = vld [vmem:[#allocation2 + $0x1b8] sm:$0xff]
    %v3643 = vld [vmem:[#allocation2 + $0x1d8] sm:$0xff]
    %v3644 = vld [vmem:[#allocation2 + $0x1f8] sm:$0xff]
    %v3645 = vld [vmem:[#allocation2 + $0x218] sm:$0xff]
    %v3646 = vld [vmem:[#allocation2 + $0x238] sm:$0xff]
    %v3647 = vld [vmem:[#allocation2 + $0x258] sm:$0xff]
    %v3648 = vld [vmem:[#allocation2 + $0x278] sm:$0xff]
    %v3649 = vld [vmem:[#allocation2 + $0x298] sm:$0xff]
    %v3650 = vld [vmem:[#allocation2 + $0x2b8] sm:$0xff]
    %v3651 = vld [vmem:[#allocation2 + $0x2d8] sm:$0xff]
    %v3652 = vld [vmem:[#allocation2 + $0x2f8] sm:$0xff]
    %v3653 = vld [vmem:[#allocation2 + $0x318] sm:$0xff]
    %v3654 = vld [vmem:[#allocation2 + $0x338] sm:$0xff]
    %v3655 = vld [vmem:[#allocation2 + $0x358] sm:$0xff]
    %v3656 = vld [vmem:[#allocation2 + $0x378] sm:$0xff]
    %v3657 = vld [vmem:[#allocation2 + $0x398] sm:$0xff]
    %v3658 = vld [vmem:[#allocation2 + $0x3b8] sm:$0xff]
    %v3659 = vld [vmem:[#allocation2 + $0x3d8] sm:$0xff]
    %v3660 = vld [vmem:[#allocation2 + $0x3f8] sm:$0xff]
    %v3661 = vld [vmem:[#allocation2 + $0x418] sm:$0xff]
    %v3662 = vld [vmem:[#allocation2 + $0x438] sm:$0xff]
    %v3663 = vld [vmem:[#allocation2 + $0x458] sm:$0xff]
    %v3664 = vld [vmem:[#allocation2 + $0x478] sm:$0xff]
    %v3665 = vld [vmem:[#allocation2 + $0x498] sm:$0xff]
    %v3666 = vld [vmem:[#allocation2 + $0x4b8] sm:$0xff]
    %v3667 = vld [vmem:[#allocation2 + $0x4d8] sm:$0xff]
    %v3668 = vld [vmem:[#allocation2 + $0x4f8] sm:$0xff]
    %v3669 = vld [vmem:[#allocation2 + $0x518] sm:$0xff]
    %v3670 = vld [vmem:[#allocation2 + $0x538] sm:$0xff]
    %v3671 = vld [vmem:[#allocation2 + $0x558] sm:$0xff]
    %v3672 = vld [vmem:[#allocation2 + $0x578] sm:$0xff]
    %v3673 = vld [vmem:[#allocation2 + $0x598] sm:$0xff]
    %v3674 = vld [vmem:[#allocation2 + $0x5b8] sm:$0xff]
    %v3675 = vld [vmem:[#allocation2 + $0x5d8] sm:$0xff]
    %v3676 = vld [vmem:[#allocation2 + $0x5f8] sm:$0xff]
    %v3677 = vld [vmem:[#allocation2 + $0x618] sm:$0xff]
    %v3678 = vld [vmem:[#allocation2 + $0x638] sm:$0xff]
    %v3679 = vld [vmem:[#allocation2 + $0x658] sm:$0xff]
    %v3680 = vld [vmem:[#allocation2 + $0x678] sm:$0xff]
    %v3681 = vld [vmem:[#allocation2 + $0x698] sm:$0xff]
    %v3682 = vld [vmem:[#allocation2 + $0x6b8] sm:$0xff]
    %v3683 = vld [vmem:[#allocation2 + $0x6d8] sm:$0xff]
    %v3684 = vld [vmem:[#allocation2 + $0x6f8] sm:$0xff]
    %v3685 = vld [vmem:[#allocation2 + $0x718] sm:$0xff]
    %v3686 = vld [vmem:[#allocation2 + $0x738] sm:$0xff]
    %v3687 = vld [vmem:[#allocation2 + $0x758] sm:$0xff]
    %v3688 = vld [vmem:[#allocation2 + $0x778] sm:$0xff]
    %v3689 = vld [vmem:[#allocation2 + $0x798] sm:$0xff]
    %v3690 = vld [vmem:[#allocation2 + $0x7b8] sm:$0xff]
    %v3691 = vld [vmem:[#allocation2 + $0x7d8] sm:$0xff]
    %v3692 = vld [vmem:[#allocation2 + $0x7f8] sm:$0xff]
    %v3693 = vld [vmem:[#allocation2 + $0x818] sm:$0xff]
    %v3694 = vld [vmem:[#allocation2 + $0x838] sm:$0xff]
    %v3695 = vld [vmem:[#allocation2 + $0x858] sm:$0xff]
    %v3696 = vld [vmem:[#allocation2 + $0x878] sm:$0xff]
    %v3697 = vld [vmem:[#allocation2 + $0x898] sm:$0xff]
    %v3698 = vld [vmem:[#allocation2 + $0x8b8] sm:$0xff]
    %v3699 = vld [vmem:[#allocation2 + $0x8d8] sm:$0xff]
    %v3700 = vld [vmem:[#allocation2 + $0x8f8] sm:$0xff]
    %v3701 = vld [vmem:[#allocation2 + $0x918] sm:$0xff]
    %v3702 = vld [vmem:[#allocation2 + $0x938] sm:$0xff]
    %v3703 = vld [vmem:[#allocation2 + $0x958] sm:$0xff]
    %v3704 = vld [vmem:[#allocation2 + $0x978] sm:$0xff]
    %v3705 = vld [vmem:[#allocation2 + $0x998] sm:$0xff]
    %v3706 = vld [vmem:[#allocation2 + $0x9b8] sm:$0xff]
    %v3707 = vld [vmem:[#allocation2 + $0x9d8] sm:$0xff]
    %v3708 = vld [vmem:[#allocation2 + $0x9f8] sm:$0xff]
    %v3709 = vld [vmem:[#allocation2 + $0xa18] sm:$0xff]
    %v3710 = vld [vmem:[#allocation2 + $0xa38] sm:$0xff]
    %v3711 = vld [vmem:[#allocation2 + $0xa58] sm:$0xff]
    %v3712 = vld [vmem:[#allocation2 + $0xa78] sm:$0xff]
    %v3713 = vld [vmem:[#allocation2 + $0xa98] sm:$0xff]
    %v3714 = vld [vmem:[#allocation2 + $0xab8] sm:$0xff]
    %v3715 = vld [vmem:[#allocation2 + $0xad8] sm:$0xff]
    %v3716 = vld [vmem:[#allocation2 + $0xaf8] sm:$0xff]
    %v3717 = vld [vmem:[#allocation2 + $0xb18] sm:$0xff]
    %v3718 = vld [vmem:[#allocation2 + $0xb38] sm:$0xff]
    %v3719 = vld [vmem:[#allocation2 + $0xb58] sm:$0xff]
    %v3720 = vld [vmem:[#allocation2 + $0xb78] sm:$0xff]
    %v3721 = vld [vmem:[#allocation2 + $0xb98] sm:$0xff]
    %v3722 = vld [vmem:[#allocation2 + $0xbb8] sm:$0xff]
    %v3723 = vld [vmem:[#allocation2 + $0xbd8] sm:$0xff]
    %v3724 = vld [vmem:[#allocation2 + $0xbf8] sm:$0xff]
    %v3725 = vld [vmem:[#allocation2 + $0xc18] sm:$0xff]
    %v3726 = vld [vmem:[#allocation2 + $0xc38] sm:$0xff]
    %v3727 = vld [vmem:[#allocation2 + $0xc58] sm:$0xff]
    %v3728 = vld [vmem:[#allocation2 + $0xc78] sm:$0xff]
    %v3729 = vld [vmem:[#allocation2 + $0xc98] sm:$0xff]
    %v3730 = vld [vmem:[#allocation2 + $0xcb8] sm:$0xff]
    %v3731 = vld [vmem:[#allocation2 + $0xcd8] sm:$0xff]
    %v3732 = vld [vmem:[#allocation2 + $0xcf8] sm:$0xff]
    %v3733 = vld [vmem:[#allocation2 + $0xd18] sm:$0xff]
    %v3734 = vld [vmem:[#allocation2 + $0xd38] sm:$0xff]
    %v3735 = vld [vmem:[#allocation2 + $0xd58] sm:$0xff]
    %v3736 = vld [vmem:[#allocation2 + $0xd78] sm:$0xff]
    %v3737 = vld [vmem:[#allocation2 + $0xd98] sm:$0xff]
    %v3738 = vld [vmem:[#allocation2 + $0xdb8] sm:$0xff]
    %v3739 = vld [vmem:[#allocation2 + $0xdd8] sm:$0xff]
    %v3740 = vld [vmem:[#allocation2 + $0xdf8] sm:$0xff]
    %v3741 = vld [vmem:[#allocation2 + $0xe18] sm:$0xff]
    %v3742 = vld [vmem:[#allocation2 + $0xe38] sm:$0xff]
    %v3743 = vld [vmem:[#allocation2 + $0xe58] sm:$0xff]
    %v3744 = vld [vmem:[#allocation2 + $0xe78] sm:$0xff]
    %v3745 = vld [vmem:[#allocation2 + $0xe98] sm:$0xff]
    %v3746 = vld [vmem:[#allocation2 + $0xeb8] sm:$0xff]
    %v3747 = vld [vmem:[#allocation2 + $0xed8] sm:$0xff]
    %v3748 = vld [vmem:[#allocation2 + $0xef8] sm:$0xff]
    %v3749 = vld [vmem:[#allocation2 + $0xf18] sm:$0xff]
    %v3750 = vld [vmem:[#allocation2 + $0xf38] sm:$0xff]
    %v3751 = vld [vmem:[#allocation2 + $0xf58] sm:$0xff]
    %v3752 = vld [vmem:[#allocation2 + $0xf78] sm:$0xff]
    %v3753 = vld [vmem:[#allocation2 + $0xf98] sm:$0xff]
    %v3754 = vld [vmem:[#allocation2 + $0xfb8] sm:$0xff]
    %v3755 = vld [vmem:[#allocation2 + $0xfd8] sm:$0xff]
    %v3756 = vld [vmem:[#allocation2 + $0xff8] sm:$0xff]
    %3757 = vmatpush.msra.mxu0 %v95
    %3758 = vmatpush.msra.mxu0 %v94
    %3759 = vmatpush.msra.mxu0 %v93
    %3760 = vmatpush.msra.mxu0 %v92
    %3761 = vmatpush.msra.mxu0 %v91
    %3762 = vmatpush.msra.mxu0 %v90
    %3763 = vmatpush.msra.mxu0 %v89
    %3764 = vmatpush.msra.mxu0 %v88
    %3765 = vmatpush.msra.mxu0 %v87
    %3766 = vmatpush.msra.mxu0 %v86
    %3767 = vmatpush.msra.mxu0 %v85
    %3768 = vmatpush.msra.mxu0 %v84
    %3769 = vmatpush.msra.mxu0 %v83
    %3770 = vmatpush.msra.mxu0 %v82
    %3771 = vmatpush.msra.mxu0 %v81
    %3772 = vmatpush.msra.mxu0 %v80
    %3773 = vmatmul.f32.gmra.mxu0 %v3629
    %v3774 = vpop.f32.mrf.mxu0
    %v3775 = vadd.f32 %v227, %v3774
    %3776 = vmatmul.f32.gmra.mxu0 %v3630
    %v3777 = vpop.f32.mrf.mxu0
    %v3778 = vadd.f32 %v227, %v3777
    %3779 = vmatmul.f32.gmra.mxu0 %v3631
    %v3780 = vpop.f32.mrf.mxu0
    %v3781 = vadd.f32 %v227, %v3780
    %3782 = vmatmul.f32.gmra.mxu0 %v3632
    %v3783 = vpop.f32.mrf.mxu0
    %v3784 = vadd.f32 %v227, %v3783
    %3785 = vmatmul.f32.gmra.mxu0 %v3633
    %v3786 = vpop.f32.mrf.mxu0
    %v3787 = vadd.f32 %v227, %v3786
    %3788 = vmatmul.f32.gmra.mxu0 %v3634
    %v3789 = vpop.f32.mrf.mxu0
    %v3790 = vadd.f32 %v227, %v3789
    %3791 = vmatmul.f32.gmra.mxu0 %v3635
    %v3792 = vpop.f32.mrf.mxu0
    %v3793 = vadd.f32 %v227, %v3792
    %3794 = vmatmul.f32.gmra.mxu0 %v3636
    %v3795 = vpop.f32.mrf.mxu0
    %v3796 = vadd.f32 %v227, %v3795
    %3797 = vmatmul.f32.gmra.mxu0 %v3637
    %v3798 = vpop.f32.mrf.mxu0
    %v3799 = vadd.f32 %v227, %v3798
    %3800 = vmatmul.f32.gmra.mxu0 %v3638
    %v3801 = vpop.f32.mrf.mxu0
    %v3802 = vadd.f32 %v227, %v3801
    %3803 = vmatmul.f32.gmra.mxu0 %v3639
    %v3804 = vpop.f32.mrf.mxu0
    %v3805 = vadd.f32 %v227, %v3804
    %3806 = vmatmul.f32.gmra.mxu0 %v3640
    %v3807 = vpop.f32.mrf.mxu0
    %v3808 = vadd.f32 %v227, %v3807
    %3809 = vmatmul.f32.gmra.mxu0 %v3641
    %v3810 = vpop.f32.mrf.mxu0
    %v3811 = vadd.f32 %v227, %v3810
    %3812 = vmatmul.f32.gmra.mxu0 %v3642
    %v3813 = vpop.f32.mrf.mxu0
    %v3814 = vadd.f32 %v227, %v3813
    %3815 = vmatmul.f32.gmra.mxu0 %v3643
    %v3816 = vpop.f32.mrf.mxu0
    %v3817 = vadd.f32 %v227, %v3816
    %3818 = vmatmul.f32.gmra.mxu0 %v3644
    %v3819 = vpop.f32.mrf.mxu0
    %v3820 = vadd.f32 %v227, %v3819
    %3821 = vmatmul.f32.gmra.mxu0 %v3645
    %v3822 = vpop.f32.mrf.mxu0
    %v3823 = vadd.f32 %v227, %v3822
    %3824 = vmatmul.f32.gmra.mxu0 %v3646
    %v3825 = vpop.f32.mrf.mxu0
    %v3826 = vadd.f32 %v227, %v3825
    %3827 = vmatmul.f32.gmra.mxu0 %v3647
    %v3828 = vpop.f32.mrf.mxu0
    %v3829 = vadd.f32 %v227, %v3828
    %3830 = vmatmul.f32.gmra.mxu0 %v3648
    %v3831 = vpop.f32.mrf.mxu0
    %v3832 = vadd.f32 %v227, %v3831
    %3833 = vmatmul.f32.gmra.mxu0 %v3649
    %v3834 = vpop.f32.mrf.mxu0
    %v3835 = vadd.f32 %v227, %v3834
    %3836 = vmatmul.f32.gmra.mxu0 %v3650
    %v3837 = vpop.f32.mrf.mxu0
    %v3838 = vadd.f32 %v227, %v3837
    %3839 = vmatmul.f32.gmra.mxu0 %v3651
    %v3840 = vpop.f32.mrf.mxu0
    %v3841 = vadd.f32 %v227, %v3840
    %3842 = vmatmul.f32.gmra.mxu0 %v3652
    %v3843 = vpop.f32.mrf.mxu0
    %v3844 = vadd.f32 %v227, %v3843
    %3845 = vmatmul.f32.gmra.mxu0 %v3653
    %v3846 = vpop.f32.mrf.mxu0
    %v3847 = vadd.f32 %v227, %v3846
    %3848 = vmatmul.f32.gmra.mxu0 %v3654
    %v3849 = vpop.f32.mrf.mxu0
    %v3850 = vadd.f32 %v227, %v3849
    %3851 = vmatmul.f32.gmra.mxu0 %v3655
    %v3852 = vpop.f32.mrf.mxu0
    %v3853 = vadd.f32 %v227, %v3852
    %3854 = vmatmul.f32.gmra.mxu0 %v3656
    %v3855 = vpop.f32.mrf.mxu0
    %v3856 = vadd.f32 %v227, %v3855
    %3857 = vmatmul.f32.gmra.mxu0 %v3657
    %v3858 = vpop.f32.mrf.mxu0
    %v3859 = vadd.f32 %v227, %v3858
    %3860 = vmatmul.f32.gmra.mxu0 %v3658
    %v3861 = vpop.f32.mrf.mxu0
    %v3862 = vadd.f32 %v227, %v3861
    %3863 = vmatmul.f32.gmra.mxu0 %v3659
    %v3864 = vpop.f32.mrf.mxu0
    %v3865 = vadd.f32 %v227, %v3864
    %3866 = vmatmul.f32.gmra.mxu0 %v3660
    %v3867 = vpop.f32.mrf.mxu0
    %v3868 = vadd.f32 %v227, %v3867
    %3869 = vmatmul.f32.gmra.mxu0 %v3661
    %v3870 = vpop.f32.mrf.mxu0
    %v3871 = vadd.f32 %v227, %v3870
    %3872 = vmatmul.f32.gmra.mxu0 %v3662
    %v3873 = vpop.f32.mrf.mxu0
    %v3874 = vadd.f32 %v227, %v3873
    %3875 = vmatmul.f32.gmra.mxu0 %v3663
    %v3876 = vpop.f32.mrf.mxu0
    %v3877 = vadd.f32 %v227, %v3876
    %3878 = vmatmul.f32.gmra.mxu0 %v3664
    %v3879 = vpop.f32.mrf.mxu0
    %v3880 = vadd.f32 %v227, %v3879
    %3881 = vmatmul.f32.gmra.mxu0 %v3665
    %v3882 = vpop.f32.mrf.mxu0
    %v3883 = vadd.f32 %v227, %v3882
    %3884 = vmatmul.f32.gmra.mxu0 %v3666
    %v3885 = vpop.f32.mrf.mxu0
    %v3886 = vadd.f32 %v227, %v3885
    %3887 = vmatmul.f32.gmra.mxu0 %v3667
    %v3888 = vpop.f32.mrf.mxu0
    %v3889 = vadd.f32 %v227, %v3888
    %3890 = vmatmul.f32.gmra.mxu0 %v3668
    %v3891 = vpop.f32.mrf.mxu0
    %v3892 = vadd.f32 %v227, %v3891
    %3893 = vmatmul.f32.gmra.mxu0 %v3669
    %v3894 = vpop.f32.mrf.mxu0
    %v3895 = vadd.f32 %v227, %v3894
    %3896 = vmatmul.f32.gmra.mxu0 %v3670
    %v3897 = vpop.f32.mrf.mxu0
    %v3898 = vadd.f32 %v227, %v3897
    %3899 = vmatmul.f32.gmra.mxu0 %v3671
    %v3900 = vpop.f32.mrf.mxu0
    %v3901 = vadd.f32 %v227, %v3900
    %3902 = vmatmul.f32.gmra.mxu0 %v3672
    %v3903 = vpop.f32.mrf.mxu0
    %v3904 = vadd.f32 %v227, %v3903
    %3905 = vmatmul.f32.gmra.mxu0 %v3673
    %v3906 = vpop.f32.mrf.mxu0
    %v3907 = vadd.f32 %v227, %v3906
    %3908 = vmatmul.f32.gmra.mxu0 %v3674
    %v3909 = vpop.f32.mrf.mxu0
    %v3910 = vadd.f32 %v227, %v3909
    %3911 = vmatmul.f32.gmra.mxu0 %v3675
    %v3912 = vpop.f32.mrf.mxu0
    %v3913 = vadd.f32 %v227, %v3912
    %3914 = vmatmul.f32.gmra.mxu0 %v3676
    %v3915 = vpop.f32.mrf.mxu0
    %v3916 = vadd.f32 %v227, %v3915
    %3917 = vmatmul.f32.gmra.mxu0 %v3677
    %v3918 = vpop.f32.mrf.mxu0
    %v3919 = vadd.f32 %v227, %v3918
    %3920 = vmatmul.f32.gmra.mxu0 %v3678
    %v3921 = vpop.f32.mrf.mxu0
    %v3922 = vadd.f32 %v227, %v3921
    %3923 = vmatmul.f32.gmra.mxu0 %v3679
    %v3924 = vpop.f32.mrf.mxu0
    %v3925 = vadd.f32 %v227, %v3924
    %3926 = vmatmul.f32.gmra.mxu0 %v3680
    %v3927 = vpop.f32.mrf.mxu0
    %v3928 = vadd.f32 %v227, %v3927
    %3929 = vmatmul.f32.gmra.mxu0 %v3681
    %v3930 = vpop.f32.mrf.mxu0
    %v3931 = vadd.f32 %v227, %v3930
    %3932 = vmatmul.f32.gmra.mxu0 %v3682
    %v3933 = vpop.f32.mrf.mxu0
    %v3934 = vadd.f32 %v227, %v3933
    %3935 = vmatmul.f32.gmra.mxu0 %v3683
    %v3936 = vpop.f32.mrf.mxu0
    %v3937 = vadd.f32 %v227, %v3936
    %3938 = vmatmul.f32.gmra.mxu0 %v3684
    %v3939 = vpop.f32.mrf.mxu0
    %v3940 = vadd.f32 %v227, %v3939
    %3941 = vmatmul.f32.gmra.mxu0 %v3685
    %v3942 = vpop.f32.mrf.mxu0
    %v3943 = vadd.f32 %v227, %v3942
    %3944 = vmatmul.f32.gmra.mxu0 %v3686
    %v3945 = vpop.f32.mrf.mxu0
    %v3946 = vadd.f32 %v227, %v3945
    %3947 = vmatmul.f32.gmra.mxu0 %v3687
    %v3948 = vpop.f32.mrf.mxu0
    %v3949 = vadd.f32 %v227, %v3948
    %3950 = vmatmul.f32.gmra.mxu0 %v3688
    %v3951 = vpop.f32.mrf.mxu0
    %v3952 = vadd.f32 %v227, %v3951
    %3953 = vmatmul.f32.gmra.mxu0 %v3689
    %v3954 = vpop.f32.mrf.mxu0
    %v3955 = vadd.f32 %v227, %v3954
    %3956 = vmatmul.f32.gmra.mxu0 %v3690
    %v3957 = vpop.f32.mrf.mxu0
    %v3958 = vadd.f32 %v227, %v3957
    %3959 = vmatmul.f32.gmra.mxu0 %v3691
    %v3960 = vpop.f32.mrf.mxu0
    %v3961 = vadd.f32 %v227, %v3960
    %3962 = vmatmul.f32.gmra.mxu0 %v3692
    %v3963 = vpop.f32.mrf.mxu0
    %v3964 = vadd.f32 %v227, %v3963
    %3965 = vmatmul.f32.gmra.mxu0 %v3693
    %v3966 = vpop.f32.mrf.mxu0
    %v3967 = vadd.f32 %v227, %v3966
    %3968 = vmatmul.f32.gmra.mxu0 %v3694
    %v3969 = vpop.f32.mrf.mxu0
    %v3970 = vadd.f32 %v227, %v3969
    %3971 = vmatmul.f32.gmra.mxu0 %v3695
    %v3972 = vpop.f32.mrf.mxu0
    %v3973 = vadd.f32 %v227, %v3972
    %3974 = vmatmul.f32.gmra.mxu0 %v3696
    %v3975 = vpop.f32.mrf.mxu0
    %v3976 = vadd.f32 %v227, %v3975
    %3977 = vmatmul.f32.gmra.mxu0 %v3697
    %v3978 = vpop.f32.mrf.mxu0
    %v3979 = vadd.f32 %v227, %v3978
    %3980 = vmatmul.f32.gmra.mxu0 %v3698
    %v3981 = vpop.f32.mrf.mxu0
    %v3982 = vadd.f32 %v227, %v3981
    %3983 = vmatmul.f32.gmra.mxu0 %v3699
    %v3984 = vpop.f32.mrf.mxu0
    %v3985 = vadd.f32 %v227, %v3984
    %3986 = vmatmul.f32.gmra.mxu0 %v3700
    %v3987 = vpop.f32.mrf.mxu0
    %v3988 = vadd.f32 %v227, %v3987
    %3989 = vmatmul.f32.gmra.mxu0 %v3701
    %v3990 = vpop.f32.mrf.mxu0
    %v3991 = vadd.f32 %v227, %v3990
    %3992 = vmatmul.f32.gmra.mxu0 %v3702
    %v3993 = vpop.f32.mrf.mxu0
    %v3994 = vadd.f32 %v227, %v3993
    %3995 = vmatmul.f32.gmra.mxu0 %v3703
    %v3996 = vpop.f32.mrf.mxu0
    %v3997 = vadd.f32 %v227, %v3996
    %3998 = vmatmul.f32.gmra.mxu0 %v3704
    %v3999 = vpop.f32.mrf.mxu0
    %v4000 = vadd.f32 %v227, %v3999
    %4001 = vmatmul.f32.gmra.mxu0 %v3705
    %v4002 = vpop.f32.mrf.mxu0
    %v4003 = vadd.f32 %v227, %v4002
    %4004 = vmatmul.f32.gmra.mxu0 %v3706
    %v4005 = vpop.f32.mrf.mxu0
    %v4006 = vadd.f32 %v227, %v4005
    %4007 = vmatmul.f32.gmra.mxu0 %v3707
    %v4008 = vpop.f32.mrf.mxu0
    %v4009 = vadd.f32 %v227, %v4008
    %4010 = vmatmul.f32.gmra.mxu0 %v3708
    %v4011 = vpop.f32.mrf.mxu0
    %v4012 = vadd.f32 %v227, %v4011
    %4013 = vmatmul.f32.gmra.mxu0 %v3709
    %v4014 = vpop.f32.mrf.mxu0
    %v4015 = vadd.f32 %v227, %v4014
    %4016 = vmatmul.f32.gmra.mxu0 %v3710
    %v4017 = vpop.f32.mrf.mxu0
    %v4018 = vadd.f32 %v227, %v4017
    %4019 = vmatmul.f32.gmra.mxu0 %v3711
    %v4020 = vpop.f32.mrf.mxu0
    %v4021 = vadd.f32 %v227, %v4020
    %4022 = vmatmul.f32.gmra.mxu0 %v3712
    %v4023 = vpop.f32.mrf.mxu0
    %v4024 = vadd.f32 %v227, %v4023
    %4025 = vmatmul.f32.gmra.mxu0 %v3713
    %v4026 = vpop.f32.mrf.mxu0
    %v4027 = vadd.f32 %v227, %v4026
    %4028 = vmatmul.f32.gmra.mxu0 %v3714
    %v4029 = vpop.f32.mrf.mxu0
    %v4030 = vadd.f32 %v227, %v4029
    %4031 = vmatmul.f32.gmra.mxu0 %v3715
    %v4032 = vpop.f32.mrf.mxu0
    %v4033 = vadd.f32 %v227, %v4032
    %4034 = vmatmul.f32.gmra.mxu0 %v3716
    %v4035 = vpop.f32.mrf.mxu0
    %v4036 = vadd.f32 %v227, %v4035
    %4037 = vmatmul.f32.gmra.mxu0 %v3717
    %v4038 = vpop.f32.mrf.mxu0
    %v4039 = vadd.f32 %v227, %v4038
    %4040 = vmatmul.f32.gmra.mxu0 %v3718
    %v4041 = vpop.f32.mrf.mxu0
    %v4042 = vadd.f32 %v227, %v4041
    %4043 = vmatmul.f32.gmra.mxu0 %v3719
    %v4044 = vpop.f32.mrf.mxu0
    %v4045 = vadd.f32 %v227, %v4044
    %4046 = vmatmul.f32.gmra.mxu0 %v3720
    %v4047 = vpop.f32.mrf.mxu0
    %v4048 = vadd.f32 %v227, %v4047
    %4049 = vmatmul.f32.gmra.mxu0 %v3721
    %v4050 = vpop.f32.mrf.mxu0
    %v4051 = vadd.f32 %v227, %v4050
    %4052 = vmatmul.f32.gmra.mxu0 %v3722
    %v4053 = vpop.f32.mrf.mxu0
    %v4054 = vadd.f32 %v227, %v4053
    %4055 = vmatmul.f32.gmra.mxu0 %v3723
    %v4056 = vpop.f32.mrf.mxu0
    %v4057 = vadd.f32 %v227, %v4056
    %4058 = vmatmul.f32.gmra.mxu0 %v3724
    %v4059 = vpop.f32.mrf.mxu0
    %v4060 = vadd.f32 %v227, %v4059
    %4061 = vmatmul.f32.gmra.mxu0 %v3725
    %v4062 = vpop.f32.mrf.mxu0
    %v4063 = vadd.f32 %v227, %v4062
    %4064 = vmatmul.f32.gmra.mxu0 %v3726
    %v4065 = vpop.f32.mrf.mxu0
    %v4066 = vadd.f32 %v227, %v4065
    %4067 = vmatmul.f32.gmra.mxu0 %v3727
    %v4068 = vpop.f32.mrf.mxu0
    %v4069 = vadd.f32 %v227, %v4068
    %4070 = vmatmul.f32.gmra.mxu0 %v3728
    %v4071 = vpop.f32.mrf.mxu0
    %v4072 = vadd.f32 %v227, %v4071
    %4073 = vmatmul.f32.gmra.mxu0 %v3729
    %v4074 = vpop.f32.mrf.mxu0
    %v4075 = vadd.f32 %v227, %v4074
    %4076 = vmatmul.f32.gmra.mxu0 %v3730
    %v4077 = vpop.f32.mrf.mxu0
    %v4078 = vadd.f32 %v227, %v4077
    %4079 = vmatmul.f32.gmra.mxu0 %v3731
    %v4080 = vpop.f32.mrf.mxu0
    %v4081 = vadd.f32 %v227, %v4080
    %4082 = vmatmul.f32.gmra.mxu0 %v3732
    %v4083 = vpop.f32.mrf.mxu0
    %v4084 = vadd.f32 %v227, %v4083
    %4085 = vmatmul.f32.gmra.mxu0 %v3733
    %v4086 = vpop.f32.mrf.mxu0
    %v4087 = vadd.f32 %v227, %v4086
    %4088 = vmatmul.f32.gmra.mxu0 %v3734
    %v4089 = vpop.f32.mrf.mxu0
    %v4090 = vadd.f32 %v227, %v4089
    %4091 = vmatmul.f32.gmra.mxu0 %v3735
    %v4092 = vpop.f32.mrf.mxu0
    %v4093 = vadd.f32 %v227, %v4092
    %4094 = vmatmul.f32.gmra.mxu0 %v3736
    %v4095 = vpop.f32.mrf.mxu0
    %v4096 = vadd.f32 %v227, %v4095
    %4097 = vmatmul.f32.gmra.mxu0 %v3737
    %v4098 = vpop.f32.mrf.mxu0
    %v4099 = vadd.f32 %v227, %v4098
    %4100 = vmatmul.f32.gmra.mxu0 %v3738
    %v4101 = vpop.f32.mrf.mxu0
    %v4102 = vadd.f32 %v227, %v4101
    %4103 = vmatmul.f32.gmra.mxu0 %v3739
    %v4104 = vpop.f32.mrf.mxu0
    %v4105 = vadd.f32 %v227, %v4104
    %4106 = vmatmul.f32.gmra.mxu0 %v3740
    %v4107 = vpop.f32.mrf.mxu0
    %v4108 = vadd.f32 %v227, %v4107
    %4109 = vmatmul.f32.gmra.mxu0 %v3741
    %v4110 = vpop.f32.mrf.mxu0
    %v4111 = vadd.f32 %v227, %v4110
    %4112 = vmatmul.f32.gmra.mxu0 %v3742
    %v4113 = vpop.f32.mrf.mxu0
    %v4114 = vadd.f32 %v227, %v4113
    %4115 = vmatmul.f32.gmra.mxu0 %v3743
    %v4116 = vpop.f32.mrf.mxu0
    %v4117 = vadd.f32 %v227, %v4116
    %4118 = vmatmul.f32.gmra.mxu0 %v3744
    %v4119 = vpop.f32.mrf.mxu0
    %v4120 = vadd.f32 %v227, %v4119
    %4121 = vmatmul.f32.gmra.mxu0 %v3745
    %v4122 = vpop.f32.mrf.mxu0
    %v4123 = vadd.f32 %v227, %v4122
    %4124 = vmatmul.f32.gmra.mxu0 %v3746
    %v4125 = vpop.f32.mrf.mxu0
    %v4126 = vadd.f32 %v227, %v4125
    %4127 = vmatmul.f32.gmra.mxu0 %v3747
    %v4128 = vpop.f32.mrf.mxu0
    %v4129 = vadd.f32 %v227, %v4128
    %4130 = vmatmul.f32.gmra.mxu0 %v3748
    %v4131 = vpop.f32.mrf.mxu0
    %v4132 = vadd.f32 %v227, %v4131
    %4133 = vmatmul.f32.gmra.mxu0 %v3749
    %v4134 = vpop.f32.mrf.mxu0
    %v4135 = vadd.f32 %v227, %v4134
    %4136 = vmatmul.f32.gmra.mxu0 %v3750
    %v4137 = vpop.f32.mrf.mxu0
    %v4138 = vadd.f32 %v227, %v4137
    %4139 = vmatmul.f32.gmra.mxu0 %v3751
    %v4140 = vpop.f32.mrf.mxu0
    %v4141 = vadd.f32 %v227, %v4140
    %4142 = vmatmul.f32.gmra.mxu0 %v3752
    %v4143 = vpop.f32.mrf.mxu0
    %v4144 = vadd.f32 %v227, %v4143
    %4145 = vmatmul.f32.gmra.mxu0 %v3753
    %v4146 = vpop.f32.mrf.mxu0
    %v4147 = vadd.f32 %v227, %v4146
    %4148 = vmatmul.f32.gmra.mxu0 %v3754
    %v4149 = vpop.f32.mrf.mxu0
    %v4150 = vadd.f32 %v227, %v4149
    %4151 = vmatmul.f32.gmra.mxu0 %v3755
    %v4152 = vpop.f32.mrf.mxu0
    %v4153 = vadd.f32 %v227, %v4152
    %4154 = vmatmul.f32.gmra.mxu0 %v3756
    %v4155 = vpop.f32.mrf.mxu0
    %v4156 = vadd.f32 %v227, %v4155
    %4157 = vdwg.mxu0
    %v4158 = vtanh.pop %v3775
    %v4159 = vtanh.pop %v3778
    %v4160 = vtanh.pop %v3781
    %v4161 = vtanh.pop %v3784
    %v4162 = vtanh.pop %v3787
    %v4163 = vtanh.pop %v3790
    %v4164 = vtanh.pop %v3793
    %v4165 = vtanh.pop %v3796
    %v4166 = vtanh.pop %v3799
    %v4167 = vtanh.pop %v3802
    %v4168 = vtanh.pop %v3805
    %v4169 = vtanh.pop %v3808
    %v4170 = vtanh.pop %v3811
    %v4171 = vtanh.pop %v3814
    %v4172 = vtanh.pop %v3817
    %v4173 = vtanh.pop %v3820
    %v4174 = vtanh.pop %v3823
    %v4175 = vtanh.pop %v3826
    %v4176 = vtanh.pop %v3829
    %v4177 = vtanh.pop %v3832
    %v4178 = vtanh.pop %v3835
    %v4179 = vtanh.pop %v3838
    %v4180 = vtanh.pop %v3841
    %v4181 = vtanh.pop %v3844
    %v4182 = vtanh.pop %v3847
    %v4183 = vtanh.pop %v3850
    %v4184 = vtanh.pop %v3853
    %v4185 = vtanh.pop %v3856
    %v4186 = vtanh.pop %v3859
    %v4187 = vtanh.pop %v3862
    %v4188 = vtanh.pop %v3865
    %v4189 = vtanh.pop %v3868
    %v4190 = vtanh.pop %v3871
    %v4191 = vtanh.pop %v3874
    %v4192 = vtanh.pop %v3877
    %v4193 = vtanh.pop %v3880
    %v4194 = vtanh.pop %v3883
    %v4195 = vtanh.pop %v3886
    %v4196 = vtanh.pop %v3889
    %v4197 = vtanh.pop %v3892
    %v4198 = vtanh.pop %v3895
    %v4199 = vtanh.pop %v3898
    %v4200 = vtanh.pop %v3901
    %v4201 = vtanh.pop %v3904
    %v4202 = vtanh.pop %v3907
    %v4203 = vtanh.pop %v3910
    %v4204 = vtanh.pop %v3913
    %v4205 = vtanh.pop %v3916
    %v4206 = vtanh.pop %v3919
    %v4207 = vtanh.pop %v3922
    %v4208 = vtanh.pop %v3925
    %v4209 = vtanh.pop %v3928
    %v4210 = vtanh.pop %v3931
    %v4211 = vtanh.pop %v3934
    %v4212 = vtanh.pop %v3937
    %v4213 = vtanh.pop %v3940
    %v4214 = vtanh.pop %v3943
    %v4215 = vtanh.pop %v3946
    %v4216 = vtanh.pop %v3949
    %v4217 = vtanh.pop %v3952
    %v4218 = vtanh.pop %v3955
    %v4219 = vtanh.pop %v3958
    %v4220 = vtanh.pop %v3961
    %v4221 = vtanh.pop %v3964
    %v4222 = vtanh.pop %v3967
    %v4223 = vtanh.pop %v3970
    %v4224 = vtanh.pop %v3973
    %v4225 = vtanh.pop %v3976
    %v4226 = vtanh.pop %v3979
    %v4227 = vtanh.pop %v3982
    %v4228 = vtanh.pop %v3985
    %v4229 = vtanh.pop %v3988
    %v4230 = vtanh.pop %v3991
    %v4231 = vtanh.pop %v3994
    %v4232 = vtanh.pop %v3997
    %v4233 = vtanh.pop %v4000
    %v4234 = vtanh.pop %v4003
    %v4235 = vtanh.pop %v4006
    %v4236 = vtanh.pop %v4009
    %v4237 = vtanh.pop %v4012
    %v4238 = vtanh.pop %v4015
    %v4239 = vtanh.pop %v4018
    %v4240 = vtanh.pop %v4021
    %v4241 = vtanh.pop %v4024
    %v4242 = vtanh.pop %v4027
    %v4243 = vtanh.pop %v4030
    %v4244 = vtanh.pop %v4033
    %v4245 = vtanh.pop %v4036
    %v4246 = vtanh.pop %v4039
    %v4247 = vtanh.pop %v4042
    %v4248 = vtanh.pop %v4045
    %v4249 = vtanh.pop %v4048
    %v4250 = vtanh.pop %v4051
    %v4251 = vtanh.pop %v4054
    %v4252 = vtanh.pop %v4057
    %v4253 = vtanh.pop %v4060
    %v4254 = vtanh.pop %v4063
    %v4255 = vtanh.pop %v4066
    %v4256 = vtanh.pop %v4069
    %v4257 = vtanh.pop %v4072
    %v4258 = vtanh.pop %v4075
    %v4259 = vtanh.pop %v4078
    %v4260 = vtanh.pop %v4081
    %v4261 = vtanh.pop %v4084
    %v4262 = vtanh.pop %v4087
    %v4263 = vtanh.pop %v4090
    %v4264 = vtanh.pop %v4093
    %v4265 = vtanh.pop %v4096
    %v4266 = vtanh.pop %v4099
    %v4267 = vtanh.pop %v4102
    %v4268 = vtanh.pop %v4105
    %v4269 = vtanh.pop %v4108
    %v4270 = vtanh.pop %v4111
    %v4271 = vtanh.pop %v4114
    %v4272 = vtanh.pop %v4117
    %v4273 = vtanh.pop %v4120
    %v4274 = vtanh.pop %v4123
    %v4275 = vtanh.pop %v4126
    %v4276 = vtanh.pop %v4129
    %v4277 = vtanh.pop %v4132
    %v4278 = vtanh.pop %v4135
    %v4279 = vtanh.pop %v4138
    %v4280 = vtanh.pop %v4141
    %v4281 = vtanh.pop %v4144
    %v4282 = vtanh.pop %v4147
    %v4283 = vtanh.pop %v4150
    %v4284 = vtanh.pop %v4153
    %v4285 = vtanh.pop %v4156
    %v4286 = vmul.f32 %v4158, %v759
    %v4287 = vmul.f32 %v4159, %v759
    %v4288 = vmul.f32 %v4160, %v759
    %v4289 = vmul.f32 %v4161, %v759
    %v4290 = vmul.f32 %v4162, %v759
    %v4291 = vmul.f32 %v4163, %v759
    %v4292 = vmul.f32 %v4164, %v759
    %v4293 = vmul.f32 %v4165, %v759
    %v4294 = vmul.f32 %v4166, %v759
    %v4295 = vmul.f32 %v4167, %v759
    %v4296 = vmul.f32 %v4168, %v759
    %v4297 = vmul.f32 %v4169, %v759
    %v4298 = vmul.f32 %v4170, %v759
    %v4299 = vmul.f32 %v4171, %v759
    %v4300 = vmul.f32 %v4172, %v759
    %v4301 = vmul.f32 %v4173, %v759
    %v4302 = vmul.f32 %v4174, %v759
    %v4303 = vmul.f32 %v4175, %v759
    %v4304 = vmul.f32 %v4176, %v759
    %v4305 = vmul.f32 %v4177, %v759
    %v4306 = vmul.f32 %v4178, %v759
    %v4307 = vmul.f32 %v4179, %v759
    %v4308 = vmul.f32 %v4180, %v759
    %v4309 = vmul.f32 %v4181, %v759
    %v4310 = vmul.f32 %v4182, %v759
    %v4311 = vmul.f32 %v4183, %v759
    %v4312 = vmul.f32 %v4184, %v759
    %v4313 = vmul.f32 %v4185, %v759
    %v4314 = vmul.f32 %v4186, %v759
    %v4315 = vmul.f32 %v4187, %v759
    %v4316 = vmul.f32 %v4188, %v759
    %v4317 = vmul.f32 %v4189, %v759
    %v4318 = vmul.f32 %v4190, %v759
    %v4319 = vmul.f32 %v4191, %v759
    %v4320 = vmul.f32 %v4192, %v759
    %v4321 = vmul.f32 %v4193, %v759
    %v4322 = vmul.f32 %v4194, %v759
    %v4323 = vmul.f32 %v4195, %v759
    %v4324 = vmul.f32 %v4196, %v759
    %v4325 = vmul.f32 %v4197, %v759
    %v4326 = vmul.f32 %v4198, %v759
    %v4327 = vmul.f32 %v4199, %v759
    %v4328 = vmul.f32 %v4200, %v759
    %v4329 = vmul.f32 %v4201, %v759
    %v4330 = vmul.f32 %v4202, %v759
    %v4331 = vmul.f32 %v4203, %v759
    %v4332 = vmul.f32 %v4204, %v759
    %v4333 = vmul.f32 %v4205, %v759
    %v4334 = vmul.f32 %v4206, %v759
    %v4335 = vmul.f32 %v4207, %v759
    %v4336 = vmul.f32 %v4208, %v759
    %v4337 = vmul.f32 %v4209, %v759
    %v4338 = vmul.f32 %v4210, %v759
    %v4339 = vmul.f32 %v4211, %v759
    %v4340 = vmul.f32 %v4212, %v759
    %v4341 = vmul.f32 %v4213, %v759
    %v4342 = vmul.f32 %v4214, %v759
    %v4343 = vmul.f32 %v4215, %v759
    %v4344 = vmul.f32 %v4216, %v759
    %v4345 = vmul.f32 %v4217, %v759
    %v4346 = vmul.f32 %v4218, %v759
    %v4347 = vmul.f32 %v4219, %v759
    %v4348 = vmul.f32 %v4220, %v759
    %v4349 = vmul.f32 %v4221, %v759
    %v4350 = vmul.f32 %v4222, %v759
    %v4351 = vmul.f32 %v4223, %v759
    %v4352 = vmul.f32 %v4224, %v759
    %v4353 = vmul.f32 %v4225, %v759
    %v4354 = vmul.f32 %v4226, %v759
    %v4355 = vmul.f32 %v4227, %v759
    %v4356 = vmul.f32 %v4228, %v759
    %v4357 = vmul.f32 %v4229, %v759
    %v4358 = vmul.f32 %v4230, %v759
    %v4359 = vmul.f32 %v4231, %v759
    %v4360 = vmul.f32 %v4232, %v759
    %v4361 = vmul.f32 %v4233, %v759
    %v4362 = vmul.f32 %v4234, %v759
    %v4363 = vmul.f32 %v4235, %v759
    %v4364 = vmul.f32 %v4236, %v759
    %v4365 = vmul.f32 %v4237, %v759
    %v4366 = vmul.f32 %v4238, %v759
    %v4367 = vmul.f32 %v4239, %v759
    %v4368 = vmul.f32 %v4240, %v759
    %v4369 = vmul.f32 %v4241, %v759
    %v4370 = vmul.f32 %v4242, %v759
    %v4371 = vmul.f32 %v4243, %v759
    %v4372 = vmul.f32 %v4244, %v759
    %v4373 = vmul.f32 %v4245, %v759
    %v4374 = vmul.f32 %v4246, %v759
    %v4375 = vmul.f32 %v4247, %v759
    %v4376 = vmul.f32 %v4248, %v759
    %v4377 = vmul.f32 %v4249, %v759
    %v4378 = vmul.f32 %v4250, %v759
    %v4379 = vmul.f32 %v4251, %v759
    %v4380 = vmul.f32 %v4252, %v759
    %v4381 = vmul.f32 %v4253, %v759
    %v4382 = vmul.f32 %v4254, %v759
    %v4383 = vmul.f32 %v4255, %v759
    %v4384 = vmul.f32 %v4256, %v759
    %v4385 = vmul.f32 %v4257, %v759
    %v4386 = vmul.f32 %v4258, %v759
    %v4387 = vmul.f32 %v4259, %v759
    %v4388 = vmul.f32 %v4260, %v759
    %v4389 = vmul.f32 %v4261, %v759
    %v4390 = vmul.f32 %v4262, %v759
    %v4391 = vmul.f32 %v4263, %v759
    %v4392 = vmul.f32 %v4264, %v759
    %v4393 = vmul.f32 %v4265, %v759
    %v4394 = vmul.f32 %v4266, %v759
    %v4395 = vmul.f32 %v4267, %v759
    %v4396 = vmul.f32 %v4268, %v759
    %v4397 = vmul.f32 %v4269, %v759
    %v4398 = vmul.f32 %v4270, %v759
    %v4399 = vmul.f32 %v4271, %v759
    %v4400 = vmul.f32 %v4272, %v759
    %v4401 = vmul.f32 %v4273, %v759
    %v4402 = vmul.f32 %v4274, %v759
    %v4403 = vmul.f32 %v4275, %v759
    %v4404 = vmul.f32 %v4276, %v759
    %v4405 = vmul.f32 %v4277, %v759
    %v4406 = vmul.f32 %v4278, %v759
    %v4407 = vmul.f32 %v4279, %v759
    %v4408 = vmul.f32 %v4280, %v759
    %v4409 = vmul.f32 %v4281, %v759
    %v4410 = vmul.f32 %v4282, %v759
    %v4411 = vmul.f32 %v4283, %v759
    %v4412 = vmul.f32 %v4284, %v759
    %v4413 = vmul.f32 %v4285, %v759
    %4414 = vadd.xlane.f32.xlu0 %v4286
    %v4415 = vpop.xlane.xlu0 %4414
    %4416 = vadd.xlane.f32.xlu0 %v4287
    %v4417 = vpop.xlane.xlu0 %4416
    %4418 = vadd.xlane.f32.xlu0 %v4288
    %v4419 = vpop.xlane.xlu0 %4418
    %4420 = vadd.xlane.f32.xlu0 %v4289
    %v4421 = vpop.xlane.xlu0 %4420
    %4422 = vadd.xlane.f32.xlu0 %v4290
    %v4423 = vpop.xlane.xlu0 %4422
    %4424 = vadd.xlane.f32.xlu0 %v4291
    %v4425 = vpop.xlane.xlu0 %4424
    %4426 = vadd.xlane.f32.xlu0 %v4292
    %v4427 = vpop.xlane.xlu0 %4426
    %4428 = vadd.xlane.f32.xlu0 %v4293
    %v4429 = vpop.xlane.xlu0 %4428
    %4430 = vadd.xlane.f32.xlu0 %v4294
    %v4431 = vpop.xlane.xlu0 %4430
    %4432 = vadd.xlane.f32.xlu0 %v4295
    %v4433 = vpop.xlane.xlu0 %4432
    %4434 = vadd.xlane.f32.xlu0 %v4296
    %v4435 = vpop.xlane.xlu0 %4434
    %4436 = vadd.xlane.f32.xlu0 %v4297
    %v4437 = vpop.xlane.xlu0 %4436
    %4438 = vadd.xlane.f32.xlu0 %v4298
    %v4439 = vpop.xlane.xlu0 %4438
    %4440 = vadd.xlane.f32.xlu0 %v4299
    %v4441 = vpop.xlane.xlu0 %4440
    %4442 = vadd.xlane.f32.xlu0 %v4300
    %v4443 = vpop.xlane.xlu0 %4442
    %4444 = vadd.xlane.f32.xlu0 %v4301
    %v4445 = vpop.xlane.xlu0 %4444
    %4446 = vadd.xlane.f32.xlu0 %v4302
    %v4447 = vpop.xlane.xlu0 %4446
    %4448 = vadd.xlane.f32.xlu0 %v4303
    %v4449 = vpop.xlane.xlu0 %4448
    %4450 = vadd.xlane.f32.xlu0 %v4304
    %v4451 = vpop.xlane.xlu0 %4450
    %4452 = vadd.xlane.f32.xlu0 %v4305
    %v4453 = vpop.xlane.xlu0 %4452
    %4454 = vadd.xlane.f32.xlu0 %v4306
    %v4455 = vpop.xlane.xlu0 %4454
    %4456 = vadd.xlane.f32.xlu0 %v4307
    %v4457 = vpop.xlane.xlu0 %4456
    %4458 = vadd.xlane.f32.xlu0 %v4308
    %v4459 = vpop.xlane.xlu0 %4458
    %4460 = vadd.xlane.f32.xlu0 %v4309
    %v4461 = vpop.xlane.xlu0 %4460
    %4462 = vadd.xlane.f32.xlu0 %v4310
    %v4463 = vpop.xlane.xlu0 %4462
    %4464 = vadd.xlane.f32.xlu0 %v4311
    %v4465 = vpop.xlane.xlu0 %4464
    %4466 = vadd.xlane.f32.xlu0 %v4312
    %v4467 = vpop.xlane.xlu0 %4466
    %4468 = vadd.xlane.f32.xlu0 %v4313
    %v4469 = vpop.xlane.xlu0 %4468
    %4470 = vadd.xlane.f32.xlu0 %v4314
    %v4471 = vpop.xlane.xlu0 %4470
    %4472 = vadd.xlane.f32.xlu0 %v4315
    %v4473 = vpop.xlane.xlu0 %4472
    %4474 = vadd.xlane.f32.xlu0 %v4316
    %v4475 = vpop.xlane.xlu0 %4474
    %4476 = vadd.xlane.f32.xlu0 %v4317
    %v4477 = vpop.xlane.xlu0 %4476
    %4478 = vadd.xlane.f32.xlu0 %v4318
    %v4479 = vpop.xlane.xlu0 %4478
    %4480 = vadd.xlane.f32.xlu0 %v4319
    %v4481 = vpop.xlane.xlu0 %4480
    %4482 = vadd.xlane.f32.xlu0 %v4320
    %v4483 = vpop.xlane.xlu0 %4482
    %4484 = vadd.xlane.f32.xlu0 %v4321
    %v4485 = vpop.xlane.xlu0 %4484
    %4486 = vadd.xlane.f32.xlu0 %v4322
    %v4487 = vpop.xlane.xlu0 %4486
    %4488 = vadd.xlane.f32.xlu0 %v4323
    %v4489 = vpop.xlane.xlu0 %4488
    %4490 = vadd.xlane.f32.xlu0 %v4324
    %v4491 = vpop.xlane.xlu0 %4490
    %4492 = vadd.xlane.f32.xlu0 %v4325
    %v4493 = vpop.xlane.xlu0 %4492
    %4494 = vadd.xlane.f32.xlu0 %v4326
    %v4495 = vpop.xlane.xlu0 %4494
    %4496 = vadd.xlane.f32.xlu0 %v4327
    %v4497 = vpop.xlane.xlu0 %4496
    %4498 = vadd.xlane.f32.xlu0 %v4328
    %v4499 = vpop.xlane.xlu0 %4498
    %4500 = vadd.xlane.f32.xlu0 %v4329
    %v4501 = vpop.xlane.xlu0 %4500
    %4502 = vadd.xlane.f32.xlu0 %v4330
    %v4503 = vpop.xlane.xlu0 %4502
    %4504 = vadd.xlane.f32.xlu0 %v4331
    %v4505 = vpop.xlane.xlu0 %4504
    %4506 = vadd.xlane.f32.xlu0 %v4332
    %v4507 = vpop.xlane.xlu0 %4506
    %4508 = vadd.xlane.f32.xlu0 %v4333
    %v4509 = vpop.xlane.xlu0 %4508
    %4510 = vadd.xlane.f32.xlu0 %v4334
    %v4511 = vpop.xlane.xlu0 %4510
    %4512 = vadd.xlane.f32.xlu0 %v4335
    %v4513 = vpop.xlane.xlu0 %4512
    %4514 = vadd.xlane.f32.xlu0 %v4336
    %v4515 = vpop.xlane.xlu0 %4514
    %4516 = vadd.xlane.f32.xlu0 %v4337
    %v4517 = vpop.xlane.xlu0 %4516
    %4518 = vadd.xlane.f32.xlu0 %v4338
    %v4519 = vpop.xlane.xlu0 %4518
    %4520 = vadd.xlane.f32.xlu0 %v4339
    %v4521 = vpop.xlane.xlu0 %4520
    %4522 = vadd.xlane.f32.xlu0 %v4340
    %v4523 = vpop.xlane.xlu0 %4522
    %4524 = vadd.xlane.f32.xlu0 %v4341
    %v4525 = vpop.xlane.xlu0 %4524
    %4526 = vadd.xlane.f32.xlu0 %v4342
    %v4527 = vpop.xlane.xlu0 %4526
    %4528 = vadd.xlane.f32.xlu0 %v4343
    %v4529 = vpop.xlane.xlu0 %4528
    %4530 = vadd.xlane.f32.xlu0 %v4344
    %v4531 = vpop.xlane.xlu0 %4530
    %4532 = vadd.xlane.f32.xlu0 %v4345
    %v4533 = vpop.xlane.xlu0 %4532
    %4534 = vadd.xlane.f32.xlu0 %v4346
    %v4535 = vpop.xlane.xlu0 %4534
    %4536 = vadd.xlane.f32.xlu0 %v4347
    %v4537 = vpop.xlane.xlu0 %4536
    %4538 = vadd.xlane.f32.xlu0 %v4348
    %v4539 = vpop.xlane.xlu0 %4538
    %4540 = vadd.xlane.f32.xlu0 %v4349
    %v4541 = vpop.xlane.xlu0 %4540
    %4542 = vadd.xlane.f32.xlu0 %v4350
    %v4543 = vpop.xlane.xlu0 %4542
    %4544 = vadd.xlane.f32.xlu0 %v4351
    %v4545 = vpop.xlane.xlu0 %4544
    %4546 = vadd.xlane.f32.xlu0 %v4352
    %v4547 = vpop.xlane.xlu0 %4546
    %4548 = vadd.xlane.f32.xlu0 %v4353
    %v4549 = vpop.xlane.xlu0 %4548
    %4550 = vadd.xlane.f32.xlu0 %v4354
    %v4551 = vpop.xlane.xlu0 %4550
    %4552 = vadd.xlane.f32.xlu0 %v4355
    %v4553 = vpop.xlane.xlu0 %4552
    %4554 = vadd.xlane.f32.xlu0 %v4356
    %v4555 = vpop.xlane.xlu0 %4554
    %4556 = vadd.xlane.f32.xlu0 %v4357
    %v4557 = vpop.xlane.xlu0 %4556
    %4558 = vadd.xlane.f32.xlu0 %v4358
    %v4559 = vpop.xlane.xlu0 %4558
    %4560 = vadd.xlane.f32.xlu0 %v4359
    %v4561 = vpop.xlane.xlu0 %4560
    %4562 = vadd.xlane.f32.xlu0 %v4360
    %v4563 = vpop.xlane.xlu0 %4562
    %4564 = vadd.xlane.f32.xlu0 %v4361
    %v4565 = vpop.xlane.xlu0 %4564
    %4566 = vadd.xlane.f32.xlu0 %v4362
    %v4567 = vpop.xlane.xlu0 %4566
    %4568 = vadd.xlane.f32.xlu0 %v4363
    %v4569 = vpop.xlane.xlu0 %4568
    %4570 = vadd.xlane.f32.xlu0 %v4364
    %v4571 = vpop.xlane.xlu0 %4570
    %4572 = vadd.xlane.f32.xlu0 %v4365
    %v4573 = vpop.xlane.xlu0 %4572
    %4574 = vadd.xlane.f32.xlu0 %v4366
    %v4575 = vpop.xlane.xlu0 %4574
    %4576 = vadd.xlane.f32.xlu0 %v4367
    %v4577 = vpop.xlane.xlu0 %4576
    %4578 = vadd.xlane.f32.xlu0 %v4368
    %v4579 = vpop.xlane.xlu0 %4578
    %4580 = vadd.xlane.f32.xlu0 %v4369
    %v4581 = vpop.xlane.xlu0 %4580
    %4582 = vadd.xlane.f32.xlu0 %v4370
    %v4583 = vpop.xlane.xlu0 %4582
    %4584 = vadd.xlane.f32.xlu0 %v4371
    %v4585 = vpop.xlane.xlu0 %4584
    %4586 = vadd.xlane.f32.xlu0 %v4372
    %v4587 = vpop.xlane.xlu0 %4586
    %4588 = vadd.xlane.f32.xlu0 %v4373
    %v4589 = vpop.xlane.xlu0 %4588
    %4590 = vadd.xlane.f32.xlu0 %v4374
    %v4591 = vpop.xlane.xlu0 %4590
    %4592 = vadd.xlane.f32.xlu0 %v4375
    %v4593 = vpop.xlane.xlu0 %4592
    %4594 = vadd.xlane.f32.xlu0 %v4376
    %v4595 = vpop.xlane.xlu0 %4594
    %4596 = vadd.xlane.f32.xlu0 %v4377
    %v4597 = vpop.xlane.xlu0 %4596
    %4598 = vadd.xlane.f32.xlu0 %v4378
    %v4599 = vpop.xlane.xlu0 %4598
    %4600 = vadd.xlane.f32.xlu0 %v4379
    %v4601 = vpop.xlane.xlu0 %4600
    %4602 = vadd.xlane.f32.xlu0 %v4380
    %v4603 = vpop.xlane.xlu0 %4602
    %4604 = vadd.xlane.f32.xlu0 %v4381
    %v4605 = vpop.xlane.xlu0 %4604
    %4606 = vadd.xlane.f32.xlu0 %v4382
    %v4607 = vpop.xlane.xlu0 %4606
    %4608 = vadd.xlane.f32.xlu0 %v4383
    %v4609 = vpop.xlane.xlu0 %4608
    %4610 = vadd.xlane.f32.xlu0 %v4384
    %v4611 = vpop.xlane.xlu0 %4610
    %4612 = vadd.xlane.f32.xlu0 %v4385
    %v4613 = vpop.xlane.xlu0 %4612
    %4614 = vadd.xlane.f32.xlu0 %v4386
    %v4615 = vpop.xlane.xlu0 %4614
    %4616 = vadd.xlane.f32.xlu0 %v4387
    %v4617 = vpop.xlane.xlu0 %4616
    %4618 = vadd.xlane.f32.xlu0 %v4388
    %v4619 = vpop.xlane.xlu0 %4618
    %4620 = vadd.xlane.f32.xlu0 %v4389
    %v4621 = vpop.xlane.xlu0 %4620
    %4622 = vadd.xlane.f32.xlu0 %v4390
    %v4623 = vpop.xlane.xlu0 %4622
    %4624 = vadd.xlane.f32.xlu0 %v4391
    %v4625 = vpop.xlane.xlu0 %4624
    %4626 = vadd.xlane.f32.xlu0 %v4392
    %v4627 = vpop.xlane.xlu0 %4626
    %4628 = vadd.xlane.f32.xlu0 %v4393
    %v4629 = vpop.xlane.xlu0 %4628
    %4630 = vadd.xlane.f32.xlu0 %v4394
    %v4631 = vpop.xlane.xlu0 %4630
    %4632 = vadd.xlane.f32.xlu0 %v4395
    %v4633 = vpop.xlane.xlu0 %4632
    %4634 = vadd.xlane.f32.xlu0 %v4396
    %v4635 = vpop.xlane.xlu0 %4634
    %4636 = vadd.xlane.f32.xlu0 %v4397
    %v4637 = vpop.xlane.xlu0 %4636
    %4638 = vadd.xlane.f32.xlu0 %v4398
    %v4639 = vpop.xlane.xlu0 %4638
    %4640 = vadd.xlane.f32.xlu0 %v4399
    %v4641 = vpop.xlane.xlu0 %4640
    %4642 = vadd.xlane.f32.xlu0 %v4400
    %v4643 = vpop.xlane.xlu0 %4642
    %4644 = vadd.xlane.f32.xlu0 %v4401
    %v4645 = vpop.xlane.xlu0 %4644
    %4646 = vadd.xlane.f32.xlu0 %v4402
    %v4647 = vpop.xlane.xlu0 %4646
    %4648 = vadd.xlane.f32.xlu0 %v4403
    %v4649 = vpop.xlane.xlu0 %4648
    %4650 = vadd.xlane.f32.xlu0 %v4404
    %v4651 = vpop.xlane.xlu0 %4650
    %4652 = vadd.xlane.f32.xlu0 %v4405
    %v4653 = vpop.xlane.xlu0 %4652
    %4654 = vadd.xlane.f32.xlu0 %v4406
    %v4655 = vpop.xlane.xlu0 %4654
    %4656 = vadd.xlane.f32.xlu0 %v4407
    %v4657 = vpop.xlane.xlu0 %4656
    %4658 = vadd.xlane.f32.xlu0 %v4408
    %v4659 = vpop.xlane.xlu0 %4658
    %4660 = vadd.xlane.f32.xlu0 %v4409
    %v4661 = vpop.xlane.xlu0 %4660
    %4662 = vadd.xlane.f32.xlu0 %v4410
    %v4663 = vpop.xlane.xlu0 %4662
    %4664 = vadd.xlane.f32.xlu0 %v4411
    %v4665 = vpop.xlane.xlu0 %4664
    %4666 = vadd.xlane.f32.xlu0 %v4412
    %v4667 = vpop.xlane.xlu0 %4666
    %4668 = vadd.xlane.f32.xlu0 %v4413
    %v4669 = vpop.xlane.xlu0 %4668
    %v4670 = vadd.f32 %v4415, %v4417
    %v4671 = vadd.f32 %v4670, %v4419
    %v4672 = vadd.f32 %v4671, %v4421
    %v4673 = vadd.f32 %v4672, %v4423
    %v4674 = vadd.f32 %v4673, %v4425
    %v4675 = vadd.f32 %v4674, %v4427
    %v4676 = vadd.f32 %v4675, %v4429
    %v4677 = vadd.f32 %v4676, %v4431
    %v4678 = vadd.f32 %v4677, %v4433
    %v4679 = vadd.f32 %v4678, %v4435
    %v4680 = vadd.f32 %v4679, %v4437
    %v4681 = vadd.f32 %v4680, %v4439
    %v4682 = vadd.f32 %v4681, %v4441
    %v4683 = vadd.f32 %v4682, %v4443
    %v4684 = vadd.f32 %v4683, %v4445
    %v4685 = vadd.f32 %v4684, %v4447
    %v4686 = vadd.f32 %v4685, %v4449
    %v4687 = vadd.f32 %v4686, %v4451
    %v4688 = vadd.f32 %v4687, %v4453
    %v4689 = vadd.f32 %v4688, %v4455
    %v4690 = vadd.f32 %v4689, %v4457
    %v4691 = vadd.f32 %v4690, %v4459
    %v4692 = vadd.f32 %v4691, %v4461
    %v4693 = vadd.f32 %v4692, %v4463
    %v4694 = vadd.f32 %v4693, %v4465
    %v4695 = vadd.f32 %v4694, %v4467
    %v4696 = vadd.f32 %v4695, %v4469
    %v4697 = vadd.f32 %v4696, %v4471
    %v4698 = vadd.f32 %v4697, %v4473
    %v4699 = vadd.f32 %v4698, %v4475
    %v4700 = vadd.f32 %v4699, %v4477
    %v4701 = vadd.f32 %v4700, %v4479
    %v4702 = vadd.f32 %v4701, %v4481
    %v4703 = vadd.f32 %v4702, %v4483
    %v4704 = vadd.f32 %v4703, %v4485
    %v4705 = vadd.f32 %v4704, %v4487
    %v4706 = vadd.f32 %v4705, %v4489
    %v4707 = vadd.f32 %v4706, %v4491
    %v4708 = vadd.f32 %v4707, %v4493
    %v4709 = vadd.f32 %v4708, %v4495
    %v4710 = vadd.f32 %v4709, %v4497
    %v4711 = vadd.f32 %v4710, %v4499
    %v4712 = vadd.f32 %v4711, %v4501
    %v4713 = vadd.f32 %v4712, %v4503
    %v4714 = vadd.f32 %v4713, %v4505
    %v4715 = vadd.f32 %v4714, %v4507
    %v4716 = vadd.f32 %v4715, %v4509
    %v4717 = vadd.f32 %v4716, %v4511
    %v4718 = vadd.f32 %v4717, %v4513
    %v4719 = vadd.f32 %v4718, %v4515
    %v4720 = vadd.f32 %v4719, %v4517
    %v4721 = vadd.f32 %v4720, %v4519
    %v4722 = vadd.f32 %v4721, %v4521
    %v4723 = vadd.f32 %v4722, %v4523
    %v4724 = vadd.f32 %v4723, %v4525
    %v4725 = vadd.f32 %v4724, %v4527
    %v4726 = vadd.f32 %v4725, %v4529
    %v4727 = vadd.f32 %v4726, %v4531
    %v4728 = vadd.f32 %v4727, %v4533
    %v4729 = vadd.f32 %v4728, %v4535
    %v4730 = vadd.f32 %v4729, %v4537
    %v4731 = vadd.f32 %v4730, %v4539
    %v4732 = vadd.f32 %v4731, %v4541
    %v4733 = vadd.f32 %v4732, %v4543
    %v4734 = vadd.f32 %v4733, %v4545
    %v4735 = vadd.f32 %v4734, %v4547
    %v4736 = vadd.f32 %v4735, %v4549
    %v4737 = vadd.f32 %v4736, %v4551
    %v4738 = vadd.f32 %v4737, %v4553
    %v4739 = vadd.f32 %v4738, %v4555
    %v4740 = vadd.f32 %v4739, %v4557
    %v4741 = vadd.f32 %v4740, %v4559
    %v4742 = vadd.f32 %v4741, %v4561
    %v4743 = vadd.f32 %v4742, %v4563
    %v4744 = vadd.f32 %v4743, %v4565
    %v4745 = vadd.f32 %v4744, %v4567
    %v4746 = vadd.f32 %v4745, %v4569
    %v4747 = vadd.f32 %v4746, %v4571
    %v4748 = vadd.f32 %v4747, %v4573
    %v4749 = vadd.f32 %v4748, %v4575
    %v4750 = vadd.f32 %v4749, %v4577
    %v4751 = vadd.f32 %v4750, %v4579
    %v4752 = vadd.f32 %v4751, %v4581
    %v4753 = vadd.f32 %v4752, %v4583
    %v4754 = vadd.f32 %v4753, %v4585
    %v4755 = vadd.f32 %v4754, %v4587
    %v4756 = vadd.f32 %v4755, %v4589
    %v4757 = vadd.f32 %v4756, %v4591
    %v4758 = vadd.f32 %v4757, %v4593
    %v4759 = vadd.f32 %v4758, %v4595
    %v4760 = vadd.f32 %v4759, %v4597
    %v4761 = vadd.f32 %v4760, %v4599
    %v4762 = vadd.f32 %v4761, %v4601
    %v4763 = vadd.f32 %v4762, %v4603
    %v4764 = vadd.f32 %v4763, %v4605
    %v4765 = vadd.f32 %v4764, %v4607
    %v4766 = vadd.f32 %v4765, %v4609
    %v4767 = vadd.f32 %v4766, %v4611
    %v4768 = vadd.f32 %v4767, %v4613
    %v4769 = vadd.f32 %v4768, %v4615
    %v4770 = vadd.f32 %v4769, %v4617
    %v4771 = vadd.f32 %v4770, %v4619
    %v4772 = vadd.f32 %v4771, %v4621
    %v4773 = vadd.f32 %v4772, %v4623
    %v4774 = vadd.f32 %v4773, %v4625
    %v4775 = vadd.f32 %v4774, %v4627
    %v4776 = vadd.f32 %v4775, %v4629
    %v4777 = vadd.f32 %v4776, %v4631
    %v4778 = vadd.f32 %v4777, %v4633
    %v4779 = vadd.f32 %v4778, %v4635
    %v4780 = vadd.f32 %v4779, %v4637
    %v4781 = vadd.f32 %v4780, %v4639
    %v4782 = vadd.f32 %v4781, %v4641
    %v4783 = vadd.f32 %v4782, %v4643
    %v4784 = vadd.f32 %v4783, %v4645
    %v4785 = vadd.f32 %v4784, %v4647
    %v4786 = vadd.f32 %v4785, %v4649
    %v4787 = vadd.f32 %v4786, %v4651
    %v4788 = vadd.f32 %v4787, %v4653
    %v4789 = vadd.f32 %v4788, %v4655
    %v4790 = vadd.f32 %v4789, %v4657
    %v4791 = vadd.f32 %v4790, %v4659
    %v4792 = vadd.f32 %v4791, %v4661
    %v4793 = vadd.f32 %v4792, %v4663
    %v4794 = vadd.f32 %v4793, %v4665
    %v4795 = vadd.f32 %v4794, %v4667
    %v4796 = vadd.f32 %v4795, %v4669
    %v4797 = vrot.slane %v4796, 4
    %v4798 = vadd.f32 %v4796, %v4797
    %v4799 = vrot.slane %v4798, 2
    %v4800 = vadd.f32 %v4798, %v4799
    %v4801 = vrot.slane %v4800, 1
    %v4802 = vadd.f32 %v4800, %v4801
    %v4803 = vmul.f32 %v4802, 0.0009765625
    %v4804 = vmax.f32 %v1278, %v2453
    %v4805 = vmax.f32 %v4804, %v3628
    %v4806 = vmax.f32 %v4805, %v4803
    %v4807 = vsub.f32 %v1278, %v4806
    %v4808 = vmul.f32 %v4807, 1.442695
    %v4809 = vpow.pop %v4808
    %v4810 = vsub.f32 %v2453, %v4806
    %v4811 = vmul.f32 %v4810, 1.442695
    %v4812 = vpow.pop %v4811
    %v4813 = vsub.f32 %v3628, %v4806
    %v4814 = vmul.f32 %v4813, 1.442695
    %v4815 = vpow.pop %v4814
    %v4816 = vsub.f32 %v4803, %v4806
    %v4817 = vmul.f32 %v4816, 1.442695
    %v4818 = vpow.pop %v4817
    %v4819 = vadd.f32 %v4809, %v4812
    %v4820 = vadd.f32 %v4819, %v4815
    %v4821 = vadd.f32 %v4820, %v4818
    %v4822 = vrcp.pop %v4821
    %v4823 = vmul.f32 %v4821, %v4822
    %v4824 = vsub.f32 1.0, %v4823
    %v4825 = vmul.f32 %v4822, %v4824
    %v4826 = vadd.f32 %v4822, %v4825
    %vm4827 = vweird.f32 %v4821
    %vm4828 = vweird.f32 %v4822
    %vm4829 = vmor %vm4827, %vm4828
    %v4830 = vsel %vm4829, %v4822, %v4826
    %v4831 = vand.u32 2147483647, %v4821
    %vm4832 = vcmp.eq.f32.partialorder %v4831, 8.507059e+37
    %v4833 = vand.u32 %v4821, 2147483648
    %v4834 = vor.u32 1.1754944e-38, %v4833
    %v4835 = vsel %vm4832, %v4834, %v4830
    %v4836 = vmul.f32 %v4809, %v4835
    %v4837 = vmul.f32 %v4812, %v4835
    %v4838 = vmul.f32 %v4815, %v4835
    %v4839 = vmul.f32 %v4818, %v4835
    %v4840 = vlaneseq
    %v4841 = vand.u32 %v4840, 127
    %vm4842 = vcmp.eq.s32.totalorder %v4841, 0
    %v4843 = vsel %vm4842, %v4836, 0.0
    %vm4844 = vcmp.eq.s32.totalorder %v4841, 1
    %v4845 = vsel %vm4844, %v4837, %v4843
    %vm4846 = vcmp.eq.s32.totalorder %v4841, 2
    %v4847 = vsel %vm4846, %v4838, %v4845
    %vm4848 = vcmp.eq.s32.totalorder %v4841, 3
    %v4849 = vsel %vm4848, %v4839, %v4847
    %vm4850 = vcmask 24576
    %4851 = vst.msk [vmem:[#allocation11] sm:$0x1] %vm4850, %v4849
    %v4852 = vld [vmem:[#allocation2] sm:$0xff]
    %v4853 = vld [vmem:[#allocation2 + $0x20] sm:$0xff]
    %v4854 = vld [vmem:[#allocation2 + $0x40] sm:$0xff]
    %v4855 = vld [vmem:[#allocation2 + $0x60] sm:$0xff]
    %v4856 = vld [vmem:[#allocation2 + $0x80] sm:$0xff]
    %v4857 = vld [vmem:[#allocation2 + $0xa0] sm:$0xff]
    %v4858 = vld [vmem:[#allocation2 + $0xc0] sm:$0xff]
    %v4859 = vld [vmem:[#allocation2 + $0xe0] sm:$0xff]
    %v4860 = vld [vmem:[#allocation2 + $0x100] sm:$0xff]
    %v4861 = vld [vmem:[#allocation2 + $0x120] sm:$0xff]
    %v4862 = vld [vmem:[#allocation2 + $0x140] sm:$0xff]
    %v4863 = vld [vmem:[#allocation2 + $0x160] sm:$0xff]
    %v4864 = vld [vmem:[#allocation2 + $0x180] sm:$0xff]
    %v4865 = vld [vmem:[#allocation2 + $0x1a0] sm:$0xff]
    %v4866 = vld [vmem:[#allocation2 + $0x1c0] sm:$0xff]
    %v4867 = vld [vmem:[#allocation2 + $0x1e0] sm:$0xff]
    %v4868 = vld [vmem:[#allocation2 + $0x200] sm:$0xff]
    %v4869 = vld [vmem:[#allocation2 + $0x220] sm:$0xff]
    %v4870 = vld [vmem:[#allocation2 + $0x240] sm:$0xff]
    %v4871 = vld [vmem:[#allocation2 + $0x260] sm:$0xff]
    %v4872 = vld [vmem:[#allocation2 + $0x280] sm:$0xff]
    %v4873 = vld [vmem:[#allocation2 + $0x2a0] sm:$0xff]
    %v4874 = vld [vmem:[#allocation2 + $0x2c0] sm:$0xff]
    %v4875 = vld [vmem:[#allocation2 + $0x2e0] sm:$0xff]
    %v4876 = vld [vmem:[#allocation2 + $0x300] sm:$0xff]
    %v4877 = vld [vmem:[#allocation2 + $0x320] sm:$0xff]
    %v4878 = vld [vmem:[#allocation2 + $0x340] sm:$0xff]
    %v4879 = vld [vmem:[#allocation2 + $0x360] sm:$0xff]
    %v4880 = vld [vmem:[#allocation2 + $0x380] sm:$0xff]
    %v4881 = vld [vmem:[#allocation2 + $0x3a0] sm:$0xff]
    %v4882 = vld [vmem:[#allocation2 + $0x3c0] sm:$0xff]
    %v4883 = vld [vmem:[#allocation2 + $0x3e0] sm:$0xff]
    %v4884 = vld [vmem:[#allocation2 + $0x400] sm:$0xff]
    %v4885 = vld [vmem:[#allocation2 + $0x420] sm:$0xff]
    %v4886 = vld [vmem:[#allocation2 + $0x440] sm:$0xff]
    %v4887 = vld [vmem:[#allocation2 + $0x460] sm:$0xff]
    %v4888 = vld [vmem:[#allocation2 + $0x480] sm:$0xff]
    %v4889 = vld [vmem:[#allocation2 + $0x4a0] sm:$0xff]
    %v4890 = vld [vmem:[#allocation2 + $0x4c0] sm:$0xff]
    %v4891 = vld [vmem:[#allocation2 + $0x4e0] sm:$0xff]
    %v4892 = vld [vmem:[#allocation2 + $0x500] sm:$0xff]
    %v4893 = vld [vmem:[#allocation2 + $0x520] sm:$0xff]
    %v4894 = vld [vmem:[#allocation2 + $0x540] sm:$0xff]
    %v4895 = vld [vmem:[#allocation2 + $0x560] sm:$0xff]
    %v4896 = vld [vmem:[#allocation2 + $0x580] sm:$0xff]
    %v4897 = vld [vmem:[#allocation2 + $0x5a0] sm:$0xff]
    %v4898 = vld [vmem:[#allocation2 + $0x5c0] sm:$0xff]
    %v4899 = vld [vmem:[#allocation2 + $0x5e0] sm:$0xff]
    %v4900 = vld [vmem:[#allocation2 + $0x600] sm:$0xff]
    %v4901 = vld [vmem:[#allocation2 + $0x620] sm:$0xff]
    %v4902 = vld [vmem:[#allocation2 + $0x640] sm:$0xff]
    %v4903 = vld [vmem:[#allocation2 + $0x660] sm:$0xff]
    %v4904 = vld [vmem:[#allocation2 + $0x680] sm:$0xff]
    %v4905 = vld [vmem:[#allocation2 + $0x6a0] sm:$0xff]
    %v4906 = vld [vmem:[#allocation2 + $0x6c0] sm:$0xff]
    %v4907 = vld [vmem:[#allocation2 + $0x6e0] sm:$0xff]
    %v4908 = vld [vmem:[#allocation2 + $0x700] sm:$0xff]
    %v4909 = vld [vmem:[#allocation2 + $0x720] sm:$0xff]
    %v4910 = vld [vmem:[#allocation2 + $0x740] sm:$0xff]
    %v4911 = vld [vmem:[#allocation2 + $0x760] sm:$0xff]
    %v4912 = vld [vmem:[#allocation2 + $0x780] sm:$0xff]
    %v4913 = vld [vmem:[#allocation2 + $0x7a0] sm:$0xff]
    %v4914 = vld [vmem:[#allocation2 + $0x7c0] sm:$0xff]
    %v4915 = vld [vmem:[#allocation2 + $0x7e0] sm:$0xff]
    %v4916 = vld [vmem:[#allocation2 + $0x800] sm:$0xff]
    %v4917 = vld [vmem:[#allocation2 + $0x820] sm:$0xff]
    %v4918 = vld [vmem:[#allocation2 + $0x840] sm:$0xff]
    %v4919 = vld [vmem:[#allocation2 + $0x860] sm:$0xff]
    %v4920 = vld [vmem:[#allocation2 + $0x880] sm:$0xff]
    %v4921 = vld [vmem:[#allocation2 + $0x8a0] sm:$0xff]
    %v4922 = vld [vmem:[#allocation2 + $0x8c0] sm:$0xff]
    %v4923 = vld [vmem:[#allocation2 + $0x8e0] sm:$0xff]
    %v4924 = vld [vmem:[#allocation2 + $0x900] sm:$0xff]
    %v4925 = vld [vmem:[#allocation2 + $0x920] sm:$0xff]
    %v4926 = vld [vmem:[#allocation2 + $0x940] sm:$0xff]
    %v4927 = vld [vmem:[#allocation2 + $0x960] sm:$0xff]
    %v4928 = vld [vmem:[#allocation2 + $0x980] sm:$0xff]
    %v4929 = vld [vmem:[#allocation2 + $0x9a0] sm:$0xff]
    %v4930 = vld [vmem:[#allocation2 + $0x9c0] sm:$0xff]
    %v4931 = vld [vmem:[#allocation2 + $0x9e0] sm:$0xff]
    %v4932 = vld [vmem:[#allocation2 + $0xa00] sm:$0xff]
    %v4933 = vld [vmem:[#allocation2 + $0xa20] sm:$0xff]
    %v4934 = vld [vmem:[#allocation2 + $0xa40] sm:$0xff]
    %v4935 = vld [vmem:[#allocation2 + $0xa60] sm:$0xff]
    %v4936 = vld [vmem:[#allocation2 + $0xa80] sm:$0xff]
    %v4937 = vld [vmem:[#allocation2 + $0xaa0] sm:$0xff]
    %v4938 = vld [vmem:[#allocation2 + $0xac0] sm:$0xff]
    %v4939 = vld [vmem:[#allocation2 + $0xae0] sm:$0xff]
    %v4940 = vld [vmem:[#allocation2 + $0xb00] sm:$0xff]
    %v4941 = vld [vmem:[#allocation2 + $0xb20] sm:$0xff]
    %v4942 = vld [vmem:[#allocation2 + $0xb40] sm:$0xff]
    %v4943 = vld [vmem:[#allocation2 + $0xb60] sm:$0xff]
    %v4944 = vld [vmem:[#allocation2 + $0xb80] sm:$0xff]
    %v4945 = vld [vmem:[#allocation2 + $0xba0] sm:$0xff]
    %v4946 = vld [vmem:[#allocation2 + $0xbc0] sm:$0xff]
    %v4947 = vld [vmem:[#allocation2 + $0xbe0] sm:$0xff]
    %v4948 = vld [vmem:[#allocation2 + $0xc00] sm:$0xff]
    %v4949 = vld [vmem:[#allocation2 + $0xc20] sm:$0xff]
    %v4950 = vld [vmem:[#allocation2 + $0xc40] sm:$0xff]
    %v4951 = vld [vmem:[#allocation2 + $0xc60] sm:$0xff]
    %v4952 = vld [vmem:[#allocation2 + $0xc80] sm:$0xff]
    %v4953 = vld [vmem:[#allocation2 + $0xca0] sm:$0xff]
    %v4954 = vld [vmem:[#allocation2 + $0xcc0] sm:$0xff]
    %v4955 = vld [vmem:[#allocation2 + $0xce0] sm:$0xff]
    %v4956 = vld [vmem:[#allocation2 + $0xd00] sm:$0xff]
    %v4957 = vld [vmem:[#allocation2 + $0xd20] sm:$0xff]
    %v4958 = vld [vmem:[#allocation2 + $0xd40] sm:$0xff]
    %v4959 = vld [vmem:[#allocation2 + $0xd60] sm:$0xff]
    %v4960 = vld [vmem:[#allocation2 + $0xd80] sm:$0xff]
    %v4961 = vld [vmem:[#allocation2 + $0xda0] sm:$0xff]
    %v4962 = vld [vmem:[#allocation2 + $0xdc0] sm:$0xff]
    %v4963 = vld [vmem:[#allocation2 + $0xde0] sm:$0xff]
    %v4964 = vld [vmem:[#allocation2 + $0xe00] sm:$0xff]
    %v4965 = vld [vmem:[#allocation2 + $0xe20] sm:$0xff]
    %v4966 = vld [vmem:[#allocation2 + $0xe40] sm:$0xff]
    %v4967 = vld [vmem:[#allocation2 + $0xe60] sm:$0xff]
    %v4968 = vld [vmem:[#allocation2 + $0xe80] sm:$0xff]
    %v4969 = vld [vmem:[#allocation2 + $0xea0] sm:$0xff]
    %v4970 = vld [vmem:[#allocation2 + $0xec0] sm:$0xff]
    %v4971 = vld [vmem:[#allocation2 + $0xee0] sm:$0xff]
    %v4972 = vld [vmem:[#allocation2 + $0xf00] sm:$0xff]
    %v4973 = vld [vmem:[#allocation2 + $0xf20] sm:$0xff]
    %v4974 = vld [vmem:[#allocation2 + $0xf40] sm:$0xff]
    %v4975 = vld [vmem:[#allocation2 + $0xf60] sm:$0xff]
    %v4976 = vld [vmem:[#allocation2 + $0xf80] sm:$0xff]
    %v4977 = vld [vmem:[#allocation2 + $0xfa0] sm:$0xff]
    %v4978 = vld [vmem:[#allocation2 + $0xfc0] sm:$0xff]
    %v4979 = vld [vmem:[#allocation2 + $0xfe0] sm:$0xff]
    %v4980 = vmul.f32 %v4836, %v4852
    %v4981 = vmul.f32 %v4836, %v4853
    %v4982 = vmul.f32 %v4836, %v4854
    %v4983 = vmul.f32 %v4836, %v4855
    %v4984 = vmul.f32 %v4836, %v4856
    %v4985 = vmul.f32 %v4836, %v4857
    %v4986 = vmul.f32 %v4836, %v4858
    %v4987 = vmul.f32 %v4836, %v4859
    %v4988 = vmul.f32 %v4836, %v4860
    %v4989 = vmul.f32 %v4836, %v4861
    %v4990 = vmul.f32 %v4836, %v4862
    %v4991 = vmul.f32 %v4836, %v4863
    %v4992 = vmul.f32 %v4836, %v4864
    %v4993 = vmul.f32 %v4836, %v4865
    %v4994 = vmul.f32 %v4836, %v4866
    %v4995 = vmul.f32 %v4836, %v4867
    %v4996 = vmul.f32 %v4836, %v4868
    %v4997 = vmul.f32 %v4836, %v4869
    %v4998 = vmul.f32 %v4836, %v4870
    %v4999 = vmul.f32 %v4836, %v4871
    %v5000 = vmul.f32 %v4836, %v4872
    %v5001 = vmul.f32 %v4836, %v4873
    %v5002 = vmul.f32 %v4836, %v4874
    %v5003 = vmul.f32 %v4836, %v4875
    %v5004 = vmul.f32 %v4836, %v4876
    %v5005 = vmul.f32 %v4836, %v4877
    %v5006 = vmul.f32 %v4836, %v4878
    %v5007 = vmul.f32 %v4836, %v4879
    %v5008 = vmul.f32 %v4836, %v4880
    %v5009 = vmul.f32 %v4836, %v4881
    %v5010 = vmul.f32 %v4836, %v4882
    %v5011 = vmul.f32 %v4836, %v4883
    %v5012 = vmul.f32 %v4836, %v4884
    %v5013 = vmul.f32 %v4836, %v4885
    %v5014 = vmul.f32 %v4836, %v4886
    %v5015 = vmul.f32 %v4836, %v4887
    %v5016 = vmul.f32 %v4836, %v4888
    %v5017 = vmul.f32 %v4836, %v4889
    %v5018 = vmul.f32 %v4836, %v4890
    %v5019 = vmul.f32 %v4836, %v4891
    %v5020 = vmul.f32 %v4836, %v4892
    %v5021 = vmul.f32 %v4836, %v4893
    %v5022 = vmul.f32 %v4836, %v4894
    %v5023 = vmul.f32 %v4836, %v4895
    %v5024 = vmul.f32 %v4836, %v4896
    %v5025 = vmul.f32 %v4836, %v4897
    %v5026 = vmul.f32 %v4836, %v4898
    %v5027 = vmul.f32 %v4836, %v4899
    %v5028 = vmul.f32 %v4836, %v4900
    %v5029 = vmul.f32 %v4836, %v4901
    %v5030 = vmul.f32 %v4836, %v4902
    %v5031 = vmul.f32 %v4836, %v4903
    %v5032 = vmul.f32 %v4836, %v4904
    %v5033 = vmul.f32 %v4836, %v4905
    %v5034 = vmul.f32 %v4836, %v4906
    %v5035 = vmul.f32 %v4836, %v4907
    %v5036 = vmul.f32 %v4836, %v4908
    %v5037 = vmul.f32 %v4836, %v4909
    %v5038 = vmul.f32 %v4836, %v4910
    %v5039 = vmul.f32 %v4836, %v4911
    %v5040 = vmul.f32 %v4836, %v4912
    %v5041 = vmul.f32 %v4836, %v4913
    %v5042 = vmul.f32 %v4836, %v4914
    %v5043 = vmul.f32 %v4836, %v4915
    %v5044 = vmul.f32 %v4836, %v4916
    %v5045 = vmul.f32 %v4836, %v4917
    %v5046 = vmul.f32 %v4836, %v4918
    %v5047 = vmul.f32 %v4836, %v4919
    %v5048 = vmul.f32 %v4836, %v4920
    %v5049 = vmul.f32 %v4836, %v4921
    %v5050 = vmul.f32 %v4836, %v4922
    %v5051 = vmul.f32 %v4836, %v4923
    %v5052 = vmul.f32 %v4836, %v4924
    %v5053 = vmul.f32 %v4836, %v4925
    %v5054 = vmul.f32 %v4836, %v4926
    %v5055 = vmul.f32 %v4836, %v4927
    %v5056 = vmul.f32 %v4836, %v4928
    %v5057 = vmul.f32 %v4836, %v4929
    %v5058 = vmul.f32 %v4836, %v4930
    %v5059 = vmul.f32 %v4836, %v4931
    %v5060 = vmul.f32 %v4836, %v4932
    %v5061 = vmul.f32 %v4836, %v4933
    %v5062 = vmul.f32 %v4836, %v4934
    %v5063 = vmul.f32 %v4836, %v4935
    %v5064 = vmul.f32 %v4836, %v4936
    %v5065 = vmul.f32 %v4836, %v4937
    %v5066 = vmul.f32 %v4836, %v4938
    %v5067 = vmul.f32 %v4836, %v4939
    %v5068 = vmul.f32 %v4836, %v4940
    %v5069 = vmul.f32 %v4836, %v4941
    %v5070 = vmul.f32 %v4836, %v4942
    %v5071 = vmul.f32 %v4836, %v4943
    %v5072 = vmul.f32 %v4836, %v4944
    %v5073 = vmul.f32 %v4836, %v4945
    %v5074 = vmul.f32 %v4836, %v4946
    %v5075 = vmul.f32 %v4836, %v4947
    %v5076 = vmul.f32 %v4836, %v4948
    %v5077 = vmul.f32 %v4836, %v4949
    %v5078 = vmul.f32 %v4836, %v4950
    %v5079 = vmul.f32 %v4836, %v4951
    %v5080 = vmul.f32 %v4836, %v4952
    %v5081 = vmul.f32 %v4836, %v4953
    %v5082 = vmul.f32 %v4836, %v4954
    %v5083 = vmul.f32 %v4836, %v4955
    %v5084 = vmul.f32 %v4836, %v4956
    %v5085 = vmul.f32 %v4836, %v4957
    %v5086 = vmul.f32 %v4836, %v4958
    %v5087 = vmul.f32 %v4836, %v4959
    %v5088 = vmul.f32 %v4836, %v4960
    %v5089 = vmul.f32 %v4836, %v4961
    %v5090 = vmul.f32 %v4836, %v4962
    %v5091 = vmul.f32 %v4836, %v4963
    %v5092 = vmul.f32 %v4836, %v4964
    %v5093 = vmul.f32 %v4836, %v4965
    %v5094 = vmul.f32 %v4836, %v4966
    %v5095 = vmul.f32 %v4836, %v4967
    %v5096 = vmul.f32 %v4836, %v4968
    %v5097 = vmul.f32 %v4836, %v4969
    %v5098 = vmul.f32 %v4836, %v4970
    %v5099 = vmul.f32 %v4836, %v4971
    %v5100 = vmul.f32 %v4836, %v4972
    %v5101 = vmul.f32 %v4836, %v4973
    %v5102 = vmul.f32 %v4836, %v4974
    %v5103 = vmul.f32 %v4836, %v4975
    %v5104 = vmul.f32 %v4836, %v4976
    %v5105 = vmul.f32 %v4836, %v4977
    %v5106 = vmul.f32 %v4836, %v4978
    %v5107 = vmul.f32 %v4836, %v4979
    %v5108 = vld [vmem:[#allocation2 + $0x8] sm:$0xff]
    %v5109 = vld [vmem:[#allocation2 + $0x28] sm:$0xff]
    %v5110 = vld [vmem:[#allocation2 + $0x48] sm:$0xff]
    %v5111 = vld [vmem:[#allocation2 + $0x68] sm:$0xff]
    %v5112 = vld [vmem:[#allocation2 + $0x88] sm:$0xff]
    %v5113 = vld [vmem:[#allocation2 + $0xa8] sm:$0xff]
    %v5114 = vld [vmem:[#allocation2 + $0xc8] sm:$0xff]
    %v5115 = vld [vmem:[#allocation2 + $0xe8] sm:$0xff]
    %v5116 = vld [vmem:[#allocation2 + $0x108] sm:$0xff]
    %v5117 = vld [vmem:[#allocation2 + $0x128] sm:$0xff]
    %v5118 = vld [vmem:[#allocation2 + $0x148] sm:$0xff]
    %v5119 = vld [vmem:[#allocation2 + $0x168] sm:$0xff]
    %v5120 = vld [vmem:[#allocation2 + $0x188] sm:$0xff]
    %v5121 = vld [vmem:[#allocation2 + $0x1a8] sm:$0xff]
    %v5122 = vld [vmem:[#allocation2 + $0x1c8] sm:$0xff]
    %v5123 = vld [vmem:[#allocation2 + $0x1e8] sm:$0xff]
    %v5124 = vld [vmem:[#allocation2 + $0x208] sm:$0xff]
    %v5125 = vld [vmem:[#allocation2 + $0x228] sm:$0xff]
    %v5126 = vld [vmem:[#allocation2 + $0x248] sm:$0xff]
    %v5127 = vld [vmem:[#allocation2 + $0x268] sm:$0xff]
    %v5128 = vld [vmem:[#allocation2 + $0x288] sm:$0xff]
    %v5129 = vld [vmem:[#allocation2 + $0x2a8] sm:$0xff]
    %v5130 = vld [vmem:[#allocation2 + $0x2c8] sm:$0xff]
    %v5131 = vld [vmem:[#allocation2 + $0x2e8] sm:$0xff]
    %v5132 = vld [vmem:[#allocation2 + $0x308] sm:$0xff]
    %v5133 = vld [vmem:[#allocation2 + $0x328] sm:$0xff]
    %v5134 = vld [vmem:[#allocation2 + $0x348] sm:$0xff]
    %v5135 = vld [vmem:[#allocation2 + $0x368] sm:$0xff]
    %v5136 = vld [vmem:[#allocation2 + $0x388] sm:$0xff]
    %v5137 = vld [vmem:[#allocation2 + $0x3a8] sm:$0xff]
    %v5138 = vld [vmem:[#allocation2 + $0x3c8] sm:$0xff]
    %v5139 = vld [vmem:[#allocation2 + $0x3e8] sm:$0xff]
    %v5140 = vld [vmem:[#allocation2 + $0x408] sm:$0xff]
    %v5141 = vld [vmem:[#allocation2 + $0x428] sm:$0xff]
    %v5142 = vld [vmem:[#allocation2 + $0x448] sm:$0xff]
    %v5143 = vld [vmem:[#allocation2 + $0x468] sm:$0xff]
    %v5144 = vld [vmem:[#allocation2 + $0x488] sm:$0xff]
    %v5145 = vld [vmem:[#allocation2 + $0x4a8] sm:$0xff]
    %v5146 = vld [vmem:[#allocation2 + $0x4c8] sm:$0xff]
    %v5147 = vld [vmem:[#allocation2 + $0x4e8] sm:$0xff]
    %v5148 = vld [vmem:[#allocation2 + $0x508] sm:$0xff]
    %v5149 = vld [vmem:[#allocation2 + $0x528] sm:$0xff]
    %v5150 = vld [vmem:[#allocation2 + $0x548] sm:$0xff]
    %v5151 = vld [vmem:[#allocation2 + $0x568] sm:$0xff]
    %v5152 = vld [vmem:[#allocation2 + $0x588] sm:$0xff]
    %v5153 = vld [vmem:[#allocation2 + $0x5a8] sm:$0xff]
    %v5154 = vld [vmem:[#allocation2 + $0x5c8] sm:$0xff]
    %v5155 = vld [vmem:[#allocation2 + $0x5e8] sm:$0xff]
    %v5156 = vld [vmem:[#allocation2 + $0x608] sm:$0xff]
    %v5157 = vld [vmem:[#allocation2 + $0x628] sm:$0xff]
    %v5158 = vld [vmem:[#allocation2 + $0x648] sm:$0xff]
    %v5159 = vld [vmem:[#allocation2 + $0x668] sm:$0xff]
    %v5160 = vld [vmem:[#allocation2 + $0x688] sm:$0xff]
    %v5161 = vld [vmem:[#allocation2 + $0x6a8] sm:$0xff]
    %v5162 = vld [vmem:[#allocation2 + $0x6c8] sm:$0xff]
    %v5163 = vld [vmem:[#allocation2 + $0x6e8] sm:$0xff]
    %v5164 = vld [vmem:[#allocation2 + $0x708] sm:$0xff]
    %v5165 = vld [vmem:[#allocation2 + $0x728] sm:$0xff]
    %v5166 = vld [vmem:[#allocation2 + $0x748] sm:$0xff]
    %v5167 = vld [vmem:[#allocation2 + $0x768] sm:$0xff]
    %v5168 = vld [vmem:[#allocation2 + $0x788] sm:$0xff]
    %v5169 = vld [vmem:[#allocation2 + $0x7a8] sm:$0xff]
    %v5170 = vld [vmem:[#allocation2 + $0x7c8] sm:$0xff]
    %v5171 = vld [vmem:[#allocation2 + $0x7e8] sm:$0xff]
    %v5172 = vld [vmem:[#allocation2 + $0x808] sm:$0xff]
    %v5173 = vld [vmem:[#allocation2 + $0x828] sm:$0xff]
    %v5174 = vld [vmem:[#allocation2 + $0x848] sm:$0xff]
    %v5175 = vld [vmem:[#allocation2 + $0x868] sm:$0xff]
    %v5176 = vld [vmem:[#allocation2 + $0x888] sm:$0xff]
    %v5177 = vld [vmem:[#allocation2 + $0x8a8] sm:$0xff]
    %v5178 = vld [vmem:[#allocation2 + $0x8c8] sm:$0xff]
    %v5179 = vld [vmem:[#allocation2 + $0x8e8] sm:$0xff]
    %v5180 = vld [vmem:[#allocation2 + $0x908] sm:$0xff]
    %v5181 = vld [vmem:[#allocation2 + $0x928] sm:$0xff]
    %v5182 = vld [vmem:[#allocation2 + $0x948] sm:$0xff]
    %v5183 = vld [vmem:[#allocation2 + $0x968] sm:$0xff]
    %v5184 = vld [vmem:[#allocation2 + $0x988] sm:$0xff]
    %v5185 = vld [vmem:[#allocation2 + $0x9a8] sm:$0xff]
    %v5186 = vld [vmem:[#allocation2 + $0x9c8] sm:$0xff]
    %v5187 = vld [vmem:[#allocation2 + $0x9e8] sm:$0xff]
    %v5188 = vld [vmem:[#allocation2 + $0xa08] sm:$0xff]
    %v5189 = vld [vmem:[#allocation2 + $0xa28] sm:$0xff]
    %v5190 = vld [vmem:[#allocation2 + $0xa48] sm:$0xff]
    %v5191 = vld [vmem:[#allocation2 + $0xa68] sm:$0xff]
    %v5192 = vld [vmem:[#allocation2 + $0xa88] sm:$0xff]
    %v5193 = vld [vmem:[#allocation2 + $0xaa8] sm:$0xff]
    %v5194 = vld [vmem:[#allocation2 + $0xac8] sm:$0xff]
    %v5195 = vld [vmem:[#allocation2 + $0xae8] sm:$0xff]
    %v5196 = vld [vmem:[#allocation2 + $0xb08] sm:$0xff]
    %v5197 = vld [vmem:[#allocation2 + $0xb28] sm:$0xff]
    %v5198 = vld [vmem:[#allocation2 + $0xb48] sm:$0xff]
    %v5199 = vld [vmem:[#allocation2 + $0xb68] sm:$0xff]
    %v5200 = vld [vmem:[#allocation2 + $0xb88] sm:$0xff]
    %v5201 = vld [vmem:[#allocation2 + $0xba8] sm:$0xff]
    %v5202 = vld [vmem:[#allocation2 + $0xbc8] sm:$0xff]
    %v5203 = vld [vmem:[#allocation2 + $0xbe8] sm:$0xff]
    %v5204 = vld [vmem:[#allocation2 + $0xc08] sm:$0xff]
    %v5205 = vld [vmem:[#allocation2 + $0xc28] sm:$0xff]
    %v5206 = vld [vmem:[#allocation2 + $0xc48] sm:$0xff]
    %v5207 = vld [vmem:[#allocation2 + $0xc68] sm:$0xff]
    %v5208 = vld [vmem:[#allocation2 + $0xc88] sm:$0xff]
    %v5209 = vld [vmem:[#allocation2 + $0xca8] sm:$0xff]
    %v5210 = vld [vmem:[#allocation2 + $0xcc8] sm:$0xff]
    %v5211 = vld [vmem:[#allocation2 + $0xce8] sm:$0xff]
    %v5212 = vld [vmem:[#allocation2 + $0xd08] sm:$0xff]
    %v5213 = vld [vmem:[#allocation2 + $0xd28] sm:$0xff]
    %v5214 = vld [vmem:[#allocation2 + $0xd48] sm:$0xff]
    %v5215 = vld [vmem:[#allocation2 + $0xd68] sm:$0xff]
    %v5216 = vld [vmem:[#allocation2 + $0xd88] sm:$0xff]
    %v5217 = vld [vmem:[#allocation2 + $0xda8] sm:$0xff]
    %v5218 = vld [vmem:[#allocation2 + $0xdc8] sm:$0xff]
    %v5219 = vld [vmem:[#allocation2 + $0xde8] sm:$0xff]
    %v5220 = vld [vmem:[#allocation2 + $0xe08] sm:$0xff]
    %v5221 = vld [vmem:[#allocation2 + $0xe28] sm:$0xff]
    %v5222 = vld [vmem:[#allocation2 + $0xe48] sm:$0xff]
    %v5223 = vld [vmem:[#allocation2 + $0xe68] sm:$0xff]
    %v5224 = vld [vmem:[#allocation2 + $0xe88] sm:$0xff]
    %v5225 = vld [vmem:[#allocation2 + $0xea8] sm:$0xff]
    %v5226 = vld [vmem:[#allocation2 + $0xec8] sm:$0xff]
    %v5227 = vld [vmem:[#allocation2 + $0xee8] sm:$0xff]
    %v5228 = vld [vmem:[#allocation2 + $0xf08] sm:$0xff]
    %v5229 = vld [vmem:[#allocation2 + $0xf28] sm:$0xff]
    %v5230 = vld [vmem:[#allocation2 + $0xf48] sm:$0xff]
    %v5231 = vld [vmem:[#allocation2 + $0xf68] sm:$0xff]
    %v5232 = vld [vmem:[#allocation2 + $0xf88] sm:$0xff]
    %v5233 = vld [vmem:[#allocation2 + $0xfa8] sm:$0xff]
    %v5234 = vld [vmem:[#allocation2 + $0xfc8] sm:$0xff]
    %v5235 = vld [vmem:[#allocation2 + $0xfe8] sm:$0xff]
    %v5236 = vmul.f32 %v4837, %v5108
    %v5237 = vmul.f32 %v4837, %v5109
    %v5238 = vmul.f32 %v4837, %v5110
    %v5239 = vmul.f32 %v4837, %v5111
    %v5240 = vmul.f32 %v4837, %v5112
    %v5241 = vmul.f32 %v4837, %v5113
    %v5242 = vmul.f32 %v4837, %v5114
    %v5243 = vmul.f32 %v4837, %v5115
    %v5244 = vmul.f32 %v4837, %v5116
    %v5245 = vmul.f32 %v4837, %v5117
    %v5246 = vmul.f32 %v4837, %v5118
    %v5247 = vmul.f32 %v4837, %v5119
    %v5248 = vmul.f32 %v4837, %v5120
    %v5249 = vmul.f32 %v4837, %v5121
    %v5250 = vmul.f32 %v4837, %v5122
    %v5251 = vmul.f32 %v4837, %v5123
    %v5252 = vmul.f32 %v4837, %v5124
    %v5253 = vmul.f32 %v4837, %v5125
    %v5254 = vmul.f32 %v4837, %v5126
    %v5255 = vmul.f32 %v4837, %v5127
    %v5256 = vmul.f32 %v4837, %v5128
    %v5257 = vmul.f32 %v4837, %v5129
    %v5258 = vmul.f32 %v4837, %v5130
    %v5259 = vmul.f32 %v4837, %v5131
    %v5260 = vmul.f32 %v4837, %v5132
    %v5261 = vmul.f32 %v4837, %v5133
    %v5262 = vmul.f32 %v4837, %v5134
    %v5263 = vmul.f32 %v4837, %v5135
    %v5264 = vmul.f32 %v4837, %v5136
    %v5265 = vmul.f32 %v4837, %v5137
    %v5266 = vmul.f32 %v4837, %v5138
    %v5267 = vmul.f32 %v4837, %v5139
    %v5268 = vmul.f32 %v4837, %v5140
    %v5269 = vmul.f32 %v4837, %v5141
    %v5270 = vmul.f32 %v4837, %v5142
    %v5271 = vmul.f32 %v4837, %v5143
    %v5272 = vmul.f32 %v4837, %v5144
    %v5273 = vmul.f32 %v4837, %v5145
    %v5274 = vmul.f32 %v4837, %v5146
    %v5275 = vmul.f32 %v4837, %v5147
    %v5276 = vmul.f32 %v4837, %v5148
    %v5277 = vmul.f32 %v4837, %v5149
    %v5278 = vmul.f32 %v4837, %v5150
    %v5279 = vmul.f32 %v4837, %v5151
    %v5280 = vmul.f32 %v4837, %v5152
    %v5281 = vmul.f32 %v4837, %v5153
    %v5282 = vmul.f32 %v4837, %v5154
    %v5283 = vmul.f32 %v4837, %v5155
    %v5284 = vmul.f32 %v4837, %v5156
    %v5285 = vmul.f32 %v4837, %v5157
    %v5286 = vmul.f32 %v4837, %v5158
    %v5287 = vmul.f32 %v4837, %v5159
    %v5288 = vmul.f32 %v4837, %v5160
    %v5289 = vmul.f32 %v4837, %v5161
    %v5290 = vmul.f32 %v4837, %v5162
    %v5291 = vmul.f32 %v4837, %v5163
    %v5292 = vmul.f32 %v4837, %v5164
    %v5293 = vmul.f32 %v4837, %v5165
    %v5294 = vmul.f32 %v4837, %v5166
    %v5295 = vmul.f32 %v4837, %v5167
    %v5296 = vmul.f32 %v4837, %v5168
    %v5297 = vmul.f32 %v4837, %v5169
    %v5298 = vmul.f32 %v4837, %v5170
    %v5299 = vmul.f32 %v4837, %v5171
    %v5300 = vmul.f32 %v4837, %v5172
    %v5301 = vmul.f32 %v4837, %v5173
    %v5302 = vmul.f32 %v4837, %v5174
    %v5303 = vmul.f32 %v4837, %v5175
    %v5304 = vmul.f32 %v4837, %v5176
    %v5305 = vmul.f32 %v4837, %v5177
    %v5306 = vmul.f32 %v4837, %v5178
    %v5307 = vmul.f32 %v4837, %v5179
    %v5308 = vmul.f32 %v4837, %v5180
    %v5309 = vmul.f32 %v4837, %v5181
    %v5310 = vmul.f32 %v4837, %v5182
    %v5311 = vmul.f32 %v4837, %v5183
    %v5312 = vmul.f32 %v4837, %v5184
    %v5313 = vmul.f32 %v4837, %v5185
    %v5314 = vmul.f32 %v4837, %v5186
    %v5315 = vmul.f32 %v4837, %v5187
    %v5316 = vmul.f32 %v4837, %v5188
    %v5317 = vmul.f32 %v4837, %v5189
    %v5318 = vmul.f32 %v4837, %v5190
    %v5319 = vmul.f32 %v4837, %v5191
    %v5320 = vmul.f32 %v4837, %v5192
    %v5321 = vmul.f32 %v4837, %v5193
    %v5322 = vmul.f32 %v4837, %v5194
    %v5323 = vmul.f32 %v4837, %v5195
    %v5324 = vmul.f32 %v4837, %v5196
    %v5325 = vmul.f32 %v4837, %v5197
    %v5326 = vmul.f32 %v4837, %v5198
    %v5327 = vmul.f32 %v4837, %v5199
    %v5328 = vmul.f32 %v4837, %v5200
    %v5329 = vmul.f32 %v4837, %v5201
    %v5330 = vmul.f32 %v4837, %v5202
    %v5331 = vmul.f32 %v4837, %v5203
    %v5332 = vmul.f32 %v4837, %v5204
    %v5333 = vmul.f32 %v4837, %v5205
    %v5334 = vmul.f32 %v4837, %v5206
    %v5335 = vmul.f32 %v4837, %v5207
    %v5336 = vmul.f32 %v4837, %v5208
    %v5337 = vmul.f32 %v4837, %v5209
    %v5338 = vmul.f32 %v4837, %v5210
    %v5339 = vmul.f32 %v4837, %v5211
    %v5340 = vmul.f32 %v4837, %v5212
    %v5341 = vmul.f32 %v4837, %v5213
    %v5342 = vmul.f32 %v4837, %v5214
    %v5343 = vmul.f32 %v4837, %v5215
    %v5344 = vmul.f32 %v4837, %v5216
    %v5345 = vmul.f32 %v4837, %v5217
    %v5346 = vmul.f32 %v4837, %v5218
    %v5347 = vmul.f32 %v4837, %v5219
    %v5348 = vmul.f32 %v4837, %v5220
    %v5349 = vmul.f32 %v4837, %v5221
    %v5350 = vmul.f32 %v4837, %v5222
    %v5351 = vmul.f32 %v4837, %v5223
    %v5352 = vmul.f32 %v4837, %v5224
    %v5353 = vmul.f32 %v4837, %v5225
    %v5354 = vmul.f32 %v4837, %v5226
    %v5355 = vmul.f32 %v4837, %v5227
    %v5356 = vmul.f32 %v4837, %v5228
    %v5357 = vmul.f32 %v4837, %v5229
    %v5358 = vmul.f32 %v4837, %v5230
    %v5359 = vmul.f32 %v4837, %v5231
    %v5360 = vmul.f32 %v4837, %v5232
    %v5361 = vmul.f32 %v4837, %v5233
    %v5362 = vmul.f32 %v4837, %v5234
    %v5363 = vmul.f32 %v4837, %v5235
    %v5364 = vadd.f32 %v4980, %v5236
    %v5365 = vadd.f32 %v4981, %v5237
    %v5366 = vadd.f32 %v4982, %v5238
    %v5367 = vadd.f32 %v4983, %v5239
    %v5368 = vadd.f32 %v4984, %v5240
    %v5369 = vadd.f32 %v4985, %v5241
    %v5370 = vadd.f32 %v4986, %v5242
    %v5371 = vadd.f32 %v4987, %v5243
    %v5372 = vadd.f32 %v4988, %v5244
    %v5373 = vadd.f32 %v4989, %v5245
    %v5374 = vadd.f32 %v4990, %v5246
    %v5375 = vadd.f32 %v4991, %v5247
    %v5376 = vadd.f32 %v4992, %v5248
    %v5377 = vadd.f32 %v4993, %v5249
    %v5378 = vadd.f32 %v4994, %v5250
    %v5379 = vadd.f32 %v4995, %v5251
    %v5380 = vadd.f32 %v4996, %v5252
    %v5381 = vadd.f32 %v4997, %v5253
    %v5382 = vadd.f32 %v4998, %v5254
    %v5383 = vadd.f32 %v4999, %v5255
    %v5384 = vadd.f32 %v5000, %v5256
    %v5385 = vadd.f32 %v5001, %v5257
    %v5386 = vadd.f32 %v5002, %v5258
    %v5387 = vadd.f32 %v5003, %v5259
    %v5388 = vadd.f32 %v5004, %v5260
    %v5389 = vadd.f32 %v5005, %v5261
    %v5390 = vadd.f32 %v5006, %v5262
    %v5391 = vadd.f32 %v5007, %v5263
    %v5392 = vadd.f32 %v5008, %v5264
    %v5393 = vadd.f32 %v5009, %v5265
    %v5394 = vadd.f32 %v5010, %v5266
    %v5395 = vadd.f32 %v5011, %v5267
    %v5396 = vadd.f32 %v5012, %v5268
    %v5397 = vadd.f32 %v5013, %v5269
    %v5398 = vadd.f32 %v5014, %v5270
    %v5399 = vadd.f32 %v5015, %v5271
    %v5400 = vadd.f32 %v5016, %v5272
    %v5401 = vadd.f32 %v5017, %v5273
    %v5402 = vadd.f32 %v5018, %v5274
    %v5403 = vadd.f32 %v5019, %v5275
    %v5404 = vadd.f32 %v5020, %v5276
    %v5405 = vadd.f32 %v5021, %v5277
    %v5406 = vadd.f32 %v5022, %v5278
    %v5407 = vadd.f32 %v5023, %v5279
    %v5408 = vadd.f32 %v5024, %v5280
    %v5409 = vadd.f32 %v5025, %v5281
    %v5410 = vadd.f32 %v5026, %v5282
    %v5411 = vadd.f32 %v5027, %v5283
    %v5412 = vadd.f32 %v5028, %v5284
    %v5413 = vadd.f32 %v5029, %v5285
    %v5414 = vadd.f32 %v5030, %v5286
    %v5415 = vadd.f32 %v5031, %v5287
    %v5416 = vadd.f32 %v5032, %v5288
    %v5417 = vadd.f32 %v5033, %v5289
    %v5418 = vadd.f32 %v5034, %v5290
    %v5419 = vadd.f32 %v5035, %v5291
    %v5420 = vadd.f32 %v5036, %v5292
    %v5421 = vadd.f32 %v5037, %v5293
    %v5422 = vadd.f32 %v5038, %v5294
    %v5423 = vadd.f32 %v5039, %v5295
    %v5424 = vadd.f32 %v5040, %v5296
    %v5425 = vadd.f32 %v5041, %v5297
    %v5426 = vadd.f32 %v5042, %v5298
    %v5427 = vadd.f32 %v5043, %v5299
    %v5428 = vadd.f32 %v5044, %v5300
    %v5429 = vadd.f32 %v5045, %v5301
    %v5430 = vadd.f32 %v5046, %v5302
    %v5431 = vadd.f32 %v5047, %v5303
    %v5432 = vadd.f32 %v5048, %v5304
    %v5433 = vadd.f32 %v5049, %v5305
    %v5434 = vadd.f32 %v5050, %v5306
    %v5435 = vadd.f32 %v5051, %v5307
    %v5436 = vadd.f32 %v5052, %v5308
    %v5437 = vadd.f32 %v5053, %v5309
    %v5438 = vadd.f32 %v5054, %v5310
    %v5439 = vadd.f32 %v5055, %v5311
    %v5440 = vadd.f32 %v5056, %v5312
    %v5441 = vadd.f32 %v5057, %v5313
    %v5442 = vadd.f32 %v5058, %v5314
    %v5443 = vadd.f32 %v5059, %v5315
    %v5444 = vadd.f32 %v5060, %v5316
    %v5445 = vadd.f32 %v5061, %v5317
    %v5446 = vadd.f32 %v5062, %v5318
    %v5447 = vadd.f32 %v5063, %v5319
    %v5448 = vadd.f32 %v5064, %v5320
    %v5449 = vadd.f32 %v5065, %v5321
    %v5450 = vadd.f32 %v5066, %v5322
    %v5451 = vadd.f32 %v5067, %v5323
    %v5452 = vadd.f32 %v5068, %v5324
    %v5453 = vadd.f32 %v5069, %v5325
    %v5454 = vadd.f32 %v5070, %v5326
    %v5455 = vadd.f32 %v5071, %v5327
    %v5456 = vadd.f32 %v5072, %v5328
    %v5457 = vadd.f32 %v5073, %v5329
    %v5458 = vadd.f32 %v5074, %v5330
    %v5459 = vadd.f32 %v5075, %v5331
    %v5460 = vadd.f32 %v5076, %v5332
    %v5461 = vadd.f32 %v5077, %v5333
    %v5462 = vadd.f32 %v5078, %v5334
    %v5463 = vadd.f32 %v5079, %v5335
    %v5464 = vadd.f32 %v5080, %v5336
    %v5465 = vadd.f32 %v5081, %v5337
    %v5466 = vadd.f32 %v5082, %v5338
    %v5467 = vadd.f32 %v5083, %v5339
    %v5468 = vadd.f32 %v5084, %v5340
    %v5469 = vadd.f32 %v5085, %v5341
    %v5470 = vadd.f32 %v5086, %v5342
    %v5471 = vadd.f32 %v5087, %v5343
    %v5472 = vadd.f32 %v5088, %v5344
    %v5473 = vadd.f32 %v5089, %v5345
    %v5474 = vadd.f32 %v5090, %v5346
    %v5475 = vadd.f32 %v5091, %v5347
    %v5476 = vadd.f32 %v5092, %v5348
    %v5477 = vadd.f32 %v5093, %v5349
    %v5478 = vadd.f32 %v5094, %v5350
    %v5479 = vadd.f32 %v5095, %v5351
    %v5480 = vadd.f32 %v5096, %v5352
    %v5481 = vadd.f32 %v5097, %v5353
    %v5482 = vadd.f32 %v5098, %v5354
    %v5483 = vadd.f32 %v5099, %v5355
    %v5484 = vadd.f32 %v5100, %v5356
    %v5485 = vadd.f32 %v5101, %v5357
    %v5486 = vadd.f32 %v5102, %v5358
    %v5487 = vadd.f32 %v5103, %v5359
    %v5488 = vadd.f32 %v5104, %v5360
    %v5489 = vadd.f32 %v5105, %v5361
    %v5490 = vadd.f32 %v5106, %v5362
    %v5491 = vadd.f32 %v5107, %v5363
    %v5492 = vld [vmem:[#allocation2 + $0x10] sm:$0xff]
    %v5493 = vld [vmem:[#allocation2 + $0x30] sm:$0xff]
    %v5494 = vld [vmem:[#allocation2 + $0x50] sm:$0xff]
    %v5495 = vld [vmem:[#allocation2 + $0x70] sm:$0xff]
    %v5496 = vld [vmem:[#allocation2 + $0x90] sm:$0xff]
    %v5497 = vld [vmem:[#allocation2 + $0xb0] sm:$0xff]
    %v5498 = vld [vmem:[#allocation2 + $0xd0] sm:$0xff]
    %v5499 = vld [vmem:[#allocation2 + $0xf0] sm:$0xff]
    %v5500 = vld [vmem:[#allocation2 + $0x110] sm:$0xff]
    %v5501 = vld [vmem:[#allocation2 + $0x130] sm:$0xff]
    %v5502 = vld [vmem:[#allocation2 + $0x150] sm:$0xff]
    %v5503 = vld [vmem:[#allocation2 + $0x170] sm:$0xff]
    %v5504 = vld [vmem:[#allocation2 + $0x190] sm:$0xff]
    %v5505 = vld [vmem:[#allocation2 + $0x1b0] sm:$0xff]
    %v5506 = vld [vmem:[#allocation2 + $0x1d0] sm:$0xff]
    %v5507 = vld [vmem:[#allocation2 + $0x1f0] sm:$0xff]
    %v5508 = vld [vmem:[#allocation2 + $0x210] sm:$0xff]
    %v5509 = vld [vmem:[#allocation2 + $0x230] sm:$0xff]
    %v5510 = vld [vmem:[#allocation2 + $0x250] sm:$0xff]
    %v5511 = vld [vmem:[#allocation2 + $0x270] sm:$0xff]
    %v5512 = vld [vmem:[#allocation2 + $0x290] sm:$0xff]
    %v5513 = vld [vmem:[#allocation2 + $0x2b0] sm:$0xff]
    %v5514 = vld [vmem:[#allocation2 + $0x2d0] sm:$0xff]
    %v5515 = vld [vmem:[#allocation2 + $0x2f0] sm:$0xff]
    %v5516 = vld [vmem:[#allocation2 + $0x310] sm:$0xff]
    %v5517 = vld [vmem:[#allocation2 + $0x330] sm:$0xff]
    %v5518 = vld [vmem:[#allocation2 + $0x350] sm:$0xff]
    %v5519 = vld [vmem:[#allocation2 + $0x370] sm:$0xff]
    %v5520 = vld [vmem:[#allocation2 + $0x390] sm:$0xff]
    %v5521 = vld [vmem:[#allocation2 + $0x3b0] sm:$0xff]
    %v5522 = vld [vmem:[#allocation2 + $0x3d0] sm:$0xff]
    %v5523 = vld [vmem:[#allocation2 + $0x3f0] sm:$0xff]
    %v5524 = vld [vmem:[#allocation2 + $0x410] sm:$0xff]
    %v5525 = vld [vmem:[#allocation2 + $0x430] sm:$0xff]
    %v5526 = vld [vmem:[#allocation2 + $0x450] sm:$0xff]
    %v5527 = vld [vmem:[#allocation2 + $0x470] sm:$0xff]
    %v5528 = vld [vmem:[#allocation2 + $0x490] sm:$0xff]
    %v5529 = vld [vmem:[#allocation2 + $0x4b0] sm:$0xff]
    %v5530 = vld [vmem:[#allocation2 + $0x4d0] sm:$0xff]
    %v5531 = vld [vmem:[#allocation2 + $0x4f0] sm:$0xff]
    %v5532 = vld [vmem:[#allocation2 + $0x510] sm:$0xff]
    %v5533 = vld [vmem:[#allocation2 + $0x530] sm:$0xff]
    %v5534 = vld [vmem:[#allocation2 + $0x550] sm:$0xff]
    %v5535 = vld [vmem:[#allocation2 + $0x570] sm:$0xff]
    %v5536 = vld [vmem:[#allocation2 + $0x590] sm:$0xff]
    %v5537 = vld [vmem:[#allocation2 + $0x5b0] sm:$0xff]
    %v5538 = vld [vmem:[#allocation2 + $0x5d0] sm:$0xff]
    %v5539 = vld [vmem:[#allocation2 + $0x5f0] sm:$0xff]
    %v5540 = vld [vmem:[#allocation2 + $0x610] sm:$0xff]
    %v5541 = vld [vmem:[#allocation2 + $0x630] sm:$0xff]
    %v5542 = vld [vmem:[#allocation2 + $0x650] sm:$0xff]
    %v5543 = vld [vmem:[#allocation2 + $0x670] sm:$0xff]
    %v5544 = vld [vmem:[#allocation2 + $0x690] sm:$0xff]
    %v5545 = vld [vmem:[#allocation2 + $0x6b0] sm:$0xff]
    %v5546 = vld [vmem:[#allocation2 + $0x6d0] sm:$0xff]
    %v5547 = vld [vmem:[#allocation2 + $0x6f0] sm:$0xff]
    %v5548 = vld [vmem:[#allocation2 + $0x710] sm:$0xff]
    %v5549 = vld [vmem:[#allocation2 + $0x730] sm:$0xff]
    %v5550 = vld [vmem:[#allocation2 + $0x750] sm:$0xff]
    %v5551 = vld [vmem:[#allocation2 + $0x770] sm:$0xff]
    %v5552 = vld [vmem:[#allocation2 + $0x790] sm:$0xff]
    %v5553 = vld [vmem:[#allocation2 + $0x7b0] sm:$0xff]
    %v5554 = vld [vmem:[#allocation2 + $0x7d0] sm:$0xff]
    %v5555 = vld [vmem:[#allocation2 + $0x7f0] sm:$0xff]
    %v5556 = vld [vmem:[#allocation2 + $0x810] sm:$0xff]
    %v5557 = vld [vmem:[#allocation2 + $0x830] sm:$0xff]
    %v5558 = vld [vmem:[#allocation2 + $0x850] sm:$0xff]
    %v5559 = vld [vmem:[#allocation2 + $0x870] sm:$0xff]
    %v5560 = vld [vmem:[#allocation2 + $0x890] sm:$0xff]
    %v5561 = vld [vmem:[#allocation2 + $0x8b0] sm:$0xff]
    %v5562 = vld [vmem:[#allocation2 + $0x8d0] sm:$0xff]
    %v5563 = vld [vmem:[#allocation2 + $0x8f0] sm:$0xff]
    %v5564 = vld [vmem:[#allocation2 + $0x910] sm:$0xff]
    %v5565 = vld [vmem:[#allocation2 + $0x930] sm:$0xff]
    %v5566 = vld [vmem:[#allocation2 + $0x950] sm:$0xff]
    %v5567 = vld [vmem:[#allocation2 + $0x970] sm:$0xff]
    %v5568 = vld [vmem:[#allocation2 + $0x990] sm:$0xff]
    %v5569 = vld [vmem:[#allocation2 + $0x9b0] sm:$0xff]
    %v5570 = vld [vmem:[#allocation2 + $0x9d0] sm:$0xff]
    %v5571 = vld [vmem:[#allocation2 + $0x9f0] sm:$0xff]
    %v5572 = vld [vmem:[#allocation2 + $0xa10] sm:$0xff]
    %v5573 = vld [vmem:[#allocation2 + $0xa30] sm:$0xff]
    %v5574 = vld [vmem:[#allocation2 + $0xa50] sm:$0xff]
    %v5575 = vld [vmem:[#allocation2 + $0xa70] sm:$0xff]
    %v5576 = vld [vmem:[#allocation2 + $0xa90] sm:$0xff]
    %v5577 = vld [vmem:[#allocation2 + $0xab0] sm:$0xff]
    %v5578 = vld [vmem:[#allocation2 + $0xad0] sm:$0xff]
    %v5579 = vld [vmem:[#allocation2 + $0xaf0] sm:$0xff]
    %v5580 = vld [vmem:[#allocation2 + $0xb10] sm:$0xff]
    %v5581 = vld [vmem:[#allocation2 + $0xb30] sm:$0xff]
    %v5582 = vld [vmem:[#allocation2 + $0xb50] sm:$0xff]
    %v5583 = vld [vmem:[#allocation2 + $0xb70] sm:$0xff]
    %v5584 = vld [vmem:[#allocation2 + $0xb90] sm:$0xff]
    %v5585 = vld [vmem:[#allocation2 + $0xbb0] sm:$0xff]
    %v5586 = vld [vmem:[#allocation2 + $0xbd0] sm:$0xff]
    %v5587 = vld [vmem:[#allocation2 + $0xbf0] sm:$0xff]
    %v5588 = vld [vmem:[#allocation2 + $0xc10] sm:$0xff]
    %v5589 = vld [vmem:[#allocation2 + $0xc30] sm:$0xff]
    %v5590 = vld [vmem:[#allocation2 + $0xc50] sm:$0xff]
    %v5591 = vld [vmem:[#allocation2 + $0xc70] sm:$0xff]
    %v5592 = vld [vmem:[#allocation2 + $0xc90] sm:$0xff]
    %v5593 = vld [vmem:[#allocation2 + $0xcb0] sm:$0xff]
    %v5594 = vld [vmem:[#allocation2 + $0xcd0] sm:$0xff]
    %v5595 = vld [vmem:[#allocation2 + $0xcf0] sm:$0xff]
    %v5596 = vld [vmem:[#allocation2 + $0xd10] sm:$0xff]
    %v5597 = vld [vmem:[#allocation2 + $0xd30] sm:$0xff]
    %v5598 = vld [vmem:[#allocation2 + $0xd50] sm:$0xff]
    %v5599 = vld [vmem:[#allocation2 + $0xd70] sm:$0xff]
    %v5600 = vld [vmem:[#allocation2 + $0xd90] sm:$0xff]
    %v5601 = vld [vmem:[#allocation2 + $0xdb0] sm:$0xff]
    %v5602 = vld [vmem:[#allocation2 + $0xdd0] sm:$0xff]
    %v5603 = vld [vmem:[#allocation2 + $0xdf0] sm:$0xff]
    %v5604 = vld [vmem:[#allocation2 + $0xe10] sm:$0xff]
    %v5605 = vld [vmem:[#allocation2 + $0xe30] sm:$0xff]
    %v5606 = vld [vmem:[#allocation2 + $0xe50] sm:$0xff]
    %v5607 = vld [vmem:[#allocation2 + $0xe70] sm:$0xff]
    %v5608 = vld [vmem:[#allocation2 + $0xe90] sm:$0xff]
    %v5609 = vld [vmem:[#allocation2 + $0xeb0] sm:$0xff]
    %v5610 = vld [vmem:[#allocation2 + $0xed0] sm:$0xff]
    %v5611 = vld [vmem:[#allocation2 + $0xef0] sm:$0xff]
    %v5612 = vld [vmem:[#allocation2 + $0xf10] sm:$0xff]
    %v5613 = vld [vmem:[#allocation2 + $0xf30] sm:$0xff]
    %v5614 = vld [vmem:[#allocation2 + $0xf50] sm:$0xff]
    %v5615 = vld [vmem:[#allocation2 + $0xf70] sm:$0xff]
    %v5616 = vld [vmem:[#allocation2 + $0xf90] sm:$0xff]
    %v5617 = vld [vmem:[#allocation2 + $0xfb0] sm:$0xff]
    %v5618 = vld [vmem:[#allocation2 + $0xfd0] sm:$0xff]
    %v5619 = vld [vmem:[#allocation2 + $0xff0] sm:$0xff]
    %v5620 = vmul.f32 %v4838, %v5492
    %v5621 = vmul.f32 %v4838, %v5493
    %v5622 = vmul.f32 %v4838, %v5494
    %v5623 = vmul.f32 %v4838, %v5495
    %v5624 = vmul.f32 %v4838, %v5496
    %v5625 = vmul.f32 %v4838, %v5497
    %v5626 = vmul.f32 %v4838, %v5498
    %v5627 = vmul.f32 %v4838, %v5499
    %v5628 = vmul.f32 %v4838, %v5500
    %v5629 = vmul.f32 %v4838, %v5501
    %v5630 = vmul.f32 %v4838, %v5502
    %v5631 = vmul.f32 %v4838, %v5503
    %v5632 = vmul.f32 %v4838, %v5504
    %v5633 = vmul.f32 %v4838, %v5505
    %v5634 = vmul.f32 %v4838, %v5506
    %v5635 = vmul.f32 %v4838, %v5507
    %v5636 = vmul.f32 %v4838, %v5508
    %v5637 = vmul.f32 %v4838, %v5509
    %v5638 = vmul.f32 %v4838, %v5510
    %v5639 = vmul.f32 %v4838, %v5511
    %v5640 = vmul.f32 %v4838, %v5512
    %v5641 = vmul.f32 %v4838, %v5513
    %v5642 = vmul.f32 %v4838, %v5514
    %v5643 = vmul.f32 %v4838, %v5515
    %v5644 = vmul.f32 %v4838, %v5516
    %v5645 = vmul.f32 %v4838, %v5517
    %v5646 = vmul.f32 %v4838, %v5518
    %v5647 = vmul.f32 %v4838, %v5519
    %v5648 = vmul.f32 %v4838, %v5520
    %v5649 = vmul.f32 %v4838, %v5521
    %v5650 = vmul.f32 %v4838, %v5522
    %v5651 = vmul.f32 %v4838, %v5523
    %v5652 = vmul.f32 %v4838, %v5524
    %v5653 = vmul.f32 %v4838, %v5525
    %v5654 = vmul.f32 %v4838, %v5526
    %v5655 = vmul.f32 %v4838, %v5527
    %v5656 = vmul.f32 %v4838, %v5528
    %v5657 = vmul.f32 %v4838, %v5529
    %v5658 = vmul.f32 %v4838, %v5530
    %v5659 = vmul.f32 %v4838, %v5531
    %v5660 = vmul.f32 %v4838, %v5532
    %v5661 = vmul.f32 %v4838, %v5533
    %v5662 = vmul.f32 %v4838, %v5534
    %v5663 = vmul.f32 %v4838, %v5535
    %v5664 = vmul.f32 %v4838, %v5536
    %v5665 = vmul.f32 %v4838, %v5537
    %v5666 = vmul.f32 %v4838, %v5538
    %v5667 = vmul.f32 %v4838, %v5539
    %v5668 = vmul.f32 %v4838, %v5540
    %v5669 = vmul.f32 %v4838, %v5541
    %v5670 = vmul.f32 %v4838, %v5542
    %v5671 = vmul.f32 %v4838, %v5543
    %v5672 = vmul.f32 %v4838, %v5544
    %v5673 = vmul.f32 %v4838, %v5545
    %v5674 = vmul.f32 %v4838, %v5546
    %v5675 = vmul.f32 %v4838, %v5547
    %v5676 = vmul.f32 %v4838, %v5548
    %v5677 = vmul.f32 %v4838, %v5549
    %v5678 = vmul.f32 %v4838, %v5550
    %v5679 = vmul.f32 %v4838, %v5551
    %v5680 = vmul.f32 %v4838, %v5552
    %v5681 = vmul.f32 %v4838, %v5553
    %v5682 = vmul.f32 %v4838, %v5554
    %v5683 = vmul.f32 %v4838, %v5555
    %v5684 = vmul.f32 %v4838, %v5556
    %v5685 = vmul.f32 %v4838, %v5557
    %v5686 = vmul.f32 %v4838, %v5558
    %v5687 = vmul.f32 %v4838, %v5559
    %v5688 = vmul.f32 %v4838, %v5560
    %v5689 = vmul.f32 %v4838, %v5561
    %v5690 = vmul.f32 %v4838, %v5562
    %v5691 = vmul.f32 %v4838, %v5563
    %v5692 = vmul.f32 %v4838, %v5564
    %v5693 = vmul.f32 %v4838, %v5565
    %v5694 = vmul.f32 %v4838, %v5566
    %v5695 = vmul.f32 %v4838, %v5567
    %v5696 = vmul.f32 %v4838, %v5568
    %v5697 = vmul.f32 %v4838, %v5569
    %v5698 = vmul.f32 %v4838, %v5570
    %v5699 = vmul.f32 %v4838, %v5571
    %v5700 = vmul.f32 %v4838, %v5572
    %v5701 = vmul.f32 %v4838, %v5573
    %v5702 = vmul.f32 %v4838, %v5574
    %v5703 = vmul.f32 %v4838, %v5575
    %v5704 = vmul.f32 %v4838, %v5576
    %v5705 = vmul.f32 %v4838, %v5577
    %v5706 = vmul.f32 %v4838, %v5578
    %v5707 = vmul.f32 %v4838, %v5579
    %v5708 = vmul.f32 %v4838, %v5580
    %v5709 = vmul.f32 %v4838, %v5581
    %v5710 = vmul.f32 %v4838, %v5582
    %v5711 = vmul.f32 %v4838, %v5583
    %v5712 = vmul.f32 %v4838, %v5584
    %v5713 = vmul.f32 %v4838, %v5585
    %v5714 = vmul.f32 %v4838, %v5586
    %v5715 = vmul.f32 %v4838, %v5587
    %v5716 = vmul.f32 %v4838, %v5588
    %v5717 = vmul.f32 %v4838, %v5589
    %v5718 = vmul.f32 %v4838, %v5590
    %v5719 = vmul.f32 %v4838, %v5591
    %v5720 = vmul.f32 %v4838, %v5592
    %v5721 = vmul.f32 %v4838, %v5593
    %v5722 = vmul.f32 %v4838, %v5594
    %v5723 = vmul.f32 %v4838, %v5595
    %v5724 = vmul.f32 %v4838, %v5596
    %v5725 = vmul.f32 %v4838, %v5597
    %v5726 = vmul.f32 %v4838, %v5598
    %v5727 = vmul.f32 %v4838, %v5599
    %v5728 = vmul.f32 %v4838, %v5600
    %v5729 = vmul.f32 %v4838, %v5601
    %v5730 = vmul.f32 %v4838, %v5602
    %v5731 = vmul.f32 %v4838, %v5603
    %v5732 = vmul.f32 %v4838, %v5604
    %v5733 = vmul.f32 %v4838, %v5605
    %v5734 = vmul.f32 %v4838, %v5606
    %v5735 = vmul.f32 %v4838, %v5607
    %v5736 = vmul.f32 %v4838, %v5608
    %v5737 = vmul.f32 %v4838, %v5609
    %v5738 = vmul.f32 %v4838, %v5610
    %v5739 = vmul.f32 %v4838, %v5611
    %v5740 = vmul.f32 %v4838, %v5612
    %v5741 = vmul.f32 %v4838, %v5613
    %v5742 = vmul.f32 %v4838, %v5614
    %v5743 = vmul.f32 %v4838, %v5615
    %v5744 = vmul.f32 %v4838, %v5616
    %v5745 = vmul.f32 %v4838, %v5617
    %v5746 = vmul.f32 %v4838, %v5618
    %v5747 = vmul.f32 %v4838, %v5619
    %v5748 = vadd.f32 %v5364, %v5620
    %v5749 = vadd.f32 %v5365, %v5621
    %v5750 = vadd.f32 %v5366, %v5622
    %v5751 = vadd.f32 %v5367, %v5623
    %v5752 = vadd.f32 %v5368, %v5624
    %v5753 = vadd.f32 %v5369, %v5625
    %v5754 = vadd.f32 %v5370, %v5626
    %v5755 = vadd.f32 %v5371, %v5627
    %v5756 = vadd.f32 %v5372, %v5628
    %v5757 = vadd.f32 %v5373, %v5629
    %v5758 = vadd.f32 %v5374, %v5630
    %v5759 = vadd.f32 %v5375, %v5631
    %v5760 = vadd.f32 %v5376, %v5632
    %v5761 = vadd.f32 %v5377, %v5633
    %v5762 = vadd.f32 %v5378, %v5634
    %v5763 = vadd.f32 %v5379, %v5635
    %v5764 = vadd.f32 %v5380, %v5636
    %v5765 = vadd.f32 %v5381, %v5637
    %v5766 = vadd.f32 %v5382, %v5638
    %v5767 = vadd.f32 %v5383, %v5639
    %v5768 = vadd.f32 %v5384, %v5640
    %v5769 = vadd.f32 %v5385, %v5641
    %v5770 = vadd.f32 %v5386, %v5642
    %v5771 = vadd.f32 %v5387, %v5643
    %v5772 = vadd.f32 %v5388, %v5644
    %v5773 = vadd.f32 %v5389, %v5645
    %v5774 = vadd.f32 %v5390, %v5646
    %v5775 = vadd.f32 %v5391, %v5647
    %v5776 = vadd.f32 %v5392, %v5648
    %v5777 = vadd.f32 %v5393, %v5649
    %v5778 = vadd.f32 %v5394, %v5650
    %v5779 = vadd.f32 %v5395, %v5651
    %v5780 = vadd.f32 %v5396, %v5652
    %v5781 = vadd.f32 %v5397, %v5653
    %v5782 = vadd.f32 %v5398, %v5654
    %v5783 = vadd.f32 %v5399, %v5655
    %v5784 = vadd.f32 %v5400, %v5656
    %v5785 = vadd.f32 %v5401, %v5657
    %v5786 = vadd.f32 %v5402, %v5658
    %v5787 = vadd.f32 %v5403, %v5659
    %v5788 = vadd.f32 %v5404, %v5660
    %v5789 = vadd.f32 %v5405, %v5661
    %v5790 = vadd.f32 %v5406, %v5662
    %v5791 = vadd.f32 %v5407, %v5663
    %v5792 = vadd.f32 %v5408, %v5664
    %v5793 = vadd.f32 %v5409, %v5665
    %v5794 = vadd.f32 %v5410, %v5666
    %v5795 = vadd.f32 %v5411, %v5667
    %v5796 = vadd.f32 %v5412, %v5668
    %v5797 = vadd.f32 %v5413, %v5669
    %v5798 = vadd.f32 %v5414, %v5670
    %v5799 = vadd.f32 %v5415, %v5671
    %v5800 = vadd.f32 %v5416, %v5672
    %v5801 = vadd.f32 %v5417, %v5673
    %v5802 = vadd.f32 %v5418, %v5674
    %v5803 = vadd.f32 %v5419, %v5675
    %v5804 = vadd.f32 %v5420, %v5676
    %v5805 = vadd.f32 %v5421, %v5677
    %v5806 = vadd.f32 %v5422, %v5678
    %v5807 = vadd.f32 %v5423, %v5679
    %v5808 = vadd.f32 %v5424, %v5680
    %v5809 = vadd.f32 %v5425, %v5681
    %v5810 = vadd.f32 %v5426, %v5682
    %v5811 = vadd.f32 %v5427, %v5683
    %v5812 = vadd.f32 %v5428, %v5684
    %v5813 = vadd.f32 %v5429, %v5685
    %v5814 = vadd.f32 %v5430, %v5686
    %v5815 = vadd.f32 %v5431, %v5687
    %v5816 = vadd.f32 %v5432, %v5688
    %v5817 = vadd.f32 %v5433, %v5689
    %v5818 = vadd.f32 %v5434, %v5690
    %v5819 = vadd.f32 %v5435, %v5691
    %v5820 = vadd.f32 %v5436, %v5692
    %v5821 = vadd.f32 %v5437, %v5693
    %v5822 = vadd.f32 %v5438, %v5694
    %v5823 = vadd.f32 %v5439, %v5695
    %v5824 = vadd.f32 %v5440, %v5696
    %v5825 = vadd.f32 %v5441, %v5697
    %v5826 = vadd.f32 %v5442, %v5698
    %v5827 = vadd.f32 %v5443, %v5699
    %v5828 = vadd.f32 %v5444, %v5700
    %v5829 = vadd.f32 %v5445, %v5701
    %v5830 = vadd.f32 %v5446, %v5702
    %v5831 = vadd.f32 %v5447, %v5703
    %v5832 = vadd.f32 %v5448, %v5704
    %v5833 = vadd.f32 %v5449, %v5705
    %v5834 = vadd.f32 %v5450, %v5706
    %v5835 = vadd.f32 %v5451, %v5707
    %v5836 = vadd.f32 %v5452, %v5708
    %v5837 = vadd.f32 %v5453, %v5709
    %v5838 = vadd.f32 %v5454, %v5710
    %v5839 = vadd.f32 %v5455, %v5711
    %v5840 = vadd.f32 %v5456, %v5712
    %v5841 = vadd.f32 %v5457, %v5713
    %v5842 = vadd.f32 %v5458, %v5714
    %v5843 = vadd.f32 %v5459, %v5715
    %v5844 = vadd.f32 %v5460, %v5716
    %v5845 = vadd.f32 %v5461, %v5717
    %v5846 = vadd.f32 %v5462, %v5718
    %v5847 = vadd.f32 %v5463, %v5719
    %v5848 = vadd.f32 %v5464, %v5720
    %v5849 = vadd.f32 %v5465, %v5721
    %v5850 = vadd.f32 %v5466, %v5722
    %v5851 = vadd.f32 %v5467, %v5723
    %v5852 = vadd.f32 %v5468, %v5724
    %v5853 = vadd.f32 %v5469, %v5725
    %v5854 = vadd.f32 %v5470, %v5726
    %v5855 = vadd.f32 %v5471, %v5727
    %v5856 = vadd.f32 %v5472, %v5728
    %v5857 = vadd.f32 %v5473, %v5729
    %v5858 = vadd.f32 %v5474, %v5730
    %v5859 = vadd.f32 %v5475, %v5731
    %v5860 = vadd.f32 %v5476, %v5732
    %v5861 = vadd.f32 %v5477, %v5733
    %v5862 = vadd.f32 %v5478, %v5734
    %v5863 = vadd.f32 %v5479, %v5735
    %v5864 = vadd.f32 %v5480, %v5736
    %v5865 = vadd.f32 %v5481, %v5737
    %v5866 = vadd.f32 %v5482, %v5738
    %v5867 = vadd.f32 %v5483, %v5739
    %v5868 = vadd.f32 %v5484, %v5740
    %v5869 = vadd.f32 %v5485, %v5741
    %v5870 = vadd.f32 %v5486, %v5742
    %v5871 = vadd.f32 %v5487, %v5743
    %v5872 = vadd.f32 %v5488, %v5744
    %v5873 = vadd.f32 %v5489, %v5745
    %v5874 = vadd.f32 %v5490, %v5746
    %v5875 = vadd.f32 %v5491, %v5747
    %v5876 = vld [vmem:[#allocation2 + $0x18] sm:$0xff]
    %v5877 = vld [vmem:[#allocation2 + $0x38] sm:$0xff]
    %v5878 = vld [vmem:[#allocation2 + $0x58] sm:$0xff]
    %v5879 = vld [vmem:[#allocation2 + $0x78] sm:$0xff]
    %v5880 = vld [vmem:[#allocation2 + $0x98] sm:$0xff]
    %v5881 = vld [vmem:[#allocation2 + $0xb8] sm:$0xff]
    %v5882 = vld [vmem:[#allocation2 + $0xd8] sm:$0xff]
    %v5883 = vld [vmem:[#allocation2 + $0xf8] sm:$0xff]
    %v5884 = vld [vmem:[#allocation2 + $0x118] sm:$0xff]
    %v5885 = vld [vmem:[#allocation2 + $0x138] sm:$0xff]
    %v5886 = vld [vmem:[#allocation2 + $0x158] sm:$0xff]
    %v5887 = vld [vmem:[#allocation2 + $0x178] sm:$0xff]
    %v5888 = vld [vmem:[#allocation2 + $0x198] sm:$0xff]
    %v5889 = vld [vmem:[#allocation2 + $0x1b8] sm:$0xff]
    %v5890 = vld [vmem:[#allocation2 + $0x1d8] sm:$0xff]
    %v5891 = vld [vmem:[#allocation2 + $0x1f8] sm:$0xff]
    %v5892 = vld [vmem:[#allocation2 + $0x218] sm:$0xff]
    %v5893 = vld [vmem:[#allocation2 + $0x238] sm:$0xff]
    %v5894 = vld [vmem:[#allocation2 + $0x258] sm:$0xff]
    %v5895 = vld [vmem:[#allocation2 + $0x278] sm:$0xff]
    %v5896 = vld [vmem:[#allocation2 + $0x298] sm:$0xff]
    %v5897 = vld [vmem:[#allocation2 + $0x2b8] sm:$0xff]
    %v5898 = vld [vmem:[#allocation2 + $0x2d8] sm:$0xff]
    %v5899 = vld [vmem:[#allocation2 + $0x2f8] sm:$0xff]
    %v5900 = vld [vmem:[#allocation2 + $0x318] sm:$0xff]
    %v5901 = vld [vmem:[#allocation2 + $0x338] sm:$0xff]
    %v5902 = vld [vmem:[#allocation2 + $0x358] sm:$0xff]
    %v5903 = vld [vmem:[#allocation2 + $0x378] sm:$0xff]
    %v5904 = vld [vmem:[#allocation2 + $0x398] sm:$0xff]
    %v5905 = vld [vmem:[#allocation2 + $0x3b8] sm:$0xff]
    %v5906 = vld [vmem:[#allocation2 + $0x3d8] sm:$0xff]
    %v5907 = vld [vmem:[#allocation2 + $0x3f8] sm:$0xff]
    %v5908 = vld [vmem:[#allocation2 + $0x418] sm:$0xff]
    %v5909 = vld [vmem:[#allocation2 + $0x438] sm:$0xff]
    %v5910 = vld [vmem:[#allocation2 + $0x458] sm:$0xff]
    %v5911 = vld [vmem:[#allocation2 + $0x478] sm:$0xff]
    %v5912 = vld [vmem:[#allocation2 + $0x498] sm:$0xff]
    %v5913 = vld [vmem:[#allocation2 + $0x4b8] sm:$0xff]
    %v5914 = vld [vmem:[#allocation2 + $0x4d8] sm:$0xff]
    %v5915 = vld [vmem:[#allocation2 + $0x4f8] sm:$0xff]
    %v5916 = vld [vmem:[#allocation2 + $0x518] sm:$0xff]
    %v5917 = vld [vmem:[#allocation2 + $0x538] sm:$0xff]
    %v5918 = vld [vmem:[#allocation2 + $0x558] sm:$0xff]
    %v5919 = vld [vmem:[#allocation2 + $0x578] sm:$0xff]
    %v5920 = vld [vmem:[#allocation2 + $0x598] sm:$0xff]
    %v5921 = vld [vmem:[#allocation2 + $0x5b8] sm:$0xff]
    %v5922 = vld [vmem:[#allocation2 + $0x5d8] sm:$0xff]
    %v5923 = vld [vmem:[#allocation2 + $0x5f8] sm:$0xff]
    %v5924 = vld [vmem:[#allocation2 + $0x618] sm:$0xff]
    %v5925 = vld [vmem:[#allocation2 + $0x638] sm:$0xff]
    %v5926 = vld [vmem:[#allocation2 + $0x658] sm:$0xff]
    %v5927 = vld [vmem:[#allocation2 + $0x678] sm:$0xff]
    %v5928 = vld [vmem:[#allocation2 + $0x698] sm:$0xff]
    %v5929 = vld [vmem:[#allocation2 + $0x6b8] sm:$0xff]
    %v5930 = vld [vmem:[#allocation2 + $0x6d8] sm:$0xff]
    %v5931 = vld [vmem:[#allocation2 + $0x6f8] sm:$0xff]
    %v5932 = vld [vmem:[#allocation2 + $0x718] sm:$0xff]
    %v5933 = vld [vmem:[#allocation2 + $0x738] sm:$0xff]
    %v5934 = vld [vmem:[#allocation2 + $0x758] sm:$0xff]
    %v5935 = vld [vmem:[#allocation2 + $0x778] sm:$0xff]
    %v5936 = vld [vmem:[#allocation2 + $0x798] sm:$0xff]
    %v5937 = vld [vmem:[#allocation2 + $0x7b8] sm:$0xff]
    %v5938 = vld [vmem:[#allocation2 + $0x7d8] sm:$0xff]
    %v5939 = vld [vmem:[#allocation2 + $0x7f8] sm:$0xff]
    %v5940 = vld [vmem:[#allocation2 + $0x818] sm:$0xff]
    %v5941 = vld [vmem:[#allocation2 + $0x838] sm:$0xff]
    %v5942 = vld [vmem:[#allocation2 + $0x858] sm:$0xff]
    %v5943 = vld [vmem:[#allocation2 + $0x878] sm:$0xff]
    %v5944 = vld [vmem:[#allocation2 + $0x898] sm:$0xff]
    %v5945 = vld [vmem:[#allocation2 + $0x8b8] sm:$0xff]
    %v5946 = vld [vmem:[#allocation2 + $0x8d8] sm:$0xff]
    %v5947 = vld [vmem:[#allocation2 + $0x8f8] sm:$0xff]
    %v5948 = vld [vmem:[#allocation2 + $0x918] sm:$0xff]
    %v5949 = vld [vmem:[#allocation2 + $0x938] sm:$0xff]
    %v5950 = vld [vmem:[#allocation2 + $0x958] sm:$0xff]
    %v5951 = vld [vmem:[#allocation2 + $0x978] sm:$0xff]
    %v5952 = vld [vmem:[#allocation2 + $0x998] sm:$0xff]
    %v5953 = vld [vmem:[#allocation2 + $0x9b8] sm:$0xff]
    %v5954 = vld [vmem:[#allocation2 + $0x9d8] sm:$0xff]
    %v5955 = vld [vmem:[#allocation2 + $0x9f8] sm:$0xff]
    %v5956 = vld [vmem:[#allocation2 + $0xa18] sm:$0xff]
    %v5957 = vld [vmem:[#allocation2 + $0xa38] sm:$0xff]
    %v5958 = vld [vmem:[#allocation2 + $0xa58] sm:$0xff]
    %v5959 = vld [vmem:[#allocation2 + $0xa78] sm:$0xff]
    %v5960 = vld [vmem:[#allocation2 + $0xa98] sm:$0xff]
    %v5961 = vld [vmem:[#allocation2 + $0xab8] sm:$0xff]
    %v5962 = vld [vmem:[#allocation2 + $0xad8] sm:$0xff]
    %v5963 = vld [vmem:[#allocation2 + $0xaf8] sm:$0xff]
    %v5964 = vld [vmem:[#allocation2 + $0xb18] sm:$0xff]
    %v5965 = vld [vmem:[#allocation2 + $0xb38] sm:$0xff]
    %v5966 = vld [vmem:[#allocation2 + $0xb58] sm:$0xff]
    %v5967 = vld [vmem:[#allocation2 + $0xb78] sm:$0xff]
    %v5968 = vld [vmem:[#allocation2 + $0xb98] sm:$0xff]
    %v5969 = vld [vmem:[#allocation2 + $0xbb8] sm:$0xff]
    %v5970 = vld [vmem:[#allocation2 + $0xbd8] sm:$0xff]
    %v5971 = vld [vmem:[#allocation2 + $0xbf8] sm:$0xff]
    %v5972 = vld [vmem:[#allocation2 + $0xc18] sm:$0xff]
    %v5973 = vld [vmem:[#allocation2 + $0xc38] sm:$0xff]
    %v5974 = vld [vmem:[#allocation2 + $0xc58] sm:$0xff]
    %v5975 = vld [vmem:[#allocation2 + $0xc78] sm:$0xff]
    %v5976 = vld [vmem:[#allocation2 + $0xc98] sm:$0xff]
    %v5977 = vld [vmem:[#allocation2 + $0xcb8] sm:$0xff]
    %v5978 = vld [vmem:[#allocation2 + $0xcd8] sm:$0xff]
    %v5979 = vld [vmem:[#allocation2 + $0xcf8] sm:$0xff]
    %v5980 = vld [vmem:[#allocation2 + $0xd18] sm:$0xff]
    %v5981 = vld [vmem:[#allocation2 + $0xd38] sm:$0xff]
    %v5982 = vld [vmem:[#allocation2 + $0xd58] sm:$0xff]
    %v5983 = vld [vmem:[#allocation2 + $0xd78] sm:$0xff]
    %v5984 = vld [vmem:[#allocation2 + $0xd98] sm:$0xff]
    %v5985 = vld [vmem:[#allocation2 + $0xdb8] sm:$0xff]
    %v5986 = vld [vmem:[#allocation2 + $0xdd8] sm:$0xff]
    %v5987 = vld [vmem:[#allocation2 + $0xdf8] sm:$0xff]
    %v5988 = vld [vmem:[#allocation2 + $0xe18] sm:$0xff]
    %v5989 = vld [vmem:[#allocation2 + $0xe38] sm:$0xff]
    %v5990 = vld [vmem:[#allocation2 + $0xe58] sm:$0xff]
    %v5991 = vld [vmem:[#allocation2 + $0xe78] sm:$0xff]
    %v5992 = vld [vmem:[#allocation2 + $0xe98] sm:$0xff]
    %v5993 = vld [vmem:[#allocation2 + $0xeb8] sm:$0xff]
    %v5994 = vld [vmem:[#allocation2 + $0xed8] sm:$0xff]
    %v5995 = vld [vmem:[#allocation2 + $0xef8] sm:$0xff]
    %v5996 = vld [vmem:[#allocation2 + $0xf18] sm:$0xff]
    %v5997 = vld [vmem:[#allocation2 + $0xf38] sm:$0xff]
    %v5998 = vld [vmem:[#allocation2 + $0xf58] sm:$0xff]
    %v5999 = vld [vmem:[#allocation2 + $0xf78] sm:$0xff]
    %v6000 = vld [vmem:[#allocation2 + $0xf98] sm:$0xff]
    %v6001 = vld [vmem:[#allocation2 + $0xfb8] sm:$0xff]
    %v6002 = vld [vmem:[#allocation2 + $0xfd8] sm:$0xff]
    %v6003 = vld [vmem:[#allocation2 + $0xff8] sm:$0xff]
    %v6004 = vmul.f32 %v4839, %v5876
    %v6005 = vmul.f32 %v4839, %v5877
    %v6006 = vmul.f32 %v4839, %v5878
    %v6007 = vmul.f32 %v4839, %v5879
    %v6008 = vmul.f32 %v4839, %v5880
    %v6009 = vmul.f32 %v4839, %v5881
    %v6010 = vmul.f32 %v4839, %v5882
    %v6011 = vmul.f32 %v4839, %v5883
    %v6012 = vmul.f32 %v4839, %v5884
    %v6013 = vmul.f32 %v4839, %v5885
    %v6014 = vmul.f32 %v4839, %v5886
    %v6015 = vmul.f32 %v4839, %v5887
    %v6016 = vmul.f32 %v4839, %v5888
    %v6017 = vmul.f32 %v4839, %v5889
    %v6018 = vmul.f32 %v4839, %v5890
    %v6019 = vmul.f32 %v4839, %v5891
    %v6020 = vmul.f32 %v4839, %v5892
    %v6021 = vmul.f32 %v4839, %v5893
    %v6022 = vmul.f32 %v4839, %v5894
    %v6023 = vmul.f32 %v4839, %v5895
    %v6024 = vmul.f32 %v4839, %v5896
    %v6025 = vmul.f32 %v4839, %v5897
    %v6026 = vmul.f32 %v4839, %v5898
    %v6027 = vmul.f32 %v4839, %v5899
    %v6028 = vmul.f32 %v4839, %v5900
    %v6029 = vmul.f32 %v4839, %v5901
    %v6030 = vmul.f32 %v4839, %v5902
    %v6031 = vmul.f32 %v4839, %v5903
    %v6032 = vmul.f32 %v4839, %v5904
    %v6033 = vmul.f32 %v4839, %v5905
    %v6034 = vmul.f32 %v4839, %v5906
    %v6035 = vmul.f32 %v4839, %v5907
    %v6036 = vmul.f32 %v4839, %v5908
    %v6037 = vmul.f32 %v4839, %v5909
    %v6038 = vmul.f32 %v4839, %v5910
    %v6039 = vmul.f32 %v4839, %v5911
    %v6040 = vmul.f32 %v4839, %v5912
    %v6041 = vmul.f32 %v4839, %v5913
    %v6042 = vmul.f32 %v4839, %v5914
    %v6043 = vmul.f32 %v4839, %v5915
    %v6044 = vmul.f32 %v4839, %v5916
    %v6045 = vmul.f32 %v4839, %v5917
    %v6046 = vmul.f32 %v4839, %v5918
    %v6047 = vmul.f32 %v4839, %v5919
    %v6048 = vmul.f32 %v4839, %v5920
    %v6049 = vmul.f32 %v4839, %v5921
    %v6050 = vmul.f32 %v4839, %v5922
    %v6051 = vmul.f32 %v4839, %v5923
    %v6052 = vmul.f32 %v4839, %v5924
    %v6053 = vmul.f32 %v4839, %v5925
    %v6054 = vmul.f32 %v4839, %v5926
    %v6055 = vmul.f32 %v4839, %v5927
    %v6056 = vmul.f32 %v4839, %v5928
    %v6057 = vmul.f32 %v4839, %v5929
    %v6058 = vmul.f32 %v4839, %v5930
    %v6059 = vmul.f32 %v4839, %v5931
    %v6060 = vmul.f32 %v4839, %v5932
    %v6061 = vmul.f32 %v4839, %v5933
    %v6062 = vmul.f32 %v4839, %v5934
    %v6063 = vmul.f32 %v4839, %v5935
    %v6064 = vmul.f32 %v4839, %v5936
    %v6065 = vmul.f32 %v4839, %v5937
    %v6066 = vmul.f32 %v4839, %v5938
    %v6067 = vmul.f32 %v4839, %v5939
    %v6068 = vmul.f32 %v4839, %v5940
    %v6069 = vmul.f32 %v4839, %v5941
    %v6070 = vmul.f32 %v4839, %v5942
    %v6071 = vmul.f32 %v4839, %v5943
    %v6072 = vmul.f32 %v4839, %v5944
    %v6073 = vmul.f32 %v4839, %v5945
    %v6074 = vmul.f32 %v4839, %v5946
    %v6075 = vmul.f32 %v4839, %v5947
    %v6076 = vmul.f32 %v4839, %v5948
    %v6077 = vmul.f32 %v4839, %v5949
    %v6078 = vmul.f32 %v4839, %v5950
    %v6079 = vmul.f32 %v4839, %v5951
    %v6080 = vmul.f32 %v4839, %v5952
    %v6081 = vmul.f32 %v4839, %v5953
    %v6082 = vmul.f32 %v4839, %v5954
    %v6083 = vmul.f32 %v4839, %v5955
    %v6084 = vmul.f32 %v4839, %v5956
    %v6085 = vmul.f32 %v4839, %v5957
    %v6086 = vmul.f32 %v4839, %v5958
    %v6087 = vmul.f32 %v4839, %v5959
    %v6088 = vmul.f32 %v4839, %v5960
    %v6089 = vmul.f32 %v4839, %v5961
    %v6090 = vmul.f32 %v4839, %v5962
    %v6091 = vmul.f32 %v4839, %v5963
    %v6092 = vmul.f32 %v4839, %v5964
    %v6093 = vmul.f32 %v4839, %v5965
    %v6094 = vmul.f32 %v4839, %v5966
    %v6095 = vmul.f32 %v4839, %v5967
    %v6096 = vmul.f32 %v4839, %v5968
    %v6097 = vmul.f32 %v4839, %v5969
    %v6098 = vmul.f32 %v4839, %v5970
    %v6099 = vmul.f32 %v4839, %v5971
    %v6100 = vmul.f32 %v4839, %v5972
    %v6101 = vmul.f32 %v4839, %v5973
    %v6102 = vmul.f32 %v4839, %v5974
    %v6103 = vmul.f32 %v4839, %v5975
    %v6104 = vmul.f32 %v4839, %v5976
    %v6105 = vmul.f32 %v4839, %v5977
    %v6106 = vmul.f32 %v4839, %v5978
    %v6107 = vmul.f32 %v4839, %v5979
    %v6108 = vmul.f32 %v4839, %v5980
    %v6109 = vmul.f32 %v4839, %v5981
    %v6110 = vmul.f32 %v4839, %v5982
    %v6111 = vmul.f32 %v4839, %v5983
    %v6112 = vmul.f32 %v4839, %v5984
    %v6113 = vmul.f32 %v4839, %v5985
    %v6114 = vmul.f32 %v4839, %v5986
    %v6115 = vmul.f32 %v4839, %v5987
    %v6116 = vmul.f32 %v4839, %v5988
    %v6117 = vmul.f32 %v4839, %v5989
    %v6118 = vmul.f32 %v4839, %v5990
    %v6119 = vmul.f32 %v4839, %v5991
    %v6120 = vmul.f32 %v4839, %v5992
    %v6121 = vmul.f32 %v4839, %v5993
    %v6122 = vmul.f32 %v4839, %v5994
    %v6123 = vmul.f32 %v4839, %v5995
    %v6124 = vmul.f32 %v4839, %v5996
    %v6125 = vmul.f32 %v4839, %v5997
    %v6126 = vmul.f32 %v4839, %v5998
    %v6127 = vmul.f32 %v4839, %v5999
    %v6128 = vmul.f32 %v4839, %v6000
    %v6129 = vmul.f32 %v4839, %v6001
    %v6130 = vmul.f32 %v4839, %v6002
    %v6131 = vmul.f32 %v4839, %v6003
    %v6132 = vadd.f32 %v5748, %v6004
    %v6133 = vadd.f32 %v5749, %v6005
    %v6134 = vadd.f32 %v5750, %v6006
    %v6135 = vadd.f32 %v5751, %v6007
    %v6136 = vadd.f32 %v5752, %v6008
    %v6137 = vadd.f32 %v5753, %v6009
    %v6138 = vadd.f32 %v5754, %v6010
    %v6139 = vadd.f32 %v5755, %v6011
    %v6140 = vadd.f32 %v5756, %v6012
    %v6141 = vadd.f32 %v5757, %v6013
    %v6142 = vadd.f32 %v5758, %v6014
    %v6143 = vadd.f32 %v5759, %v6015
    %v6144 = vadd.f32 %v5760, %v6016
    %v6145 = vadd.f32 %v5761, %v6017
    %v6146 = vadd.f32 %v5762, %v6018
    %v6147 = vadd.f32 %v5763, %v6019
    %v6148 = vadd.f32 %v5764, %v6020
    %v6149 = vadd.f32 %v5765, %v6021
    %v6150 = vadd.f32 %v5766, %v6022
    %v6151 = vadd.f32 %v5767, %v6023
    %v6152 = vadd.f32 %v5768, %v6024
    %v6153 = vadd.f32 %v5769, %v6025
    %v6154 = vadd.f32 %v5770, %v6026
    %v6155 = vadd.f32 %v5771, %v6027
    %v6156 = vadd.f32 %v5772, %v6028
    %v6157 = vadd.f32 %v5773, %v6029
    %v6158 = vadd.f32 %v5774, %v6030
    %v6159 = vadd.f32 %v5775, %v6031
    %v6160 = vadd.f32 %v5776, %v6032
    %v6161 = vadd.f32 %v5777, %v6033
    %v6162 = vadd.f32 %v5778, %v6034
    %v6163 = vadd.f32 %v5779, %v6035
    %v6164 = vadd.f32 %v5780, %v6036
    %v6165 = vadd.f32 %v5781, %v6037
    %v6166 = vadd.f32 %v5782, %v6038
    %v6167 = vadd.f32 %v5783, %v6039
    %v6168 = vadd.f32 %v5784, %v6040
    %v6169 = vadd.f32 %v5785, %v6041
    %v6170 = vadd.f32 %v5786, %v6042
    %v6171 = vadd.f32 %v5787, %v6043
    %v6172 = vadd.f32 %v5788, %v6044
    %v6173 = vadd.f32 %v5789, %v6045
    %v6174 = vadd.f32 %v5790, %v6046
    %v6175 = vadd.f32 %v5791, %v6047
    %v6176 = vadd.f32 %v5792, %v6048
    %v6177 = vadd.f32 %v5793, %v6049
    %v6178 = vadd.f32 %v5794, %v6050
    %v6179 = vadd.f32 %v5795, %v6051
    %v6180 = vadd.f32 %v5796, %v6052
    %v6181 = vadd.f32 %v5797, %v6053
    %v6182 = vadd.f32 %v5798, %v6054
    %v6183 = vadd.f32 %v5799, %v6055
    %v6184 = vadd.f32 %v5800, %v6056
    %v6185 = vadd.f32 %v5801, %v6057
    %v6186 = vadd.f32 %v5802, %v6058
    %v6187 = vadd.f32 %v5803, %v6059
    %v6188 = vadd.f32 %v5804, %v6060
    %v6189 = vadd.f32 %v5805, %v6061
    %v6190 = vadd.f32 %v5806, %v6062
    %v6191 = vadd.f32 %v5807, %v6063
    %v6192 = vadd.f32 %v5808, %v6064
    %v6193 = vadd.f32 %v5809, %v6065
    %v6194 = vadd.f32 %v5810, %v6066
    %v6195 = vadd.f32 %v5811, %v6067
    %v6196 = vadd.f32 %v5812, %v6068
    %v6197 = vadd.f32 %v5813, %v6069
    %v6198 = vadd.f32 %v5814, %v6070
    %v6199 = vadd.f32 %v5815, %v6071
    %v6200 = vadd.f32 %v5816, %v6072
    %v6201 = vadd.f32 %v5817, %v6073
    %v6202 = vadd.f32 %v5818, %v6074
    %v6203 = vadd.f32 %v5819, %v6075
    %v6204 = vadd.f32 %v5820, %v6076
    %v6205 = vadd.f32 %v5821, %v6077
    %v6206 = vadd.f32 %v5822, %v6078
    %v6207 = vadd.f32 %v5823, %v6079
    %v6208 = vadd.f32 %v5824, %v6080
    %v6209 = vadd.f32 %v5825, %v6081
    %v6210 = vadd.f32 %v5826, %v6082
    %v6211 = vadd.f32 %v5827, %v6083
    %v6212 = vadd.f32 %v5828, %v6084
    %v6213 = vadd.f32 %v5829, %v6085
    %v6214 = vadd.f32 %v5830, %v6086
    %v6215 = vadd.f32 %v5831, %v6087
    %v6216 = vadd.f32 %v5832, %v6088
    %v6217 = vadd.f32 %v5833, %v6089
    %v6218 = vadd.f32 %v5834, %v6090
    %v6219 = vadd.f32 %v5835, %v6091
    %v6220 = vadd.f32 %v5836, %v6092
    %v6221 = vadd.f32 %v5837, %v6093
    %v6222 = vadd.f32 %v5838, %v6094
    %v6223 = vadd.f32 %v5839, %v6095
    %v6224 = vadd.f32 %v5840, %v6096
    %v6225 = vadd.f32 %v5841, %v6097
    %v6226 = vadd.f32 %v5842, %v6098
    %v6227 = vadd.f32 %v5843, %v6099
    %v6228 = vadd.f32 %v5844, %v6100
    %v6229 = vadd.f32 %v5845, %v6101
    %v6230 = vadd.f32 %v5846, %v6102
    %v6231 = vadd.f32 %v5847, %v6103
    %v6232 = vadd.f32 %v5848, %v6104
    %v6233 = vadd.f32 %v5849, %v6105
    %v6234 = vadd.f32 %v5850, %v6106
    %v6235 = vadd.f32 %v5851, %v6107
    %v6236 = vadd.f32 %v5852, %v6108
    %v6237 = vadd.f32 %v5853, %v6109
    %v6238 = vadd.f32 %v5854, %v6110
    %v6239 = vadd.f32 %v5855, %v6111
    %v6240 = vadd.f32 %v5856, %v6112
    %v6241 = vadd.f32 %v5857, %v6113
    %v6242 = vadd.f32 %v5858, %v6114
    %v6243 = vadd.f32 %v5859, %v6115
    %v6244 = vadd.f32 %v5860, %v6116
    %v6245 = vadd.f32 %v5861, %v6117
    %v6246 = vadd.f32 %v5862, %v6118
    %v6247 = vadd.f32 %v5863, %v6119
    %v6248 = vadd.f32 %v5864, %v6120
    %v6249 = vadd.f32 %v5865, %v6121
    %v6250 = vadd.f32 %v5866, %v6122
    %v6251 = vadd.f32 %v5867, %v6123
    %v6252 = vadd.f32 %v5868, %v6124
    %v6253 = vadd.f32 %v5869, %v6125
    %v6254 = vadd.f32 %v5870, %v6126
    %v6255 = vadd.f32 %v5871, %v6127
    %v6256 = vadd.f32 %v5872, %v6128
    %v6257 = vadd.f32 %v5873, %v6129
    %v6258 = vadd.f32 %v5874, %v6130
    %v6259 = vadd.f32 %v5875, %v6131
    %6260 = vst [vmem:[#allocation10] sm:$0xff] %v6132
    %6261 = vst [vmem:[#allocation10 + $0x8] sm:$0xff] %v6133
    %6262 = vst [vmem:[#allocation10 + $0x10] sm:$0xff] %v6134
    %6263 = vst [vmem:[#allocation10 + $0x18] sm:$0xff] %v6135
    %6264 = vst [vmem:[#allocation10 + $0x20] sm:$0xff] %v6136
    %6265 = vst [vmem:[#allocation10 + $0x28] sm:$0xff] %v6137
    %6266 = vst [vmem:[#allocation10 + $0x30] sm:$0xff] %v6138
    %6267 = vst [vmem:[#allocation10 + $0x38] sm:$0xff] %v6139
    %6268 = vst [vmem:[#allocation10 + $0x40] sm:$0xff] %v6140
    %6269 = vst [vmem:[#allocation10 + $0x48] sm:$0xff] %v6141
    %6270 = vst [vmem:[#allocation10 + $0x50] sm:$0xff] %v6142
    %6271 = vst [vmem:[#allocation10 + $0x58] sm:$0xff] %v6143
    %6272 = vst [vmem:[#allocation10 + $0x60] sm:$0xff] %v6144
    %6273 = vst [vmem:[#allocation10 + $0x68] sm:$0xff] %v6145
    %6274 = vst [vmem:[#allocation10 + $0x70] sm:$0xff] %v6146
    %6275 = vst [vmem:[#allocation10 + $0x78] sm:$0xff] %v6147
    %6276 = vst [vmem:[#allocation10 + $0x80] sm:$0xff] %v6148
    %6277 = vst [vmem:[#allocation10 + $0x88] sm:$0xff] %v6149
    %6278 = vst [vmem:[#allocation10 + $0x90] sm:$0xff] %v6150
    %6279 = vst [vmem:[#allocation10 + $0x98] sm:$0xff] %v6151
    %6280 = vst [vmem:[#allocation10 + $0xa0] sm:$0xff] %v6152
    %6281 = vst [vmem:[#allocation10 + $0xa8] sm:$0xff] %v6153
    %6282 = vst [vmem:[#allocation10 + $0xb0] sm:$0xff] %v6154
    %6283 = vst [vmem:[#allocation10 + $0xb8] sm:$0xff] %v6155
    %6284 = vst [vmem:[#allocation10 + $0xc0] sm:$0xff] %v6156
    %6285 = vst [vmem:[#allocation10 + $0xc8] sm:$0xff] %v6157
    %6286 = vst [vmem:[#allocation10 + $0xd0] sm:$0xff] %v6158
    %6287 = vst [vmem:[#allocation10 + $0xd8] sm:$0xff] %v6159
    %6288 = vst [vmem:[#allocation10 + $0xe0] sm:$0xff] %v6160
    %6289 = vst [vmem:[#allocation10 + $0xe8] sm:$0xff] %v6161
    %6290 = vst [vmem:[#allocation10 + $0xf0] sm:$0xff] %v6162
    %6291 = vst [vmem:[#allocation10 + $0xf8] sm:$0xff] %v6163
    %6292 = vst [vmem:[#allocation10 + $0x100] sm:$0xff] %v6164
    %6293 = vst [vmem:[#allocation10 + $0x108] sm:$0xff] %v6165
    %6294 = vst [vmem:[#allocation10 + $0x110] sm:$0xff] %v6166
    %6295 = vst [vmem:[#allocation10 + $0x118] sm:$0xff] %v6167
    %6296 = vst [vmem:[#allocation10 + $0x120] sm:$0xff] %v6168
    %6297 = vst [vmem:[#allocation10 + $0x128] sm:$0xff] %v6169
    %6298 = vst [vmem:[#allocation10 + $0x130] sm:$0xff] %v6170
    %6299 = vst [vmem:[#allocation10 + $0x138] sm:$0xff] %v6171
    %6300 = vst [vmem:[#allocation10 + $0x140] sm:$0xff] %v6172
    %6301 = vst [vmem:[#allocation10 + $0x148] sm:$0xff] %v6173
    %6302 = vst [vmem:[#allocation10 + $0x150] sm:$0xff] %v6174
    %6303 = vst [vmem:[#allocation10 + $0x158] sm:$0xff] %v6175
    %6304 = vst [vmem:[#allocation10 + $0x160] sm:$0xff] %v6176
    %6305 = vst [vmem:[#allocation10 + $0x168] sm:$0xff] %v6177
    %6306 = vst [vmem:[#allocation10 + $0x170] sm:$0xff] %v6178
    %6307 = vst [vmem:[#allocation10 + $0x178] sm:$0xff] %v6179
    %6308 = vst [vmem:[#allocation10 + $0x180] sm:$0xff] %v6180
    %6309 = vst [vmem:[#allocation10 + $0x188] sm:$0xff] %v6181
    %6310 = vst [vmem:[#allocation10 + $0x190] sm:$0xff] %v6182
    %6311 = vst [vmem:[#allocation10 + $0x198] sm:$0xff] %v6183
    %6312 = vst [vmem:[#allocation10 + $0x1a0] sm:$0xff] %v6184
    %6313 = vst [vmem:[#allocation10 + $0x1a8] sm:$0xff] %v6185
    %6314 = vst [vmem:[#allocation10 + $0x1b0] sm:$0xff] %v6186
    %6315 = vst [vmem:[#allocation10 + $0x1b8] sm:$0xff] %v6187
    %6316 = vst [vmem:[#allocation10 + $0x1c0] sm:$0xff] %v6188
    %6317 = vst [vmem:[#allocation10 + $0x1c8] sm:$0xff] %v6189
    %6318 = vst [vmem:[#allocation10 + $0x1d0] sm:$0xff] %v6190
    %6319 = vst [vmem:[#allocation10 + $0x1d8] sm:$0xff] %v6191
    %6320 = vst [vmem:[#allocation10 + $0x1e0] sm:$0xff] %v6192
    %6321 = vst [vmem:[#allocation10 + $0x1e8] sm:$0xff] %v6193
    %6322 = vst [vmem:[#allocation10 + $0x1f0] sm:$0xff] %v6194
    %6323 = vst [vmem:[#allocation10 + $0x1f8] sm:$0xff] %v6195
    %6324 = vst [vmem:[#allocation10 + $0x200] sm:$0xff] %v6196
    %6325 = vst [vmem:[#allocation10 + $0x208] sm:$0xff] %v6197
    %6326 = vst [vmem:[#allocation10 + $0x210] sm:$0xff] %v6198
    %6327 = vst [vmem:[#allocation10 + $0x218] sm:$0xff] %v6199
    %6328 = vst [vmem:[#allocation10 + $0x220] sm:$0xff] %v6200
    %6329 = vst [vmem:[#allocation10 + $0x228] sm:$0xff] %v6201
    %6330 = vst [vmem:[#allocation10 + $0x230] sm:$0xff] %v6202
    %6331 = vst [vmem:[#allocation10 + $0x238] sm:$0xff] %v6203
    %6332 = vst [vmem:[#allocation10 + $0x240] sm:$0xff] %v6204
    %6333 = vst [vmem:[#allocation10 + $0x248] sm:$0xff] %v6205
    %6334 = vst [vmem:[#allocation10 + $0x250] sm:$0xff] %v6206
    %6335 = vst [vmem:[#allocation10 + $0x258] sm:$0xff] %v6207
    %6336 = vst [vmem:[#allocation10 + $0x260] sm:$0xff] %v6208
    %6337 = vst [vmem:[#allocation10 + $0x268] sm:$0xff] %v6209
    %6338 = vst [vmem:[#allocation10 + $0x270] sm:$0xff] %v6210
    %6339 = vst [vmem:[#allocation10 + $0x278] sm:$0xff] %v6211
    %6340 = vst [vmem:[#allocation10 + $0x280] sm:$0xff] %v6212
    %6341 = vst [vmem:[#allocation10 + $0x288] sm:$0xff] %v6213
    %6342 = vst [vmem:[#allocation10 + $0x290] sm:$0xff] %v6214
    %6343 = vst [vmem:[#allocation10 + $0x298] sm:$0xff] %v6215
    %6344 = vst [vmem:[#allocation10 + $0x2a0] sm:$0xff] %v6216
    %6345 = vst [vmem:[#allocation10 + $0x2a8] sm:$0xff] %v6217
    %6346 = vst [vmem:[#allocation10 + $0x2b0] sm:$0xff] %v6218
    %6347 = vst [vmem:[#allocation10 + $0x2b8] sm:$0xff] %v6219
    %6348 = vst [vmem:[#allocation10 + $0x2c0] sm:$0xff] %v6220
    %6349 = vst [vmem:[#allocation10 + $0x2c8] sm:$0xff] %v6221
    %6350 = vst [vmem:[#allocation10 + $0x2d0] sm:$0xff] %v6222
    %6351 = vst [vmem:[#allocation10 + $0x2d8] sm:$0xff] %v6223
    %6352 = vst [vmem:[#allocation10 + $0x2e0] sm:$0xff] %v6224
    %6353 = vst [vmem:[#allocation10 + $0x2e8] sm:$0xff] %v6225
    %6354 = vst [vmem:[#allocation10 + $0x2f0] sm:$0xff] %v6226
    %6355 = vst [vmem:[#allocation10 + $0x2f8] sm:$0xff] %v6227
    %6356 = vst [vmem:[#allocation10 + $0x300] sm:$0xff] %v6228
    %6357 = vst [vmem:[#allocation10 + $0x308] sm:$0xff] %v6229
    %6358 = vst [vmem:[#allocation10 + $0x310] sm:$0xff] %v6230
    %6359 = vst [vmem:[#allocation10 + $0x318] sm:$0xff] %v6231
    %6360 = vst [vmem:[#allocation10 + $0x320] sm:$0xff] %v6232
    %6361 = vst [vmem:[#allocation10 + $0x328] sm:$0xff] %v6233
    %6362 = vst [vmem:[#allocation10 + $0x330] sm:$0xff] %v6234
    %6363 = vst [vmem:[#allocation10 + $0x338] sm:$0xff] %v6235
    %6364 = vst [vmem:[#allocation10 + $0x340] sm:$0xff] %v6236
    %6365 = vst [vmem:[#allocation10 + $0x348] sm:$0xff] %v6237
    %6366 = vst [vmem:[#allocation10 + $0x350] sm:$0xff] %v6238
    %6367 = vst [vmem:[#allocation10 + $0x358] sm:$0xff] %v6239
    %6368 = vst [vmem:[#allocation10 + $0x360] sm:$0xff] %v6240
    %6369 = vst [vmem:[#allocation10 + $0x368] sm:$0xff] %v6241
    %6370 = vst [vmem:[#allocation10 + $0x370] sm:$0xff] %v6242
    %6371 = vst [vmem:[#allocation10 + $0x378] sm:$0xff] %v6243
    %6372 = vst [vmem:[#allocation10 + $0x380] sm:$0xff] %v6244
    %6373 = vst [vmem:[#allocation10 + $0x388] sm:$0xff] %v6245
    %6374 = vst [vmem:[#allocation10 + $0x390] sm:$0xff] %v6246
    %6375 = vst [vmem:[#allocation10 + $0x398] sm:$0xff] %v6247
    %6376 = vst [vmem:[#allocation10 + $0x3a0] sm:$0xff] %v6248
    %6377 = vst [vmem:[#allocation10 + $0x3a8] sm:$0xff] %v6249
    %6378 = vst [vmem:[#allocation10 + $0x3b0] sm:$0xff] %v6250
    %6379 = vst [vmem:[#allocation10 + $0x3b8] sm:$0xff] %v6251
    %6380 = vst [vmem:[#allocation10 + $0x3c0] sm:$0xff] %v6252
    %6381 = vst [vmem:[#allocation10 + $0x3c8] sm:$0xff] %v6253
    %6382 = vst [vmem:[#allocation10 + $0x3d0] sm:$0xff] %v6254
    %6383 = vst [vmem:[#allocation10 + $0x3d8] sm:$0xff] %v6255
    %6384 = vst [vmem:[#allocation10 + $0x3e0] sm:$0xff] %v6256
    %6385 = vst [vmem:[#allocation10 + $0x3e8] sm:$0xff] %v6257
    %6386 = vst [vmem:[#allocation10 + $0x3f0] sm:$0xff] %v6258
    %6387 = vst [vmem:[#allocation10 + $0x3f8] sm:$0xff] %v6259
    // Predicated region
    $region34: #{tpu_custom_call.1} parent=1 // pred_check
      _
    $region35: #{tpu_custom_call.1} parent=1 // pred_check_branch
      %6389 = sbr.rel (0) target = $region37
    $region36: #{tpu_custom_call.1} parent=1 // pred_region
      %6391 = vsyncadd [#allocation4], 0
      %s6392 = sshll.u32 [#allocation10], 4
      %s6393 = int_to_ptr.vmem [resolvable:$true] %s6392
      %s6394 = sshll.u32 %s4, 4
      %s6395 = int_to_ptr.hbm [resolvable:$true] %s6394
      %6400 = dma.vmem_to_hbm [thread:$0]  %s6393, 16384, %s6395, [#allocation4], 128, 128, 8
    $region37: #{tpu_custom_call.1} parent=1 // pred_fallthru
      _
    // Predicated region
    $region38: #{tpu_custom_call.1} parent=1 // pred_check
      _
    $region39: #{tpu_custom_call.1} parent=1 // pred_check_branch
      %6402 = sbr.rel (0) target = $region41
    $region40: #{tpu_custom_call.1} parent=1 // pred_region
      %6404 = vsyncadd [#allocation12], 0
      %s6406 = sshll.u32 [#allocation11], 4
      %s6407 = int_to_ptr.vmem [resolvable:$true] %s6406
      %s6408 = sshll.u32 %s5, 4
      %s6409 = int_to_ptr.hbm [resolvable:$true] %s6408
      %6411 = dma.vmem_to_hbm [thread:$0]  %s6407, 16, %s6409, [#allocation12]
    $region41: #{tpu_custom_call.1} parent=1 // pred_fallthru
      _
    // Predicated region
    $region42: #{tpu_custom_call.1} parent=1 // pred_check
      _
    $region43: #{tpu_custom_call.1} parent=1 // pred_check_branch
      %6413 = sbr.rel (0) target = $region45
    $region44: #{tpu_custom_call.1} parent=1 // pred_region
      %6415 = dma.done [#allocation4], 16384
    $region45: #{tpu_custom_call.1} parent=1 // pred_fallthru
      _
    // Predicated region
    $region46: #{tpu_custom_call.1} parent=1 // pred_check
      _
    $region47: #{tpu_custom_call.1} parent=1 // pred_check_branch
      %6417 = sbr.rel (0) target = $region49
    $region48: #{tpu_custom_call.1} parent=1 // pred_region
      %6419 = dma.done [#allocation12], 16
    $region49: #{tpu_custom_call.1} parent=1 // pred_fallthru
      _
    %6420 = vsyncpa [#allocation3], 1
    %6421 = vsyncpa [#allocation6], 1
    %6422 = vsyncpa [#allocation9], 1
    %6423 = vsyncpa [#allocation4], 1
    %6424 = vsyncpa [#allocation12], 1

</llo_original>
